<compile_context>
chip_gen: v6e
topology: v6e:2x2x1
jax: 0.10.0
libtpu: 0.0.40
codegen_flags: <defaults>
</compile_context>

<pallas_src>
import jax
import jax.numpy as jnp
from jax.experimental import pallas as pl
from jax.experimental.pallas import tpu as pltpu

# ----- model dimensions (fixed by the PyTorch module) ----------------------- #
KH = KW = 3
COUT = 10                 # conv output channels
HI = WI = 28
HO = WO = 26
HW = HO * WO              # 676 spatial positions
D1 = COUT * HW            # 6760 flattened features
H1, H2, NOUT = 50, 20, 10
PAD = 128                 # lane-dense padded feature width for the MLP
CHUNK = 8                 # batch rows per register-resident conv sub-chunk (1 sublane tile)


# ------------------------------ fused kernel -------------------------------- #

def fused_convnet_kernel(xs_ref, wc_ref, bc_ref, w1_ref, b1_ref,
                         w2_ref, b2_ref, w3_ref, b3_ref, o_ref, a_sc):
    """One batch tile, fully fused forward pass.

    xs_ref : [9, TB, 676] VMEM  im2col taps (tap k = kh*3+kw leading -> free views)
    wc_ref : [10, 9] SMEM       conv weights     bc_ref : [10] SMEM conv bias
    w1_ref : [10, 676, 128]     per-channel Linear1 weights (PyTorch (c,h,w) order)
    w2_ref : [128, 128]  w3_ref : [128, 128]  b*_ref : [1, 128]  (zero padded)
    o_ref  : [TB, 128]          only the first 10 lanes are meaningful
    a_sc   : [2, TB, 676] VMEM  double-buffered per-channel conv activation
    """
    tb = o_ref.shape[0]
    n_chunks = tb // CHUNK

    acc1 = None
    for c in range(COUT):
        slot = c & 1

        # Conv + ReLU for channel c, register-blocked over 8-row batch chunks:
        # the [8, 676] accumulator stays in vregs through all 9 tap FMAs.
        @pl.loop(0, n_chunks)
        def _conv_chunk(ci, c=c, slot=slot):
            cs = pl.multiple_of(ci * CHUNK, CHUNK)
            a = xs_ref[0, pl.ds(cs, CHUNK), :] * wc_ref[c, 0]
            for k in range(1, KH * KW):
                a = a + xs_ref[k, pl.ds(cs, CHUNK), :] * wc_ref[c, k]
            a_sc[slot, pl.ds(cs, CHUNK), :] = jnp.maximum(a + bc_ref[c], 0.0)

        # Contract this channel's activation into Linear1 on the MXU with a
        # full-tile LHS so the [676,128] RHS is pushed once per channel per tile.
        d = jnp.dot(a_sc[slot], w1_ref[c], preferred_element_type=jnp.float32)
        acc1 = d if acc1 is None else acc1 + d

    h = jnp.maximum(acc1 + b1_ref[...], 0.0)                  # [TB,128], lanes 50+ are 0
    h = jnp.maximum(
        jnp.dot(h, w2_ref[...], preferred_element_type=jnp.float32) + b2_ref[...],
        0.0)                                                  # [TB,128], lanes 20+ are 0
    o_ref[...] = (jnp.dot(h, w3_ref[...], preferred_element_type=jnp.float32)
                  + b3_ref[...])                              # [TB,128]


# --------------------- one-time parameter preprocessing --------------------- #

def prepare_params(params):
    """Torch-layout params -> kernel-ready arrays. Call once, outside the hot path."""
    f32 = jnp.float32
    wc = params["wc"].astype(f32).reshape(COUT, KH * KW)              # [10, 9]
    bc = params["bc"].astype(f32)                                     # [10]

    # Linear1: torch columns are in (c, h, w) order -> per-channel [676, 50], pad N->128.
    w1 = params["w1"].astype(f32).reshape(H1, COUT, HW)               # [50, 10, 676]
    w1 = jnp.transpose(w1, (1, 2, 0))                                 # [10, 676, 50]
    w1 = jnp.pad(w1, ((0, 0), (0, 0), (0, PAD - H1)))                 # [10, 676, 128]
    b1 = jnp.pad(params["b1"].astype(f32), (0, PAD - H1)).reshape(1, PAD)

    w2 = jnp.pad(params["w2"].astype(f32).T,
                 ((0, PAD - H1), (0, PAD - H2)))                      # [128, 128]
    b2 = jnp.pad(params["b2"].astype(f32), (0, PAD - H2)).reshape(1, PAD)

    w3 = jnp.pad(params["w3"].astype(f32).T,
                 ((0, PAD - H2), (0, PAD - NOUT)))                    # [128, 128]
    b3 = jnp.pad(params["b3"].astype(f32), (0, PAD - NOUT)).reshape(1, PAD)

    return {"wc": wc, "bc": bc, "w1": w1, "b1": b1,
            "w2": w2, "b2": b2, "w3": w3, "b3": b3}


# ------------------------------ JAX wrapper ---------------------------------- #

def _batch_tile(batch):
    """Batch-tile rows: multiple of CHUNK, <=128, >=2 grid steps when possible (v7x)."""
    bc = -(-batch // CHUNK) * CHUNK
    if bc <= CHUNK:
        return CHUNK
    half = -(-(bc // 2) // CHUNK) * CHUNK
    return max(CHUNK, min(128, half))


def simple_convnet_forward(x, kp):
    """x: [B, 1, 28, 28] float32, kp = prepare_params(params) -> [B, 10] float32."""
    B = x.shape[0]
    xs2 = x[:, 0].astype(jnp.float32)                                 # [B, 28, 28]
    # Lane-dense im2col with the tap axis LEADING: [9, B, 676]
    # (tap k = kh*3+kw, spatial hw = h*26+w) so in-kernel tap selection is a
    # zero-cost leading-axis view (no sublane-strided relayout copies).
    xs = jnp.stack(
        [xs2[:, i:i + HO, j:j + WO].reshape(B, HW)
         for i in range(KH) for j in range(KW)],
        axis=0)
    # TODO(synk): on v5e the wrapper im2col (~24 KB/example HBM round-trip) could be
    # removed by passing raw [B,784] pixels and building taps in-kernel with
    # pltpu.roll plus a 784-stride, zero-row-padded w1 re-index.

    tb = _batch_tile(B)
    b_pad = -(-B // tb) * tb
    if b_pad != B:
        xs = jnp.pad(xs, ((0, 0), (0, b_pad - B), (0, 0)))
    grid = (b_pad // tb,)

    smem = pl.BlockSpec(memory_space=pltpu.MemorySpace.SMEM)

    def resident(shape):  # full-array VMEM block that stays put across the grid
        return pl.BlockSpec(shape, lambda i, _s=shape: (0,) * len(_s))
    # TODO(synk): pipeline_mode=pl.Buffered(1) on the resident weight specs would drop
    # their never-used second VMEM buffer (~3.5 MB) once single-buffering is supported.

    # Advisory cost estimate using the padded dims actually issued to the MXU/VPU.
    flops = 2 * b_pad * (HW * KH * KW * COUT + HW * PAD * COUT + PAD * PAD + PAD * PAD)
    bytes_accessed = 4 * (xs.size + kp["w1"].size + kp["w2"].size + kp["w3"].size
                          + 3 * PAD + b_pad * PAD)

    out = pl.pallas_call(
        fused_convnet_kernel,
        out_shape=jax.ShapeDtypeStruct((b_pad, PAD), jnp.float32),
        grid=grid,
        in_specs=[
            pl.BlockSpec((KH * KW, tb, HW), lambda i: (0, i, 0)),     # xs (batch-tiled)
            smem,                                                     # wc -> SMEM scalars
            smem,                                                     # bc -> SMEM scalars
            resident((COUT, HW, PAD)),                                # w1 (resident)
            resident((1, PAD)),                                       # b1
            resident((PAD, PAD)),                                     # w2
            resident((1, PAD)),                                       # b2
            resident((PAD, PAD)),                                     # w3
            resident((1, PAD)),                                       # b3
        ],
        out_specs=pl.BlockSpec((tb, PAD), lambda i: (i, 0)),
        scratch_shapes=[pltpu.VMEM((2, tb, HW), jnp.float32)],
        compiler_params=pltpu.CompilerParams(
            dimension_semantics=("parallel",),
            # ~14 MiB actually used at tb=128 (xs 2x3.1 MB, w1 2x3.5 MB, scratch
            # 0.7 MB) -- comfortably under v7x's 64 MiB physical VMEM.
            vmem_limit_bytes=32 * 1024 * 1024),
        cost_estimate=pl.CostEstimate(
            flops=flops, transcendentals=0, bytes_accessed=bytes_accessed),
    )(xs, kp["wc"], kp["bc"], kp["w1"], kp["b1"],
      kp["w2"], kp["b2"], kp["w3"], kp["b3"])

    return out[:B, :NOUT]


# ----------------------------- pure-JAX reference ---------------------------- #

def reference_forward(x, params):
    conv = jax.lax.conv_general_dilated(
        x, params["wc"], window_strides=(1, 1), padding="VALID",
        dimension_numbers=("NCHW", "OIHW", "NCHW"))
    conv = jnp.maximum(conv + params["bc"][None, :, None, None], 0.0)
    flat = conv.reshape(x.shape[0], -1)                      # NCHW flatten (c, h, w)
    h = jnp.maximum(flat @ params["w1"].T + params["b1"], 0.0)
    h = jnp.maximum(h @ params["w2"].T + params["b2"], 0.0)
    return h @ params["w3"].T + params["b3"]


# ----------------------------------- main ------------------------------------ #

if __name__ == "__main__":
    key = jax.random.PRNGKey(0)
    ks = jax.random.split(key, 9)

    params = {
        "wc": jax.random.normal(ks[0], (10, 1, 3, 3), jnp.float32) * 0.1,
        "bc": jax.random.normal(ks[1], (10,), jnp.float32) * 0.1,
        "w1": jax.random.normal(ks[2], (50, D1), jnp.float32) * 0.02,
        "b1": jax.random.normal(ks[3], (50,), jnp.float32) * 0.02,
        "w2": jax.random.normal(ks[4], (20, 50), jnp.float32) * 0.1,
        "b2": jax.random.normal(ks[5], (20,), jnp.float32) * 0.1,
        "w3": jax.random.normal(ks[6], (10, 20), jnp.float32) * 0.1,
        "b3": jax.random.normal(ks[7], (10,), jnp.float32) * 0.1,
    }

    # batch=2, channels=1, spatial=28 (architecture requires 28x28 -> 26x26 after conv)
    x = jax.random.normal(ks[8], (2, 1, 28, 28), jnp.float32)

    kp = prepare_params(params)            # one-time weight prep, hoisted off hot path
    fwd = jax.jit(simple_convnet_forward)

    out = fwd(x, kp)
    out = jax.block_until_ready(out)

    ref = reference_forward(x, params)
    assert out.shape == (2, 10)
    assert bool(jnp.allclose(out, ref, atol=1e-4, rtol=1e-4)), "mismatch vs reference"

    print("KERNEL_OK")
</pallas_src>

<mosaic_0001>
module attributes {stable_mosaic.version = 11 : i64} {
  func.func @fused_convnet_kernel(%arg0: i32, %arg1: memref<9x8x676xf32, #tpu.memory_space<vmem>>, %arg2: memref<10x9xf32, #tpu.memory_space<smem>>, %arg3: memref<10xf32, #tpu.memory_space<smem>>, %arg4: memref<10x676x128xf32, #tpu.memory_space<vmem>>, %arg5: memref<1x128xf32, #tpu.memory_space<vmem>>, %arg6: memref<128x128xf32, #tpu.memory_space<vmem>>, %arg7: memref<1x128xf32, #tpu.memory_space<vmem>>, %arg8: memref<128x128xf32, #tpu.memory_space<vmem>>, %arg9: memref<1x128xf32, #tpu.memory_space<vmem>>, %arg10: memref<8x128xf32, #tpu.memory_space<vmem>>, %arg11: memref<2x8x676xf32, #tpu.memory_space<vmem>>) attributes {dimension_semantics = [#tpu.dimension_semantics<parallel>], iteration_bounds = array<i64: 1>, scalar_prefetch = 0 : i64, scratch_operands = 1 : i64, tpu.core_type = #tpu.core_type<tc>, window_params = [{transform_indices = @transform_0, window_bounds = array<i64: 9, 8, 676>}, {transform_indices = @transform_1, window_bounds = array<i64: 10, 9>}, {transform_indices = @transform_2, window_bounds = array<i64: 10>}, {pipeline_mode = #tpu.pipeline_mode<synchronous>, transform_indices = @transform_3, window_bounds = array<i64: 10, 676, 128>}, {pipeline_mode = #tpu.pipeline_mode<synchronous>, transform_indices = @transform_4, window_bounds = array<i64: 1, 128>}, {pipeline_mode = #tpu.pipeline_mode<synchronous>, transform_indices = @transform_5, window_bounds = array<i64: 128, 128>}, {pipeline_mode = #tpu.pipeline_mode<synchronous>, transform_indices = @transform_6, window_bounds = array<i64: 1, 128>}, {pipeline_mode = #tpu.pipeline_mode<synchronous>, transform_indices = @transform_7, window_bounds = array<i64: 128, 128>}, {pipeline_mode = #tpu.pipeline_mode<synchronous>, transform_indices = @transform_8, window_bounds = array<i64: 1, 128>}, {transform_indices = @transform_9, window_bounds = array<i64: 8, 128>}]} {
    %c0_i32 = arith.constant 0 : i32
    %c1_i32 = arith.constant 1 : i32
    %0 = arith.muli %c0_i32, %c1_i32 : i32
    %c0_i32_0 = arith.constant 0 : i32
    %1 = arith.addi %c0_i32_0, %0 : i32
    %c8_i32 = arith.constant 8 : i32
    %2 = arith.muli %1, %c8_i32 : i32
    %3 = tpu.assume_multiple %2, 8 : i32
    %c0 = arith.constant 0 : index
    %4 = arith.index_cast %3 : i32 to index
    %c0_1 = arith.constant 0 : index
    %5 = vector.load %arg1[%c0, %4, %c0_1] : memref<9x8x676xf32, #tpu.memory_space<vmem>>, vector<1x8x676xf32>
    %6 = vector.shape_cast %5 : vector<1x8x676xf32> to vector<8x676xf32>
    %c0_2 = arith.constant 0 : index
    %c0_3 = arith.constant 0 : index
    %7 = memref.load %arg2[%c0_2, %c0_3] : memref<10x9xf32, #tpu.memory_space<smem>>
    %8 = vector.broadcast %7 : f32 to vector<8x676xf32>
    %9 = arith.mulf %6, %8 : vector<8x676xf32>
    %c1 = arith.constant 1 : index
    %10 = arith.index_cast %3 : i32 to index
    %c0_4 = arith.constant 0 : index
    %11 = vector.load %arg1[%c1, %10, %c0_4] : memref<9x8x676xf32, #tpu.memory_space<vmem>>, vector<1x8x676xf32>
    %12 = vector.shape_cast %11 : vector<1x8x676xf32> to vector<8x676xf32>
    %c0_5 = arith.constant 0 : index
    %c1_6 = arith.constant 1 : index
    %13 = memref.load %arg2[%c0_5, %c1_6] : memref<10x9xf32, #tpu.memory_space<smem>>
    %14 = vector.broadcast %13 : f32 to vector<8x676xf32>
    %15 = arith.mulf %12, %14 : vector<8x676xf32>
    %16 = arith.addf %9, %15 : vector<8x676xf32>
    %c2 = arith.constant 2 : index
    %17 = arith.index_cast %3 : i32 to index
    %c0_7 = arith.constant 0 : index
    %18 = vector.load %arg1[%c2, %17, %c0_7] : memref<9x8x676xf32, #tpu.memory_space<vmem>>, vector<1x8x676xf32>
    %19 = vector.shape_cast %18 : vector<1x8x676xf32> to vector<8x676xf32>
    %c0_8 = arith.constant 0 : index
    %c2_9 = arith.constant 2 : index
    %20 = memref.load %arg2[%c0_8, %c2_9] : memref<10x9xf32, #tpu.memory_space<smem>>
    %21 = vector.broadcast %20 : f32 to vector<8x676xf32>
    %22 = arith.mulf %19, %21 : vector<8x676xf32>
    %23 = arith.addf %16, %22 : vector<8x676xf32>
    %c3 = arith.constant 3 : index
    %24 = arith.index_cast %3 : i32 to index
    %c0_10 = arith.constant 0 : index
    %25 = vector.load %arg1[%c3, %24, %c0_10] : memref<9x8x676xf32, #tpu.memory_space<vmem>>, vector<1x8x676xf32>
    %26 = vector.shape_cast %25 : vector<1x8x676xf32> to vector<8x676xf32>
    %c0_11 = arith.constant 0 : index
    %c3_12 = arith.constant 3 : index
    %27 = memref.load %arg2[%c0_11, %c3_12] : memref<10x9xf32, #tpu.memory_space<smem>>
    %28 = vector.broadcast %27 : f32 to vector<8x676xf32>
    %29 = arith.mulf %26, %28 : vector<8x676xf32>
    %30 = arith.addf %23, %29 : vector<8x676xf32>
    %c4 = arith.constant 4 : index
    %31 = arith.index_cast %3 : i32 to index
    %c0_13 = arith.constant 0 : index
    %32 = vector.load %arg1[%c4, %31, %c0_13] : memref<9x8x676xf32, #tpu.memory_space<vmem>>, vector<1x8x676xf32>
    %33 = vector.shape_cast %32 : vector<1x8x676xf32> to vector<8x676xf32>
    %c0_14 = arith.constant 0 : index
    %c4_15 = arith.constant 4 : index
    %34 = memref.load %arg2[%c0_14, %c4_15] : memref<10x9xf32, #tpu.memory_space<smem>>
    %35 = vector.broadcast %34 : f32 to vector<8x676xf32>
    %36 = arith.mulf %33, %35 : vector<8x676xf32>
    %37 = arith.addf %30, %36 : vector<8x676xf32>
    %c5 = arith.constant 5 : index
    %38 = arith.index_cast %3 : i32 to index
    %c0_16 = arith.constant 0 : index
    %39 = vector.load %arg1[%c5, %38, %c0_16] : memref<9x8x676xf32, #tpu.memory_space<vmem>>, vector<1x8x676xf32>
    %40 = vector.shape_cast %39 : vector<1x8x676xf32> to vector<8x676xf32>
    %c0_17 = arith.constant 0 : index
    %c5_18 = arith.constant 5 : index
    %41 = memref.load %arg2[%c0_17, %c5_18] : memref<10x9xf32, #tpu.memory_space<smem>>
    %42 = vector.broadcast %41 : f32 to vector<8x676xf32>
    %43 = arith.mulf %40, %42 : vector<8x676xf32>
    %44 = arith.addf %37, %43 : vector<8x676xf32>
    %c6 = arith.constant 6 : index
    %45 = arith.index_cast %3 : i32 to index
    %c0_19 = arith.constant 0 : index
    %46 = vector.load %arg1[%c6, %45, %c0_19] : memref<9x8x676xf32, #tpu.memory_space<vmem>>, vector<1x8x676xf32>
    %47 = vector.shape_cast %46 : vector<1x8x676xf32> to vector<8x676xf32>
    %c0_20 = arith.constant 0 : index
    %c6_21 = arith.constant 6 : index
    %48 = memref.load %arg2[%c0_20, %c6_21] : memref<10x9xf32, #tpu.memory_space<smem>>
    %49 = vector.broadcast %48 : f32 to vector<8x676xf32>
    %50 = arith.mulf %47, %49 : vector<8x676xf32>
    %51 = arith.addf %44, %50 : vector<8x676xf32>
    %c7 = arith.constant 7 : index
    %52 = arith.index_cast %3 : i32 to index
    %c0_22 = arith.constant 0 : index
    %53 = vector.load %arg1[%c7, %52, %c0_22] : memref<9x8x676xf32, #tpu.memory_space<vmem>>, vector<1x8x676xf32>
    %54 = vector.shape_cast %53 : vector<1x8x676xf32> to vector<8x676xf32>
    %c0_23 = arith.constant 0 : index
    %c7_24 = arith.constant 7 : index
    %55 = memref.load %arg2[%c0_23, %c7_24] : memref<10x9xf32, #tpu.memory_space<smem>>
    %56 = vector.broadcast %55 : f32 to vector<8x676xf32>
    %57 = arith.mulf %54, %56 : vector<8x676xf32>
    %58 = arith.addf %51, %57 : vector<8x676xf32>
    %c8 = arith.constant 8 : index
    %59 = arith.index_cast %3 : i32 to index
    %c0_25 = arith.constant 0 : index
    %60 = vector.load %arg1[%c8, %59, %c0_25] : memref<9x8x676xf32, #tpu.memory_space<vmem>>, vector<1x8x676xf32>
    %61 = vector.shape_cast %60 : vector<1x8x676xf32> to vector<8x676xf32>
    %c0_26 = arith.constant 0 : index
    %c8_27 = arith.constant 8 : index
    %62 = memref.load %arg2[%c0_26, %c8_27] : memref<10x9xf32, #tpu.memory_space<smem>>
    %63 = vector.broadcast %62 : f32 to vector<8x676xf32>
    %64 = arith.mulf %61, %63 : vector<8x676xf32>
    %65 = arith.addf %58, %64 : vector<8x676xf32>
    %c0_28 = arith.constant 0 : index
    %66 = memref.load %arg3[%c0_28] : memref<10xf32, #tpu.memory_space<smem>>
    %67 = vector.broadcast %66 : f32 to vector<8x676xf32>
    %68 = arith.addf %65, %67 : vector<8x676xf32>
    %cst = arith.constant 0.000000e+00 : f32
    %69 = vector.broadcast %cst : f32 to vector<8x676xf32>
    %70 = arith.maximumf %68, %69 : vector<8x676xf32>
    %c0_29 = arith.constant 0 : index
    %71 = arith.index_cast %3 : i32 to index
    %c0_30 = arith.constant 0 : index
    %72 = vector.load %arg11[%c0_29, %71, %c0_30] : memref<2x8x676xf32, #tpu.memory_space<vmem>>, vector<1x8x676xf32>
    %73 = vector.shape_cast %72 : vector<1x8x676xf32> to vector<8x676xf32>
    %74 = vector.shape_cast %70 : vector<8x676xf32> to vector<1x8x676xf32>
    tpu.vector_store %arg11[%c0_29, %71, %c0_30], %74 {strides = array<i32>} : memref<2x8x676xf32, #tpu.memory_space<vmem>>, vector<1x8x676xf32>,
    %c1_i32_31 = arith.constant 1 : i32
    %c0_32 = arith.constant 0 : index
    %c0_33 = arith.constant 0 : index
    %c0_34 = arith.constant 0 : index
    %75 = vector.load %arg11[%c0_32, %c0_33, %c0_34] : memref<2x8x676xf32, #tpu.memory_space<vmem>>, vector<1x8x676xf32>
    %76 = vector.shape_cast %75 : vector<1x8x676xf32> to vector<8x676xf32>
    %c0_35 = arith.constant 0 : index
    %c0_36 = arith.constant 0 : index
    %c0_37 = arith.constant 0 : index
    %77 = vector.load %arg4[%c0_35, %c0_36, %c0_37] : memref<10x676x128xf32, #tpu.memory_space<vmem>>, vector<1x676x128xf32>
    %78 = vector.shape_cast %77 : vector<1x676x128xf32> to vector<676x128xf32>
    %cst_38 = arith.constant dense<0.000000e+00> : vector<8x128xf32>
    %79 = tpu.matmul %76, %78, %cst_38 {dimension_numbers = #tpu.dot_dimension_numbers<[1], [0], [0], [1], [0, 0, 1, 1], [], []>} : vector<8x676xf32>, vector<676x128xf32>, vector<8x128xf32> -> vector<8x128xf32>
    %c0_i32_39 = arith.constant 0 : i32
    %c1_i32_40 = arith.constant 1 : i32
    %80 = arith.muli %c0_i32_39, %c1_i32_40 : i32
    %c0_i32_41 = arith.constant 0 : i32
    %81 = arith.addi %c0_i32_41, %80 : i32
    %c8_i32_42 = arith.constant 8 : i32
    %82 = arith.muli %81, %c8_i32_42 : i32
    %83 = tpu.assume_multiple %82, 8 : i32
    %c0_43 = arith.constant 0 : index
    %84 = arith.index_cast %83 : i32 to index
    %c0_44 = arith.constant 0 : index
    %85 = vector.load %arg1[%c0_43, %84, %c0_44] : memref<9x8x676xf32, #tpu.memory_space<vmem>>, vector<1x8x676xf32>
    %86 = vector.shape_cast %85 : vector<1x8x676xf32> to vector<8x676xf32>
    %c1_45 = arith.constant 1 : index
    %c0_46 = arith.constant 0 : index
    %87 = memref.load %arg2[%c1_45, %c0_46] : memref<10x9xf32, #tpu.memory_space<smem>>
    %88 = vector.broadcast %87 : f32 to vector<8x676xf32>
    %89 = arith.mulf %86, %88 : vector<8x676xf32>
    %c1_47 = arith.constant 1 : index
    %90 = arith.index_cast %83 : i32 to index
    %c0_48 = arith.constant 0 : index
    %91 = vector.load %arg1[%c1_47, %90, %c0_48] : memref<9x8x676xf32, #tpu.memory_space<vmem>>, vector<1x8x676xf32>
    %92 = vector.shape_cast %91 : vector<1x8x676xf32> to vector<8x676xf32>
    %c1_49 = arith.constant 1 : index
    %c1_50 = arith.constant 1 : index
    %93 = memref.load %arg2[%c1_49, %c1_50] : memref<10x9xf32, #tpu.memory_space<smem>>
    %94 = vector.broadcast %93 : f32 to vector<8x676xf32>
    %95 = arith.mulf %92, %94 : vector<8x676xf32>
    %96 = arith.addf %89, %95 : vector<8x676xf32>
    %c2_51 = arith.constant 2 : index
    %97 = arith.index_cast %83 : i32 to index
    %c0_52 = arith.constant 0 : index
    %98 = vector.load %arg1[%c2_51, %97, %c0_52] : memref<9x8x676xf32, #tpu.memory_space<vmem>>, vector<1x8x676xf32>
    %99 = vector.shape_cast %98 : vector<1x8x676xf32> to vector<8x676xf32>
    %c1_53 = arith.constant 1 : index
    %c2_54 = arith.constant 2 : index
    %100 = memref.load %arg2[%c1_53, %c2_54] : memref<10x9xf32, #tpu.memory_space<smem>>
    %101 = vector.broadcast %100 : f32 to vector<8x676xf32>
    %102 = arith.mulf %99, %101 : vector<8x676xf32>
    %103 = arith.addf %96, %102 : vector<8x676xf32>
    %c3_55 = arith.constant 3 : index
    %104 = arith.index_cast %83 : i32 to index
    %c0_56 = arith.constant 0 : index
    %105 = vector.load %arg1[%c3_55, %104, %c0_56] : memref<9x8x676xf32, #tpu.memory_space<vmem>>, vector<1x8x676xf32>
    %106 = vector.shape_cast %105 : vector<1x8x676xf32> to vector<8x676xf32>
    %c1_57 = arith.constant 1 : index
    %c3_58 = arith.constant 3 : index
    %107 = memref.load %arg2[%c1_57, %c3_58] : memref<10x9xf32, #tpu.memory_space<smem>>
    %108 = vector.broadcast %107 : f32 to vector<8x676xf32>
    %109 = arith.mulf %106, %108 : vector<8x676xf32>
    %110 = arith.addf %103, %109 : vector<8x676xf32>
    %c4_59 = arith.constant 4 : index
    %111 = arith.index_cast %83 : i32 to index
    %c0_60 = arith.constant 0 : index
    %112 = vector.load %arg1[%c4_59, %111, %c0_60] : memref<9x8x676xf32, #tpu.memory_space<vmem>>, vector<1x8x676xf32>
    %113 = vector.shape_cast %112 : vector<1x8x676xf32> to vector<8x676xf32>
    %c1_61 = arith.constant 1 : index
    %c4_62 = arith.constant 4 : index
    %114 = memref.load %arg2[%c1_61, %c4_62] : memref<10x9xf32, #tpu.memory_space<smem>>
    %115 = vector.broadcast %114 : f32 to vector<8x676xf32>
    %116 = arith.mulf %113, %115 : vector<8x676xf32>
    %117 = arith.addf %110, %116 : vector<8x676xf32>
    %c5_63 = arith.constant 5 : index
    %118 = arith.index_cast %83 : i32 to index
    %c0_64 = arith.constant 0 : index
    %119 = vector.load %arg1[%c5_63, %118, %c0_64] : memref<9x8x676xf32, #tpu.memory_space<vmem>>, vector<1x8x676xf32>
    %120 = vector.shape_cast %119 : vector<1x8x676xf32> to vector<8x676xf32>
    %c1_65 = arith.constant 1 : index
    %c5_66 = arith.constant 5 : index
    %121 = memref.load %arg2[%c1_65, %c5_66] : memref<10x9xf32, #tpu.memory_space<smem>>
    %122 = vector.broadcast %121 : f32 to vector<8x676xf32>
    %123 = arith.mulf %120, %122 : vector<8x676xf32>
    %124 = arith.addf %117, %123 : vector<8x676xf32>
    %c6_67 = arith.constant 6 : index
    %125 = arith.index_cast %83 : i32 to index
    %c0_68 = arith.constant 0 : index
    %126 = vector.load %arg1[%c6_67, %125, %c0_68] : memref<9x8x676xf32, #tpu.memory_space<vmem>>, vector<1x8x676xf32>
    %127 = vector.shape_cast %126 : vector<1x8x676xf32> to vector<8x676xf32>
    %c1_69 = arith.constant 1 : index
    %c6_70 = arith.constant 6 : index
    %128 = memref.load %arg2[%c1_69, %c6_70] : memref<10x9xf32, #tpu.memory_space<smem>>
    %129 = vector.broadcast %128 : f32 to vector<8x676xf32>
    %130 = arith.mulf %127, %129 : vector<8x676xf32>
    %131 = arith.addf %124, %130 : vector<8x676xf32>
    %c7_71 = arith.constant 7 : index
    %132 = arith.index_cast %83 : i32 to index
    %c0_72 = arith.constant 0 : index
    %133 = vector.load %arg1[%c7_71, %132, %c0_72] : memref<9x8x676xf32, #tpu.memory_space<vmem>>, vector<1x8x676xf32>
    %134 = vector.shape_cast %133 : vector<1x8x676xf32> to vector<8x676xf32>
    %c1_73 = arith.constant 1 : index
    %c7_74 = arith.constant 7 : index
    %135 = memref.load %arg2[%c1_73, %c7_74] : memref<10x9xf32, #tpu.memory_space<smem>>
    %136 = vector.broadcast %135 : f32 to vector<8x676xf32>
    %137 = arith.mulf %134, %136 : vector<8x676xf32>
    %138 = arith.addf %131, %137 : vector<8x676xf32>
    %c8_75 = arith.constant 8 : index
    %139 = arith.index_cast %83 : i32 to index
    %c0_76 = arith.constant 0 : index
    %140 = vector.load %arg1[%c8_75, %139, %c0_76] : memref<9x8x676xf32, #tpu.memory_space<vmem>>, vector<1x8x676xf32>
    %141 = vector.shape_cast %140 : vector<1x8x676xf32> to vector<8x676xf32>
    %c1_77 = arith.constant 1 : index
    %c8_78 = arith.constant 8 : index
    %142 = memref.load %arg2[%c1_77, %c8_78] : memref<10x9xf32, #tpu.memory_space<smem>>
    %143 = vector.broadcast %142 : f32 to vector<8x676xf32>
    %144 = arith.mulf %141, %143 : vector<8x676xf32>
    %145 = arith.addf %138, %144 : vector<8x676xf32>
    %c1_79 = arith.constant 1 : index
    %146 = memref.load %arg3[%c1_79] : memref<10xf32, #tpu.memory_space<smem>>
    %147 = vector.broadcast %146 : f32 to vector<8x676xf32>
    %148 = arith.addf %145, %147 : vector<8x676xf32>
    %cst_80 = arith.constant 0.000000e+00 : f32
    %149 = vector.broadcast %cst_80 : f32 to vector<8x676xf32>
    %150 = arith.maximumf %148, %149 : vector<8x676xf32>
    %c1_81 = arith.constant 1 : index
    %151 = arith.index_cast %83 : i32 to index
    %c0_82 = arith.constant 0 : index
    %152 = vector.load %arg11[%c1_81, %151, %c0_82] : memref<2x8x676xf32, #tpu.memory_space<vmem>>, vector<1x8x676xf32>
    %153 = vector.shape_cast %152 : vector<1x8x676xf32> to vector<8x676xf32>
    %154 = vector.shape_cast %150 : vector<8x676xf32> to vector<1x8x676xf32>
    tpu.vector_store %arg11[%c1_81, %151, %c0_82], %154 {strides = array<i32>} : memref<2x8x676xf32, #tpu.memory_space<vmem>>, vector<1x8x676xf32>,
    %c1_i32_83 = arith.constant 1 : i32
    %c1_84 = arith.constant 1 : index
    %c0_85 = arith.constant 0 : index
    %c0_86 = arith.constant 0 : index
    %155 = vector.load %arg11[%c1_84, %c0_85, %c0_86] : memref<2x8x676xf32, #tpu.memory_space<vmem>>, vector<1x8x676xf32>
    %156 = vector.shape_cast %155 : vector<1x8x676xf32> to vector<8x676xf32>
    %c1_87 = arith.constant 1 : index
    %c0_88 = arith.constant 0 : index
    %c0_89 = arith.constant 0 : index
    %157 = vector.load %arg4[%c1_87, %c0_88, %c0_89] : memref<10x676x128xf32, #tpu.memory_space<vmem>>, vector<1x676x128xf32>
    %158 = vector.shape_cast %157 : vector<1x676x128xf32> to vector<676x128xf32>
    %cst_90 = arith.constant dense<0.000000e+00> : vector<8x128xf32>
    %159 = tpu.matmul %156, %158, %cst_90 {dimension_numbers = #tpu.dot_dimension_numbers<[1], [0], [0], [1], [0, 0, 1, 1], [], []>} : vector<8x676xf32>, vector<676x128xf32>, vector<8x128xf32> -> vector<8x128xf32>
    %160 = arith.addf %79, %159 : vector<8x128xf32>
    %c0_i32_91 = arith.constant 0 : i32
    %c1_i32_92 = arith.constant 1 : i32
    %161 = arith.muli %c0_i32_91, %c1_i32_92 : i32
    %c0_i32_93 = arith.constant 0 : i32
    %162 = arith.addi %c0_i32_93, %161 : i32
    %c8_i32_94 = arith.constant 8 : i32
    %163 = arith.muli %162, %c8_i32_94 : i32
    %164 = tpu.assume_multiple %163, 8 : i32
    %c0_95 = arith.constant 0 : index
    %165 = arith.index_cast %164 : i32 to index
    %c0_96 = arith.constant 0 : index
    %166 = vector.load %arg1[%c0_95, %165, %c0_96] : memref<9x8x676xf32, #tpu.memory_space<vmem>>, vector<1x8x676xf32>
    %167 = vector.shape_cast %166 : vector<1x8x676xf32> to vector<8x676xf32>
    %c2_97 = arith.constant 2 : index
    %c0_98 = arith.constant 0 : index
    %168 = memref.load %arg2[%c2_97, %c0_98] : memref<10x9xf32, #tpu.memory_space<smem>>
    %169 = vector.broadcast %168 : f32 to vector<8x676xf32>
    %170 = arith.mulf %167, %169 : vector<8x676xf32>
    %c1_99 = arith.constant 1 : index
    %171 = arith.index_cast %164 : i32 to index
    %c0_100 = arith.constant 0 : index
    %172 = vector.load %arg1[%c1_99, %171, %c0_100] : memref<9x8x676xf32, #tpu.memory_space<vmem>>, vector<1x8x676xf32>
    %173 = vector.shape_cast %172 : vector<1x8x676xf32> to vector<8x676xf32>
    %c2_101 = arith.constant 2 : index
    %c1_102 = arith.constant 1 : index
    %174 = memref.load %arg2[%c2_101, %c1_102] : memref<10x9xf32, #tpu.memory_space<smem>>
    %175 = vector.broadcast %174 : f32 to vector<8x676xf32>
    %176 = arith.mulf %173, %175 : vector<8x676xf32>
    %177 = arith.addf %170, %176 : vector<8x676xf32>
    %c2_103 = arith.constant 2 : index
    %178 = arith.index_cast %164 : i32 to index
    %c0_104 = arith.constant 0 : index
    %179 = vector.load %arg1[%c2_103, %178, %c0_104] : memref<9x8x676xf32, #tpu.memory_space<vmem>>, vector<1x8x676xf32>
    %180 = vector.shape_cast %179 : vector<1x8x676xf32> to vector<8x676xf32>
    %c2_105 = arith.constant 2 : index
    %c2_106 = arith.constant 2 : index
    %181 = memref.load %arg2[%c2_105, %c2_106] : memref<10x9xf32, #tpu.memory_space<smem>>
    %182 = vector.broadcast %181 : f32 to vector<8x676xf32>
    %183 = arith.mulf %180, %182 : vector<8x676xf32>
    %184 = arith.addf %177, %183 : vector<8x676xf32>
    %c3_107 = arith.constant 3 : index
    %185 = arith.index_cast %164 : i32 to index
    %c0_108 = arith.constant 0 : index
    %186 = vector.load %arg1[%c3_107, %185, %c0_108] : memref<9x8x676xf32, #tpu.memory_space<vmem>>, vector<1x8x676xf32>
    %187 = vector.shape_cast %186 : vector<1x8x676xf32> to vector<8x676xf32>
    %c2_109 = arith.constant 2 : index
    %c3_110 = arith.constant 3 : index
    %188 = memref.load %arg2[%c2_109, %c3_110] : memref<10x9xf32, #tpu.memory_space<smem>>
    %189 = vector.broadcast %188 : f32 to vector<8x676xf32>
    %190 = arith.mulf %187, %189 : vector<8x676xf32>
    %191 = arith.addf %184, %190 : vector<8x676xf32>
    %c4_111 = arith.constant 4 : index
    %192 = arith.index_cast %164 : i32 to index
    %c0_112 = arith.constant 0 : index
    %193 = vector.load %arg1[%c4_111, %192, %c0_112] : memref<9x8x676xf32, #tpu.memory_space<vmem>>, vector<1x8x676xf32>
    %194 = vector.shape_cast %193 : vector<1x8x676xf32> to vector<8x676xf32>
    %c2_113 = arith.constant 2 : index
    %c4_114 = arith.constant 4 : index
    %195 = memref.load %arg2[%c2_113, %c4_114] : memref<10x9xf32, #tpu.memory_space<smem>>
    %196 = vector.broadcast %195 : f32 to vector<8x676xf32>
    %197 = arith.mulf %194, %196 : vector<8x676xf32>
    %198 = arith.addf %191, %197 : vector<8x676xf32>
    %c5_115 = arith.constant 5 : index
    %199 = arith.index_cast %164 : i32 to index
    %c0_116 = arith.constant 0 : index
    %200 = vector.load %arg1[%c5_115, %199, %c0_116] : memref<9x8x676xf32, #tpu.memory_space<vmem>>, vector<1x8x676xf32>
    %201 = vector.shape_cast %200 : vector<1x8x676xf32> to vector<8x676xf32>
    %c2_117 = arith.constant 2 : index
    %c5_118 = arith.constant 5 : index
    %202 = memref.load %arg2[%c2_117, %c5_118] : memref<10x9xf32, #tpu.memory_space<smem>>
    %203 = vector.broadcast %202 : f32 to vector<8x676xf32>
    %204 = arith.mulf %201, %203 : vector<8x676xf32>
    %205 = arith.addf %198, %204 : vector<8x676xf32>
    %c6_119 = arith.constant 6 : index
    %206 = arith.index_cast %164 : i32 to index
    %c0_120 = arith.constant 0 : index
    %207 = vector.load %arg1[%c6_119, %206, %c0_120] : memref<9x8x676xf32, #tpu.memory_space<vmem>>, vector<1x8x676xf32>
    %208 = vector.shape_cast %207 : vector<1x8x676xf32> to vector<8x676xf32>
    %c2_121 = arith.constant 2 : index
    %c6_122 = arith.constant 6 : index
    %209 = memref.load %arg2[%c2_121, %c6_122] : memref<10x9xf32, #tpu.memory_space<smem>>
    %210 = vector.broadcast %209 : f32 to vector<8x676xf32>
    %211 = arith.mulf %208, %210 : vector<8x676xf32>
    %212 = arith.addf %205, %211 : vector<8x676xf32>
    %c7_123 = arith.constant 7 : index
    %213 = arith.index_cast %164 : i32 to index
    %c0_124 = arith.constant 0 : index
    %214 = vector.load %arg1[%c7_123, %213, %c0_124] : memref<9x8x676xf32, #tpu.memory_space<vmem>>, vector<1x8x676xf32>
    %215 = vector.shape_cast %214 : vector<1x8x676xf32> to vector<8x676xf32>
    %c2_125 = arith.constant 2 : index
    %c7_126 = arith.constant 7 : index
    %216 = memref.load %arg2[%c2_125, %c7_126] : memref<10x9xf32, #tpu.memory_space<smem>>
    %217 = vector.broadcast %216 : f32 to vector<8x676xf32>
    %218 = arith.mulf %215, %217 : vector<8x676xf32>
    %219 = arith.addf %212, %218 : vector<8x676xf32>
    %c8_127 = arith.constant 8 : index
    %220 = arith.index_cast %164 : i32 to index
    %c0_128 = arith.constant 0 : index
    %221 = vector.load %arg1[%c8_127, %220, %c0_128] : memref<9x8x676xf32, #tpu.memory_space<vmem>>, vector<1x8x676xf32>
    %222 = vector.shape_cast %221 : vector<1x8x676xf32> to vector<8x676xf32>
    %c2_129 = arith.constant 2 : index
    %c8_130 = arith.constant 8 : index
    %223 = memref.load %arg2[%c2_129, %c8_130] : memref<10x9xf32, #tpu.memory_space<smem>>
    %224 = vector.broadcast %223 : f32 to vector<8x676xf32>
    %225 = arith.mulf %222, %224 : vector<8x676xf32>
    %226 = arith.addf %219, %225 : vector<8x676xf32>
    %c2_131 = arith.constant 2 : index
    %227 = memref.load %arg3[%c2_131] : memref<10xf32, #tpu.memory_space<smem>>
    %228 = vector.broadcast %227 : f32 to vector<8x676xf32>
    %229 = arith.addf %226, %228 : vector<8x676xf32>
    %cst_132 = arith.constant 0.000000e+00 : f32
    %230 = vector.broadcast %cst_132 : f32 to vector<8x676xf32>
    %231 = arith.maximumf %229, %230 : vector<8x676xf32>
    %c0_133 = arith.constant 0 : index
    %232 = arith.index_cast %164 : i32 to index
    %c0_134 = arith.constant 0 : index
    %233 = vector.load %arg11[%c0_133, %232, %c0_134] : memref<2x8x676xf32, #tpu.memory_space<vmem>>, vector<1x8x676xf32>
    %234 = vector.shape_cast %233 : vector<1x8x676xf32> to vector<8x676xf32>
    %235 = vector.shape_cast %231 : vector<8x676xf32> to vector<1x8x676xf32>
    tpu.vector_store %arg11[%c0_133, %232, %c0_134], %235 {strides = array<i32>} : memref<2x8x676xf32, #tpu.memory_space<vmem>>, vector<1x8x676xf32>,
    %c1_i32_135 = arith.constant 1 : i32
    %c0_136 = arith.constant 0 : index
    %c0_137 = arith.constant 0 : index
    %c0_138 = arith.constant 0 : index
    %236 = vector.load %arg11[%c0_136, %c0_137, %c0_138] : memref<2x8x676xf32, #tpu.memory_space<vmem>>, vector<1x8x676xf32>
    %237 = vector.shape_cast %236 : vector<1x8x676xf32> to vector<8x676xf32>
    %c2_139 = arith.constant 2 : index
    %c0_140 = arith.constant 0 : index
    %c0_141 = arith.constant 0 : index
    %238 = vector.load %arg4[%c2_139, %c0_140, %c0_141] : memref<10x676x128xf32, #tpu.memory_space<vmem>>, vector<1x676x128xf32>
    %239 = vector.shape_cast %238 : vector<1x676x128xf32> to vector<676x128xf32>
    %cst_142 = arith.constant dense<0.000000e+00> : vector<8x128xf32>
    %240 = tpu.matmul %237, %239, %cst_142 {dimension_numbers = #tpu.dot_dimension_numbers<[1], [0], [0], [1], [0, 0, 1, 1], [], []>} : vector<8x676xf32>, vector<676x128xf32>, vector<8x128xf32> -> vector<8x128xf32>
    %241 = arith.addf %160, %240 : vector<8x128xf32>
    %c0_i32_143 = arith.constant 0 : i32
    %c1_i32_144 = arith.constant 1 : i32
    %242 = arith.muli %c0_i32_143, %c1_i32_144 : i32
    %c0_i32_145 = arith.constant 0 : i32
    %243 = arith.addi %c0_i32_145, %242 : i32
    %c8_i32_146 = arith.constant 8 : i32
    %244 = arith.muli %243, %c8_i32_146 : i32
    %245 = tpu.assume_multiple %244, 8 : i32
    %c0_147 = arith.constant 0 : index
    %246 = arith.index_cast %245 : i32 to index
    %c0_148 = arith.constant 0 : index
    %247 = vector.load %arg1[%c0_147, %246, %c0_148] : memref<9x8x676xf32, #tpu.memory_space<vmem>>, vector<1x8x676xf32>
    %248 = vector.shape_cast %247 : vector<1x8x676xf32> to vector<8x676xf32>
    %c3_149 = arith.constant 3 : index
    %c0_150 = arith.constant 0 : index
    %249 = memref.load %arg2[%c3_149, %c0_150] : memref<10x9xf32, #tpu.memory_space<smem>>
    %250 = vector.broadcast %249 : f32 to vector<8x676xf32>
    %251 = arith.mulf %248, %250 : vector<8x676xf32>
    %c1_151 = arith.constant 1 : index
    %252 = arith.index_cast %245 : i32 to index
    %c0_152 = arith.constant 0 : index
    %253 = vector.load %arg1[%c1_151, %252, %c0_152] : memref<9x8x676xf32, #tpu.memory_space<vmem>>, vector<1x8x676xf32>
    %254 = vector.shape_cast %253 : vector<1x8x676xf32> to vector<8x676xf32>
    %c3_153 = arith.constant 3 : index
    %c1_154 = arith.constant 1 : index
    %255 = memref.load %arg2[%c3_153, %c1_154] : memref<10x9xf32, #tpu.memory_space<smem>>
    %256 = vector.broadcast %255 : f32 to vector<8x676xf32>
    %257 = arith.mulf %254, %256 : vector<8x676xf32>
    %258 = arith.addf %251, %257 : vector<8x676xf32>
    %c2_155 = arith.constant 2 : index
    %259 = arith.index_cast %245 : i32 to index
    %c0_156 = arith.constant 0 : index
    %260 = vector.load %arg1[%c2_155, %259, %c0_156] : memref<9x8x676xf32, #tpu.memory_space<vmem>>, vector<1x8x676xf32>
    %261 = vector.shape_cast %260 : vector<1x8x676xf32> to vector<8x676xf32>
    %c3_157 = arith.constant 3 : index
    %c2_158 = arith.constant 2 : index
    %262 = memref.load %arg2[%c3_157, %c2_158] : memref<10x9xf32, #tpu.memory_space<smem>>
    %263 = vector.broadcast %262 : f32 to vector<8x676xf32>
    %264 = arith.mulf %261, %263 : vector<8x676xf32>
    %265 = arith.addf %258, %264 : vector<8x676xf32>
    %c3_159 = arith.constant 3 : index
    %266 = arith.index_cast %245 : i32 to index
    %c0_160 = arith.constant 0 : index
    %267 = vector.load %arg1[%c3_159, %266, %c0_160] : memref<9x8x676xf32, #tpu.memory_space<vmem>>, vector<1x8x676xf32>
    %268 = vector.shape_cast %267 : vector<1x8x676xf32> to vector<8x676xf32>
    %c3_161 = arith.constant 3 : index
    %c3_162 = arith.constant 3 : index
    %269 = memref.load %arg2[%c3_161, %c3_162] : memref<10x9xf32, #tpu.memory_space<smem>>
    %270 = vector.broadcast %269 : f32 to vector<8x676xf32>
    %271 = arith.mulf %268, %270 : vector<8x676xf32>
    %272 = arith.addf %265, %271 : vector<8x676xf32>
    %c4_163 = arith.constant 4 : index
    %273 = arith.index_cast %245 : i32 to index
    %c0_164 = arith.constant 0 : index
    %274 = vector.load %arg1[%c4_163, %273, %c0_164] : memref<9x8x676xf32, #tpu.memory_space<vmem>>, vector<1x8x676xf32>
    %275 = vector.shape_cast %274 : vector<1x8x676xf32> to vector<8x676xf32>
    %c3_165 = arith.constant 3 : index
    %c4_166 = arith.constant 4 : index
    %276 = memref.load %arg2[%c3_165, %c4_166] : memref<10x9xf32, #tpu.memory_space<smem>>
    %277 = vector.broadcast %276 : f32 to vector<8x676xf32>
    %278 = arith.mulf %275, %277 : vector<8x676xf32>
    %279 = arith.addf %272, %278 : vector<8x676xf32>
    %c5_167 = arith.constant 5 : index
    %280 = arith.index_cast %245 : i32 to index
    %c0_168 = arith.constant 0 : index
    %281 = vector.load %arg1[%c5_167, %280, %c0_168] : memref<9x8x676xf32, #tpu.memory_space<vmem>>, vector<1x8x676xf32>
    %282 = vector.shape_cast %281 : vector<1x8x676xf32> to vector<8x676xf32>
    %c3_169 = arith.constant 3 : index
    %c5_170 = arith.constant 5 : index
    %283 = memref.load %arg2[%c3_169, %c5_170] : memref<10x9xf32, #tpu.memory_space<smem>>
    %284 = vector.broadcast %283 : f32 to vector<8x676xf32>
    %285 = arith.mulf %282, %284 : vector<8x676xf32>
    %286 = arith.addf %279, %285 : vector<8x676xf32>
    %c6_171 = arith.constant 6 : index
    %287 = arith.index_cast %245 : i32 to index
    %c0_172 = arith.constant 0 : index
    %288 = vector.load %arg1[%c6_171, %287, %c0_172] : memref<9x8x676xf32, #tpu.memory_space<vmem>>, vector<1x8x676xf32>
    %289 = vector.shape_cast %288 : vector<1x8x676xf32> to vector<8x676xf32>
    %c3_173 = arith.constant 3 : index
    %c6_174 = arith.constant 6 : index
    %290 = memref.load %arg2[%c3_173, %c6_174] : memref<10x9xf32, #tpu.memory_space<smem>>
    %291 = vector.broadcast %290 : f32 to vector<8x676xf32>
    %292 = arith.mulf %289, %291 : vector<8x676xf32>
    %293 = arith.addf %286, %292 : vector<8x676xf32>
    %c7_175 = arith.constant 7 : index
    %294 = arith.index_cast %245 : i32 to index
    %c0_176 = arith.constant 0 : index
    %295 = vector.load %arg1[%c7_175, %294, %c0_176] : memref<9x8x676xf32, #tpu.memory_space<vmem>>, vector<1x8x676xf32>
    %296 = vector.shape_cast %295 : vector<1x8x676xf32> to vector<8x676xf32>
    %c3_177 = arith.constant 3 : index
    %c7_178 = arith.constant 7 : index
    %297 = memref.load %arg2[%c3_177, %c7_178] : memref<10x9xf32, #tpu.memory_space<smem>>
    %298 = vector.broadcast %297 : f32 to vector<8x676xf32>
    %299 = arith.mulf %296, %298 : vector<8x676xf32>
    %300 = arith.addf %293, %299 : vector<8x676xf32>
    %c8_179 = arith.constant 8 : index
    %301 = arith.index_cast %245 : i32 to index
    %c0_180 = arith.constant 0 : index
    %302 = vector.load %arg1[%c8_179, %301, %c0_180] : memref<9x8x676xf32, #tpu.memory_space<vmem>>, vector<1x8x676xf32>
    %303 = vector.shape_cast %302 : vector<1x8x676xf32> to vector<8x676xf32>
    %c3_181 = arith.constant 3 : index
    %c8_182 = arith.constant 8 : index
    %304 = memref.load %arg2[%c3_181, %c8_182] : memref<10x9xf32, #tpu.memory_space<smem>>
    %305 = vector.broadcast %304 : f32 to vector<8x676xf32>
    %306 = arith.mulf %303, %305 : vector<8x676xf32>
    %307 = arith.addf %300, %306 : vector<8x676xf32>
    %c3_183 = arith.constant 3 : index
    %308 = memref.load %arg3[%c3_183] : memref<10xf32, #tpu.memory_space<smem>>
    %309 = vector.broadcast %308 : f32 to vector<8x676xf32>
    %310 = arith.addf %307, %309 : vector<8x676xf32>
    %cst_184 = arith.constant 0.000000e+00 : f32
    %311 = vector.broadcast %cst_184 : f32 to vector<8x676xf32>
    %312 = arith.maximumf %310, %311 : vector<8x676xf32>
    %c1_185 = arith.constant 1 : index
    %313 = arith.index_cast %245 : i32 to index
    %c0_186 = arith.constant 0 : index
    %314 = vector.load %arg11[%c1_185, %313, %c0_186] : memref<2x8x676xf32, #tpu.memory_space<vmem>>, vector<1x8x676xf32>
    %315 = vector.shape_cast %314 : vector<1x8x676xf32> to vector<8x676xf32>
    %316 = vector.shape_cast %312 : vector<8x676xf32> to vector<1x8x676xf32>
    tpu.vector_store %arg11[%c1_185, %313, %c0_186], %316 {strides = array<i32>} : memref<2x8x676xf32, #tpu.memory_space<vmem>>, vector<1x8x676xf32>,
    %c1_i32_187 = arith.constant 1 : i32
    %c1_188 = arith.constant 1 : index
    %c0_189 = arith.constant 0 : index
    %c0_190 = arith.constant 0 : index
    %317 = vector.load %arg11[%c1_188, %c0_189, %c0_190] : memref<2x8x676xf32, #tpu.memory_space<vmem>>, vector<1x8x676xf32>
    %318 = vector.shape_cast %317 : vector<1x8x676xf32> to vector<8x676xf32>
    %c3_191 = arith.constant 3 : index
    %c0_192 = arith.constant 0 : index
    %c0_193 = arith.constant 0 : index
    %319 = vector.load %arg4[%c3_191, %c0_192, %c0_193] : memref<10x676x128xf32, #tpu.memory_space<vmem>>, vector<1x676x128xf32>
    %320 = vector.shape_cast %319 : vector<1x676x128xf32> to vector<676x128xf32>
    %cst_194 = arith.constant dense<0.000000e+00> : vector<8x128xf32>
    %321 = tpu.matmul %318, %320, %cst_194 {dimension_numbers = #tpu.dot_dimension_numbers<[1], [0], [0], [1], [0, 0, 1, 1], [], []>} : vector<8x676xf32>, vector<676x128xf32>, vector<8x128xf32> -> vector<8x128xf32>
    %322 = arith.addf %241, %321 : vector<8x128xf32>
    %c0_i32_195 = arith.constant 0 : i32
    %c1_i32_196 = arith.constant 1 : i32
    %323 = arith.muli %c0_i32_195, %c1_i32_196 : i32
    %c0_i32_197 = arith.constant 0 : i32
    %324 = arith.addi %c0_i32_197, %323 : i32
    %c8_i32_198 = arith.constant 8 : i32
    %325 = arith.muli %324, %c8_i32_198 : i32
    %326 = tpu.assume_multiple %325, 8 : i32
    %c0_199 = arith.constant 0 : index
    %327 = arith.index_cast %326 : i32 to index
    %c0_200 = arith.constant 0 : index
    %328 = vector.load %arg1[%c0_199, %327, %c0_200] : memref<9x8x676xf32, #tpu.memory_space<vmem>>, vector<1x8x676xf32>
    %329 = vector.shape_cast %328 : vector<1x8x676xf32> to vector<8x676xf32>
    %c4_201 = arith.constant 4 : index
    %c0_202 = arith.constant 0 : index
    %330 = memref.load %arg2[%c4_201, %c0_202] : memref<10x9xf32, #tpu.memory_space<smem>>
    %331 = vector.broadcast %330 : f32 to vector<8x676xf32>
    %332 = arith.mulf %329, %331 : vector<8x676xf32>
    %c1_203 = arith.constant 1 : index
    %333 = arith.index_cast %326 : i32 to index
    %c0_204 = arith.constant 0 : index
    %334 = vector.load %arg1[%c1_203, %333, %c0_204] : memref<9x8x676xf32, #tpu.memory_space<vmem>>, vector<1x8x676xf32>
    %335 = vector.shape_cast %334 : vector<1x8x676xf32> to vector<8x676xf32>
    %c4_205 = arith.constant 4 : index
    %c1_206 = arith.constant 1 : index
    %336 = memref.load %arg2[%c4_205, %c1_206] : memref<10x9xf32, #tpu.memory_space<smem>>
    %337 = vector.broadcast %336 : f32 to vector<8x676xf32>
    %338 = arith.mulf %335, %337 : vector<8x676xf32>
    %339 = arith.addf %332, %338 : vector<8x676xf32>
    %c2_207 = arith.constant 2 : index
    %340 = arith.index_cast %326 : i32 to index
    %c0_208 = arith.constant 0 : index
    %341 = vector.load %arg1[%c2_207, %340, %c0_208] : memref<9x8x676xf32, #tpu.memory_space<vmem>>, vector<1x8x676xf32>
    %342 = vector.shape_cast %341 : vector<1x8x676xf32> to vector<8x676xf32>
    %c4_209 = arith.constant 4 : index
    %c2_210 = arith.constant 2 : index
    %343 = memref.load %arg2[%c4_209, %c2_210] : memref<10x9xf32, #tpu.memory_space<smem>>
    %344 = vector.broadcast %343 : f32 to vector<8x676xf32>
    %345 = arith.mulf %342, %344 : vector<8x676xf32>
    %346 = arith.addf %339, %345 : vector<8x676xf32>
    %c3_211 = arith.constant 3 : index
    %347 = arith.index_cast %326 : i32 to index
    %c0_212 = arith.constant 0 : index
    %348 = vector.load %arg1[%c3_211, %347, %c0_212] : memref<9x8x676xf32, #tpu.memory_space<vmem>>, vector<1x8x676xf32>
    %349 = vector.shape_cast %348 : vector<1x8x676xf32> to vector<8x676xf32>
    %c4_213 = arith.constant 4 : index
    %c3_214 = arith.constant 3 : index
    %350 = memref.load %arg2[%c4_213, %c3_214] : memref<10x9xf32, #tpu.memory_space<smem>>
    %351 = vector.broadcast %350 : f32 to vector<8x676xf32>
    %352 = arith.mulf %349, %351 : vector<8x676xf32>
    %353 = arith.addf %346, %352 : vector<8x676xf32>
    %c4_215 = arith.constant 4 : index
    %354 = arith.index_cast %326 : i32 to index
    %c0_216 = arith.constant 0 : index
    %355 = vector.load %arg1[%c4_215, %354, %c0_216] : memref<9x8x676xf32, #tpu.memory_space<vmem>>, vector<1x8x676xf32>
    %356 = vector.shape_cast %355 : vector<1x8x676xf32> to vector<8x676xf32>
    %c4_217 = arith.constant 4 : index
    %c4_218 = arith.constant 4 : index
    %357 = memref.load %arg2[%c4_217, %c4_218] : memref<10x9xf32, #tpu.memory_space<smem>>
    %358 = vector.broadcast %357 : f32 to vector<8x676xf32>
    %359 = arith.mulf %356, %358 : vector<8x676xf32>
    %360 = arith.addf %353, %359 : vector<8x676xf32>
    %c5_219 = arith.constant 5 : index
    %361 = arith.index_cast %326 : i32 to index
    %c0_220 = arith.constant 0 : index
    %362 = vector.load %arg1[%c5_219, %361, %c0_220] : memref<9x8x676xf32, #tpu.memory_space<vmem>>, vector<1x8x676xf32>
    %363 = vector.shape_cast %362 : vector<1x8x676xf32> to vector<8x676xf32>
    %c4_221 = arith.constant 4 : index
    %c5_222 = arith.constant 5 : index
    %364 = memref.load %arg2[%c4_221, %c5_222] : memref<10x9xf32, #tpu.memory_space<smem>>
    %365 = vector.broadcast %364 : f32 to vector<8x676xf32>
    %366 = arith.mulf %363, %365 : vector<8x676xf32>
    %367 = arith.addf %360, %366 : vector<8x676xf32>
    %c6_223 = arith.constant 6 : index
    %368 = arith.index_cast %326 : i32 to index
    %c0_224 = arith.constant 0 : index
    %369 = vector.load %arg1[%c6_223, %368, %c0_224] : memref<9x8x676xf32, #tpu.memory_space<vmem>>, vector<1x8x676xf32>
    %370 = vector.shape_cast %369 : vector<1x8x676xf32> to vector<8x676xf32>
    %c4_225 = arith.constant 4 : index
    %c6_226 = arith.constant 6 : index
    %371 = memref.load %arg2[%c4_225, %c6_226] : memref<10x9xf32, #tpu.memory_space<smem>>
    %372 = vector.broadcast %371 : f32 to vector<8x676xf32>
    %373 = arith.mulf %370, %372 : vector<8x676xf32>
    %374 = arith.addf %367, %373 : vector<8x676xf32>
    %c7_227 = arith.constant 7 : index
    %375 = arith.index_cast %326 : i32 to index
    %c0_228 = arith.constant 0 : index
    %376 = vector.load %arg1[%c7_227, %375, %c0_228] : memref<9x8x676xf32, #tpu.memory_space<vmem>>, vector<1x8x676xf32>
    %377 = vector.shape_cast %376 : vector<1x8x676xf32> to vector<8x676xf32>
    %c4_229 = arith.constant 4 : index
    %c7_230 = arith.constant 7 : index
    %378 = memref.load %arg2[%c4_229, %c7_230] : memref<10x9xf32, #tpu.memory_space<smem>>
    %379 = vector.broadcast %378 : f32 to vector<8x676xf32>
    %380 = arith.mulf %377, %379 : vector<8x676xf32>
    %381 = arith.addf %374, %380 : vector<8x676xf32>
    %c8_231 = arith.constant 8 : index
    %382 = arith.index_cast %326 : i32 to index
    %c0_232 = arith.constant 0 : index
    %383 = vector.load %arg1[%c8_231, %382, %c0_232] : memref<9x8x676xf32, #tpu.memory_space<vmem>>, vector<1x8x676xf32>
    %384 = vector.shape_cast %383 : vector<1x8x676xf32> to vector<8x676xf32>
    %c4_233 = arith.constant 4 : index
    %c8_234 = arith.constant 8 : index
    %385 = memref.load %arg2[%c4_233, %c8_234] : memref<10x9xf32, #tpu.memory_space<smem>>
    %386 = vector.broadcast %385 : f32 to vector<8x676xf32>
    %387 = arith.mulf %384, %386 : vector<8x676xf32>
    %388 = arith.addf %381, %387 : vector<8x676xf32>
    %c4_235 = arith.constant 4 : index
    %389 = memref.load %arg3[%c4_235] : memref<10xf32, #tpu.memory_space<smem>>
    %390 = vector.broadcast %389 : f32 to vector<8x676xf32>
    %391 = arith.addf %388, %390 : vector<8x676xf32>
    %cst_236 = arith.constant 0.000000e+00 : f32
    %392 = vector.broadcast %cst_236 : f32 to vector<8x676xf32>
    %393 = arith.maximumf %391, %392 : vector<8x676xf32>
    %c0_237 = arith.constant 0 : index
    %394 = arith.index_cast %326 : i32 to index
    %c0_238 = arith.constant 0 : index
    %395 = vector.load %arg11[%c0_237, %394, %c0_238] : memref<2x8x676xf32, #tpu.memory_space<vmem>>, vector<1x8x676xf32>
    %396 = vector.shape_cast %395 : vector<1x8x676xf32> to vector<8x676xf32>
    %397 = vector.shape_cast %393 : vector<8x676xf32> to vector<1x8x676xf32>
    tpu.vector_store %arg11[%c0_237, %394, %c0_238], %397 {strides = array<i32>} : memref<2x8x676xf32, #tpu.memory_space<vmem>>, vector<1x8x676xf32>,
    %c1_i32_239 = arith.constant 1 : i32
    %c0_240 = arith.constant 0 : index
    %c0_241 = arith.constant 0 : index
    %c0_242 = arith.constant 0 : index
    %398 = vector.load %arg11[%c0_240, %c0_241, %c0_242] : memref<2x8x676xf32, #tpu.memory_space<vmem>>, vector<1x8x676xf32>
    %399 = vector.shape_cast %398 : vector<1x8x676xf32> to vector<8x676xf32>
    %c4_243 = arith.constant 4 : index
    %c0_244 = arith.constant 0 : index
    %c0_245 = arith.constant 0 : index
    %400 = vector.load %arg4[%c4_243, %c0_244, %c0_245] : memref<10x676x128xf32, #tpu.memory_space<vmem>>, vector<1x676x128xf32>
    %401 = vector.shape_cast %400 : vector<1x676x128xf32> to vector<676x128xf32>
    %cst_246 = arith.constant dense<0.000000e+00> : vector<8x128xf32>
    %402 = tpu.matmul %399, %401, %cst_246 {dimension_numbers = #tpu.dot_dimension_numbers<[1], [0], [0], [1], [0, 0, 1, 1], [], []>} : vector<8x676xf32>, vector<676x128xf32>, vector<8x128xf32> -> vector<8x128xf32>
    %403 = arith.addf %322, %402 : vector<8x128xf32>
    %c0_i32_247 = arith.constant 0 : i32
    %c1_i32_248 = arith.constant 1 : i32
    %404 = arith.muli %c0_i32_247, %c1_i32_248 : i32
    %c0_i32_249 = arith.constant 0 : i32
    %405 = arith.addi %c0_i32_249, %404 : i32
    %c8_i32_250 = arith.constant 8 : i32
    %406 = arith.muli %405, %c8_i32_250 : i32
    %407 = tpu.assume_multiple %406, 8 : i32
    %c0_251 = arith.constant 0 : index
    %408 = arith.index_cast %407 : i32 to index
    %c0_252 = arith.constant 0 : index
    %409 = vector.load %arg1[%c0_251, %408, %c0_252] : memref<9x8x676xf32, #tpu.memory_space<vmem>>, vector<1x8x676xf32>
    %410 = vector.shape_cast %409 : vector<1x8x676xf32> to vector<8x676xf32>
    %c5_253 = arith.constant 5 : index
    %c0_254 = arith.constant 0 : index
    %411 = memref.load %arg2[%c5_253, %c0_254] : memref<10x9xf32, #tpu.memory_space<smem>>
    %412 = vector.broadcast %411 : f32 to vector<8x676xf32>
    %413 = arith.mulf %410, %412 : vector<8x676xf32>
    %c1_255 = arith.constant 1 : index
    %414 = arith.index_cast %407 : i32 to index
    %c0_256 = arith.constant 0 : index
    %415 = vector.load %arg1[%c1_255, %414, %c0_256] : memref<9x8x676xf32, #tpu.memory_space<vmem>>, vector<1x8x676xf32>
    %416 = vector.shape_cast %415 : vector<1x8x676xf32> to vector<8x676xf32>
    %c5_257 = arith.constant 5 : index
    %c1_258 = arith.constant 1 : index
    %417 = memref.load %arg2[%c5_257, %c1_258] : memref<10x9xf32, #tpu.memory_space<smem>>
    %418 = vector.broadcast %417 : f32 to vector<8x676xf32>
    %419 = arith.mulf %416, %418 : vector<8x676xf32>
    %420 = arith.addf %413, %419 : vector<8x676xf32>
    %c2_259 = arith.constant 2 : index
    %421 = arith.index_cast %407 : i32 to index
    %c0_260 = arith.constant 0 : index
    %422 = vector.load %arg1[%c2_259, %421, %c0_260] : memref<9x8x676xf32, #tpu.memory_space<vmem>>, vector<1x8x676xf32>
    %423 = vector.shape_cast %422 : vector<1x8x676xf32> to vector<8x676xf32>
    %c5_261 = arith.constant 5 : index
    %c2_262 = arith.constant 2 : index
    %424 = memref.load %arg2[%c5_261, %c2_262] : memref<10x9xf32, #tpu.memory_space<smem>>
    %425 = vector.broadcast %424 : f32 to vector<8x676xf32>
    %426 = arith.mulf %423, %425 : vector<8x676xf32>
    %427 = arith.addf %420, %426 : vector<8x676xf32>
    %c3_263 = arith.constant 3 : index
    %428 = arith.index_cast %407 : i32 to index
    %c0_264 = arith.constant 0 : index
    %429 = vector.load %arg1[%c3_263, %428, %c0_264] : memref<9x8x676xf32, #tpu.memory_space<vmem>>, vector<1x8x676xf32>
    %430 = vector.shape_cast %429 : vector<1x8x676xf32> to vector<8x676xf32>
    %c5_265 = arith.constant 5 : index
    %c3_266 = arith.constant 3 : index
    %431 = memref.load %arg2[%c5_265, %c3_266] : memref<10x9xf32, #tpu.memory_space<smem>>
    %432 = vector.broadcast %431 : f32 to vector<8x676xf32>
    %433 = arith.mulf %430, %432 : vector<8x676xf32>
    %434 = arith.addf %427, %433 : vector<8x676xf32>
    %c4_267 = arith.constant 4 : index
    %435 = arith.index_cast %407 : i32 to index
    %c0_268 = arith.constant 0 : index
    %436 = vector.load %arg1[%c4_267, %435, %c0_268] : memref<9x8x676xf32, #tpu.memory_space<vmem>>, vector<1x8x676xf32>
    %437 = vector.shape_cast %436 : vector<1x8x676xf32> to vector<8x676xf32>
    %c5_269 = arith.constant 5 : index
    %c4_270 = arith.constant 4 : index
    %438 = memref.load %arg2[%c5_269, %c4_270] : memref<10x9xf32, #tpu.memory_space<smem>>
    %439 = vector.broadcast %438 : f32 to vector<8x676xf32>
    %440 = arith.mulf %437, %439 : vector<8x676xf32>
    %441 = arith.addf %434, %440 : vector<8x676xf32>
    %c5_271 = arith.constant 5 : index
    %442 = arith.index_cast %407 : i32 to index
    %c0_272 = arith.constant 0 : index
    %443 = vector.load %arg1[%c5_271, %442, %c0_272] : memref<9x8x676xf32, #tpu.memory_space<vmem>>, vector<1x8x676xf32>
    %444 = vector.shape_cast %443 : vector<1x8x676xf32> to vector<8x676xf32>
    %c5_273 = arith.constant 5 : index
    %c5_274 = arith.constant 5 : index
    %445 = memref.load %arg2[%c5_273, %c5_274] : memref<10x9xf32, #tpu.memory_space<smem>>
    %446 = vector.broadcast %445 : f32 to vector<8x676xf32>
    %447 = arith.mulf %444, %446 : vector<8x676xf32>
    %448 = arith.addf %441, %447 : vector<8x676xf32>
    %c6_275 = arith.constant 6 : index
    %449 = arith.index_cast %407 : i32 to index
    %c0_276 = arith.constant 0 : index
    %450 = vector.load %arg1[%c6_275, %449, %c0_276] : memref<9x8x676xf32, #tpu.memory_space<vmem>>, vector<1x8x676xf32>
    %451 = vector.shape_cast %450 : vector<1x8x676xf32> to vector<8x676xf32>
    %c5_277 = arith.constant 5 : index
    %c6_278 = arith.constant 6 : index
    %452 = memref.load %arg2[%c5_277, %c6_278] : memref<10x9xf32, #tpu.memory_space<smem>>
    %453 = vector.broadcast %452 : f32 to vector<8x676xf32>
    %454 = arith.mulf %451, %453 : vector<8x676xf32>
    %455 = arith.addf %448, %454 : vector<8x676xf32>
    %c7_279 = arith.constant 7 : index
    %456 = arith.index_cast %407 : i32 to index
    %c0_280 = arith.constant 0 : index
    %457 = vector.load %arg1[%c7_279, %456, %c0_280] : memref<9x8x676xf32, #tpu.memory_space<vmem>>, vector<1x8x676xf32>
    %458 = vector.shape_cast %457 : vector<1x8x676xf32> to vector<8x676xf32>
    %c5_281 = arith.constant 5 : index
    %c7_282 = arith.constant 7 : index
    %459 = memref.load %arg2[%c5_281, %c7_282] : memref<10x9xf32, #tpu.memory_space<smem>>
    %460 = vector.broadcast %459 : f32 to vector<8x676xf32>
    %461 = arith.mulf %458, %460 : vector<8x676xf32>
    %462 = arith.addf %455, %461 : vector<8x676xf32>
    %c8_283 = arith.constant 8 : index
    %463 = arith.index_cast %407 : i32 to index
    %c0_284 = arith.constant 0 : index
    %464 = vector.load %arg1[%c8_283, %463, %c0_284] : memref<9x8x676xf32, #tpu.memory_space<vmem>>, vector<1x8x676xf32>
    %465 = vector.shape_cast %464 : vector<1x8x676xf32> to vector<8x676xf32>
    %c5_285 = arith.constant 5 : index
    %c8_286 = arith.constant 8 : index
    %466 = memref.load %arg2[%c5_285, %c8_286] : memref<10x9xf32, #tpu.memory_space<smem>>
    %467 = vector.broadcast %466 : f32 to vector<8x676xf32>
    %468 = arith.mulf %465, %467 : vector<8x676xf32>
    %469 = arith.addf %462, %468 : vector<8x676xf32>
    %c5_287 = arith.constant 5 : index
    %470 = memref.load %arg3[%c5_287] : memref<10xf32, #tpu.memory_space<smem>>
    %471 = vector.broadcast %470 : f32 to vector<8x676xf32>
    %472 = arith.addf %469, %471 : vector<8x676xf32>
    %cst_288 = arith.constant 0.000000e+00 : f32
    %473 = vector.broadcast %cst_288 : f32 to vector<8x676xf32>
    %474 = arith.maximumf %472, %473 : vector<8x676xf32>
    %c1_289 = arith.constant 1 : index
    %475 = arith.index_cast %407 : i32 to index
    %c0_290 = arith.constant 0 : index
    %476 = vector.load %arg11[%c1_289, %475, %c0_290] : memref<2x8x676xf32, #tpu.memory_space<vmem>>, vector<1x8x676xf32>
    %477 = vector.shape_cast %476 : vector<1x8x676xf32> to vector<8x676xf32>
    %478 = vector.shape_cast %474 : vector<8x676xf32> to vector<1x8x676xf32>
    tpu.vector_store %arg11[%c1_289, %475, %c0_290], %478 {strides = array<i32>} : memref<2x8x676xf32, #tpu.memory_space<vmem>>, vector<1x8x676xf32>,
    %c1_i32_291 = arith.constant 1 : i32
    %c1_292 = arith.constant 1 : index
    %c0_293 = arith.constant 0 : index
    %c0_294 = arith.constant 0 : index
    %479 = vector.load %arg11[%c1_292, %c0_293, %c0_294] : memref<2x8x676xf32, #tpu.memory_space<vmem>>, vector<1x8x676xf32>
    %480 = vector.shape_cast %479 : vector<1x8x676xf32> to vector<8x676xf32>
    %c5_295 = arith.constant 5 : index
    %c0_296 = arith.constant 0 : index
    %c0_297 = arith.constant 0 : index
    %481 = vector.load %arg4[%c5_295, %c0_296, %c0_297] : memref<10x676x128xf32, #tpu.memory_space<vmem>>, vector<1x676x128xf32>
    %482 = vector.shape_cast %481 : vector<1x676x128xf32> to vector<676x128xf32>
    %cst_298 = arith.constant dense<0.000000e+00> : vector<8x128xf32>
    %483 = tpu.matmul %480, %482, %cst_298 {dimension_numbers = #tpu.dot_dimension_numbers<[1], [0], [0], [1], [0, 0, 1, 1], [], []>} : vector<8x676xf32>, vector<676x128xf32>, vector<8x128xf32> -> vector<8x128xf32>
    %484 = arith.addf %403, %483 : vector<8x128xf32>
    %c0_i32_299 = arith.constant 0 : i32
    %c1_i32_300 = arith.constant 1 : i32
    %485 = arith.muli %c0_i32_299, %c1_i32_300 : i32
    %c0_i32_301 = arith.constant 0 : i32
    %486 = arith.addi %c0_i32_301, %485 : i32
    %c8_i32_302 = arith.constant 8 : i32
    %487 = arith.muli %486, %c8_i32_302 : i32
    %488 = tpu.assume_multiple %487, 8 : i32
    %c0_303 = arith.constant 0 : index
    %489 = arith.index_cast %488 : i32 to index
    %c0_304 = arith.constant 0 : index
    %490 = vector.load %arg1[%c0_303, %489, %c0_304] : memref<9x8x676xf32, #tpu.memory_space<vmem>>, vector<1x8x676xf32>
    %491 = vector.shape_cast %490 : vector<1x8x676xf32> to vector<8x676xf32>
    %c6_305 = arith.constant 6 : index
    %c0_306 = arith.constant 0 : index
    %492 = memref.load %arg2[%c6_305, %c0_306] : memref<10x9xf32, #tpu.memory_space<smem>>
    %493 = vector.broadcast %492 : f32 to vector<8x676xf32>
    %494 = arith.mulf %491, %493 : vector<8x676xf32>
    %c1_307 = arith.constant 1 : index
    %495 = arith.index_cast %488 : i32 to index
    %c0_308 = arith.constant 0 : index
    %496 = vector.load %arg1[%c1_307, %495, %c0_308] : memref<9x8x676xf32, #tpu.memory_space<vmem>>, vector<1x8x676xf32>
    %497 = vector.shape_cast %496 : vector<1x8x676xf32> to vector<8x676xf32>
    %c6_309 = arith.constant 6 : index
    %c1_310 = arith.constant 1 : index
    %498 = memref.load %arg2[%c6_309, %c1_310] : memref<10x9xf32, #tpu.memory_space<smem>>
    %499 = vector.broadcast %498 : f32 to vector<8x676xf32>
    %500 = arith.mulf %497, %499 : vector<8x676xf32>
    %501 = arith.addf %494, %500 : vector<8x676xf32>
    %c2_311 = arith.constant 2 : index
    %502 = arith.index_cast %488 : i32 to index
    %c0_312 = arith.constant 0 : index
    %503 = vector.load %arg1[%c2_311, %502, %c0_312] : memref<9x8x676xf32, #tpu.memory_space<vmem>>, vector<1x8x676xf32>
    %504 = vector.shape_cast %503 : vector<1x8x676xf32> to vector<8x676xf32>
    %c6_313 = arith.constant 6 : index
    %c2_314 = arith.constant 2 : index
    %505 = memref.load %arg2[%c6_313, %c2_314] : memref<10x9xf32, #tpu.memory_space<smem>>
    %506 = vector.broadcast %505 : f32 to vector<8x676xf32>
    %507 = arith.mulf %504, %506 : vector<8x676xf32>
    %508 = arith.addf %501, %507 : vector<8x676xf32>
    %c3_315 = arith.constant 3 : index
    %509 = arith.index_cast %488 : i32 to index
    %c0_316 = arith.constant 0 : index
    %510 = vector.load %arg1[%c3_315, %509, %c0_316] : memref<9x8x676xf32, #tpu.memory_space<vmem>>, vector<1x8x676xf32>
    %511 = vector.shape_cast %510 : vector<1x8x676xf32> to vector<8x676xf32>
    %c6_317 = arith.constant 6 : index
    %c3_318 = arith.constant 3 : index
    %512 = memref.load %arg2[%c6_317, %c3_318] : memref<10x9xf32, #tpu.memory_space<smem>>
    %513 = vector.broadcast %512 : f32 to vector<8x676xf32>
    %514 = arith.mulf %511, %513 : vector<8x676xf32>
    %515 = arith.addf %508, %514 : vector<8x676xf32>
    %c4_319 = arith.constant 4 : index
    %516 = arith.index_cast %488 : i32 to index
    %c0_320 = arith.constant 0 : index
    %517 = vector.load %arg1[%c4_319, %516, %c0_320] : memref<9x8x676xf32, #tpu.memory_space<vmem>>, vector<1x8x676xf32>
    %518 = vector.shape_cast %517 : vector<1x8x676xf32> to vector<8x676xf32>
    %c6_321 = arith.constant 6 : index
    %c4_322 = arith.constant 4 : index
    %519 = memref.load %arg2[%c6_321, %c4_322] : memref<10x9xf32, #tpu.memory_space<smem>>
    %520 = vector.broadcast %519 : f32 to vector<8x676xf32>
    %521 = arith.mulf %518, %520 : vector<8x676xf32>
    %522 = arith.addf %515, %521 : vector<8x676xf32>
    %c5_323 = arith.constant 5 : index
    %523 = arith.index_cast %488 : i32 to index
    %c0_324 = arith.constant 0 : index
    %524 = vector.load %arg1[%c5_323, %523, %c0_324] : memref<9x8x676xf32, #tpu.memory_space<vmem>>, vector<1x8x676xf32>
    %525 = vector.shape_cast %524 : vector<1x8x676xf32> to vector<8x676xf32>
    %c6_325 = arith.constant 6 : index
    %c5_326 = arith.constant 5 : index
    %526 = memref.load %arg2[%c6_325, %c5_326] : memref<10x9xf32, #tpu.memory_space<smem>>
    %527 = vector.broadcast %526 : f32 to vector<8x676xf32>
    %528 = arith.mulf %525, %527 : vector<8x676xf32>
    %529 = arith.addf %522, %528 : vector<8x676xf32>
    %c6_327 = arith.constant 6 : index
    %530 = arith.index_cast %488 : i32 to index
    %c0_328 = arith.constant 0 : index
    %531 = vector.load %arg1[%c6_327, %530, %c0_328] : memref<9x8x676xf32, #tpu.memory_space<vmem>>, vector<1x8x676xf32>
    %532 = vector.shape_cast %531 : vector<1x8x676xf32> to vector<8x676xf32>
    %c6_329 = arith.constant 6 : index
    %c6_330 = arith.constant 6 : index
    %533 = memref.load %arg2[%c6_329, %c6_330] : memref<10x9xf32, #tpu.memory_space<smem>>
    %534 = vector.broadcast %533 : f32 to vector<8x676xf32>
    %535 = arith.mulf %532, %534 : vector<8x676xf32>
    %536 = arith.addf %529, %535 : vector<8x676xf32>
    %c7_331 = arith.constant 7 : index
    %537 = arith.index_cast %488 : i32 to index
    %c0_332 = arith.constant 0 : index
    %538 = vector.load %arg1[%c7_331, %537, %c0_332] : memref<9x8x676xf32, #tpu.memory_space<vmem>>, vector<1x8x676xf32>
    %539 = vector.shape_cast %538 : vector<1x8x676xf32> to vector<8x676xf32>
    %c6_333 = arith.constant 6 : index
    %c7_334 = arith.constant 7 : index
    %540 = memref.load %arg2[%c6_333, %c7_334] : memref<10x9xf32, #tpu.memory_space<smem>>
    %541 = vector.broadcast %540 : f32 to vector<8x676xf32>
    %542 = arith.mulf %539, %541 : vector<8x676xf32>
    %543 = arith.addf %536, %542 : vector<8x676xf32>
    %c8_335 = arith.constant 8 : index
    %544 = arith.index_cast %488 : i32 to index
    %c0_336 = arith.constant 0 : index
    %545 = vector.load %arg1[%c8_335, %544, %c0_336] : memref<9x8x676xf32, #tpu.memory_space<vmem>>, vector<1x8x676xf32>
    %546 = vector.shape_cast %545 : vector<1x8x676xf32> to vector<8x676xf32>
    %c6_337 = arith.constant 6 : index
    %c8_338 = arith.constant 8 : index
    %547 = memref.load %arg2[%c6_337, %c8_338] : memref<10x9xf32, #tpu.memory_space<smem>>
    %548 = vector.broadcast %547 : f32 to vector<8x676xf32>
    %549 = arith.mulf %546, %548 : vector<8x676xf32>
    %550 = arith.addf %543, %549 : vector<8x676xf32>
    %c6_339 = arith.constant 6 : index
    %551 = memref.load %arg3[%c6_339] : memref<10xf32, #tpu.memory_space<smem>>
    %552 = vector.broadcast %551 : f32 to vector<8x676xf32>
    %553 = arith.addf %550, %552 : vector<8x676xf32>
    %cst_340 = arith.constant 0.000000e+00 : f32
    %554 = vector.broadcast %cst_340 : f32 to vector<8x676xf32>
    %555 = arith.maximumf %553, %554 : vector<8x676xf32>
    %c0_341 = arith.constant 0 : index
    %556 = arith.index_cast %488 : i32 to index
    %c0_342 = arith.constant 0 : index
    %557 = vector.load %arg11[%c0_341, %556, %c0_342] : memref<2x8x676xf32, #tpu.memory_space<vmem>>, vector<1x8x676xf32>
    %558 = vector.shape_cast %557 : vector<1x8x676xf32> to vector<8x676xf32>
    %559 = vector.shape_cast %555 : vector<8x676xf32> to vector<1x8x676xf32>
    tpu.vector_store %arg11[%c0_341, %556, %c0_342], %559 {strides = array<i32>} : memref<2x8x676xf32, #tpu.memory_space<vmem>>, vector<1x8x676xf32>,
    %c1_i32_343 = arith.constant 1 : i32
    %c0_344 = arith.constant 0 : index
    %c0_345 = arith.constant 0 : index
    %c0_346 = arith.constant 0 : index
    %560 = vector.load %arg11[%c0_344, %c0_345, %c0_346] : memref<2x8x676xf32, #tpu.memory_space<vmem>>, vector<1x8x676xf32>
    %561 = vector.shape_cast %560 : vector<1x8x676xf32> to vector<8x676xf32>
    %c6_347 = arith.constant 6 : index
    %c0_348 = arith.constant 0 : index
    %c0_349 = arith.constant 0 : index
    %562 = vector.load %arg4[%c6_347, %c0_348, %c0_349] : memref<10x676x128xf32, #tpu.memory_space<vmem>>, vector<1x676x128xf32>
    %563 = vector.shape_cast %562 : vector<1x676x128xf32> to vector<676x128xf32>
    %cst_350 = arith.constant dense<0.000000e+00> : vector<8x128xf32>
    %564 = tpu.matmul %561, %563, %cst_350 {dimension_numbers = #tpu.dot_dimension_numbers<[1], [0], [0], [1], [0, 0, 1, 1], [], []>} : vector<8x676xf32>, vector<676x128xf32>, vector<8x128xf32> -> vector<8x128xf32>
    %565 = arith.addf %484, %564 : vector<8x128xf32>
    %c0_i32_351 = arith.constant 0 : i32
    %c1_i32_352 = arith.constant 1 : i32
    %566 = arith.muli %c0_i32_351, %c1_i32_352 : i32
    %c0_i32_353 = arith.constant 0 : i32
    %567 = arith.addi %c0_i32_353, %566 : i32
    %c8_i32_354 = arith.constant 8 : i32
    %568 = arith.muli %567, %c8_i32_354 : i32
    %569 = tpu.assume_multiple %568, 8 : i32
    %c0_355 = arith.constant 0 : index
    %570 = arith.index_cast %569 : i32 to index
    %c0_356 = arith.constant 0 : index
    %571 = vector.load %arg1[%c0_355, %570, %c0_356] : memref<9x8x676xf32, #tpu.memory_space<vmem>>, vector<1x8x676xf32>
    %572 = vector.shape_cast %571 : vector<1x8x676xf32> to vector<8x676xf32>
    %c7_357 = arith.constant 7 : index
    %c0_358 = arith.constant 0 : index
    %573 = memref.load %arg2[%c7_357, %c0_358] : memref<10x9xf32, #tpu.memory_space<smem>>
    %574 = vector.broadcast %573 : f32 to vector<8x676xf32>
    %575 = arith.mulf %572, %574 : vector<8x676xf32>
    %c1_359 = arith.constant 1 : index
    %576 = arith.index_cast %569 : i32 to index
    %c0_360 = arith.constant 0 : index
    %577 = vector.load %arg1[%c1_359, %576, %c0_360] : memref<9x8x676xf32, #tpu.memory_space<vmem>>, vector<1x8x676xf32>
    %578 = vector.shape_cast %577 : vector<1x8x676xf32> to vector<8x676xf32>
    %c7_361 = arith.constant 7 : index
    %c1_362 = arith.constant 1 : index
    %579 = memref.load %arg2[%c7_361, %c1_362] : memref<10x9xf32, #tpu.memory_space<smem>>
    %580 = vector.broadcast %579 : f32 to vector<8x676xf32>
    %581 = arith.mulf %578, %580 : vector<8x676xf32>
    %582 = arith.addf %575, %581 : vector<8x676xf32>
    %c2_363 = arith.constant 2 : index
    %583 = arith.index_cast %569 : i32 to index
    %c0_364 = arith.constant 0 : index
    %584 = vector.load %arg1[%c2_363, %583, %c0_364] : memref<9x8x676xf32, #tpu.memory_space<vmem>>, vector<1x8x676xf32>
    %585 = vector.shape_cast %584 : vector<1x8x676xf32> to vector<8x676xf32>
    %c7_365 = arith.constant 7 : index
    %c2_366 = arith.constant 2 : index
    %586 = memref.load %arg2[%c7_365, %c2_366] : memref<10x9xf32, #tpu.memory_space<smem>>
    %587 = vector.broadcast %586 : f32 to vector<8x676xf32>
    %588 = arith.mulf %585, %587 : vector<8x676xf32>
    %589 = arith.addf %582, %588 : vector<8x676xf32>
    %c3_367 = arith.constant 3 : index
    %590 = arith.index_cast %569 : i32 to index
    %c0_368 = arith.constant 0 : index
    %591 = vector.load %arg1[%c3_367, %590, %c0_368] : memref<9x8x676xf32, #tpu.memory_space<vmem>>, vector<1x8x676xf32>
    %592 = vector.shape_cast %591 : vector<1x8x676xf32> to vector<8x676xf32>
    %c7_369 = arith.constant 7 : index
    %c3_370 = arith.constant 3 : index
    %593 = memref.load %arg2[%c7_369, %c3_370] : memref<10x9xf32, #tpu.memory_space<smem>>
    %594 = vector.broadcast %593 : f32 to vector<8x676xf32>
    %595 = arith.mulf %592, %594 : vector<8x676xf32>
    %596 = arith.addf %589, %595 : vector<8x676xf32>
    %c4_371 = arith.constant 4 : index
    %597 = arith.index_cast %569 : i32 to index
    %c0_372 = arith.constant 0 : index
    %598 = vector.load %arg1[%c4_371, %597, %c0_372] : memref<9x8x676xf32, #tpu.memory_space<vmem>>, vector<1x8x676xf32>
    %599 = vector.shape_cast %598 : vector<1x8x676xf32> to vector<8x676xf32>
    %c7_373 = arith.constant 7 : index
    %c4_374 = arith.constant 4 : index
    %600 = memref.load %arg2[%c7_373, %c4_374] : memref<10x9xf32, #tpu.memory_space<smem>>
    %601 = vector.broadcast %600 : f32 to vector<8x676xf32>
    %602 = arith.mulf %599, %601 : vector<8x676xf32>
    %603 = arith.addf %596, %602 : vector<8x676xf32>
    %c5_375 = arith.constant 5 : index
    %604 = arith.index_cast %569 : i32 to index
    %c0_376 = arith.constant 0 : index
    %605 = vector.load %arg1[%c5_375, %604, %c0_376] : memref<9x8x676xf32, #tpu.memory_space<vmem>>, vector<1x8x676xf32>
    %606 = vector.shape_cast %605 : vector<1x8x676xf32> to vector<8x676xf32>
    %c7_377 = arith.constant 7 : index
    %c5_378 = arith.constant 5 : index
    %607 = memref.load %arg2[%c7_377, %c5_378] : memref<10x9xf32, #tpu.memory_space<smem>>
    %608 = vector.broadcast %607 : f32 to vector<8x676xf32>
    %609 = arith.mulf %606, %608 : vector<8x676xf32>
    %610 = arith.addf %603, %609 : vector<8x676xf32>
    %c6_379 = arith.constant 6 : index
    %611 = arith.index_cast %569 : i32 to index
    %c0_380 = arith.constant 0 : index
    %612 = vector.load %arg1[%c6_379, %611, %c0_380] : memref<9x8x676xf32, #tpu.memory_space<vmem>>, vector<1x8x676xf32>
    %613 = vector.shape_cast %612 : vector<1x8x676xf32> to vector<8x676xf32>
    %c7_381 = arith.constant 7 : index
    %c6_382 = arith.constant 6 : index
    %614 = memref.load %arg2[%c7_381, %c6_382] : memref<10x9xf32, #tpu.memory_space<smem>>
    %615 = vector.broadcast %614 : f32 to vector<8x676xf32>
    %616 = arith.mulf %613, %615 : vector<8x676xf32>
    %617 = arith.addf %610, %616 : vector<8x676xf32>
    %c7_383 = arith.constant 7 : index
    %618 = arith.index_cast %569 : i32 to index
    %c0_384 = arith.constant 0 : index
    %619 = vector.load %arg1[%c7_383, %618, %c0_384] : memref<9x8x676xf32, #tpu.memory_space<vmem>>, vector<1x8x676xf32>
    %620 = vector.shape_cast %619 : vector<1x8x676xf32> to vector<8x676xf32>
    %c7_385 = arith.constant 7 : index
    %c7_386 = arith.constant 7 : index
    %621 = memref.load %arg2[%c7_385, %c7_386] : memref<10x9xf32, #tpu.memory_space<smem>>
    %622 = vector.broadcast %621 : f32 to vector<8x676xf32>
    %623 = arith.mulf %620, %622 : vector<8x676xf32>
    %624 = arith.addf %617, %623 : vector<8x676xf32>
    %c8_387 = arith.constant 8 : index
    %625 = arith.index_cast %569 : i32 to index
    %c0_388 = arith.constant 0 : index
    %626 = vector.load %arg1[%c8_387, %625, %c0_388] : memref<9x8x676xf32, #tpu.memory_space<vmem>>, vector<1x8x676xf32>
    %627 = vector.shape_cast %626 : vector<1x8x676xf32> to vector<8x676xf32>
    %c7_389 = arith.constant 7 : index
    %c8_390 = arith.constant 8 : index
    %628 = memref.load %arg2[%c7_389, %c8_390] : memref<10x9xf32, #tpu.memory_space<smem>>
    %629 = vector.broadcast %628 : f32 to vector<8x676xf32>
    %630 = arith.mulf %627, %629 : vector<8x676xf32>
    %631 = arith.addf %624, %630 : vector<8x676xf32>
    %c7_391 = arith.constant 7 : index
    %632 = memref.load %arg3[%c7_391] : memref<10xf32, #tpu.memory_space<smem>>
    %633 = vector.broadcast %632 : f32 to vector<8x676xf32>
    %634 = arith.addf %631, %633 : vector<8x676xf32>
    %cst_392 = arith.constant 0.000000e+00 : f32
    %635 = vector.broadcast %cst_392 : f32 to vector<8x676xf32>
    %636 = arith.maximumf %634, %635 : vector<8x676xf32>
    %c1_393 = arith.constant 1 : index
    %637 = arith.index_cast %569 : i32 to index
    %c0_394 = arith.constant 0 : index
    %638 = vector.load %arg11[%c1_393, %637, %c0_394] : memref<2x8x676xf32, #tpu.memory_space<vmem>>, vector<1x8x676xf32>
    %639 = vector.shape_cast %638 : vector<1x8x676xf32> to vector<8x676xf32>
    %640 = vector.shape_cast %636 : vector<8x676xf32> to vector<1x8x676xf32>
    tpu.vector_store %arg11[%c1_393, %637, %c0_394], %640 {strides = array<i32>} : memref<2x8x676xf32, #tpu.memory_space<vmem>>, vector<1x8x676xf32>,
    %c1_i32_395 = arith.constant 1 : i32
    %c1_396 = arith.constant 1 : index
    %c0_397 = arith.constant 0 : index
    %c0_398 = arith.constant 0 : index
    %641 = vector.load %arg11[%c1_396, %c0_397, %c0_398] : memref<2x8x676xf32, #tpu.memory_space<vmem>>, vector<1x8x676xf32>
    %642 = vector.shape_cast %641 : vector<1x8x676xf32> to vector<8x676xf32>
    %c7_399 = arith.constant 7 : index
    %c0_400 = arith.constant 0 : index
    %c0_401 = arith.constant 0 : index
    %643 = vector.load %arg4[%c7_399, %c0_400, %c0_401] : memref<10x676x128xf32, #tpu.memory_space<vmem>>, vector<1x676x128xf32>
    %644 = vector.shape_cast %643 : vector<1x676x128xf32> to vector<676x128xf32>
    %cst_402 = arith.constant dense<0.000000e+00> : vector<8x128xf32>
    %645 = tpu.matmul %642, %644, %cst_402 {dimension_numbers = #tpu.dot_dimension_numbers<[1], [0], [0], [1], [0, 0, 1, 1], [], []>} : vector<8x676xf32>, vector<676x128xf32>, vector<8x128xf32> -> vector<8x128xf32>
    %646 = arith.addf %565, %645 : vector<8x128xf32>
    %c0_i32_403 = arith.constant 0 : i32
    %c1_i32_404 = arith.constant 1 : i32
    %647 = arith.muli %c0_i32_403, %c1_i32_404 : i32
    %c0_i32_405 = arith.constant 0 : i32
    %648 = arith.addi %c0_i32_405, %647 : i32
    %c8_i32_406 = arith.constant 8 : i32
    %649 = arith.muli %648, %c8_i32_406 : i32
    %650 = tpu.assume_multiple %649, 8 : i32
    %c0_407 = arith.constant 0 : index
    %651 = arith.index_cast %650 : i32 to index
    %c0_408 = arith.constant 0 : index
    %652 = vector.load %arg1[%c0_407, %651, %c0_408] : memref<9x8x676xf32, #tpu.memory_space<vmem>>, vector<1x8x676xf32>
    %653 = vector.shape_cast %652 : vector<1x8x676xf32> to vector<8x676xf32>
    %c8_409 = arith.constant 8 : index
    %c0_410 = arith.constant 0 : index
    %654 = memref.load %arg2[%c8_409, %c0_410] : memref<10x9xf32, #tpu.memory_space<smem>>
    %655 = vector.broadcast %654 : f32 to vector<8x676xf32>
    %656 = arith.mulf %653, %655 : vector<8x676xf32>
    %c1_411 = arith.constant 1 : index
    %657 = arith.index_cast %650 : i32 to index
    %c0_412 = arith.constant 0 : index
    %658 = vector.load %arg1[%c1_411, %657, %c0_412] : memref<9x8x676xf32, #tpu.memory_space<vmem>>, vector<1x8x676xf32>
    %659 = vector.shape_cast %658 : vector<1x8x676xf32> to vector<8x676xf32>
    %c8_413 = arith.constant 8 : index
    %c1_414 = arith.constant 1 : index
    %660 = memref.load %arg2[%c8_413, %c1_414] : memref<10x9xf32, #tpu.memory_space<smem>>
    %661 = vector.broadcast %660 : f32 to vector<8x676xf32>
    %662 = arith.mulf %659, %661 : vector<8x676xf32>
    %663 = arith.addf %656, %662 : vector<8x676xf32>
    %c2_415 = arith.constant 2 : index
    %664 = arith.index_cast %650 : i32 to index
    %c0_416 = arith.constant 0 : index
    %665 = vector.load %arg1[%c2_415, %664, %c0_416] : memref<9x8x676xf32, #tpu.memory_space<vmem>>, vector<1x8x676xf32>
    %666 = vector.shape_cast %665 : vector<1x8x676xf32> to vector<8x676xf32>
    %c8_417 = arith.constant 8 : index
    %c2_418 = arith.constant 2 : index
    %667 = memref.load %arg2[%c8_417, %c2_418] : memref<10x9xf32, #tpu.memory_space<smem>>
    %668 = vector.broadcast %667 : f32 to vector<8x676xf32>
    %669 = arith.mulf %666, %668 : vector<8x676xf32>
    %670 = arith.addf %663, %669 : vector<8x676xf32>
    %c3_419 = arith.constant 3 : index
    %671 = arith.index_cast %650 : i32 to index
    %c0_420 = arith.constant 0 : index
    %672 = vector.load %arg1[%c3_419, %671, %c0_420] : memref<9x8x676xf32, #tpu.memory_space<vmem>>, vector<1x8x676xf32>
    %673 = vector.shape_cast %672 : vector<1x8x676xf32> to vector<8x676xf32>
    %c8_421 = arith.constant 8 : index
    %c3_422 = arith.constant 3 : index
    %674 = memref.load %arg2[%c8_421, %c3_422] : memref<10x9xf32, #tpu.memory_space<smem>>
    %675 = vector.broadcast %674 : f32 to vector<8x676xf32>
    %676 = arith.mulf %673, %675 : vector<8x676xf32>
    %677 = arith.addf %670, %676 : vector<8x676xf32>
    %c4_423 = arith.constant 4 : index
    %678 = arith.index_cast %650 : i32 to index
    %c0_424 = arith.constant 0 : index
    %679 = vector.load %arg1[%c4_423, %678, %c0_424] : memref<9x8x676xf32, #tpu.memory_space<vmem>>, vector<1x8x676xf32>
    %680 = vector.shape_cast %679 : vector<1x8x676xf32> to vector<8x676xf32>
    %c8_425 = arith.constant 8 : index
    %c4_426 = arith.constant 4 : index
    %681 = memref.load %arg2[%c8_425, %c4_426] : memref<10x9xf32, #tpu.memory_space<smem>>
    %682 = vector.broadcast %681 : f32 to vector<8x676xf32>
    %683 = arith.mulf %680, %682 : vector<8x676xf32>
    %684 = arith.addf %677, %683 : vector<8x676xf32>
    %c5_427 = arith.constant 5 : index
    %685 = arith.index_cast %650 : i32 to index
    %c0_428 = arith.constant 0 : index
    %686 = vector.load %arg1[%c5_427, %685, %c0_428] : memref<9x8x676xf32, #tpu.memory_space<vmem>>, vector<1x8x676xf32>
    %687 = vector.shape_cast %686 : vector<1x8x676xf32> to vector<8x676xf32>
    %c8_429 = arith.constant 8 : index
    %c5_430 = arith.constant 5 : index
    %688 = memref.load %arg2[%c8_429, %c5_430] : memref<10x9xf32, #tpu.memory_space<smem>>
    %689 = vector.broadcast %688 : f32 to vector<8x676xf32>
    %690 = arith.mulf %687, %689 : vector<8x676xf32>
    %691 = arith.addf %684, %690 : vector<8x676xf32>
    %c6_431 = arith.constant 6 : index
    %692 = arith.index_cast %650 : i32 to index
    %c0_432 = arith.constant 0 : index
    %693 = vector.load %arg1[%c6_431, %692, %c0_432] : memref<9x8x676xf32, #tpu.memory_space<vmem>>, vector<1x8x676xf32>
    %694 = vector.shape_cast %693 : vector<1x8x676xf32> to vector<8x676xf32>
    %c8_433 = arith.constant 8 : index
    %c6_434 = arith.constant 6 : index
    %695 = memref.load %arg2[%c8_433, %c6_434] : memref<10x9xf32, #tpu.memory_space<smem>>
    %696 = vector.broadcast %695 : f32 to vector<8x676xf32>
    %697 = arith.mulf %694, %696 : vector<8x676xf32>
    %698 = arith.addf %691, %697 : vector<8x676xf32>
    %c7_435 = arith.constant 7 : index
    %699 = arith.index_cast %650 : i32 to index
    %c0_436 = arith.constant 0 : index
    %700 = vector.load %arg1[%c7_435, %699, %c0_436] : memref<9x8x676xf32, #tpu.memory_space<vmem>>, vector<1x8x676xf32>
    %701 = vector.shape_cast %700 : vector<1x8x676xf32> to vector<8x676xf32>
    %c8_437 = arith.constant 8 : index
    %c7_438 = arith.constant 7 : index
    %702 = memref.load %arg2[%c8_437, %c7_438] : memref<10x9xf32, #tpu.memory_space<smem>>
    %703 = vector.broadcast %702 : f32 to vector<8x676xf32>
    %704 = arith.mulf %701, %703 : vector<8x676xf32>
    %705 = arith.addf %698, %704 : vector<8x676xf32>
    %c8_439 = arith.constant 8 : index
    %706 = arith.index_cast %650 : i32 to index
    %c0_440 = arith.constant 0 : index
    %707 = vector.load %arg1[%c8_439, %706, %c0_440] : memref<9x8x676xf32, #tpu.memory_space<vmem>>, vector<1x8x676xf32>
    %708 = vector.shape_cast %707 : vector<1x8x676xf32> to vector<8x676xf32>
    %c8_441 = arith.constant 8 : index
    %c8_442 = arith.constant 8 : index
    %709 = memref.load %arg2[%c8_441, %c8_442] : memref<10x9xf32, #tpu.memory_space<smem>>
    %710 = vector.broadcast %709 : f32 to vector<8x676xf32>
    %711 = arith.mulf %708, %710 : vector<8x676xf32>
    %712 = arith.addf %705, %711 : vector<8x676xf32>
    %c8_443 = arith.constant 8 : index
    %713 = memref.load %arg3[%c8_443] : memref<10xf32, #tpu.memory_space<smem>>
    %714 = vector.broadcast %713 : f32 to vector<8x676xf32>
    %715 = arith.addf %712, %714 : vector<8x676xf32>
    %cst_444 = arith.constant 0.000000e+00 : f32
    %716 = vector.broadcast %cst_444 : f32 to vector<8x676xf32>
    %717 = arith.maximumf %715, %716 : vector<8x676xf32>
    %c0_445 = arith.constant 0 : index
    %718 = arith.index_cast %650 : i32 to index
    %c0_446 = arith.constant 0 : index
    %719 = vector.load %arg11[%c0_445, %718, %c0_446] : memref<2x8x676xf32, #tpu.memory_space<vmem>>, vector<1x8x676xf32>
    %720 = vector.shape_cast %719 : vector<1x8x676xf32> to vector<8x676xf32>
    %721 = vector.shape_cast %717 : vector<8x676xf32> to vector<1x8x676xf32>
    tpu.vector_store %arg11[%c0_445, %718, %c0_446], %721 {strides = array<i32>} : memref<2x8x676xf32, #tpu.memory_space<vmem>>, vector<1x8x676xf32>,
    %c1_i32_447 = arith.constant 1 : i32
    %c0_448 = arith.constant 0 : index
    %c0_449 = arith.constant 0 : index
    %c0_450 = arith.constant 0 : index
    %722 = vector.load %arg11[%c0_448, %c0_449, %c0_450] : memref<2x8x676xf32, #tpu.memory_space<vmem>>, vector<1x8x676xf32>
    %723 = vector.shape_cast %722 : vector<1x8x676xf32> to vector<8x676xf32>
    %c8_451 = arith.constant 8 : index
    %c0_452 = arith.constant 0 : index
    %c0_453 = arith.constant 0 : index
    %724 = vector.load %arg4[%c8_451, %c0_452, %c0_453] : memref<10x676x128xf32, #tpu.memory_space<vmem>>, vector<1x676x128xf32>
    %725 = vector.shape_cast %724 : vector<1x676x128xf32> to vector<676x128xf32>
    %cst_454 = arith.constant dense<0.000000e+00> : vector<8x128xf32>
    %726 = tpu.matmul %723, %725, %cst_454 {dimension_numbers = #tpu.dot_dimension_numbers<[1], [0], [0], [1], [0, 0, 1, 1], [], []>} : vector<8x676xf32>, vector<676x128xf32>, vector<8x128xf32> -> vector<8x128xf32>
    %727 = arith.addf %646, %726 : vector<8x128xf32>
    %c0_i32_455 = arith.constant 0 : i32
    %c1_i32_456 = arith.constant 1 : i32
    %728 = arith.muli %c0_i32_455, %c1_i32_456 : i32
    %c0_i32_457 = arith.constant 0 : i32
    %729 = arith.addi %c0_i32_457, %728 : i32
    %c8_i32_458 = arith.constant 8 : i32
    %730 = arith.muli %729, %c8_i32_458 : i32
    %731 = tpu.assume_multiple %730, 8 : i32
    %c0_459 = arith.constant 0 : index
    %732 = arith.index_cast %731 : i32 to index
    %c0_460 = arith.constant 0 : index
    %733 = vector.load %arg1[%c0_459, %732, %c0_460] : memref<9x8x676xf32, #tpu.memory_space<vmem>>, vector<1x8x676xf32>
    %734 = vector.shape_cast %733 : vector<1x8x676xf32> to vector<8x676xf32>
    %c9 = arith.constant 9 : index
    %c0_461 = arith.constant 0 : index
    %735 = memref.load %arg2[%c9, %c0_461] : memref<10x9xf32, #tpu.memory_space<smem>>
    %736 = vector.broadcast %735 : f32 to vector<8x676xf32>
    %737 = arith.mulf %734, %736 : vector<8x676xf32>
    %c1_462 = arith.constant 1 : index
    %738 = arith.index_cast %731 : i32 to index
    %c0_463 = arith.constant 0 : index
    %739 = vector.load %arg1[%c1_462, %738, %c0_463] : memref<9x8x676xf32, #tpu.memory_space<vmem>>, vector<1x8x676xf32>
    %740 = vector.shape_cast %739 : vector<1x8x676xf32> to vector<8x676xf32>
    %c9_464 = arith.constant 9 : index
    %c1_465 = arith.constant 1 : index
    %741 = memref.load %arg2[%c9_464, %c1_465] : memref<10x9xf32, #tpu.memory_space<smem>>
    %742 = vector.broadcast %741 : f32 to vector<8x676xf32>
    %743 = arith.mulf %740, %742 : vector<8x676xf32>
    %744 = arith.addf %737, %743 : vector<8x676xf32>
    %c2_466 = arith.constant 2 : index
    %745 = arith.index_cast %731 : i32 to index
    %c0_467 = arith.constant 0 : index
    %746 = vector.load %arg1[%c2_466, %745, %c0_467] : memref<9x8x676xf32, #tpu.memory_space<vmem>>, vector<1x8x676xf32>
    %747 = vector.shape_cast %746 : vector<1x8x676xf32> to vector<8x676xf32>
    %c9_468 = arith.constant 9 : index
    %c2_469 = arith.constant 2 : index
    %748 = memref.load %arg2[%c9_468, %c2_469] : memref<10x9xf32, #tpu.memory_space<smem>>
    %749 = vector.broadcast %748 : f32 to vector<8x676xf32>
    %750 = arith.mulf %747, %749 : vector<8x676xf32>
    %751 = arith.addf %744, %750 : vector<8x676xf32>
    %c3_470 = arith.constant 3 : index
    %752 = arith.index_cast %731 : i32 to index
    %c0_471 = arith.constant 0 : index
    %753 = vector.load %arg1[%c3_470, %752, %c0_471] : memref<9x8x676xf32, #tpu.memory_space<vmem>>, vector<1x8x676xf32>
    %754 = vector.shape_cast %753 : vector<1x8x676xf32> to vector<8x676xf32>
    %c9_472 = arith.constant 9 : index
    %c3_473 = arith.constant 3 : index
    %755 = memref.load %arg2[%c9_472, %c3_473] : memref<10x9xf32, #tpu.memory_space<smem>>
    %756 = vector.broadcast %755 : f32 to vector<8x676xf32>
    %757 = arith.mulf %754, %756 : vector<8x676xf32>
    %758 = arith.addf %751, %757 : vector<8x676xf32>
    %c4_474 = arith.constant 4 : index
    %759 = arith.index_cast %731 : i32 to index
    %c0_475 = arith.constant 0 : index
    %760 = vector.load %arg1[%c4_474, %759, %c0_475] : memref<9x8x676xf32, #tpu.memory_space<vmem>>, vector<1x8x676xf32>
    %761 = vector.shape_cast %760 : vector<1x8x676xf32> to vector<8x676xf32>
    %c9_476 = arith.constant 9 : index
    %c4_477 = arith.constant 4 : index
    %762 = memref.load %arg2[%c9_476, %c4_477] : memref<10x9xf32, #tpu.memory_space<smem>>
    %763 = vector.broadcast %762 : f32 to vector<8x676xf32>
    %764 = arith.mulf %761, %763 : vector<8x676xf32>
    %765 = arith.addf %758, %764 : vector<8x676xf32>
    %c5_478 = arith.constant 5 : index
    %766 = arith.index_cast %731 : i32 to index
    %c0_479 = arith.constant 0 : index
    %767 = vector.load %arg1[%c5_478, %766, %c0_479] : memref<9x8x676xf32, #tpu.memory_space<vmem>>, vector<1x8x676xf32>
    %768 = vector.shape_cast %767 : vector<1x8x676xf32> to vector<8x676xf32>
    %c9_480 = arith.constant 9 : index
    %c5_481 = arith.constant 5 : index
    %769 = memref.load %arg2[%c9_480, %c5_481] : memref<10x9xf32, #tpu.memory_space<smem>>
    %770 = vector.broadcast %769 : f32 to vector<8x676xf32>
    %771 = arith.mulf %768, %770 : vector<8x676xf32>
    %772 = arith.addf %765, %771 : vector<8x676xf32>
    %c6_482 = arith.constant 6 : index
    %773 = arith.index_cast %731 : i32 to index
    %c0_483 = arith.constant 0 : index
    %774 = vector.load %arg1[%c6_482, %773, %c0_483] : memref<9x8x676xf32, #tpu.memory_space<vmem>>, vector<1x8x676xf32>
    %775 = vector.shape_cast %774 : vector<1x8x676xf32> to vector<8x676xf32>
    %c9_484 = arith.constant 9 : index
    %c6_485 = arith.constant 6 : index
    %776 = memref.load %arg2[%c9_484, %c6_485] : memref<10x9xf32, #tpu.memory_space<smem>>
    %777 = vector.broadcast %776 : f32 to vector<8x676xf32>
    %778 = arith.mulf %775, %777 : vector<8x676xf32>
    %779 = arith.addf %772, %778 : vector<8x676xf32>
    %c7_486 = arith.constant 7 : index
    %780 = arith.index_cast %731 : i32 to index
    %c0_487 = arith.constant 0 : index
    %781 = vector.load %arg1[%c7_486, %780, %c0_487] : memref<9x8x676xf32, #tpu.memory_space<vmem>>, vector<1x8x676xf32>
    %782 = vector.shape_cast %781 : vector<1x8x676xf32> to vector<8x676xf32>
    %c9_488 = arith.constant 9 : index
    %c7_489 = arith.constant 7 : index
    %783 = memref.load %arg2[%c9_488, %c7_489] : memref<10x9xf32, #tpu.memory_space<smem>>
    %784 = vector.broadcast %783 : f32 to vector<8x676xf32>
    %785 = arith.mulf %782, %784 : vector<8x676xf32>
    %786 = arith.addf %779, %785 : vector<8x676xf32>
    %c8_490 = arith.constant 8 : index
    %787 = arith.index_cast %731 : i32 to index
    %c0_491 = arith.constant 0 : index
    %788 = vector.load %arg1[%c8_490, %787, %c0_491] : memref<9x8x676xf32, #tpu.memory_space<vmem>>, vector<1x8x676xf32>
    %789 = vector.shape_cast %788 : vector<1x8x676xf32> to vector<8x676xf32>
    %c9_492 = arith.constant 9 : index
    %c8_493 = arith.constant 8 : index
    %790 = memref.load %arg2[%c9_492, %c8_493] : memref<10x9xf32, #tpu.memory_space<smem>>
    %791 = vector.broadcast %790 : f32 to vector<8x676xf32>
    %792 = arith.mulf %789, %791 : vector<8x676xf32>
    %793 = arith.addf %786, %792 : vector<8x676xf32>
    %c9_494 = arith.constant 9 : index
    %794 = memref.load %arg3[%c9_494] : memref<10xf32, #tpu.memory_space<smem>>
    %795 = vector.broadcast %794 : f32 to vector<8x676xf32>
    %796 = arith.addf %793, %795 : vector<8x676xf32>
    %cst_495 = arith.constant 0.000000e+00 : f32
    %797 = vector.broadcast %cst_495 : f32 to vector<8x676xf32>
    %798 = arith.maximumf %796, %797 : vector<8x676xf32>
    %c1_496 = arith.constant 1 : index
    %799 = arith.index_cast %731 : i32 to index
    %c0_497 = arith.constant 0 : index
    %800 = vector.load %arg11[%c1_496, %799, %c0_497] : memref<2x8x676xf32, #tpu.memory_space<vmem>>, vector<1x8x676xf32>
    %801 = vector.shape_cast %800 : vector<1x8x676xf32> to vector<8x676xf32>
    %802 = vector.shape_cast %798 : vector<8x676xf32> to vector<1x8x676xf32>
    tpu.vector_store %arg11[%c1_496, %799, %c0_497], %802 {strides = array<i32>} : memref<2x8x676xf32, #tpu.memory_space<vmem>>, vector<1x8x676xf32>,
    %c1_i32_498 = arith.constant 1 : i32
    %c1_499 = arith.constant 1 : index
    %c0_500 = arith.constant 0 : index
    %c0_501 = arith.constant 0 : index
    %803 = vector.load %arg11[%c1_499, %c0_500, %c0_501] : memref<2x8x676xf32, #tpu.memory_space<vmem>>, vector<1x8x676xf32>
    %804 = vector.shape_cast %803 : vector<1x8x676xf32> to vector<8x676xf32>
    %c9_502 = arith.constant 9 : index
    %c0_503 = arith.constant 0 : index
    %c0_504 = arith.constant 0 : index
    %805 = vector.load %arg4[%c9_502, %c0_503, %c0_504] : memref<10x676x128xf32, #tpu.memory_space<vmem>>, vector<1x676x128xf32>
    %806 = vector.shape_cast %805 : vector<1x676x128xf32> to vector<676x128xf32>
    %cst_505 = arith.constant dense<0.000000e+00> : vector<8x128xf32>
    %807 = tpu.matmul %804, %806, %cst_505 {dimension_numbers = #tpu.dot_dimension_numbers<[1], [0], [0], [1], [0, 0, 1, 1], [], []>} : vector<8x676xf32>, vector<676x128xf32>, vector<8x128xf32> -> vector<8x128xf32>
    %808 = arith.addf %727, %807 : vector<8x128xf32>
    %c0_506 = arith.constant 0 : index
    %c0_507 = arith.constant 0 : index
    %809 = vector.load %arg5[%c0_506, %c0_507] : memref<1x128xf32, #tpu.memory_space<vmem>>, vector<1x128xf32>
    %810 = vector.broadcast %809 : vector<1x128xf32> to vector<8x128xf32>
    %811 = arith.addf %808, %810 : vector<8x128xf32>
    %cst_508 = arith.constant 0.000000e+00 : f32
    %812 = vector.broadcast %cst_508 : f32 to vector<8x128xf32>
    %813 = arith.maximumf %811, %812 : vector<8x128xf32>
    %c0_509 = arith.constant 0 : index
    %c0_510 = arith.constant 0 : index
    %814 = vector.load %arg6[%c0_509, %c0_510] : memref<128x128xf32, #tpu.memory_space<vmem>>, vector<128x128xf32>
    %cst_511 = arith.constant dense<0.000000e+00> : vector<8x128xf32>
    %815 = tpu.matmul %813, %814, %cst_511 {dimension_numbers = #tpu.dot_dimension_numbers<[1], [0], [0], [1], [0, 0, 1, 1], [], []>} : vector<8x128xf32>, vector<128x128xf32>, vector<8x128xf32> -> vector<8x128xf32>
    %c0_512 = arith.constant 0 : index
    %c0_513 = arith.constant 0 : index
    %816 = vector.load %arg7[%c0_512, %c0_513] : memref<1x128xf32, #tpu.memory_space<vmem>>, vector<1x128xf32>
    %817 = vector.broadcast %816 : vector<1x128xf32> to vector<8x128xf32>
    %818 = arith.addf %815, %817 : vector<8x128xf32>
    %cst_514 = arith.constant 0.000000e+00 : f32
    %819 = vector.broadcast %cst_514 : f32 to vector<8x128xf32>
    %820 = arith.maximumf %818, %819 : vector<8x128xf32>
    %c0_515 = arith.constant 0 : index
    %c0_516 = arith.constant 0 : index
    %821 = vector.load %arg8[%c0_515, %c0_516] : memref<128x128xf32, #tpu.memory_space<vmem>>, vector<128x128xf32>
    %cst_517 = arith.constant dense<0.000000e+00> : vector<8x128xf32>
    %822 = tpu.matmul %820, %821, %cst_517 {dimension_numbers = #tpu.dot_dimension_numbers<[1], [0], [0], [1], [0, 0, 1, 1], [], []>} : vector<8x128xf32>, vector<128x128xf32>, vector<8x128xf32> -> vector<8x128xf32>
    %c0_518 = arith.constant 0 : index
    %c0_519 = arith.constant 0 : index
    %823 = vector.load %arg9[%c0_518, %c0_519] : memref<1x128xf32, #tpu.memory_space<vmem>>, vector<1x128xf32>
    %824 = vector.broadcast %823 : vector<1x128xf32> to vector<8x128xf32>
    %825 = arith.addf %822, %824 : vector<8x128xf32>
    %c0_520 = arith.constant 0 : index
    %c0_521 = arith.constant 0 : index
    %826 = vector.load %arg10[%c0_520, %c0_521] : memref<8x128xf32, #tpu.memory_space<vmem>>, vector<8x128xf32>
    tpu.vector_store %arg10[%c0_520, %c0_521], %825 {strides = array<i32>} : memref<8x128xf32, #tpu.memory_space<vmem>>, vector<8x128xf32>,
    return
  }
  func.func @transform_0(%arg0: i32) -> (i32, i32, i32) {
    %c0_i32 = arith.constant 0 : i32
    %c0_i32_0 = arith.constant 0 : i32
    %c0_i32_1 = arith.constant 0 : i32
    return %c0_i32, %arg0, %c0_i32_0 : i32, i32, i32
  }
  func.func @transform_1(%arg0: i32) -> (i32, i32) {
    %c0_i32 = arith.constant 0 : i32
    %c0_i32_0 = arith.constant 0 : i32
    %c0_i32_1 = arith.constant 0 : i32
    return %c0_i32, %c0_i32_0 : i32, i32
  }
  func.func @transform_2(%arg0: i32) -> i32 {
    %c0_i32 = arith.constant 0 : i32
    %c0_i32_0 = arith.constant 0 : i32
    return %c0_i32 : i32
  }
  func.func @transform_3(%arg0: i32) -> (i32, i32, i32) {
    %c0_i32 = arith.constant 0 : i32
    %c0_i32_0 = arith.constant 0 : i32
    %c0_i32_1 = arith.constant 0 : i32
    %c0_i32_2 = arith.constant 0 : i32
    return %c0_i32, %c0_i32_0, %c0_i32_1 : i32, i32, i32
  }
  func.func @transform_4(%arg0: i32) -> (i32, i32) {
    %c0_i32 = arith.constant 0 : i32
    %c0_i32_0 = arith.constant 0 : i32
    %c0_i32_1 = arith.constant 0 : i32
    return %c0_i32, %c0_i32_0 : i32, i32
  }
  func.func @transform_5(%arg0: i32) -> (i32, i32) {
    %c0_i32 = arith.constant 0 : i32
    %c0_i32_0 = arith.constant 0 : i32
    %c0_i32_1 = arith.constant 0 : i32
    return %c0_i32, %c0_i32_0 : i32, i32
  }
  func.func @transform_6(%arg0: i32) -> (i32, i32) {
    %c0_i32 = arith.constant 0 : i32
    %c0_i32_0 = arith.constant 0 : i32
    %c0_i32_1 = arith.constant 0 : i32
    return %c0_i32, %c0_i32_0 : i32, i32
  }
  func.func @transform_7(%arg0: i32) -> (i32, i32) {
    %c0_i32 = arith.constant 0 : i32
    %c0_i32_0 = arith.constant 0 : i32
    %c0_i32_1 = arith.constant 0 : i32
    return %c0_i32, %c0_i32_0 : i32, i32
  }
  func.func @transform_8(%arg0: i32) -> (i32, i32) {
    %c0_i32 = arith.constant 0 : i32
    %c0_i32_0 = arith.constant 0 : i32
    %c0_i32_1 = arith.constant 0 : i32
    return %c0_i32, %c0_i32_0 : i32, i32
  }
  func.func @transform_9(%arg0: i32) -> (i32, i32) {
    %c0_i32 = arith.constant 0 : i32
    %c0_i32_0 = arith.constant 0 : i32
    return %arg0, %c0_i32 : i32, i32
  }
}

</mosaic_0001>

<llo_original>
// kernel: simple_convnet_forward.1
$region0: #{simple_convnet_forward.1}
  #allocation0 [shape = 'u32[]', space=smem, size = 0x4, offset = 0x4, fixed_abs, tag = 'smem constant byte address 0x4 - core index']
  #allocation1 [shape = 'u32[144,128]{1,0:T(1,128)}', space=vmem, size = 0x12000, scoped, tag = 'internal scratch']
  #allocation2 [shape = 'f32[2,8,676]{2,1,0:T(8,128)}', space=vmem, size = 0xc000, scoped, tag = 'scratch operand']
  %s0 = inlined_call_operand.vmem [shape: f32[9,8,676], index: 0, kind: input, shape index: {}]
  %s1 = inlined_call_operand.hbm [shape: f32[10,9], index: 1, kind: input, shape index: {}]
  %s2 = inlined_call_operand.hbm [shape: f32[10], index: 2, kind: input, shape index: {}]
  %s3 = inlined_call_operand.hbm [shape: f32[10,676,128], index: 3, kind: input, shape index: {}]
  %s4 = inlined_call_operand.hbm [shape: f32[1,128], index: 4, kind: input, shape index: {}]
  %s5 = inlined_call_operand.hbm [shape: f32[128,128], index: 5, kind: input, shape index: {}]
  %s6 = inlined_call_operand.hbm [shape: f32[1,128], index: 6, kind: input, shape index: {}]
  %s7 = inlined_call_operand.hbm [shape: f32[128,128], index: 7, kind: input, shape index: {}]
  %s8 = inlined_call_operand.hbm [shape: f32[1,128], index: 8, kind: input, shape index: {}]
  %s9 = inlined_call_operand.vmem [shape: f32[8,128], index: 9, kind: output, shape index: {}]
  %s10 = sld [smem:[#allocation0]]
  $region78: #{simple_convnet_forward.1} parent=0
    _
  %s12 = ssub.s32 1, %s10
  %s13 = scalar_select 0, %s12, %s10
  $region1: #{simple_convnet_forward.1} parent=0
    #allocation3 [shape = 'u8[8192]{0}', space=smem, size = 0x2000, scoped, tag = 'input window, operand 1, single buffered']
    #allocation4 [shape = 's32[1]{0}', space=sflag, size = 0x4, scoped, tag = 'scoped memory for simple_convnet_forward.1']
    #allocation5 [shape = 's32[1]{0}', space=sflag, size = 0x4, scoped, tag = 'scoped memory for simple_convnet_forward.1']
    #allocation6 [shape = 'u8[512]{0}', space=smem, size = 0x200, scoped, tag = 'input window, operand 2, single buffered']
    #allocation7 [shape = 's32[1]{0}', space=sflag, size = 0x4, scoped, tag = 'scoped memory for simple_convnet_forward.1']
    #allocation8 [shape = 'u8[3481600]{0}', space=vmem, size = 0x352000, scoped, tag = 'input window, operand 3, single buffered']
    #allocation9 [shape = 'u8[512]{0}', space=vmem, size = 0x400, scoped, tag = 'input window, operand 4, single buffered']
    #allocation10 [shape = 's32[1]{0}', space=sflag, size = 0x4, scoped, tag = 'scoped memory for simple_convnet_forward.1']
    #allocation11 [shape = 'u8[65536]{0}', space=vmem, size = 0x10000, scoped, tag = 'input window, operand 5, single buffered']
    #allocation12 [shape = 'u8[512]{0}', space=vmem, size = 0x400, scoped, tag = 'input window, operand 6, single buffered']
    #allocation13 [shape = 's32[1]{0}', space=sflag, size = 0x4, scoped, tag = 'scoped memory for simple_convnet_forward.1']
    #allocation14 [shape = 'u8[65536]{0}', space=vmem, size = 0x10000, scoped, tag = 'input window, operand 7, single buffered']
    #allocation15 [shape = 'u8[512]{0}', space=vmem, size = 0x400, scoped, tag = 'input window, operand 8, single buffered']
    #allocation16 [shape = 's32[1]{0}', space=sflag, size = 0x4, scoped, tag = 'scoped memory for simple_convnet_forward.1']
    %14 = vsyncpa [#allocation5], 0
    %15 = vsyncpa [#allocation7], 0
    %16 = vsyncpa [#allocation4], 0
    %17 = vsyncpa [#allocation10], 0
    %18 = vsyncpa [#allocation13], 0
    %19 = vsyncpa [#allocation16], 0
    // Predicated region
    $region2: #{simple_convnet_forward.1} parent=1 // pred_check
      _
    $region3: #{simple_convnet_forward.1} parent=1 // pred_check_branch
      %21 = sbr.rel (0) target = $region5
    $region4: #{simple_convnet_forward.1} parent=1 // pred_region
      _
    $region5: #{simple_convnet_forward.1} parent=1 // pred_fallthru
      _
    // Predicated region
    $region6: #{simple_convnet_forward.1} parent=1 // pred_check
      _
    $region7: #{simple_convnet_forward.1} parent=1 // pred_check_branch
      %23 = sbr.rel (0) target = $region9
    $region8: #{simple_convnet_forward.1} parent=1 // pred_region
      %s25 = ssub.s32 256, 256
      %26 = vsyncadd [#allocation5], %s25
      %31 = dma.hbm_to_smem %s1, 256, [#allocation3], [#allocation5], 128, 128, 8
    $region9: #{simple_convnet_forward.1} parent=1 // pred_fallthru
      _
    // Predicated region
    $region10: #{simple_convnet_forward.1} parent=1 // pred_check
      _
    $region11: #{simple_convnet_forward.1} parent=1 // pred_check_branch
      %33 = sbr.rel (0) target = $region13
    $region12: #{simple_convnet_forward.1} parent=1 // pred_region
      %s35 = ssub.s32 16, 16
      %36 = vsyncadd [#allocation7], %s35
      %39 = dma.hbm_to_smem %s2, 16, [#allocation6], [#allocation7]
    $region13: #{simple_convnet_forward.1} parent=1 // pred_fallthru
      _
    // Predicated region
    $region14: #{simple_convnet_forward.1} parent=1 // pred_check
      _
    $region15: #{simple_convnet_forward.1} parent=1 // pred_check_branch
      %41 = sbr.rel (0) target = $region17
    $region16: #{simple_convnet_forward.1} parent=1 // pred_region
      %s43 = ssub.s32 108800, 108800
      %44 = vsyncadd [#allocation4], %s43
      %s45 = sshll.u32 [#allocation8], 4
      %s46 = int_to_ptr.vmem [resolvable:$true] %s45
      %51 = dma.hbm_to_vmem [thread:$0]  %s3, 108800, %s46, [#allocation4], 128, 128, 8
    $region17: #{simple_convnet_forward.1} parent=1 // pred_fallthru
      _
    // Predicated region
    $region18: #{simple_convnet_forward.1} parent=1 // pred_check
      _
    $region19: #{simple_convnet_forward.1} parent=1 // pred_check_branch
      %53 = sbr.rel (0) target = $region21
    $region20: #{simple_convnet_forward.1} parent=1 // pred_region
      %s55 = ssub.s32 16, 16
      %56 = vsyncadd [#allocation10], %s55
      %s58 = sshll.u32 [#allocation9], 4
      %s59 = int_to_ptr.vmem [resolvable:$true] %s58
      %61 = dma.hbm_to_vmem [thread:$0]  %s4, 16, %s59, [#allocation10]
    $region21: #{simple_convnet_forward.1} parent=1 // pred_fallthru
      _
    // Predicated region
    $region22: #{simple_convnet_forward.1} parent=1 // pred_check
      _
    $region23: #{simple_convnet_forward.1} parent=1 // pred_check_branch
      %63 = sbr.rel (0) target = $region25
    $region24: #{simple_convnet_forward.1} parent=1 // pred_region
      %s65 = ssub.s32 2048, 2048
      %66 = vsyncadd [#allocation10], %s65
      %s67 = sshll.u32 [#allocation11], 4
      %s68 = int_to_ptr.vmem [resolvable:$true] %s67
      %73 = dma.hbm_to_vmem [thread:$0]  %s5, 2048, %s68, [#allocation10], 128, 128, 8
    $region25: #{simple_convnet_forward.1} parent=1 // pred_fallthru
      _
    // Predicated region
    $region26: #{simple_convnet_forward.1} parent=1 // pred_check
      _
    $region27: #{simple_convnet_forward.1} parent=1 // pred_check_branch
      %75 = sbr.rel (0) target = $region29
    $region28: #{simple_convnet_forward.1} parent=1 // pred_region
      %s77 = ssub.s32 16, 16
      %78 = vsyncadd [#allocation13], %s77
      %s80 = sshll.u32 [#allocation12], 4
      %s81 = int_to_ptr.vmem [resolvable:$true] %s80
      %83 = dma.hbm_to_vmem [thread:$0]  %s6, 16, %s81, [#allocation13]
    $region29: #{simple_convnet_forward.1} parent=1 // pred_fallthru
      _
    // Predicated region
    $region30: #{simple_convnet_forward.1} parent=1 // pred_check
      _
    $region31: #{simple_convnet_forward.1} parent=1 // pred_check_branch
      %85 = sbr.rel (0) target = $region33
    $region32: #{simple_convnet_forward.1} parent=1 // pred_region
      %s87 = ssub.s32 2048, 2048
      %88 = vsyncadd [#allocation13], %s87
      %s89 = sshll.u32 [#allocation14], 4
      %s90 = int_to_ptr.vmem [resolvable:$true] %s89
      %95 = dma.hbm_to_vmem [thread:$0]  %s7, 2048, %s90, [#allocation13], 128, 128, 8
    $region33: #{simple_convnet_forward.1} parent=1 // pred_fallthru
      _
    // Predicated region
    $region34: #{simple_convnet_forward.1} parent=1 // pred_check
      _
    $region35: #{simple_convnet_forward.1} parent=1 // pred_check_branch
      %97 = sbr.rel (0) target = $region37
    $region36: #{simple_convnet_forward.1} parent=1 // pred_region
      %s99 = ssub.s32 16, 16
      %100 = vsyncadd [#allocation16], %s99
      %s102 = sshll.u32 [#allocation15], 4
      %s103 = int_to_ptr.vmem [resolvable:$true] %s102
      %105 = dma.hbm_to_vmem [thread:$0]  %s8, 16, %s103, [#allocation16]
    $region37: #{simple_convnet_forward.1} parent=1 // pred_fallthru
      _
    // Predicated region
    $region38: #{simple_convnet_forward.1} parent=1 // pred_check
      _
    $region39: #{simple_convnet_forward.1} parent=1 // pred_check_branch
      %107 = sbr.rel (0) target = $region41
    $region40: #{simple_convnet_forward.1} parent=1 // pred_region
      %108 = dma.done [#allocation5], 256
    $region41: #{simple_convnet_forward.1} parent=1 // pred_fallthru
      _
    // Predicated region
    $region42: #{simple_convnet_forward.1} parent=1 // pred_check
      _
    $region43: #{simple_convnet_forward.1} parent=1 // pred_check_branch
      %110 = sbr.rel (0) target = $region45
    $region44: #{simple_convnet_forward.1} parent=1 // pred_region
      %111 = dma.done [#allocation7], 16
    $region45: #{simple_convnet_forward.1} parent=1 // pred_fallthru
      _
    // Predicated region
    $region46: #{simple_convnet_forward.1} parent=1 // pred_check
      _
    $region47: #{simple_convnet_forward.1} parent=1 // pred_check_branch
      %113 = sbr.rel (0) target = $region49
    $region48: #{simple_convnet_forward.1} parent=1 // pred_region
      %114 = dma.done [#allocation4], 108800
    $region49: #{simple_convnet_forward.1} parent=1 // pred_fallthru
      _
    // Predicated region
    $region50: #{simple_convnet_forward.1} parent=1 // pred_check
      _
    $region51: #{simple_convnet_forward.1} parent=1 // pred_check_branch
      %116 = sbr.rel (0) target = $region53
    $region52: #{simple_convnet_forward.1} parent=1 // pred_region
      %117 = dma.done [#allocation10], 16
    $region53: #{simple_convnet_forward.1} parent=1 // pred_fallthru
      _
    // Predicated region
    $region54: #{simple_convnet_forward.1} parent=1 // pred_check
      _
    $region55: #{simple_convnet_forward.1} parent=1 // pred_check_branch
      %119 = sbr.rel (0) target = $region57
    $region56: #{simple_convnet_forward.1} parent=1 // pred_region
      %120 = dma.done [#allocation10], 2048
    $region57: #{simple_convnet_forward.1} parent=1 // pred_fallthru
      _
    // Predicated region
    $region58: #{simple_convnet_forward.1} parent=1 // pred_check
      _
    $region59: #{simple_convnet_forward.1} parent=1 // pred_check_branch
      %122 = sbr.rel (0) target = $region61
    $region60: #{simple_convnet_forward.1} parent=1 // pred_region
      %123 = dma.done [#allocation13], 16
    $region61: #{simple_convnet_forward.1} parent=1 // pred_fallthru
      _
    // Predicated region
    $region62: #{simple_convnet_forward.1} parent=1 // pred_check
      _
    $region63: #{simple_convnet_forward.1} parent=1 // pred_check_branch
      %125 = sbr.rel (0) target = $region65
    $region64: #{simple_convnet_forward.1} parent=1 // pred_region
      %126 = dma.done [#allocation13], 2048
    $region65: #{simple_convnet_forward.1} parent=1 // pred_fallthru
      _
    // Predicated region
    $region66: #{simple_convnet_forward.1} parent=1 // pred_check
      _
    $region67: #{simple_convnet_forward.1} parent=1 // pred_check_branch
      %128 = sbr.rel (0) target = $region69
    $region68: #{simple_convnet_forward.1} parent=1 // pred_region
      %129 = dma.done [#allocation16], 16
    $region69: #{simple_convnet_forward.1} parent=1 // pred_fallthru
      _
    %130 = sfence
    %s131 = smul.u32 0, 6
    %s132 = smul.addr %s131, 8
    %s133 = scalar_lea.vmem %s0, %s132
    %v134 = vld [vmem:[%s133] sm:$0xff]
    %v135 = vld [vmem:[%s133 + $0x8] sm:$0xff]
    %v136 = vld [vmem:[%s133 + $0x10] sm:$0xff]
    %v137 = vld [vmem:[%s133 + $0x18] sm:$0xff]
    %v138 = vld [vmem:[%s133 + $0x20] sm:$0xff]
    %v139 = vld [vmem:[%s133 + $0x28] sm:$0xff]
    %s140 = sld [smem:[#allocation3]]
    %v141 = vstv %s140
    %v142 = vmul.f32 %v134, %v141
    %v143 = vmul.f32 %v135, %v141
    %v144 = vmul.f32 %v136, %v141
    %v145 = vmul.f32 %v137, %v141
    %v146 = vmul.f32 %v138, %v141
    %v147 = vmul.f32 %v139, %v141
    %s148 = sadd.s32 %s131, 6
    %s149 = smul.addr %s148, 8
    %s150 = scalar_lea.vmem %s0, %s149
    %v151 = vld [vmem:[%s150] sm:$0xff]
    %v152 = vld [vmem:[%s150 + $0x8] sm:$0xff]
    %v153 = vld [vmem:[%s150 + $0x10] sm:$0xff]
    %v154 = vld [vmem:[%s150 + $0x18] sm:$0xff]
    %v155 = vld [vmem:[%s150 + $0x20] sm:$0xff]
    %v156 = vld [vmem:[%s150 + $0x28] sm:$0xff]
    %s157 = sld [smem:[#allocation3 + $0x1]]
    %v158 = vstv %s157
    %v159 = vmul.f32 %v151, %v158
    %v160 = vmul.f32 %v152, %v158
    %v161 = vmul.f32 %v153, %v158
    %v162 = vmul.f32 %v154, %v158
    %v163 = vmul.f32 %v155, %v158
    %v164 = vmul.f32 %v156, %v158
    %v165 = vadd.f32 %v142, %v159
    %v166 = vadd.f32 %v143, %v160
    %v167 = vadd.f32 %v144, %v161
    %v168 = vadd.f32 %v145, %v162
    %v169 = vadd.f32 %v146, %v163
    %v170 = vadd.f32 %v147, %v164
    %s171 = sadd.s32 %s131, 12
    %s172 = smul.addr %s171, 8
    %s173 = scalar_lea.vmem %s0, %s172
    %v174 = vld [vmem:[%s173] sm:$0xff]
    %v175 = vld [vmem:[%s173 + $0x8] sm:$0xff]
    %v176 = vld [vmem:[%s173 + $0x10] sm:$0xff]
    %v177 = vld [vmem:[%s173 + $0x18] sm:$0xff]
    %v178 = vld [vmem:[%s173 + $0x20] sm:$0xff]
    %v179 = vld [vmem:[%s173 + $0x28] sm:$0xff]
    %s180 = sld [smem:[#allocation3 + $0x2]]
    %v181 = vstv %s180
    %v182 = vmul.f32 %v174, %v181
    %v183 = vmul.f32 %v175, %v181
    %v184 = vmul.f32 %v176, %v181
    %v185 = vmul.f32 %v177, %v181
    %v186 = vmul.f32 %v178, %v181
    %v187 = vmul.f32 %v179, %v181
    %v188 = vadd.f32 %v165, %v182
    %v189 = vadd.f32 %v166, %v183
    %v190 = vadd.f32 %v167, %v184
    %v191 = vadd.f32 %v168, %v185
    %v192 = vadd.f32 %v169, %v186
    %v193 = vadd.f32 %v170, %v187
    %s194 = sadd.s32 %s131, 18
    %s195 = smul.addr %s194, 8
    %s196 = scalar_lea.vmem %s0, %s195
    %v197 = vld [vmem:[%s196] sm:$0xff]
    %v198 = vld [vmem:[%s196 + $0x8] sm:$0xff]
    %v199 = vld [vmem:[%s196 + $0x10] sm:$0xff]
    %v200 = vld [vmem:[%s196 + $0x18] sm:$0xff]
    %v201 = vld [vmem:[%s196 + $0x20] sm:$0xff]
    %v202 = vld [vmem:[%s196 + $0x28] sm:$0xff]
    %s203 = sld [smem:[#allocation3 + $0x3]]
    %v204 = vstv %s203
    %v205 = vmul.f32 %v197, %v204
    %v206 = vmul.f32 %v198, %v204
    %v207 = vmul.f32 %v199, %v204
    %v208 = vmul.f32 %v200, %v204
    %v209 = vmul.f32 %v201, %v204
    %v210 = vmul.f32 %v202, %v204
    %v211 = vadd.f32 %v188, %v205
    %v212 = vadd.f32 %v189, %v206
    %v213 = vadd.f32 %v190, %v207
    %v214 = vadd.f32 %v191, %v208
    %v215 = vadd.f32 %v192, %v209
    %v216 = vadd.f32 %v193, %v210
    %s217 = sadd.s32 %s131, 24
    %s218 = smul.addr %s217, 8
    %s219 = scalar_lea.vmem %s0, %s218
    %v220 = vld [vmem:[%s219] sm:$0xff]
    %v221 = vld [vmem:[%s219 + $0x8] sm:$0xff]
    %v222 = vld [vmem:[%s219 + $0x10] sm:$0xff]
    %v223 = vld [vmem:[%s219 + $0x18] sm:$0xff]
    %v224 = vld [vmem:[%s219 + $0x20] sm:$0xff]
    %v225 = vld [vmem:[%s219 + $0x28] sm:$0xff]
    %s226 = sld [smem:[#allocation3 + $0x4]]
    %v227 = vstv %s226
    %v228 = vmul.f32 %v220, %v227
    %v229 = vmul.f32 %v221, %v227
    %v230 = vmul.f32 %v222, %v227
    %v231 = vmul.f32 %v223, %v227
    %v232 = vmul.f32 %v224, %v227
    %v233 = vmul.f32 %v225, %v227
    %v234 = vadd.f32 %v211, %v228
    %v235 = vadd.f32 %v212, %v229
    %v236 = vadd.f32 %v213, %v230
    %v237 = vadd.f32 %v214, %v231
    %v238 = vadd.f32 %v215, %v232
    %v239 = vadd.f32 %v216, %v233
    %s240 = sadd.s32 %s131, 30
    %s241 = smul.addr %s240, 8
    %s242 = scalar_lea.vmem %s0, %s241
    %v243 = vld [vmem:[%s242] sm:$0xff]
    %v244 = vld [vmem:[%s242 + $0x8] sm:$0xff]
    %v245 = vld [vmem:[%s242 + $0x10] sm:$0xff]
    %v246 = vld [vmem:[%s242 + $0x18] sm:$0xff]
    %v247 = vld [vmem:[%s242 + $0x20] sm:$0xff]
    %v248 = vld [vmem:[%s242 + $0x28] sm:$0xff]
    %s249 = sld [smem:[#allocation3 + $0x5]]
    %v250 = vstv %s249
    %v251 = vmul.f32 %v243, %v250
    %v252 = vmul.f32 %v244, %v250
    %v253 = vmul.f32 %v245, %v250
    %v254 = vmul.f32 %v246, %v250
    %v255 = vmul.f32 %v247, %v250
    %v256 = vmul.f32 %v248, %v250
    %v257 = vadd.f32 %v234, %v251
    %v258 = vadd.f32 %v235, %v252
    %v259 = vadd.f32 %v236, %v253
    %v260 = vadd.f32 %v237, %v254
    %v261 = vadd.f32 %v238, %v255
    %v262 = vadd.f32 %v239, %v256
    %s263 = sadd.s32 %s131, 36
    %s264 = smul.addr %s263, 8
    %s265 = scalar_lea.vmem %s0, %s264
    %v266 = vld [vmem:[%s265] sm:$0xff]
    %v267 = vld [vmem:[%s265 + $0x8] sm:$0xff]
    %v268 = vld [vmem:[%s265 + $0x10] sm:$0xff]
    %v269 = vld [vmem:[%s265 + $0x18] sm:$0xff]
    %v270 = vld [vmem:[%s265 + $0x20] sm:$0xff]
    %v271 = vld [vmem:[%s265 + $0x28] sm:$0xff]
    %s272 = sld [smem:[#allocation3 + $0x6]]
    %v273 = vstv %s272
    %v274 = vmul.f32 %v266, %v273
    %v275 = vmul.f32 %v267, %v273
    %v276 = vmul.f32 %v268, %v273
    %v277 = vmul.f32 %v269, %v273
    %v278 = vmul.f32 %v270, %v273
    %v279 = vmul.f32 %v271, %v273
    %v280 = vadd.f32 %v257, %v274
    %v281 = vadd.f32 %v258, %v275
    %v282 = vadd.f32 %v259, %v276
    %v283 = vadd.f32 %v260, %v277
    %v284 = vadd.f32 %v261, %v278
    %v285 = vadd.f32 %v262, %v279
    %s286 = sadd.s32 %s131, 42
    %s287 = smul.addr %s286, 8
    %s288 = scalar_lea.vmem %s0, %s287
    %v289 = vld [vmem:[%s288] sm:$0xff]
    %v290 = vld [vmem:[%s288 + $0x8] sm:$0xff]
    %v291 = vld [vmem:[%s288 + $0x10] sm:$0xff]
    %v292 = vld [vmem:[%s288 + $0x18] sm:$0xff]
    %v293 = vld [vmem:[%s288 + $0x20] sm:$0xff]
    %v294 = vld [vmem:[%s288 + $0x28] sm:$0xff]
    %s295 = sld [smem:[#allocation3 + $0x7]]
    %v296 = vstv %s295
    %v297 = vmul.f32 %v289, %v296
    %v298 = vmul.f32 %v290, %v296
    %v299 = vmul.f32 %v291, %v296
    %v300 = vmul.f32 %v292, %v296
    %v301 = vmul.f32 %v293, %v296
    %v302 = vmul.f32 %v294, %v296
    %v303 = vadd.f32 %v280, %v297
    %v304 = vadd.f32 %v281, %v298
    %v305 = vadd.f32 %v282, %v299
    %v306 = vadd.f32 %v283, %v300
    %v307 = vadd.f32 %v284, %v301
    %v308 = vadd.f32 %v285, %v302
    %s309 = sadd.s32 %s131, 48
    %s310 = smul.addr %s309, 8
    %s311 = scalar_lea.vmem %s0, %s310
    %v312 = vld [vmem:[%s311] sm:$0xff]
    %v313 = vld [vmem:[%s311 + $0x8] sm:$0xff]
    %v314 = vld [vmem:[%s311 + $0x10] sm:$0xff]
    %v315 = vld [vmem:[%s311 + $0x18] sm:$0xff]
    %v316 = vld [vmem:[%s311 + $0x20] sm:$0xff]
    %v317 = vld [vmem:[%s311 + $0x28] sm:$0xff]
    %s318 = sld [smem:[#allocation3 + $0x8]]
    %v319 = vstv %s318
    %v320 = vmul.f32 %v312, %v319
    %v321 = vmul.f32 %v313, %v319
    %v322 = vmul.f32 %v314, %v319
    %v323 = vmul.f32 %v315, %v319
    %v324 = vmul.f32 %v316, %v319
    %v325 = vmul.f32 %v317, %v319
    %v326 = vadd.f32 %v303, %v320
    %v327 = vadd.f32 %v304, %v321
    %v328 = vadd.f32 %v305, %v322
    %v329 = vadd.f32 %v306, %v323
    %v330 = vadd.f32 %v307, %v324
    %v331 = vadd.f32 %v308, %v325
    %s332 = sld [smem:[#allocation6]]
    %v333 = vstv %s332
    %v334 = vadd.f32 %v326, %v333
    %v335 = vadd.f32 %v327, %v333
    %v336 = vadd.f32 %v328, %v333
    %v337 = vadd.f32 %v329, %v333
    %v338 = vadd.f32 %v330, %v333
    %v339 = vadd.f32 %v331, %v333
    %v340 = vmax.f32 %v334, 0.0
    %v341 = vmax.f32 %v335, 0.0
    %v342 = vmax.f32 %v336, 0.0
    %v343 = vmax.f32 %v337, 0.0
    %v344 = vmax.f32 %v338, 0.0
    %v345 = vmax.f32 %v339, 0.0
    %s346 = smul.addr %s131, 8
    %s347 = scalar_lea.vmem [#allocation2], %s346
    %348 = vst [vmem:[%s347] sm:$0xff] %v340
    %349 = vst [vmem:[%s347 + $0x8] sm:$0xff] %v341
    %350 = vst [vmem:[%s347 + $0x10] sm:$0xff] %v342
    %351 = vst [vmem:[%s347 + $0x18] sm:$0xff] %v343
    %352 = vst [vmem:[%s347 + $0x20] sm:$0xff] %v344
    %vm353 = vcmask 293888
    %354 = vst.msk [vmem:[%s347 + $0x28] sm:$0xff] %vm353, %v345
    %v355 = vld [vmem:[#allocation2] sm:$0xff]
    %v356 = vld [vmem:[#allocation2 + $0x8] sm:$0xff]
    %v357 = vld [vmem:[#allocation2 + $0x10] sm:$0xff]
    %v358 = vld [vmem:[#allocation2 + $0x18] sm:$0xff]
    %v359 = vld [vmem:[#allocation2 + $0x20] sm:$0xff]
    %v360 = vld [vmem:[#allocation2 + $0x28] sm:$0xff]
    %v361 = vld [vmem:[#allocation8] sm:$0xff]
    %v362 = vld [vmem:[#allocation8 + $0x8] sm:$0xff]
    %v363 = vld [vmem:[#allocation8 + $0x10] sm:$0xff]
    %v364 = vld [vmem:[#allocation8 + $0x18] sm:$0xff]
    %v365 = vld [vmem:[#allocation8 + $0x20] sm:$0xff]
    %v366 = vld [vmem:[#allocation8 + $0x28] sm:$0xff]
    %v367 = vld [vmem:[#allocation8 + $0x30] sm:$0xff]
    %v368 = vld [vmem:[#allocation8 + $0x38] sm:$0xff]
    %v369 = vld [vmem:[#allocation8 + $0x40] sm:$0xff]
    %v370 = vld [vmem:[#allocation8 + $0x48] sm:$0xff]
    %v371 = vld [vmem:[#allocation8 + $0x50] sm:$0xff]
    %v372 = vld [vmem:[#allocation8 + $0x58] sm:$0xff]
    %v373 = vld [vmem:[#allocation8 + $0x60] sm:$0xff]
    %v374 = vld [vmem:[#allocation8 + $0x68] sm:$0xff]
    %v375 = vld [vmem:[#allocation8 + $0x70] sm:$0xff]
    %v376 = vld [vmem:[#allocation8 + $0x78] sm:$0xff]
    %v377 = vld [vmem:[#allocation8 + $0x80] sm:$0xff]
    %v378 = vld [vmem:[#allocation8 + $0x88] sm:$0xff]
    %v379 = vld [vmem:[#allocation8 + $0x90] sm:$0xff]
    %v380 = vld [vmem:[#allocation8 + $0x98] sm:$0xff]
    %v381 = vld [vmem:[#allocation8 + $0xa0] sm:$0xff]
    %v382 = vld [vmem:[#allocation8 + $0xa8] sm:$0xff]
    %v383 = vld [vmem:[#allocation8 + $0xb0] sm:$0xff]
    %v384 = vld [vmem:[#allocation8 + $0xb8] sm:$0xff]
    %v385 = vld [vmem:[#allocation8 + $0xc0] sm:$0xff]
    %v386 = vld [vmem:[#allocation8 + $0xc8] sm:$0xff]
    %v387 = vld [vmem:[#allocation8 + $0xd0] sm:$0xff]
    %v388 = vld [vmem:[#allocation8 + $0xd8] sm:$0xff]
    %v389 = vld [vmem:[#allocation8 + $0xe0] sm:$0xff]
    %v390 = vld [vmem:[#allocation8 + $0xe8] sm:$0xff]
    %v391 = vld [vmem:[#allocation8 + $0xf0] sm:$0xff]
    %v392 = vld [vmem:[#allocation8 + $0xf8] sm:$0xff]
    %v393 = vld [vmem:[#allocation8 + $0x100] sm:$0xff]
    %v394 = vld [vmem:[#allocation8 + $0x108] sm:$0xff]
    %v395 = vld [vmem:[#allocation8 + $0x110] sm:$0xff]
    %v396 = vld [vmem:[#allocation8 + $0x118] sm:$0xff]
    %v397 = vld [vmem:[#allocation8 + $0x120] sm:$0xff]
    %v398 = vld [vmem:[#allocation8 + $0x128] sm:$0xff]
    %v399 = vld [vmem:[#allocation8 + $0x130] sm:$0xff]
    %v400 = vld [vmem:[#allocation8 + $0x138] sm:$0xff]
    %v401 = vld [vmem:[#allocation8 + $0x140] sm:$0xff]
    %v402 = vld [vmem:[#allocation8 + $0x148] sm:$0xff]
    %v403 = vld [vmem:[#allocation8 + $0x150] sm:$0xff]
    %v404 = vld [vmem:[#allocation8 + $0x158] sm:$0xff]
    %v405 = vld [vmem:[#allocation8 + $0x160] sm:$0xff]
    %v406 = vld [vmem:[#allocation8 + $0x168] sm:$0xff]
    %v407 = vld [vmem:[#allocation8 + $0x170] sm:$0xff]
    %v408 = vld [vmem:[#allocation8 + $0x178] sm:$0xff]
    %v409 = vld [vmem:[#allocation8 + $0x180] sm:$0xff]
    %v410 = vld [vmem:[#allocation8 + $0x188] sm:$0xff]
    %v411 = vld [vmem:[#allocation8 + $0x190] sm:$0xff]
    %v412 = vld [vmem:[#allocation8 + $0x198] sm:$0xff]
    %v413 = vld [vmem:[#allocation8 + $0x1a0] sm:$0xff]
    %v414 = vld [vmem:[#allocation8 + $0x1a8] sm:$0xff]
    %v415 = vld [vmem:[#allocation8 + $0x1b0] sm:$0xff]
    %v416 = vld [vmem:[#allocation8 + $0x1b8] sm:$0xff]
    %v417 = vld [vmem:[#allocation8 + $0x1c0] sm:$0xff]
    %v418 = vld [vmem:[#allocation8 + $0x1c8] sm:$0xff]
    %v419 = vld [vmem:[#allocation8 + $0x1d0] sm:$0xff]
    %v420 = vld [vmem:[#allocation8 + $0x1d8] sm:$0xff]
    %v421 = vld [vmem:[#allocation8 + $0x1e0] sm:$0xff]
    %v422 = vld [vmem:[#allocation8 + $0x1e8] sm:$0xff]
    %v423 = vld [vmem:[#allocation8 + $0x1f0] sm:$0xff]
    %v424 = vld [vmem:[#allocation8 + $0x1f8] sm:$0xff]
    %v425 = vld [vmem:[#allocation8 + $0x200] sm:$0xff]
    %v426 = vld [vmem:[#allocation8 + $0x208] sm:$0xff]
    %v427 = vld [vmem:[#allocation8 + $0x210] sm:$0xff]
    %v428 = vld [vmem:[#allocation8 + $0x218] sm:$0xff]
    %v429 = vld [vmem:[#allocation8 + $0x220] sm:$0xff]
    %v430 = vld [vmem:[#allocation8 + $0x228] sm:$0xff]
    %v431 = vld [vmem:[#allocation8 + $0x230] sm:$0xff]
    %v432 = vld [vmem:[#allocation8 + $0x238] sm:$0xff]
    %v433 = vld [vmem:[#allocation8 + $0x240] sm:$0xff]
    %v434 = vld [vmem:[#allocation8 + $0x248] sm:$0xff]
    %v435 = vld [vmem:[#allocation8 + $0x250] sm:$0xff]
    %v436 = vld [vmem:[#allocation8 + $0x258] sm:$0xff]
    %v437 = vld [vmem:[#allocation8 + $0x260] sm:$0xff]
    %v438 = vld [vmem:[#allocation8 + $0x268] sm:$0xff]
    %v439 = vld [vmem:[#allocation8 + $0x270] sm:$0xff]
    %v440 = vld [vmem:[#allocation8 + $0x278] sm:$0xff]
    %v441 = vld [vmem:[#allocation8 + $0x280] sm:$0xff]
    %v442 = vld [vmem:[#allocation8 + $0x288] sm:$0xff]
    %v443 = vld [vmem:[#allocation8 + $0x290] sm:$0xff]
    %v444 = vld [vmem:[#allocation8 + $0x298] sm:$0xff]
    %v445 = vld [vmem:[#allocation8 + $0x2a0] sm:$0xf]
    %v446 = vld [vmem:[%s133] sm:$0xff]
    %v447 = vld [vmem:[%s133 + $0x8] sm:$0xff]
    %v448 = vld [vmem:[%s133 + $0x10] sm:$0xff]
    %v449 = vld [vmem:[%s133 + $0x18] sm:$0xff]
    %v450 = vld [vmem:[%s133 + $0x20] sm:$0xff]
    %v451 = vld [vmem:[%s133 + $0x28] sm:$0xff]
    %s452 = sld [smem:[#allocation3 + $0x80]]
    %v453 = vstv %s452
    %v454 = vmul.f32 %v446, %v453
    %v455 = vmul.f32 %v447, %v453
    %v456 = vmul.f32 %v448, %v453
    %v457 = vmul.f32 %v449, %v453
    %v458 = vmul.f32 %v450, %v453
    %v459 = vmul.f32 %v451, %v453
    %v460 = vld [vmem:[%s150] sm:$0xff]
    %v461 = vld [vmem:[%s150 + $0x8] sm:$0xff]
    %v462 = vld [vmem:[%s150 + $0x10] sm:$0xff]
    %v463 = vld [vmem:[%s150 + $0x18] sm:$0xff]
    %v464 = vld [vmem:[%s150 + $0x20] sm:$0xff]
    %v465 = vld [vmem:[%s150 + $0x28] sm:$0xff]
    %s466 = sld [smem:[#allocation3 + $0x81]]
    %v467 = vstv %s466
    %v468 = vmul.f32 %v460, %v467
    %v469 = vmul.f32 %v461, %v467
    %v470 = vmul.f32 %v462, %v467
    %v471 = vmul.f32 %v463, %v467
    %v472 = vmul.f32 %v464, %v467
    %v473 = vmul.f32 %v465, %v467
    %v474 = vadd.f32 %v454, %v468
    %v475 = vadd.f32 %v455, %v469
    %v476 = vadd.f32 %v456, %v470
    %v477 = vadd.f32 %v457, %v471
    %v478 = vadd.f32 %v458, %v472
    %v479 = vadd.f32 %v459, %v473
    %v480 = vld [vmem:[%s173] sm:$0xff]
    %v481 = vld [vmem:[%s173 + $0x8] sm:$0xff]
    %v482 = vld [vmem:[%s173 + $0x10] sm:$0xff]
    %v483 = vld [vmem:[%s173 + $0x18] sm:$0xff]
    %v484 = vld [vmem:[%s173 + $0x20] sm:$0xff]
    %v485 = vld [vmem:[%s173 + $0x28] sm:$0xff]
    %s486 = sld [smem:[#allocation3 + $0x82]]
    %v487 = vstv %s486
    %v488 = vmul.f32 %v480, %v487
    %v489 = vmul.f32 %v481, %v487
    %v490 = vmul.f32 %v482, %v487
    %v491 = vmul.f32 %v483, %v487
    %v492 = vmul.f32 %v484, %v487
    %v493 = vmul.f32 %v485, %v487
    %v494 = vadd.f32 %v474, %v488
    %v495 = vadd.f32 %v475, %v489
    %v496 = vadd.f32 %v476, %v490
    %v497 = vadd.f32 %v477, %v491
    %v498 = vadd.f32 %v478, %v492
    %v499 = vadd.f32 %v479, %v493
    %v500 = vld [vmem:[%s196] sm:$0xff]
    %v501 = vld [vmem:[%s196 + $0x8] sm:$0xff]
    %v502 = vld [vmem:[%s196 + $0x10] sm:$0xff]
    %v503 = vld [vmem:[%s196 + $0x18] sm:$0xff]
    %v504 = vld [vmem:[%s196 + $0x20] sm:$0xff]
    %v505 = vld [vmem:[%s196 + $0x28] sm:$0xff]
    %s506 = sld [smem:[#allocation3 + $0x83]]
    %v507 = vstv %s506
    %v508 = vmul.f32 %v500, %v507
    %v509 = vmul.f32 %v501, %v507
    %v510 = vmul.f32 %v502, %v507
    %v511 = vmul.f32 %v503, %v507
    %v512 = vmul.f32 %v504, %v507
    %v513 = vmul.f32 %v505, %v507
    %v514 = vadd.f32 %v494, %v508
    %v515 = vadd.f32 %v495, %v509
    %v516 = vadd.f32 %v496, %v510
    %v517 = vadd.f32 %v497, %v511
    %v518 = vadd.f32 %v498, %v512
    %v519 = vadd.f32 %v499, %v513
    %v520 = vld [vmem:[%s219] sm:$0xff]
    %v521 = vld [vmem:[%s219 + $0x8] sm:$0xff]
    %v522 = vld [vmem:[%s219 + $0x10] sm:$0xff]
    %v523 = vld [vmem:[%s219 + $0x18] sm:$0xff]
    %v524 = vld [vmem:[%s219 + $0x20] sm:$0xff]
    %v525 = vld [vmem:[%s219 + $0x28] sm:$0xff]
    %s526 = sld [smem:[#allocation3 + $0x84]]
    %v527 = vstv %s526
    %v528 = vmul.f32 %v520, %v527
    %v529 = vmul.f32 %v521, %v527
    %v530 = vmul.f32 %v522, %v527
    %v531 = vmul.f32 %v523, %v527
    %v532 = vmul.f32 %v524, %v527
    %v533 = vmul.f32 %v525, %v527
    %v534 = vadd.f32 %v514, %v528
    %v535 = vadd.f32 %v515, %v529
    %v536 = vadd.f32 %v516, %v530
    %v537 = vadd.f32 %v517, %v531
    %v538 = vadd.f32 %v518, %v532
    %v539 = vadd.f32 %v519, %v533
    %v540 = vld [vmem:[%s242] sm:$0xff]
    %v541 = vld [vmem:[%s242 + $0x8] sm:$0xff]
    %v542 = vld [vmem:[%s242 + $0x10] sm:$0xff]
    %v543 = vld [vmem:[%s242 + $0x18] sm:$0xff]
    %v544 = vld [vmem:[%s242 + $0x20] sm:$0xff]
    %v545 = vld [vmem:[%s242 + $0x28] sm:$0xff]
    %s546 = sld [smem:[#allocation3 + $0x85]]
    %v547 = vstv %s546
    %v548 = vmul.f32 %v540, %v547
    %v549 = vmul.f32 %v541, %v547
    %v550 = vmul.f32 %v542, %v547
    %v551 = vmul.f32 %v543, %v547
    %v552 = vmul.f32 %v544, %v547
    %v553 = vmul.f32 %v545, %v547
    %v554 = vadd.f32 %v534, %v548
    %v555 = vadd.f32 %v535, %v549
    %v556 = vadd.f32 %v536, %v550
    %v557 = vadd.f32 %v537, %v551
    %v558 = vadd.f32 %v538, %v552
    %v559 = vadd.f32 %v539, %v553
    %v560 = vld [vmem:[%s265] sm:$0xff]
    %v561 = vld [vmem:[%s265 + $0x8] sm:$0xff]
    %v562 = vld [vmem:[%s265 + $0x10] sm:$0xff]
    %v563 = vld [vmem:[%s265 + $0x18] sm:$0xff]
    %v564 = vld [vmem:[%s265 + $0x20] sm:$0xff]
    %v565 = vld [vmem:[%s265 + $0x28] sm:$0xff]
    %s566 = sld [smem:[#allocation3 + $0x86]]
    %v567 = vstv %s566
    %v568 = vmul.f32 %v560, %v567
    %v569 = vmul.f32 %v561, %v567
    %v570 = vmul.f32 %v562, %v567
    %v571 = vmul.f32 %v563, %v567
    %v572 = vmul.f32 %v564, %v567
    %v573 = vmul.f32 %v565, %v567
    %v574 = vadd.f32 %v554, %v568
    %v575 = vadd.f32 %v555, %v569
    %v576 = vadd.f32 %v556, %v570
    %v577 = vadd.f32 %v557, %v571
    %v578 = vadd.f32 %v558, %v572
    %v579 = vadd.f32 %v559, %v573
    %v580 = vld [vmem:[%s288] sm:$0xff]
    %v581 = vld [vmem:[%s288 + $0x8] sm:$0xff]
    %v582 = vld [vmem:[%s288 + $0x10] sm:$0xff]
    %v583 = vld [vmem:[%s288 + $0x18] sm:$0xff]
    %v584 = vld [vmem:[%s288 + $0x20] sm:$0xff]
    %v585 = vld [vmem:[%s288 + $0x28] sm:$0xff]
    %s586 = sld [smem:[#allocation3 + $0x87]]
    %v587 = vstv %s586
    %v588 = vmul.f32 %v580, %v587
    %v589 = vmul.f32 %v581, %v587
    %v590 = vmul.f32 %v582, %v587
    %v591 = vmul.f32 %v583, %v587
    %v592 = vmul.f32 %v584, %v587
    %v593 = vmul.f32 %v585, %v587
    %v594 = vadd.f32 %v574, %v588
    %v595 = vadd.f32 %v575, %v589
    %v596 = vadd.f32 %v576, %v590
    %v597 = vadd.f32 %v577, %v591
    %v598 = vadd.f32 %v578, %v592
    %v599 = vadd.f32 %v579, %v593
    %v600 = vld [vmem:[%s311] sm:$0xff]
    %v601 = vld [vmem:[%s311 + $0x8] sm:$0xff]
    %v602 = vld [vmem:[%s311 + $0x10] sm:$0xff]
    %v603 = vld [vmem:[%s311 + $0x18] sm:$0xff]
    %v604 = vld [vmem:[%s311 + $0x20] sm:$0xff]
    %v605 = vld [vmem:[%s311 + $0x28] sm:$0xff]
    %s606 = sld [smem:[#allocation3 + $0x88]]
    %v607 = vstv %s606
    %v608 = vmul.f32 %v600, %v607
    %v609 = vmul.f32 %v601, %v607
    %v610 = vmul.f32 %v602, %v607
    %v611 = vmul.f32 %v603, %v607
    %v612 = vmul.f32 %v604, %v607
    %v613 = vmul.f32 %v605, %v607
    %v614 = vadd.f32 %v594, %v608
    %v615 = vadd.f32 %v595, %v609
    %v616 = vadd.f32 %v596, %v610
    %v617 = vadd.f32 %v597, %v611
    %v618 = vadd.f32 %v598, %v612
    %v619 = vadd.f32 %v599, %v613
    %s620 = sld [smem:[#allocation6 + $0x1]]
    %v621 = vstv %s620
    %v622 = vadd.f32 %v614, %v621
    %v623 = vadd.f32 %v615, %v621
    %v624 = vadd.f32 %v616, %v621
    %v625 = vadd.f32 %v617, %v621
    %v626 = vadd.f32 %v618, %v621
    %v627 = vadd.f32 %v619, %v621
    %v628 = vmax.f32 %v622, 0.0
    %v629 = vmax.f32 %v623, 0.0
    %v630 = vmax.f32 %v624, 0.0
    %v631 = vmax.f32 %v625, 0.0
    %v632 = vmax.f32 %v626, 0.0
    %v633 = vmax.f32 %v627, 0.0
    %s634 = smul.addr %s148, 8
    %s635 = scalar_lea.vmem [#allocation2], %s634
    %636 = vst [vmem:[%s635] sm:$0xff] %v628
    %637 = vst [vmem:[%s635 + $0x8] sm:$0xff] %v629
    %638 = vst [vmem:[%s635 + $0x10] sm:$0xff] %v630
    %639 = vst [vmem:[%s635 + $0x18] sm:$0xff] %v631
    %640 = vst [vmem:[%s635 + $0x20] sm:$0xff] %v632
    %641 = vst.msk [vmem:[%s635 + $0x28] sm:$0xff] %vm353, %v633
    %s642 = scalar_lea.vmem [#allocation2], 48
    %v643 = vld [vmem:[%s642] sm:$0xff]
    %v644 = vld [vmem:[%s642 + $0x8] sm:$0xff]
    %v645 = vld [vmem:[%s642 + $0x10] sm:$0xff]
    %v646 = vld [vmem:[%s642 + $0x18] sm:$0xff]
    %v647 = vld [vmem:[%s642 + $0x20] sm:$0xff]
    %v648 = vld [vmem:[%s642 + $0x28] sm:$0xff]
    %s649 = scalar_lea.vmem [#allocation8], 680
    %v650 = vld [vmem:[%s649] sm:$0xff]
    %v651 = vld [vmem:[%s649 + $0x8] sm:$0xff]
    %v652 = vld [vmem:[%s649 + $0x10] sm:$0xff]
    %v653 = vld [vmem:[%s649 + $0x18] sm:$0xff]
    %v654 = vld [vmem:[%s649 + $0x20] sm:$0xff]
    %v655 = vld [vmem:[%s649 + $0x28] sm:$0xff]
    %v656 = vld [vmem:[%s649 + $0x30] sm:$0xff]
    %v657 = vld [vmem:[%s649 + $0x38] sm:$0xff]
    %v658 = vld [vmem:[%s649 + $0x40] sm:$0xff]
    %v659 = vld [vmem:[%s649 + $0x48] sm:$0xff]
    %v660 = vld [vmem:[%s649 + $0x50] sm:$0xff]
    %v661 = vld [vmem:[%s649 + $0x58] sm:$0xff]
    %v662 = vld [vmem:[%s649 + $0x60] sm:$0xff]
    %v663 = vld [vmem:[%s649 + $0x68] sm:$0xff]
    %v664 = vld [vmem:[%s649 + $0x70] sm:$0xff]
    %v665 = vld [vmem:[%s649 + $0x78] sm:$0xff]
    %v666 = vld [vmem:[%s649 + $0x80] sm:$0xff]
    %v667 = vld [vmem:[%s649 + $0x88] sm:$0xff]
    %v668 = vld [vmem:[%s649 + $0x90] sm:$0xff]
    %v669 = vld [vmem:[%s649 + $0x98] sm:$0xff]
    %v670 = vld [vmem:[%s649 + $0xa0] sm:$0xff]
    %v671 = vld [vmem:[%s649 + $0xa8] sm:$0xff]
    %v672 = vld [vmem:[%s649 + $0xb0] sm:$0xff]
    %v673 = vld [vmem:[%s649 + $0xb8] sm:$0xff]
    %v674 = vld [vmem:[%s649 + $0xc0] sm:$0xff]
    %v675 = vld [vmem:[%s649 + $0xc8] sm:$0xff]
    %v676 = vld [vmem:[%s649 + $0xd0] sm:$0xff]
    %v677 = vld [vmem:[%s649 + $0xd8] sm:$0xff]
    %v678 = vld [vmem:[%s649 + $0xe0] sm:$0xff]
    %v679 = vld [vmem:[%s649 + $0xe8] sm:$0xff]
    %v680 = vld [vmem:[%s649 + $0xf0] sm:$0xff]
    %v681 = vld [vmem:[%s649 + $0xf8] sm:$0xff]
    %v682 = vld [vmem:[%s649 + $0x100] sm:$0xff]
    %v683 = vld [vmem:[%s649 + $0x108] sm:$0xff]
    %v684 = vld [vmem:[%s649 + $0x110] sm:$0xff]
    %v685 = vld [vmem:[%s649 + $0x118] sm:$0xff]
    %v686 = vld [vmem:[%s649 + $0x120] sm:$0xff]
    %v687 = vld [vmem:[%s649 + $0x128] sm:$0xff]
    %v688 = vld [vmem:[%s649 + $0x130] sm:$0xff]
    %v689 = vld [vmem:[%s649 + $0x138] sm:$0xff]
    %v690 = vld [vmem:[%s649 + $0x140] sm:$0xff]
    %v691 = vld [vmem:[%s649 + $0x148] sm:$0xff]
    %v692 = vld [vmem:[%s649 + $0x150] sm:$0xff]
    %v693 = vld [vmem:[%s649 + $0x158] sm:$0xff]
    %v694 = vld [vmem:[%s649 + $0x160] sm:$0xff]
    %v695 = vld [vmem:[%s649 + $0x168] sm:$0xff]
    %v696 = vld [vmem:[%s649 + $0x170] sm:$0xff]
    %v697 = vld [vmem:[%s649 + $0x178] sm:$0xff]
    %v698 = vld [vmem:[%s649 + $0x180] sm:$0xff]
    %v699 = vld [vmem:[%s649 + $0x188] sm:$0xff]
    %v700 = vld [vmem:[%s649 + $0x190] sm:$0xff]
    %v701 = vld [vmem:[%s649 + $0x198] sm:$0xff]
    %v702 = vld [vmem:[%s649 + $0x1a0] sm:$0xff]
    %v703 = vld [vmem:[%s649 + $0x1a8] sm:$0xff]
    %v704 = vld [vmem:[%s649 + $0x1b0] sm:$0xff]
    %v705 = vld [vmem:[%s649 + $0x1b8] sm:$0xff]
    %v706 = vld [vmem:[%s649 + $0x1c0] sm:$0xff]
    %v707 = vld [vmem:[%s649 + $0x1c8] sm:$0xff]
    %v708 = vld [vmem:[%s649 + $0x1d0] sm:$0xff]
    %v709 = vld [vmem:[%s649 + $0x1d8] sm:$0xff]
    %v710 = vld [vmem:[%s649 + $0x1e0] sm:$0xff]
    %v711 = vld [vmem:[%s649 + $0x1e8] sm:$0xff]
    %v712 = vld [vmem:[%s649 + $0x1f0] sm:$0xff]
    %v713 = vld [vmem:[%s649 + $0x1f8] sm:$0xff]
    %v714 = vld [vmem:[%s649 + $0x200] sm:$0xff]
    %v715 = vld [vmem:[%s649 + $0x208] sm:$0xff]
    %v716 = vld [vmem:[%s649 + $0x210] sm:$0xff]
    %v717 = vld [vmem:[%s649 + $0x218] sm:$0xff]
    %v718 = vld [vmem:[%s649 + $0x220] sm:$0xff]
    %v719 = vld [vmem:[%s649 + $0x228] sm:$0xff]
    %v720 = vld [vmem:[%s649 + $0x230] sm:$0xff]
    %v721 = vld [vmem:[%s649 + $0x238] sm:$0xff]
    %v722 = vld [vmem:[%s649 + $0x240] sm:$0xff]
    %v723 = vld [vmem:[%s649 + $0x248] sm:$0xff]
    %v724 = vld [vmem:[%s649 + $0x250] sm:$0xff]
    %v725 = vld [vmem:[%s649 + $0x258] sm:$0xff]
    %v726 = vld [vmem:[%s649 + $0x260] sm:$0xff]
    %v727 = vld [vmem:[%s649 + $0x268] sm:$0xff]
    %v728 = vld [vmem:[%s649 + $0x270] sm:$0xff]
    %v729 = vld [vmem:[%s649 + $0x278] sm:$0xff]
    %v730 = vld [vmem:[%s649 + $0x280] sm:$0xff]
    %v731 = vld [vmem:[%s649 + $0x288] sm:$0xff]
    %v732 = vld [vmem:[%s649 + $0x290] sm:$0xff]
    %v733 = vld [vmem:[%s649 + $0x298] sm:$0xff]
    %v734 = vld [vmem:[%s649 + $0x2a0] sm:$0xf]
    %v736 = vsel %vm353, %v648, 0
    %vm738 = vcmask 1043456
    %v740 = vsel %vm738, %v734, 0
    %742 = vmatprep.subr.mxu0 0.0
    %743 = vmatpush1.msra.mxu0 %v665
    %744 = vmatprep.subr.mxu0 0.0
    %745 = vmatpush1.msra.mxu0 %v664
    %746 = vmatprep.subr.mxu0 0.0
    %747 = vmatpush1.msra.mxu0 %v663
    %748 = vmatprep.subr.mxu0 0.0
    %749 = vmatpush1.msra.mxu0 %v662
    %750 = vmatprep.subr.mxu0 0.0
    %751 = vmatpush1.msra.mxu0 %v661
    %752 = vmatprep.subr.mxu0 0.0
    %753 = vmatpush1.msra.mxu0 %v660
    %754 = vmatprep.subr.mxu0 0.0
    %755 = vmatpush1.msra.mxu0 %v659
    %756 = vmatprep.subr.mxu0 0.0
    %757 = vmatpush1.msra.mxu0 %v658
    %758 = vmatprep.subr.mxu0 0.0
    %759 = vmatpush1.msra.mxu0 %v657
    %760 = vmatprep.subr.mxu0 0.0
    %761 = vmatpush1.msra.mxu0 %v656
    %762 = vmatprep.subr.mxu0 0.0
    %763 = vmatpush1.msra.mxu0 %v655
    %764 = vmatprep.subr.mxu0 0.0
    %765 = vmatpush1.msra.mxu0 %v654
    %766 = vmatprep.subr.mxu0 0.0
    %767 = vmatpush1.msra.mxu0 %v653
    %768 = vmatprep.subr.mxu0 0.0
    %769 = vmatpush1.msra.mxu0 %v652
    %770 = vmatprep.subr.mxu0 0.0
    %771 = vmatpush1.msra.mxu0 %v651
    %772 = vmatprep.subr.mxu0 0.0
    %773 = vmatpush1.msra.mxu0 %v650
    %774 = vmatprep.subr.mxu0 0.0
    %775 = vmatpush2.msra.mxu0 %v681
    %776 = vmatprep.subr.mxu0 0.0
    %777 = vmatpush2.msra.mxu0 %v680
    %778 = vmatprep.subr.mxu0 0.0
    %779 = vmatpush2.msra.mxu0 %v679
    %780 = vmatprep.subr.mxu0 0.0
    %781 = vmatpush2.msra.mxu0 %v678
    %782 = vmatprep.subr.mxu0 0.0
    %783 = vmatpush2.msra.mxu0 %v677
    %784 = vmatprep.subr.mxu0 0.0
    %785 = vmatpush2.msra.mxu0 %v676
    %786 = vmatprep.subr.mxu0 0.0
    %787 = vmatpush2.msra.mxu0 %v675
    %788 = vmatprep.subr.mxu0 0.0
    %789 = vmatpush2.msra.mxu0 %v674
    %790 = vmatprep.subr.mxu0 0.0
    %791 = vmatpush2.msra.mxu0 %v673
    %792 = vmatprep.subr.mxu0 0.0
    %793 = vmatpush2.msra.mxu0 %v672
    %794 = vmatprep.subr.mxu0 0.0
    %795 = vmatpush2.msra.mxu0 %v671
    %796 = vmatprep.subr.mxu0 0.0
    %797 = vmatpush2.msra.mxu0 %v670
    %798 = vmatprep.subr.mxu0 0.0
    %799 = vmatpush2.msra.mxu0 %v669
    %800 = vmatprep.subr.mxu0 0.0
    %801 = vmatpush2.msra.mxu0 %v668
    %802 = vmatprep.subr.mxu0 0.0
    %803 = vmatpush2.msra.mxu0 %v667
    %804 = vmatprep.subr.mxu0 0.0
    %805 = vmatpush2.msra.mxu0 %v666
    %806 = vmatprep.mubr.f32.mxu0 %v644
    %807 = vmatmul.mubr.f32.gmra.mxu0 %v643
    %v808 = vpop.f32.mrf.mxu0
    %v809 = vadd.f32 0.0, %v808
    %v810 = vpop.f32.mrf.mxu0
    %811 = vdwg.mxu0
    %812 = vmatprep.subr.mxu0 0.0
    %813 = vmatpush1.msra.mxu0 %v697
    %814 = vmatprep.subr.mxu0 0.0
    %815 = vmatpush1.msra.mxu0 %v696
    %816 = vmatprep.subr.mxu0 0.0
    %817 = vmatpush1.msra.mxu0 %v695
    %818 = vmatprep.subr.mxu0 0.0
    %819 = vmatpush1.msra.mxu0 %v694
    %820 = vmatprep.subr.mxu0 0.0
    %821 = vmatpush1.msra.mxu0 %v693
    %822 = vmatprep.subr.mxu0 0.0
    %823 = vmatpush1.msra.mxu0 %v692
    %824 = vmatprep.subr.mxu0 0.0
    %825 = vmatpush1.msra.mxu0 %v691
    %826 = vmatprep.subr.mxu0 0.0
    %827 = vmatpush1.msra.mxu0 %v690
    %828 = vmatprep.subr.mxu0 0.0
    %829 = vmatpush1.msra.mxu0 %v689
    %830 = vmatprep.subr.mxu0 0.0
    %831 = vmatpush1.msra.mxu0 %v688
    %832 = vmatprep.subr.mxu0 0.0
    %833 = vmatpush1.msra.mxu0 %v687
    %834 = vmatprep.subr.mxu0 0.0
    %835 = vmatpush1.msra.mxu0 %v686
    %836 = vmatprep.subr.mxu0 0.0
    %837 = vmatpush1.msra.mxu0 %v685
    %838 = vmatprep.subr.mxu0 0.0
    %839 = vmatpush1.msra.mxu0 %v684
    %840 = vmatprep.subr.mxu0 0.0
    %841 = vmatpush1.msra.mxu0 %v683
    %842 = vmatprep.subr.mxu0 0.0
    %843 = vmatpush1.msra.mxu0 %v682
    %844 = vmatprep.subr.mxu0 0.0
    %845 = vmatpush2.msra.mxu0 %v713
    %846 = vmatprep.subr.mxu0 0.0
    %847 = vmatpush2.msra.mxu0 %v712
    %848 = vmatprep.subr.mxu0 0.0
    %849 = vmatpush2.msra.mxu0 %v711
    %850 = vmatprep.subr.mxu0 0.0
    %851 = vmatpush2.msra.mxu0 %v710
    %852 = vmatprep.subr.mxu0 0.0
    %853 = vmatpush2.msra.mxu0 %v709
    %854 = vmatprep.subr.mxu0 0.0
    %855 = vmatpush2.msra.mxu0 %v708
    %856 = vmatprep.subr.mxu0 0.0
    %857 = vmatpush2.msra.mxu0 %v707
    %858 = vmatprep.subr.mxu0 0.0
    %859 = vmatpush2.msra.mxu0 %v706
    %860 = vmatprep.subr.mxu0 0.0
    %861 = vmatpush2.msra.mxu0 %v705
    %862 = vmatprep.subr.mxu0 0.0
    %863 = vmatpush2.msra.mxu0 %v704
    %864 = vmatprep.subr.mxu0 0.0
    %865 = vmatpush2.msra.mxu0 %v703
    %866 = vmatprep.subr.mxu0 0.0
    %867 = vmatpush2.msra.mxu0 %v702
    %868 = vmatprep.subr.mxu0 0.0
    %869 = vmatpush2.msra.mxu0 %v701
    %870 = vmatprep.subr.mxu0 0.0
    %871 = vmatpush2.msra.mxu0 %v700
    %872 = vmatprep.subr.mxu0 0.0
    %873 = vmatpush2.msra.mxu0 %v699
    %874 = vmatprep.subr.mxu0 0.0
    %875 = vmatpush2.msra.mxu0 %v698
    %876 = vmatprep.mubr.f32.mxu0 %v646
    %877 = vmatmul.mubr.f32.gmra.mxu0 %v645
    %v878 = vpop.f32.mrf.mxu0
    %v879 = vadd.f32 %v809, %v878
    %v880 = vpop.f32.mrf.mxu0
    %881 = vdwg.mxu0
    %882 = vmatprep.subr.mxu0 0.0
    %883 = vmatpush1.msra.mxu0 %v729
    %884 = vmatprep.subr.mxu0 0.0
    %885 = vmatpush1.msra.mxu0 %v728
    %886 = vmatprep.subr.mxu0 0.0
    %887 = vmatpush1.msra.mxu0 %v727
    %888 = vmatprep.subr.mxu0 0.0
    %889 = vmatpush1.msra.mxu0 %v726
    %890 = vmatprep.subr.mxu0 0.0
    %891 = vmatpush1.msra.mxu0 %v725
    %892 = vmatprep.subr.mxu0 0.0
    %893 = vmatpush1.msra.mxu0 %v724
    %894 = vmatprep.subr.mxu0 0.0
    %895 = vmatpush1.msra.mxu0 %v723
    %896 = vmatprep.subr.mxu0 0.0
    %897 = vmatpush1.msra.mxu0 %v722
    %898 = vmatprep.subr.mxu0 0.0
    %899 = vmatpush1.msra.mxu0 %v721
    %900 = vmatprep.subr.mxu0 0.0
    %901 = vmatpush1.msra.mxu0 %v720
    %902 = vmatprep.subr.mxu0 0.0
    %903 = vmatpush1.msra.mxu0 %v719
    %904 = vmatprep.subr.mxu0 0.0
    %905 = vmatpush1.msra.mxu0 %v718
    %906 = vmatprep.subr.mxu0 0.0
    %907 = vmatpush1.msra.mxu0 %v717
    %908 = vmatprep.subr.mxu0 0.0
    %909 = vmatpush1.msra.mxu0 %v716
    %910 = vmatprep.subr.mxu0 0.0
    %911 = vmatpush1.msra.mxu0 %v715
    %912 = vmatprep.subr.mxu0 0.0
    %913 = vmatpush1.msra.mxu0 %v714
    %914 = vmatprep.subr.mxu0 0.0
    %915 = vmatpush2.msra.mxu0 0.0
    %916 = vmatprep.subr.mxu0 0.0
    %917 = vmatpush2.msra.mxu0 0.0
    %918 = vmatprep.subr.mxu0 0.0
    %919 = vmatpush2.msra.mxu0 0.0
    %920 = vmatprep.subr.mxu0 0.0
    %921 = vmatpush2.msra.mxu0 0.0
    %922 = vmatprep.subr.mxu0 0.0
    %923 = vmatpush2.msra.mxu0 0.0
    %924 = vmatprep.subr.mxu0 0.0
    %925 = vmatpush2.msra.mxu0 0.0
    %926 = vmatprep.subr.mxu0 0.0
    %927 = vmatpush2.msra.mxu0 0.0
    %928 = vmatprep.subr.mxu0 0.0
    %929 = vmatpush2.msra.mxu0 0.0
    %930 = vmatprep.subr.mxu0 0.0
    %931 = vmatpush2.msra.mxu0 0.0
    %932 = vmatprep.subr.mxu0 0.0
    %933 = vmatpush2.msra.mxu0 0.0
    %934 = vmatprep.subr.mxu0 0.0
    %935 = vmatpush2.msra.mxu0 0.0
    %936 = vmatprep.subr.mxu0 0.0
    %937 = vmatpush2.msra.mxu0 %v740
    %938 = vmatprep.subr.mxu0 0.0
    %939 = vmatpush2.msra.mxu0 %v733
    %940 = vmatprep.subr.mxu0 0.0
    %941 = vmatpush2.msra.mxu0 %v732
    %942 = vmatprep.subr.mxu0 0.0
    %943 = vmatpush2.msra.mxu0 %v731
    %944 = vmatprep.subr.mxu0 0.0
    %945 = vmatpush2.msra.mxu0 %v730
    %946 = vmatprep.mubr.f32.mxu0 %v736
    %947 = vmatmul.mubr.f32.gmra.mxu0 %v647
    %v948 = vpop.f32.mrf.mxu0
    %v949 = vadd.f32 %v879, %v948
    %v950 = vpop.f32.mrf.mxu0
    %951 = vdwg.mxu0
    %v953 = vsel %vm353, %v360, 0
    %v956 = vsel %vm738, %v445, 0
    %958 = vmatprep.subr.mxu0 0.0
    %959 = vmatpush1.msra.mxu0 %v376
    %960 = vmatprep.subr.mxu0 0.0
    %961 = vmatpush1.msra.mxu0 %v375
    %962 = vmatprep.subr.mxu0 0.0
    %963 = vmatpush1.msra.mxu0 %v374
    %964 = vmatprep.subr.mxu0 0.0
    %965 = vmatpush1.msra.mxu0 %v373
    %966 = vmatprep.subr.mxu0 0.0
    %967 = vmatpush1.msra.mxu0 %v372
    %968 = vmatprep.subr.mxu0 0.0
    %969 = vmatpush1.msra.mxu0 %v371
    %970 = vmatprep.subr.mxu0 0.0
    %971 = vmatpush1.msra.mxu0 %v370
    %972 = vmatprep.subr.mxu0 0.0
    %973 = vmatpush1.msra.mxu0 %v369
    %974 = vmatprep.subr.mxu0 0.0
    %975 = vmatpush1.msra.mxu0 %v368
    %976 = vmatprep.subr.mxu0 0.0
    %977 = vmatpush1.msra.mxu0 %v367
    %978 = vmatprep.subr.mxu0 0.0
    %979 = vmatpush1.msra.mxu0 %v366
    %980 = vmatprep.subr.mxu0 0.0
    %981 = vmatpush1.msra.mxu0 %v365
    %982 = vmatprep.subr.mxu0 0.0
    %983 = vmatpush1.msra.mxu0 %v364
    %984 = vmatprep.subr.mxu0 0.0
    %985 = vmatpush1.msra.mxu0 %v363
    %986 = vmatprep.subr.mxu0 0.0
    %987 = vmatpush1.msra.mxu0 %v362
    %988 = vmatprep.subr.mxu0 0.0
    %989 = vmatpush1.msra.mxu0 %v361
    %990 = vmatprep.subr.mxu0 0.0
    %991 = vmatpush2.msra.mxu0 %v392
    %992 = vmatprep.subr.mxu0 0.0
    %993 = vmatpush2.msra.mxu0 %v391
    %994 = vmatprep.subr.mxu0 0.0
    %995 = vmatpush2.msra.mxu0 %v390
    %996 = vmatprep.subr.mxu0 0.0
    %997 = vmatpush2.msra.mxu0 %v389
    %998 = vmatprep.subr.mxu0 0.0
    %999 = vmatpush2.msra.mxu0 %v388
    %1000 = vmatprep.subr.mxu0 0.0
    %1001 = vmatpush2.msra.mxu0 %v387
    %1002 = vmatprep.subr.mxu0 0.0
    %1003 = vmatpush2.msra.mxu0 %v386
    %1004 = vmatprep.subr.mxu0 0.0
    %1005 = vmatpush2.msra.mxu0 %v385
    %1006 = vmatprep.subr.mxu0 0.0
    %1007 = vmatpush2.msra.mxu0 %v384
    %1008 = vmatprep.subr.mxu0 0.0
    %1009 = vmatpush2.msra.mxu0 %v383
    %1010 = vmatprep.subr.mxu0 0.0
    %1011 = vmatpush2.msra.mxu0 %v382
    %1012 = vmatprep.subr.mxu0 0.0
    %1013 = vmatpush2.msra.mxu0 %v381
    %1014 = vmatprep.subr.mxu0 0.0
    %1015 = vmatpush2.msra.mxu0 %v380
    %1016 = vmatprep.subr.mxu0 0.0
    %1017 = vmatpush2.msra.mxu0 %v379
    %1018 = vmatprep.subr.mxu0 0.0
    %1019 = vmatpush2.msra.mxu0 %v378
    %1020 = vmatprep.subr.mxu0 0.0
    %1021 = vmatpush2.msra.mxu0 %v377
    %1022 = vmatprep.mubr.f32.mxu0 %v356
    %1023 = vmatmul.mubr.f32.gmra.mxu0 %v355
    %v1024 = vpop.f32.mrf.mxu0
    %v1025 = vadd.f32 %v949, %v1024
    %v1026 = vpop.f32.mrf.mxu0
    %1027 = vdwg.mxu0
    %1028 = vmatprep.subr.mxu0 0.0
    %1029 = vmatpush1.msra.mxu0 %v408
    %1030 = vmatprep.subr.mxu0 0.0
    %1031 = vmatpush1.msra.mxu0 %v407
    %1032 = vmatprep.subr.mxu0 0.0
    %1033 = vmatpush1.msra.mxu0 %v406
    %1034 = vmatprep.subr.mxu0 0.0
    %1035 = vmatpush1.msra.mxu0 %v405
    %1036 = vmatprep.subr.mxu0 0.0
    %1037 = vmatpush1.msra.mxu0 %v404
    %1038 = vmatprep.subr.mxu0 0.0
    %1039 = vmatpush1.msra.mxu0 %v403
    %1040 = vmatprep.subr.mxu0 0.0
    %1041 = vmatpush1.msra.mxu0 %v402
    %1042 = vmatprep.subr.mxu0 0.0
    %1043 = vmatpush1.msra.mxu0 %v401
    %1044 = vmatprep.subr.mxu0 0.0
    %1045 = vmatpush1.msra.mxu0 %v400
    %1046 = vmatprep.subr.mxu0 0.0
    %1047 = vmatpush1.msra.mxu0 %v399
    %1048 = vmatprep.subr.mxu0 0.0
    %1049 = vmatpush1.msra.mxu0 %v398
    %1050 = vmatprep.subr.mxu0 0.0
    %1051 = vmatpush1.msra.mxu0 %v397
    %1052 = vmatprep.subr.mxu0 0.0
    %1053 = vmatpush1.msra.mxu0 %v396
    %1054 = vmatprep.subr.mxu0 0.0
    %1055 = vmatpush1.msra.mxu0 %v395
    %1056 = vmatprep.subr.mxu0 0.0
    %1057 = vmatpush1.msra.mxu0 %v394
    %1058 = vmatprep.subr.mxu0 0.0
    %1059 = vmatpush1.msra.mxu0 %v393
    %1060 = vmatprep.subr.mxu0 0.0
    %1061 = vmatpush2.msra.mxu0 %v424
    %1062 = vmatprep.subr.mxu0 0.0
    %1063 = vmatpush2.msra.mxu0 %v423
    %1064 = vmatprep.subr.mxu0 0.0
    %1065 = vmatpush2.msra.mxu0 %v422
    %1066 = vmatprep.subr.mxu0 0.0
    %1067 = vmatpush2.msra.mxu0 %v421
    %1068 = vmatprep.subr.mxu0 0.0
    %1069 = vmatpush2.msra.mxu0 %v420
    %1070 = vmatprep.subr.mxu0 0.0
    %1071 = vmatpush2.msra.mxu0 %v419
    %1072 = vmatprep.subr.mxu0 0.0
    %1073 = vmatpush2.msra.mxu0 %v418
    %1074 = vmatprep.subr.mxu0 0.0
    %1075 = vmatpush2.msra.mxu0 %v417
    %1076 = vmatprep.subr.mxu0 0.0
    %1077 = vmatpush2.msra.mxu0 %v416
    %1078 = vmatprep.subr.mxu0 0.0
    %1079 = vmatpush2.msra.mxu0 %v415
    %1080 = vmatprep.subr.mxu0 0.0
    %1081 = vmatpush2.msra.mxu0 %v414
    %1082 = vmatprep.subr.mxu0 0.0
    %1083 = vmatpush2.msra.mxu0 %v413
    %1084 = vmatprep.subr.mxu0 0.0
    %1085 = vmatpush2.msra.mxu0 %v412
    %1086 = vmatprep.subr.mxu0 0.0
    %1087 = vmatpush2.msra.mxu0 %v411
    %1088 = vmatprep.subr.mxu0 0.0
    %1089 = vmatpush2.msra.mxu0 %v410
    %1090 = vmatprep.subr.mxu0 0.0
    %1091 = vmatpush2.msra.mxu0 %v409
    %1092 = vmatprep.mubr.f32.mxu0 %v358
    %1093 = vmatmul.mubr.f32.gmra.mxu0 %v357
    %v1094 = vpop.f32.mrf.mxu0
    %v1095 = vadd.f32 %v1025, %v1094
    %v1096 = vpop.f32.mrf.mxu0
    %1097 = vdwg.mxu0
    %1098 = vmatprep.subr.mxu0 0.0
    %1099 = vmatpush1.msra.mxu0 %v440
    %1100 = vmatprep.subr.mxu0 0.0
    %1101 = vmatpush1.msra.mxu0 %v439
    %1102 = vmatprep.subr.mxu0 0.0
    %1103 = vmatpush1.msra.mxu0 %v438
    %1104 = vmatprep.subr.mxu0 0.0
    %1105 = vmatpush1.msra.mxu0 %v437
    %1106 = vmatprep.subr.mxu0 0.0
    %1107 = vmatpush1.msra.mxu0 %v436
    %1108 = vmatprep.subr.mxu0 0.0
    %1109 = vmatpush1.msra.mxu0 %v435
    %1110 = vmatprep.subr.mxu0 0.0
    %1111 = vmatpush1.msra.mxu0 %v434
    %1112 = vmatprep.subr.mxu0 0.0
    %1113 = vmatpush1.msra.mxu0 %v433
    %1114 = vmatprep.subr.mxu0 0.0
    %1115 = vmatpush1.msra.mxu0 %v432
    %1116 = vmatprep.subr.mxu0 0.0
    %1117 = vmatpush1.msra.mxu0 %v431
    %1118 = vmatprep.subr.mxu0 0.0
    %1119 = vmatpush1.msra.mxu0 %v430
    %1120 = vmatprep.subr.mxu0 0.0
    %1121 = vmatpush1.msra.mxu0 %v429
    %1122 = vmatprep.subr.mxu0 0.0
    %1123 = vmatpush1.msra.mxu0 %v428
    %1124 = vmatprep.subr.mxu0 0.0
    %1125 = vmatpush1.msra.mxu0 %v427
    %1126 = vmatprep.subr.mxu0 0.0
    %1127 = vmatpush1.msra.mxu0 %v426
    %1128 = vmatprep.subr.mxu0 0.0
    %1129 = vmatpush1.msra.mxu0 %v425
    %1130 = vmatprep.subr.mxu0 0.0
    %1131 = vmatpush2.msra.mxu0 0.0
    %1132 = vmatprep.subr.mxu0 0.0
    %1133 = vmatpush2.msra.mxu0 0.0
    %1134 = vmatprep.subr.mxu0 0.0
    %1135 = vmatpush2.msra.mxu0 0.0
    %1136 = vmatprep.subr.mxu0 0.0
    %1137 = vmatpush2.msra.mxu0 0.0
    %1138 = vmatprep.subr.mxu0 0.0
    %1139 = vmatpush2.msra.mxu0 0.0
    %1140 = vmatprep.subr.mxu0 0.0
    %1141 = vmatpush2.msra.mxu0 0.0
    %1142 = vmatprep.subr.mxu0 0.0
    %1143 = vmatpush2.msra.mxu0 0.0
    %1144 = vmatprep.subr.mxu0 0.0
    %1145 = vmatpush2.msra.mxu0 0.0
    %1146 = vmatprep.subr.mxu0 0.0
    %1147 = vmatpush2.msra.mxu0 0.0
    %1148 = vmatprep.subr.mxu0 0.0
    %1149 = vmatpush2.msra.mxu0 0.0
    %1150 = vmatprep.subr.mxu0 0.0
    %1151 = vmatpush2.msra.mxu0 0.0
    %1152 = vmatprep.subr.mxu0 0.0
    %1153 = vmatpush2.msra.mxu0 %v956
    %1154 = vmatprep.subr.mxu0 0.0
    %1155 = vmatpush2.msra.mxu0 %v444
    %1156 = vmatprep.subr.mxu0 0.0
    %1157 = vmatpush2.msra.mxu0 %v443
    %1158 = vmatprep.subr.mxu0 0.0
    %1159 = vmatpush2.msra.mxu0 %v442
    %1160 = vmatprep.subr.mxu0 0.0
    %1161 = vmatpush2.msra.mxu0 %v441
    %1162 = vmatprep.mubr.f32.mxu0 %v953
    %1163 = vmatmul.mubr.f32.gmra.mxu0 %v359
    %v1164 = vpop.f32.mrf.mxu0
    %v1165 = vadd.f32 %v1095, %v1164
    %v1166 = vpop.f32.mrf.mxu0
    %1167 = vdwg.mxu0
    %v1168 = vld [vmem:[%s133] sm:$0xff]
    %v1169 = vld [vmem:[%s133 + $0x8] sm:$0xff]
    %v1170 = vld [vmem:[%s133 + $0x10] sm:$0xff]
    %v1171 = vld [vmem:[%s133 + $0x18] sm:$0xff]
    %v1172 = vld [vmem:[%s133 + $0x20] sm:$0xff]
    %v1173 = vld [vmem:[%s133 + $0x28] sm:$0xff]
    %s1174 = sld [smem:[#allocation3 + $0x100]]
    %v1175 = vstv %s1174
    %v1176 = vmul.f32 %v1168, %v1175
    %v1177 = vmul.f32 %v1169, %v1175
    %v1178 = vmul.f32 %v1170, %v1175
    %v1179 = vmul.f32 %v1171, %v1175
    %v1180 = vmul.f32 %v1172, %v1175
    %v1181 = vmul.f32 %v1173, %v1175
    %v1182 = vld [vmem:[%s150] sm:$0xff]
    %v1183 = vld [vmem:[%s150 + $0x8] sm:$0xff]
    %v1184 = vld [vmem:[%s150 + $0x10] sm:$0xff]
    %v1185 = vld [vmem:[%s150 + $0x18] sm:$0xff]
    %v1186 = vld [vmem:[%s150 + $0x20] sm:$0xff]
    %v1187 = vld [vmem:[%s150 + $0x28] sm:$0xff]
    %s1188 = sld [smem:[#allocation3 + $0x101]]
    %v1189 = vstv %s1188
    %v1190 = vmul.f32 %v1182, %v1189
    %v1191 = vmul.f32 %v1183, %v1189
    %v1192 = vmul.f32 %v1184, %v1189
    %v1193 = vmul.f32 %v1185, %v1189
    %v1194 = vmul.f32 %v1186, %v1189
    %v1195 = vmul.f32 %v1187, %v1189
    %v1196 = vadd.f32 %v1176, %v1190
    %v1197 = vadd.f32 %v1177, %v1191
    %v1198 = vadd.f32 %v1178, %v1192
    %v1199 = vadd.f32 %v1179, %v1193
    %v1200 = vadd.f32 %v1180, %v1194
    %v1201 = vadd.f32 %v1181, %v1195
    %v1202 = vld [vmem:[%s173] sm:$0xff]
    %v1203 = vld [vmem:[%s173 + $0x8] sm:$0xff]
    %v1204 = vld [vmem:[%s173 + $0x10] sm:$0xff]
    %v1205 = vld [vmem:[%s173 + $0x18] sm:$0xff]
    %v1206 = vld [vmem:[%s173 + $0x20] sm:$0xff]
    %v1207 = vld [vmem:[%s173 + $0x28] sm:$0xff]
    %s1208 = sld [smem:[#allocation3 + $0x102]]
    %v1209 = vstv %s1208
    %v1210 = vmul.f32 %v1202, %v1209
    %v1211 = vmul.f32 %v1203, %v1209
    %v1212 = vmul.f32 %v1204, %v1209
    %v1213 = vmul.f32 %v1205, %v1209
    %v1214 = vmul.f32 %v1206, %v1209
    %v1215 = vmul.f32 %v1207, %v1209
    %v1216 = vadd.f32 %v1196, %v1210
    %v1217 = vadd.f32 %v1197, %v1211
    %v1218 = vadd.f32 %v1198, %v1212
    %v1219 = vadd.f32 %v1199, %v1213
    %v1220 = vadd.f32 %v1200, %v1214
    %v1221 = vadd.f32 %v1201, %v1215
    %v1222 = vld [vmem:[%s196] sm:$0xff]
    %v1223 = vld [vmem:[%s196 + $0x8] sm:$0xff]
    %v1224 = vld [vmem:[%s196 + $0x10] sm:$0xff]
    %v1225 = vld [vmem:[%s196 + $0x18] sm:$0xff]
    %v1226 = vld [vmem:[%s196 + $0x20] sm:$0xff]
    %v1227 = vld [vmem:[%s196 + $0x28] sm:$0xff]
    %s1228 = sld [smem:[#allocation3 + $0x103]]
    %v1229 = vstv %s1228
    %v1230 = vmul.f32 %v1222, %v1229
    %v1231 = vmul.f32 %v1223, %v1229
    %v1232 = vmul.f32 %v1224, %v1229
    %v1233 = vmul.f32 %v1225, %v1229
    %v1234 = vmul.f32 %v1226, %v1229
    %v1235 = vmul.f32 %v1227, %v1229
    %v1236 = vadd.f32 %v1216, %v1230
    %v1237 = vadd.f32 %v1217, %v1231
    %v1238 = vadd.f32 %v1218, %v1232
    %v1239 = vadd.f32 %v1219, %v1233
    %v1240 = vadd.f32 %v1220, %v1234
    %v1241 = vadd.f32 %v1221, %v1235
    %v1242 = vld [vmem:[%s219] sm:$0xff]
    %v1243 = vld [vmem:[%s219 + $0x8] sm:$0xff]
    %v1244 = vld [vmem:[%s219 + $0x10] sm:$0xff]
    %v1245 = vld [vmem:[%s219 + $0x18] sm:$0xff]
    %v1246 = vld [vmem:[%s219 + $0x20] sm:$0xff]
    %v1247 = vld [vmem:[%s219 + $0x28] sm:$0xff]
    %s1248 = sld [smem:[#allocation3 + $0x104]]
    %v1249 = vstv %s1248
    %v1250 = vmul.f32 %v1242, %v1249
    %v1251 = vmul.f32 %v1243, %v1249
    %v1252 = vmul.f32 %v1244, %v1249
    %v1253 = vmul.f32 %v1245, %v1249
    %v1254 = vmul.f32 %v1246, %v1249
    %v1255 = vmul.f32 %v1247, %v1249
    %v1256 = vadd.f32 %v1236, %v1250
    %v1257 = vadd.f32 %v1237, %v1251
    %v1258 = vadd.f32 %v1238, %v1252
    %v1259 = vadd.f32 %v1239, %v1253
    %v1260 = vadd.f32 %v1240, %v1254
    %v1261 = vadd.f32 %v1241, %v1255
    %v1262 = vld [vmem:[%s242] sm:$0xff]
    %v1263 = vld [vmem:[%s242 + $0x8] sm:$0xff]
    %v1264 = vld [vmem:[%s242 + $0x10] sm:$0xff]
    %v1265 = vld [vmem:[%s242 + $0x18] sm:$0xff]
    %v1266 = vld [vmem:[%s242 + $0x20] sm:$0xff]
    %v1267 = vld [vmem:[%s242 + $0x28] sm:$0xff]
    %s1268 = sld [smem:[#allocation3 + $0x105]]
    %v1269 = vstv %s1268
    %v1270 = vmul.f32 %v1262, %v1269
    %v1271 = vmul.f32 %v1263, %v1269
    %v1272 = vmul.f32 %v1264, %v1269
    %v1273 = vmul.f32 %v1265, %v1269
    %v1274 = vmul.f32 %v1266, %v1269
    %v1275 = vmul.f32 %v1267, %v1269
    %v1276 = vadd.f32 %v1256, %v1270
    %v1277 = vadd.f32 %v1257, %v1271
    %v1278 = vadd.f32 %v1258, %v1272
    %v1279 = vadd.f32 %v1259, %v1273
    %v1280 = vadd.f32 %v1260, %v1274
    %v1281 = vadd.f32 %v1261, %v1275
    %v1282 = vld [vmem:[%s265] sm:$0xff]
    %v1283 = vld [vmem:[%s265 + $0x8] sm:$0xff]
    %v1284 = vld [vmem:[%s265 + $0x10] sm:$0xff]
    %v1285 = vld [vmem:[%s265 + $0x18] sm:$0xff]
    %v1286 = vld [vmem:[%s265 + $0x20] sm:$0xff]
    %v1287 = vld [vmem:[%s265 + $0x28] sm:$0xff]
    %s1288 = sld [smem:[#allocation3 + $0x106]]
    %v1289 = vstv %s1288
    %v1290 = vmul.f32 %v1282, %v1289
    %v1291 = vmul.f32 %v1283, %v1289
    %v1292 = vmul.f32 %v1284, %v1289
    %v1293 = vmul.f32 %v1285, %v1289
    %v1294 = vmul.f32 %v1286, %v1289
    %v1295 = vmul.f32 %v1287, %v1289
    %v1296 = vadd.f32 %v1276, %v1290
    %v1297 = vadd.f32 %v1277, %v1291
    %v1298 = vadd.f32 %v1278, %v1292
    %v1299 = vadd.f32 %v1279, %v1293
    %v1300 = vadd.f32 %v1280, %v1294
    %v1301 = vadd.f32 %v1281, %v1295
    %v1302 = vld [vmem:[%s288] sm:$0xff]
    %v1303 = vld [vmem:[%s288 + $0x8] sm:$0xff]
    %v1304 = vld [vmem:[%s288 + $0x10] sm:$0xff]
    %v1305 = vld [vmem:[%s288 + $0x18] sm:$0xff]
    %v1306 = vld [vmem:[%s288 + $0x20] sm:$0xff]
    %v1307 = vld [vmem:[%s288 + $0x28] sm:$0xff]
    %s1308 = sld [smem:[#allocation3 + $0x107]]
    %v1309 = vstv %s1308
    %v1310 = vmul.f32 %v1302, %v1309
    %v1311 = vmul.f32 %v1303, %v1309
    %v1312 = vmul.f32 %v1304, %v1309
    %v1313 = vmul.f32 %v1305, %v1309
    %v1314 = vmul.f32 %v1306, %v1309
    %v1315 = vmul.f32 %v1307, %v1309
    %v1316 = vadd.f32 %v1296, %v1310
    %v1317 = vadd.f32 %v1297, %v1311
    %v1318 = vadd.f32 %v1298, %v1312
    %v1319 = vadd.f32 %v1299, %v1313
    %v1320 = vadd.f32 %v1300, %v1314
    %v1321 = vadd.f32 %v1301, %v1315
    %v1322 = vld [vmem:[%s311] sm:$0xff]
    %v1323 = vld [vmem:[%s311 + $0x8] sm:$0xff]
    %v1324 = vld [vmem:[%s311 + $0x10] sm:$0xff]
    %v1325 = vld [vmem:[%s311 + $0x18] sm:$0xff]
    %v1326 = vld [vmem:[%s311 + $0x20] sm:$0xff]
    %v1327 = vld [vmem:[%s311 + $0x28] sm:$0xff]
    %s1328 = sld [smem:[#allocation3 + $0x108]]
    %v1329 = vstv %s1328
    %v1330 = vmul.f32 %v1322, %v1329
    %v1331 = vmul.f32 %v1323, %v1329
    %v1332 = vmul.f32 %v1324, %v1329
    %v1333 = vmul.f32 %v1325, %v1329
    %v1334 = vmul.f32 %v1326, %v1329
    %v1335 = vmul.f32 %v1327, %v1329
    %v1336 = vadd.f32 %v1316, %v1330
    %v1337 = vadd.f32 %v1317, %v1331
    %v1338 = vadd.f32 %v1318, %v1332
    %v1339 = vadd.f32 %v1319, %v1333
    %v1340 = vadd.f32 %v1320, %v1334
    %v1341 = vadd.f32 %v1321, %v1335
    %s1342 = sld [smem:[#allocation6 + $0x2]]
    %v1343 = vstv %s1342
    %v1344 = vadd.f32 %v1336, %v1343
    %v1345 = vadd.f32 %v1337, %v1343
    %v1346 = vadd.f32 %v1338, %v1343
    %v1347 = vadd.f32 %v1339, %v1343
    %v1348 = vadd.f32 %v1340, %v1343
    %v1349 = vadd.f32 %v1341, %v1343
    %v1350 = vmax.f32 %v1344, 0.0
    %v1351 = vmax.f32 %v1345, 0.0
    %v1352 = vmax.f32 %v1346, 0.0
    %v1353 = vmax.f32 %v1347, 0.0
    %v1354 = vmax.f32 %v1348, 0.0
    %v1355 = vmax.f32 %v1349, 0.0
    %1356 = vst [vmem:[%s347] sm:$0xff] %v1350
    %1357 = vst [vmem:[%s347 + $0x8] sm:$0xff] %v1351
    %1358 = vst [vmem:[%s347 + $0x10] sm:$0xff] %v1352
    %1359 = vst [vmem:[%s347 + $0x18] sm:$0xff] %v1353
    %1360 = vst [vmem:[%s347 + $0x20] sm:$0xff] %v1354
    %1361 = vst.msk [vmem:[%s347 + $0x28] sm:$0xff] %vm353, %v1355
    %v1362 = vld [vmem:[#allocation2] sm:$0xff]
    %v1363 = vld [vmem:[#allocation2 + $0x8] sm:$0xff]
    %v1364 = vld [vmem:[#allocation2 + $0x10] sm:$0xff]
    %v1365 = vld [vmem:[#allocation2 + $0x18] sm:$0xff]
    %v1366 = vld [vmem:[#allocation2 + $0x20] sm:$0xff]
    %v1367 = vld [vmem:[#allocation2 + $0x28] sm:$0xff]
    %s1368 = scalar_lea.vmem [#allocation8], 1360
    %v1369 = vld [vmem:[%s1368] sm:$0xff]
    %v1370 = vld [vmem:[%s1368 + $0x8] sm:$0xff]
    %v1371 = vld [vmem:[%s1368 + $0x10] sm:$0xff]
    %v1372 = vld [vmem:[%s1368 + $0x18] sm:$0xff]
    %v1373 = vld [vmem:[%s1368 + $0x20] sm:$0xff]
    %v1374 = vld [vmem:[%s1368 + $0x28] sm:$0xff]
    %v1375 = vld [vmem:[%s1368 + $0x30] sm:$0xff]
    %v1376 = vld [vmem:[%s1368 + $0x38] sm:$0xff]
    %v1377 = vld [vmem:[%s1368 + $0x40] sm:$0xff]
    %v1378 = vld [vmem:[%s1368 + $0x48] sm:$0xff]
    %v1379 = vld [vmem:[%s1368 + $0x50] sm:$0xff]
    %v1380 = vld [vmem:[%s1368 + $0x58] sm:$0xff]
    %v1381 = vld [vmem:[%s1368 + $0x60] sm:$0xff]
    %v1382 = vld [vmem:[%s1368 + $0x68] sm:$0xff]
    %v1383 = vld [vmem:[%s1368 + $0x70] sm:$0xff]
    %v1384 = vld [vmem:[%s1368 + $0x78] sm:$0xff]
    %v1385 = vld [vmem:[%s1368 + $0x80] sm:$0xff]
    %v1386 = vld [vmem:[%s1368 + $0x88] sm:$0xff]
    %v1387 = vld [vmem:[%s1368 + $0x90] sm:$0xff]
    %v1388 = vld [vmem:[%s1368 + $0x98] sm:$0xff]
    %v1389 = vld [vmem:[%s1368 + $0xa0] sm:$0xff]
    %v1390 = vld [vmem:[%s1368 + $0xa8] sm:$0xff]
    %v1391 = vld [vmem:[%s1368 + $0xb0] sm:$0xff]
    %v1392 = vld [vmem:[%s1368 + $0xb8] sm:$0xff]
    %v1393 = vld [vmem:[%s1368 + $0xc0] sm:$0xff]
    %v1394 = vld [vmem:[%s1368 + $0xc8] sm:$0xff]
    %v1395 = vld [vmem:[%s1368 + $0xd0] sm:$0xff]
    %v1396 = vld [vmem:[%s1368 + $0xd8] sm:$0xff]
    %v1397 = vld [vmem:[%s1368 + $0xe0] sm:$0xff]
    %v1398 = vld [vmem:[%s1368 + $0xe8] sm:$0xff]
    %v1399 = vld [vmem:[%s1368 + $0xf0] sm:$0xff]
    %v1400 = vld [vmem:[%s1368 + $0xf8] sm:$0xff]
    %v1401 = vld [vmem:[%s1368 + $0x100] sm:$0xff]
    %v1402 = vld [vmem:[%s1368 + $0x108] sm:$0xff]
    %v1403 = vld [vmem:[%s1368 + $0x110] sm:$0xff]
    %v1404 = vld [vmem:[%s1368 + $0x118] sm:$0xff]
    %v1405 = vld [vmem:[%s1368 + $0x120] sm:$0xff]
    %v1406 = vld [vmem:[%s1368 + $0x128] sm:$0xff]
    %v1407 = vld [vmem:[%s1368 + $0x130] sm:$0xff]
    %v1408 = vld [vmem:[%s1368 + $0x138] sm:$0xff]
    %v1409 = vld [vmem:[%s1368 + $0x140] sm:$0xff]
    %v1410 = vld [vmem:[%s1368 + $0x148] sm:$0xff]
    %v1411 = vld [vmem:[%s1368 + $0x150] sm:$0xff]
    %v1412 = vld [vmem:[%s1368 + $0x158] sm:$0xff]
    %v1413 = vld [vmem:[%s1368 + $0x160] sm:$0xff]
    %v1414 = vld [vmem:[%s1368 + $0x168] sm:$0xff]
    %v1415 = vld [vmem:[%s1368 + $0x170] sm:$0xff]
    %v1416 = vld [vmem:[%s1368 + $0x178] sm:$0xff]
    %v1417 = vld [vmem:[%s1368 + $0x180] sm:$0xff]
    %v1418 = vld [vmem:[%s1368 + $0x188] sm:$0xff]
    %v1419 = vld [vmem:[%s1368 + $0x190] sm:$0xff]
    %v1420 = vld [vmem:[%s1368 + $0x198] sm:$0xff]
    %v1421 = vld [vmem:[%s1368 + $0x1a0] sm:$0xff]
    %v1422 = vld [vmem:[%s1368 + $0x1a8] sm:$0xff]
    %v1423 = vld [vmem:[%s1368 + $0x1b0] sm:$0xff]
    %v1424 = vld [vmem:[%s1368 + $0x1b8] sm:$0xff]
    %v1425 = vld [vmem:[%s1368 + $0x1c0] sm:$0xff]
    %v1426 = vld [vmem:[%s1368 + $0x1c8] sm:$0xff]
    %v1427 = vld [vmem:[%s1368 + $0x1d0] sm:$0xff]
    %v1428 = vld [vmem:[%s1368 + $0x1d8] sm:$0xff]
    %v1429 = vld [vmem:[%s1368 + $0x1e0] sm:$0xff]
    %v1430 = vld [vmem:[%s1368 + $0x1e8] sm:$0xff]
    %v1431 = vld [vmem:[%s1368 + $0x1f0] sm:$0xff]
    %v1432 = vld [vmem:[%s1368 + $0x1f8] sm:$0xff]
    %v1433 = vld [vmem:[%s1368 + $0x200] sm:$0xff]
    %v1434 = vld [vmem:[%s1368 + $0x208] sm:$0xff]
    %v1435 = vld [vmem:[%s1368 + $0x210] sm:$0xff]
    %v1436 = vld [vmem:[%s1368 + $0x218] sm:$0xff]
    %v1437 = vld [vmem:[%s1368 + $0x220] sm:$0xff]
    %v1438 = vld [vmem:[%s1368 + $0x228] sm:$0xff]
    %v1439 = vld [vmem:[%s1368 + $0x230] sm:$0xff]
    %v1440 = vld [vmem:[%s1368 + $0x238] sm:$0xff]
    %v1441 = vld [vmem:[%s1368 + $0x240] sm:$0xff]
    %v1442 = vld [vmem:[%s1368 + $0x248] sm:$0xff]
    %v1443 = vld [vmem:[%s1368 + $0x250] sm:$0xff]
    %v1444 = vld [vmem:[%s1368 + $0x258] sm:$0xff]
    %v1445 = vld [vmem:[%s1368 + $0x260] sm:$0xff]
    %v1446 = vld [vmem:[%s1368 + $0x268] sm:$0xff]
    %v1447 = vld [vmem:[%s1368 + $0x270] sm:$0xff]
    %v1448 = vld [vmem:[%s1368 + $0x278] sm:$0xff]
    %v1449 = vld [vmem:[%s1368 + $0x280] sm:$0xff]
    %v1450 = vld [vmem:[%s1368 + $0x288] sm:$0xff]
    %v1451 = vld [vmem:[%s1368 + $0x290] sm:$0xff]
    %v1452 = vld [vmem:[%s1368 + $0x298] sm:$0xff]
    %v1453 = vld [vmem:[%s1368 + $0x2a0] sm:$0xf]
    %v1455 = vsel %vm353, %v1367, 0
    %v1458 = vsel %vm738, %v1453, 0
    %1460 = vmatprep.subr.mxu0 0.0
    %1461 = vmatpush1.msra.mxu0 %v1384
    %1462 = vmatprep.subr.mxu0 0.0
    %1463 = vmatpush1.msra.mxu0 %v1383
    %1464 = vmatprep.subr.mxu0 0.0
    %1465 = vmatpush1.msra.mxu0 %v1382
    %1466 = vmatprep.subr.mxu0 0.0
    %1467 = vmatpush1.msra.mxu0 %v1381
    %1468 = vmatprep.subr.mxu0 0.0
    %1469 = vmatpush1.msra.mxu0 %v1380
    %1470 = vmatprep.subr.mxu0 0.0
    %1471 = vmatpush1.msra.mxu0 %v1379
    %1472 = vmatprep.subr.mxu0 0.0
    %1473 = vmatpush1.msra.mxu0 %v1378
    %1474 = vmatprep.subr.mxu0 0.0
    %1475 = vmatpush1.msra.mxu0 %v1377
    %1476 = vmatprep.subr.mxu0 0.0
    %1477 = vmatpush1.msra.mxu0 %v1376
    %1478 = vmatprep.subr.mxu0 0.0
    %1479 = vmatpush1.msra.mxu0 %v1375
    %1480 = vmatprep.subr.mxu0 0.0
    %1481 = vmatpush1.msra.mxu0 %v1374
    %1482 = vmatprep.subr.mxu0 0.0
    %1483 = vmatpush1.msra.mxu0 %v1373
    %1484 = vmatprep.subr.mxu0 0.0
    %1485 = vmatpush1.msra.mxu0 %v1372
    %1486 = vmatprep.subr.mxu0 0.0
    %1487 = vmatpush1.msra.mxu0 %v1371
    %1488 = vmatprep.subr.mxu0 0.0
    %1489 = vmatpush1.msra.mxu0 %v1370
    %1490 = vmatprep.subr.mxu0 0.0
    %1491 = vmatpush1.msra.mxu0 %v1369
    %1492 = vmatprep.subr.mxu0 0.0
    %1493 = vmatpush2.msra.mxu0 %v1400
    %1494 = vmatprep.subr.mxu0 0.0
    %1495 = vmatpush2.msra.mxu0 %v1399
    %1496 = vmatprep.subr.mxu0 0.0
    %1497 = vmatpush2.msra.mxu0 %v1398
    %1498 = vmatprep.subr.mxu0 0.0
    %1499 = vmatpush2.msra.mxu0 %v1397
    %1500 = vmatprep.subr.mxu0 0.0
    %1501 = vmatpush2.msra.mxu0 %v1396
    %1502 = vmatprep.subr.mxu0 0.0
    %1503 = vmatpush2.msra.mxu0 %v1395
    %1504 = vmatprep.subr.mxu0 0.0
    %1505 = vmatpush2.msra.mxu0 %v1394
    %1506 = vmatprep.subr.mxu0 0.0
    %1507 = vmatpush2.msra.mxu0 %v1393
    %1508 = vmatprep.subr.mxu0 0.0
    %1509 = vmatpush2.msra.mxu0 %v1392
    %1510 = vmatprep.subr.mxu0 0.0
    %1511 = vmatpush2.msra.mxu0 %v1391
    %1512 = vmatprep.subr.mxu0 0.0
    %1513 = vmatpush2.msra.mxu0 %v1390
    %1514 = vmatprep.subr.mxu0 0.0
    %1515 = vmatpush2.msra.mxu0 %v1389
    %1516 = vmatprep.subr.mxu0 0.0
    %1517 = vmatpush2.msra.mxu0 %v1388
    %1518 = vmatprep.subr.mxu0 0.0
    %1519 = vmatpush2.msra.mxu0 %v1387
    %1520 = vmatprep.subr.mxu0 0.0
    %1521 = vmatpush2.msra.mxu0 %v1386
    %1522 = vmatprep.subr.mxu0 0.0
    %1523 = vmatpush2.msra.mxu0 %v1385
    %1524 = vmatprep.mubr.f32.mxu0 %v1363
    %1525 = vmatmul.mubr.f32.gmra.mxu0 %v1362
    %v1526 = vpop.f32.mrf.mxu0
    %v1527 = vadd.f32 0.0, %v1526
    %v1528 = vpop.f32.mrf.mxu0
    %1529 = vdwg.mxu0
    %1530 = vmatprep.subr.mxu0 0.0
    %1531 = vmatpush1.msra.mxu0 %v1416
    %1532 = vmatprep.subr.mxu0 0.0
    %1533 = vmatpush1.msra.mxu0 %v1415
    %1534 = vmatprep.subr.mxu0 0.0
    %1535 = vmatpush1.msra.mxu0 %v1414
    %1536 = vmatprep.subr.mxu0 0.0
    %1537 = vmatpush1.msra.mxu0 %v1413
    %1538 = vmatprep.subr.mxu0 0.0
    %1539 = vmatpush1.msra.mxu0 %v1412
    %1540 = vmatprep.subr.mxu0 0.0
    %1541 = vmatpush1.msra.mxu0 %v1411
    %1542 = vmatprep.subr.mxu0 0.0
    %1543 = vmatpush1.msra.mxu0 %v1410
    %1544 = vmatprep.subr.mxu0 0.0
    %1545 = vmatpush1.msra.mxu0 %v1409
    %1546 = vmatprep.subr.mxu0 0.0
    %1547 = vmatpush1.msra.mxu0 %v1408
    %1548 = vmatprep.subr.mxu0 0.0
    %1549 = vmatpush1.msra.mxu0 %v1407
    %1550 = vmatprep.subr.mxu0 0.0
    %1551 = vmatpush1.msra.mxu0 %v1406
    %1552 = vmatprep.subr.mxu0 0.0
    %1553 = vmatpush1.msra.mxu0 %v1405
    %1554 = vmatprep.subr.mxu0 0.0
    %1555 = vmatpush1.msra.mxu0 %v1404
    %1556 = vmatprep.subr.mxu0 0.0
    %1557 = vmatpush1.msra.mxu0 %v1403
    %1558 = vmatprep.subr.mxu0 0.0
    %1559 = vmatpush1.msra.mxu0 %v1402
    %1560 = vmatprep.subr.mxu0 0.0
    %1561 = vmatpush1.msra.mxu0 %v1401
    %1562 = vmatprep.subr.mxu0 0.0
    %1563 = vmatpush2.msra.mxu0 %v1432
    %1564 = vmatprep.subr.mxu0 0.0
    %1565 = vmatpush2.msra.mxu0 %v1431
    %1566 = vmatprep.subr.mxu0 0.0
    %1567 = vmatpush2.msra.mxu0 %v1430
    %1568 = vmatprep.subr.mxu0 0.0
    %1569 = vmatpush2.msra.mxu0 %v1429
    %1570 = vmatprep.subr.mxu0 0.0
    %1571 = vmatpush2.msra.mxu0 %v1428
    %1572 = vmatprep.subr.mxu0 0.0
    %1573 = vmatpush2.msra.mxu0 %v1427
    %1574 = vmatprep.subr.mxu0 0.0
    %1575 = vmatpush2.msra.mxu0 %v1426
    %1576 = vmatprep.subr.mxu0 0.0
    %1577 = vmatpush2.msra.mxu0 %v1425
    %1578 = vmatprep.subr.mxu0 0.0
    %1579 = vmatpush2.msra.mxu0 %v1424
    %1580 = vmatprep.subr.mxu0 0.0
    %1581 = vmatpush2.msra.mxu0 %v1423
    %1582 = vmatprep.subr.mxu0 0.0
    %1583 = vmatpush2.msra.mxu0 %v1422
    %1584 = vmatprep.subr.mxu0 0.0
    %1585 = vmatpush2.msra.mxu0 %v1421
    %1586 = vmatprep.subr.mxu0 0.0
    %1587 = vmatpush2.msra.mxu0 %v1420
    %1588 = vmatprep.subr.mxu0 0.0
    %1589 = vmatpush2.msra.mxu0 %v1419
    %1590 = vmatprep.subr.mxu0 0.0
    %1591 = vmatpush2.msra.mxu0 %v1418
    %1592 = vmatprep.subr.mxu0 0.0
    %1593 = vmatpush2.msra.mxu0 %v1417
    %1594 = vmatprep.mubr.f32.mxu0 %v1365
    %1595 = vmatmul.mubr.f32.gmra.mxu0 %v1364
    %v1596 = vpop.f32.mrf.mxu0
    %v1597 = vadd.f32 %v1527, %v1596
    %v1598 = vpop.f32.mrf.mxu0
    %1599 = vdwg.mxu0
    %1600 = vmatprep.subr.mxu0 0.0
    %1601 = vmatpush1.msra.mxu0 %v1448
    %1602 = vmatprep.subr.mxu0 0.0
    %1603 = vmatpush1.msra.mxu0 %v1447
    %1604 = vmatprep.subr.mxu0 0.0
    %1605 = vmatpush1.msra.mxu0 %v1446
    %1606 = vmatprep.subr.mxu0 0.0
    %1607 = vmatpush1.msra.mxu0 %v1445
    %1608 = vmatprep.subr.mxu0 0.0
    %1609 = vmatpush1.msra.mxu0 %v1444
    %1610 = vmatprep.subr.mxu0 0.0
    %1611 = vmatpush1.msra.mxu0 %v1443
    %1612 = vmatprep.subr.mxu0 0.0
    %1613 = vmatpush1.msra.mxu0 %v1442
    %1614 = vmatprep.subr.mxu0 0.0
    %1615 = vmatpush1.msra.mxu0 %v1441
    %1616 = vmatprep.subr.mxu0 0.0
    %1617 = vmatpush1.msra.mxu0 %v1440
    %1618 = vmatprep.subr.mxu0 0.0
    %1619 = vmatpush1.msra.mxu0 %v1439
    %1620 = vmatprep.subr.mxu0 0.0
    %1621 = vmatpush1.msra.mxu0 %v1438
    %1622 = vmatprep.subr.mxu0 0.0
    %1623 = vmatpush1.msra.mxu0 %v1437
    %1624 = vmatprep.subr.mxu0 0.0
    %1625 = vmatpush1.msra.mxu0 %v1436
    %1626 = vmatprep.subr.mxu0 0.0
    %1627 = vmatpush1.msra.mxu0 %v1435
    %1628 = vmatprep.subr.mxu0 0.0
    %1629 = vmatpush1.msra.mxu0 %v1434
    %1630 = vmatprep.subr.mxu0 0.0
    %1631 = vmatpush1.msra.mxu0 %v1433
    %1632 = vmatprep.subr.mxu0 0.0
    %1633 = vmatpush2.msra.mxu0 0.0
    %1634 = vmatprep.subr.mxu0 0.0
    %1635 = vmatpush2.msra.mxu0 0.0
    %1636 = vmatprep.subr.mxu0 0.0
    %1637 = vmatpush2.msra.mxu0 0.0
    %1638 = vmatprep.subr.mxu0 0.0
    %1639 = vmatpush2.msra.mxu0 0.0
    %1640 = vmatprep.subr.mxu0 0.0
    %1641 = vmatpush2.msra.mxu0 0.0
    %1642 = vmatprep.subr.mxu0 0.0
    %1643 = vmatpush2.msra.mxu0 0.0
    %1644 = vmatprep.subr.mxu0 0.0
    %1645 = vmatpush2.msra.mxu0 0.0
    %1646 = vmatprep.subr.mxu0 0.0
    %1647 = vmatpush2.msra.mxu0 0.0
    %1648 = vmatprep.subr.mxu0 0.0
    %1649 = vmatpush2.msra.mxu0 0.0
    %1650 = vmatprep.subr.mxu0 0.0
    %1651 = vmatpush2.msra.mxu0 0.0
    %1652 = vmatprep.subr.mxu0 0.0
    %1653 = vmatpush2.msra.mxu0 0.0
    %1654 = vmatprep.subr.mxu0 0.0
    %1655 = vmatpush2.msra.mxu0 %v1458
    %1656 = vmatprep.subr.mxu0 0.0
    %1657 = vmatpush2.msra.mxu0 %v1452
    %1658 = vmatprep.subr.mxu0 0.0
    %1659 = vmatpush2.msra.mxu0 %v1451
    %1660 = vmatprep.subr.mxu0 0.0
    %1661 = vmatpush2.msra.mxu0 %v1450
    %1662 = vmatprep.subr.mxu0 0.0
    %1663 = vmatpush2.msra.mxu0 %v1449
    %1664 = vmatprep.mubr.f32.mxu0 %v1455
    %1665 = vmatmul.mubr.f32.gmra.mxu0 %v1366
    %v1666 = vpop.f32.mrf.mxu0
    %v1667 = vadd.f32 %v1597, %v1666
    %v1668 = vpop.f32.mrf.mxu0
    %1669 = vdwg.mxu0
    %v1670 = vadd.f32 %v1165, %v1667
    %v1671 = vld [vmem:[%s133] sm:$0xff]
    %v1672 = vld [vmem:[%s133 + $0x8] sm:$0xff]
    %v1673 = vld [vmem:[%s133 + $0x10] sm:$0xff]
    %v1674 = vld [vmem:[%s133 + $0x18] sm:$0xff]
    %v1675 = vld [vmem:[%s133 + $0x20] sm:$0xff]
    %v1676 = vld [vmem:[%s133 + $0x28] sm:$0xff]
    %s1677 = sld [smem:[#allocation3 + $0x180]]
    %v1678 = vstv %s1677
    %v1679 = vmul.f32 %v1671, %v1678
    %v1680 = vmul.f32 %v1672, %v1678
    %v1681 = vmul.f32 %v1673, %v1678
    %v1682 = vmul.f32 %v1674, %v1678
    %v1683 = vmul.f32 %v1675, %v1678
    %v1684 = vmul.f32 %v1676, %v1678
    %v1685 = vld [vmem:[%s150] sm:$0xff]
    %v1686 = vld [vmem:[%s150 + $0x8] sm:$0xff]
    %v1687 = vld [vmem:[%s150 + $0x10] sm:$0xff]
    %v1688 = vld [vmem:[%s150 + $0x18] sm:$0xff]
    %v1689 = vld [vmem:[%s150 + $0x20] sm:$0xff]
    %v1690 = vld [vmem:[%s150 + $0x28] sm:$0xff]
    %s1691 = sld [smem:[#allocation3 + $0x181]]
    %v1692 = vstv %s1691
    %v1693 = vmul.f32 %v1685, %v1692
    %v1694 = vmul.f32 %v1686, %v1692
    %v1695 = vmul.f32 %v1687, %v1692
    %v1696 = vmul.f32 %v1688, %v1692
    %v1697 = vmul.f32 %v1689, %v1692
    %v1698 = vmul.f32 %v1690, %v1692
    %v1699 = vadd.f32 %v1679, %v1693
    %v1700 = vadd.f32 %v1680, %v1694
    %v1701 = vadd.f32 %v1681, %v1695
    %v1702 = vadd.f32 %v1682, %v1696
    %v1703 = vadd.f32 %v1683, %v1697
    %v1704 = vadd.f32 %v1684, %v1698
    %v1705 = vld [vmem:[%s173] sm:$0xff]
    %v1706 = vld [vmem:[%s173 + $0x8] sm:$0xff]
    %v1707 = vld [vmem:[%s173 + $0x10] sm:$0xff]
    %v1708 = vld [vmem:[%s173 + $0x18] sm:$0xff]
    %v1709 = vld [vmem:[%s173 + $0x20] sm:$0xff]
    %v1710 = vld [vmem:[%s173 + $0x28] sm:$0xff]
    %s1711 = sld [smem:[#allocation3 + $0x182]]
    %v1712 = vstv %s1711
    %v1713 = vmul.f32 %v1705, %v1712
    %v1714 = vmul.f32 %v1706, %v1712
    %v1715 = vmul.f32 %v1707, %v1712
    %v1716 = vmul.f32 %v1708, %v1712
    %v1717 = vmul.f32 %v1709, %v1712
    %v1718 = vmul.f32 %v1710, %v1712
    %v1719 = vadd.f32 %v1699, %v1713
    %v1720 = vadd.f32 %v1700, %v1714
    %v1721 = vadd.f32 %v1701, %v1715
    %v1722 = vadd.f32 %v1702, %v1716
    %v1723 = vadd.f32 %v1703, %v1717
    %v1724 = vadd.f32 %v1704, %v1718
    %v1725 = vld [vmem:[%s196] sm:$0xff]
    %v1726 = vld [vmem:[%s196 + $0x8] sm:$0xff]
    %v1727 = vld [vmem:[%s196 + $0x10] sm:$0xff]
    %v1728 = vld [vmem:[%s196 + $0x18] sm:$0xff]
    %v1729 = vld [vmem:[%s196 + $0x20] sm:$0xff]
    %v1730 = vld [vmem:[%s196 + $0x28] sm:$0xff]
    %s1731 = sld [smem:[#allocation3 + $0x183]]
    %v1732 = vstv %s1731
    %v1733 = vmul.f32 %v1725, %v1732
    %v1734 = vmul.f32 %v1726, %v1732
    %v1735 = vmul.f32 %v1727, %v1732
    %v1736 = vmul.f32 %v1728, %v1732
    %v1737 = vmul.f32 %v1729, %v1732
    %v1738 = vmul.f32 %v1730, %v1732
    %v1739 = vadd.f32 %v1719, %v1733
    %v1740 = vadd.f32 %v1720, %v1734
    %v1741 = vadd.f32 %v1721, %v1735
    %v1742 = vadd.f32 %v1722, %v1736
    %v1743 = vadd.f32 %v1723, %v1737
    %v1744 = vadd.f32 %v1724, %v1738
    %v1745 = vld [vmem:[%s219] sm:$0xff]
    %v1746 = vld [vmem:[%s219 + $0x8] sm:$0xff]
    %v1747 = vld [vmem:[%s219 + $0x10] sm:$0xff]
    %v1748 = vld [vmem:[%s219 + $0x18] sm:$0xff]
    %v1749 = vld [vmem:[%s219 + $0x20] sm:$0xff]
    %v1750 = vld [vmem:[%s219 + $0x28] sm:$0xff]
    %s1751 = sld [smem:[#allocation3 + $0x184]]
    %v1752 = vstv %s1751
    %v1753 = vmul.f32 %v1745, %v1752
    %v1754 = vmul.f32 %v1746, %v1752
    %v1755 = vmul.f32 %v1747, %v1752
    %v1756 = vmul.f32 %v1748, %v1752
    %v1757 = vmul.f32 %v1749, %v1752
    %v1758 = vmul.f32 %v1750, %v1752
    %v1759 = vadd.f32 %v1739, %v1753
    %v1760 = vadd.f32 %v1740, %v1754
    %v1761 = vadd.f32 %v1741, %v1755
    %v1762 = vadd.f32 %v1742, %v1756
    %v1763 = vadd.f32 %v1743, %v1757
    %v1764 = vadd.f32 %v1744, %v1758
    %v1765 = vld [vmem:[%s242] sm:$0xff]
    %v1766 = vld [vmem:[%s242 + $0x8] sm:$0xff]
    %v1767 = vld [vmem:[%s242 + $0x10] sm:$0xff]
    %v1768 = vld [vmem:[%s242 + $0x18] sm:$0xff]
    %v1769 = vld [vmem:[%s242 + $0x20] sm:$0xff]
    %v1770 = vld [vmem:[%s242 + $0x28] sm:$0xff]
    %s1771 = sld [smem:[#allocation3 + $0x185]]
    %v1772 = vstv %s1771
    %v1773 = vmul.f32 %v1765, %v1772
    %v1774 = vmul.f32 %v1766, %v1772
    %v1775 = vmul.f32 %v1767, %v1772
    %v1776 = vmul.f32 %v1768, %v1772
    %v1777 = vmul.f32 %v1769, %v1772
    %v1778 = vmul.f32 %v1770, %v1772
    %v1779 = vadd.f32 %v1759, %v1773
    %v1780 = vadd.f32 %v1760, %v1774
    %v1781 = vadd.f32 %v1761, %v1775
    %v1782 = vadd.f32 %v1762, %v1776
    %v1783 = vadd.f32 %v1763, %v1777
    %v1784 = vadd.f32 %v1764, %v1778
    %v1785 = vld [vmem:[%s265] sm:$0xff]
    %v1786 = vld [vmem:[%s265 + $0x8] sm:$0xff]
    %v1787 = vld [vmem:[%s265 + $0x10] sm:$0xff]
    %v1788 = vld [vmem:[%s265 + $0x18] sm:$0xff]
    %v1789 = vld [vmem:[%s265 + $0x20] sm:$0xff]
    %v1790 = vld [vmem:[%s265 + $0x28] sm:$0xff]
    %s1791 = sld [smem:[#allocation3 + $0x186]]
    %v1792 = vstv %s1791
    %v1793 = vmul.f32 %v1785, %v1792
    %v1794 = vmul.f32 %v1786, %v1792
    %v1795 = vmul.f32 %v1787, %v1792
    %v1796 = vmul.f32 %v1788, %v1792
    %v1797 = vmul.f32 %v1789, %v1792
    %v1798 = vmul.f32 %v1790, %v1792
    %v1799 = vadd.f32 %v1779, %v1793
    %v1800 = vadd.f32 %v1780, %v1794
    %v1801 = vadd.f32 %v1781, %v1795
    %v1802 = vadd.f32 %v1782, %v1796
    %v1803 = vadd.f32 %v1783, %v1797
    %v1804 = vadd.f32 %v1784, %v1798
    %v1805 = vld [vmem:[%s288] sm:$0xff]
    %v1806 = vld [vmem:[%s288 + $0x8] sm:$0xff]
    %v1807 = vld [vmem:[%s288 + $0x10] sm:$0xff]
    %v1808 = vld [vmem:[%s288 + $0x18] sm:$0xff]
    %v1809 = vld [vmem:[%s288 + $0x20] sm:$0xff]
    %v1810 = vld [vmem:[%s288 + $0x28] sm:$0xff]
    %s1811 = sld [smem:[#allocation3 + $0x187]]
    %v1812 = vstv %s1811
    %v1813 = vmul.f32 %v1805, %v1812
    %v1814 = vmul.f32 %v1806, %v1812
    %v1815 = vmul.f32 %v1807, %v1812
    %v1816 = vmul.f32 %v1808, %v1812
    %v1817 = vmul.f32 %v1809, %v1812
    %v1818 = vmul.f32 %v1810, %v1812
    %v1819 = vadd.f32 %v1799, %v1813
    %v1820 = vadd.f32 %v1800, %v1814
    %v1821 = vadd.f32 %v1801, %v1815
    %v1822 = vadd.f32 %v1802, %v1816
    %v1823 = vadd.f32 %v1803, %v1817
    %v1824 = vadd.f32 %v1804, %v1818
    %v1825 = vld [vmem:[%s311] sm:$0xff]
    %v1826 = vld [vmem:[%s311 + $0x8] sm:$0xff]
    %v1827 = vld [vmem:[%s311 + $0x10] sm:$0xff]
    %v1828 = vld [vmem:[%s311 + $0x18] sm:$0xff]
    %v1829 = vld [vmem:[%s311 + $0x20] sm:$0xff]
    %v1830 = vld [vmem:[%s311 + $0x28] sm:$0xff]
    %s1831 = sld [smem:[#allocation3 + $0x188]]
    %v1832 = vstv %s1831
    %v1833 = vmul.f32 %v1825, %v1832
    %v1834 = vmul.f32 %v1826, %v1832
    %v1835 = vmul.f32 %v1827, %v1832
    %v1836 = vmul.f32 %v1828, %v1832
    %v1837 = vmul.f32 %v1829, %v1832
    %v1838 = vmul.f32 %v1830, %v1832
    %v1839 = vadd.f32 %v1819, %v1833
    %v1840 = vadd.f32 %v1820, %v1834
    %v1841 = vadd.f32 %v1821, %v1835
    %v1842 = vadd.f32 %v1822, %v1836
    %v1843 = vadd.f32 %v1823, %v1837
    %v1844 = vadd.f32 %v1824, %v1838
    %s1845 = sld [smem:[#allocation6 + $0x3]]
    %v1846 = vstv %s1845
    %v1847 = vadd.f32 %v1839, %v1846
    %v1848 = vadd.f32 %v1840, %v1846
    %v1849 = vadd.f32 %v1841, %v1846
    %v1850 = vadd.f32 %v1842, %v1846
    %v1851 = vadd.f32 %v1843, %v1846
    %v1852 = vadd.f32 %v1844, %v1846
    %v1853 = vmax.f32 %v1847, 0.0
    %v1854 = vmax.f32 %v1848, 0.0
    %v1855 = vmax.f32 %v1849, 0.0
    %v1856 = vmax.f32 %v1850, 0.0
    %v1857 = vmax.f32 %v1851, 0.0
    %v1858 = vmax.f32 %v1852, 0.0
    %1859 = vst [vmem:[%s635] sm:$0xff] %v1853
    %1860 = vst [vmem:[%s635 + $0x8] sm:$0xff] %v1854
    %1861 = vst [vmem:[%s635 + $0x10] sm:$0xff] %v1855
    %1862 = vst [vmem:[%s635 + $0x18] sm:$0xff] %v1856
    %1863 = vst [vmem:[%s635 + $0x20] sm:$0xff] %v1857
    %1864 = vst.msk [vmem:[%s635 + $0x28] sm:$0xff] %vm353, %v1858
    %v1865 = vld [vmem:[%s642] sm:$0xff]
    %v1866 = vld [vmem:[%s642 + $0x8] sm:$0xff]
    %v1867 = vld [vmem:[%s642 + $0x10] sm:$0xff]
    %v1868 = vld [vmem:[%s642 + $0x18] sm:$0xff]
    %v1869 = vld [vmem:[%s642 + $0x20] sm:$0xff]
    %v1870 = vld [vmem:[%s642 + $0x28] sm:$0xff]
    %s1871 = scalar_lea.vmem [#allocation8], 2040
    %v1872 = vld [vmem:[%s1871] sm:$0xff]
    %v1873 = vld [vmem:[%s1871 + $0x8] sm:$0xff]
    %v1874 = vld [vmem:[%s1871 + $0x10] sm:$0xff]
    %v1875 = vld [vmem:[%s1871 + $0x18] sm:$0xff]
    %v1876 = vld [vmem:[%s1871 + $0x20] sm:$0xff]
    %v1877 = vld [vmem:[%s1871 + $0x28] sm:$0xff]
    %v1878 = vld [vmem:[%s1871 + $0x30] sm:$0xff]
    %v1879 = vld [vmem:[%s1871 + $0x38] sm:$0xff]
    %v1880 = vld [vmem:[%s1871 + $0x40] sm:$0xff]
    %v1881 = vld [vmem:[%s1871 + $0x48] sm:$0xff]
    %v1882 = vld [vmem:[%s1871 + $0x50] sm:$0xff]
    %v1883 = vld [vmem:[%s1871 + $0x58] sm:$0xff]
    %v1884 = vld [vmem:[%s1871 + $0x60] sm:$0xff]
    %v1885 = vld [vmem:[%s1871 + $0x68] sm:$0xff]
    %v1886 = vld [vmem:[%s1871 + $0x70] sm:$0xff]
    %v1887 = vld [vmem:[%s1871 + $0x78] sm:$0xff]
    %v1888 = vld [vmem:[%s1871 + $0x80] sm:$0xff]
    %v1889 = vld [vmem:[%s1871 + $0x88] sm:$0xff]
    %v1890 = vld [vmem:[%s1871 + $0x90] sm:$0xff]
    %v1891 = vld [vmem:[%s1871 + $0x98] sm:$0xff]
    %v1892 = vld [vmem:[%s1871 + $0xa0] sm:$0xff]
    %v1893 = vld [vmem:[%s1871 + $0xa8] sm:$0xff]
    %v1894 = vld [vmem:[%s1871 + $0xb0] sm:$0xff]
    %v1895 = vld [vmem:[%s1871 + $0xb8] sm:$0xff]
    %v1896 = vld [vmem:[%s1871 + $0xc0] sm:$0xff]
    %v1897 = vld [vmem:[%s1871 + $0xc8] sm:$0xff]
    %v1898 = vld [vmem:[%s1871 + $0xd0] sm:$0xff]
    %v1899 = vld [vmem:[%s1871 + $0xd8] sm:$0xff]
    %v1900 = vld [vmem:[%s1871 + $0xe0] sm:$0xff]
    %v1901 = vld [vmem:[%s1871 + $0xe8] sm:$0xff]
    %v1902 = vld [vmem:[%s1871 + $0xf0] sm:$0xff]
    %v1903 = vld [vmem:[%s1871 + $0xf8] sm:$0xff]
    %v1904 = vld [vmem:[%s1871 + $0x100] sm:$0xff]
    %v1905 = vld [vmem:[%s1871 + $0x108] sm:$0xff]
    %v1906 = vld [vmem:[%s1871 + $0x110] sm:$0xff]
    %v1907 = vld [vmem:[%s1871 + $0x118] sm:$0xff]
    %v1908 = vld [vmem:[%s1871 + $0x120] sm:$0xff]
    %v1909 = vld [vmem:[%s1871 + $0x128] sm:$0xff]
    %v1910 = vld [vmem:[%s1871 + $0x130] sm:$0xff]
    %v1911 = vld [vmem:[%s1871 + $0x138] sm:$0xff]
    %v1912 = vld [vmem:[%s1871 + $0x140] sm:$0xff]
    %v1913 = vld [vmem:[%s1871 + $0x148] sm:$0xff]
    %v1914 = vld [vmem:[%s1871 + $0x150] sm:$0xff]
    %v1915 = vld [vmem:[%s1871 + $0x158] sm:$0xff]
    %v1916 = vld [vmem:[%s1871 + $0x160] sm:$0xff]
    %v1917 = vld [vmem:[%s1871 + $0x168] sm:$0xff]
    %v1918 = vld [vmem:[%s1871 + $0x170] sm:$0xff]
    %v1919 = vld [vmem:[%s1871 + $0x178] sm:$0xff]
    %v1920 = vld [vmem:[%s1871 + $0x180] sm:$0xff]
    %v1921 = vld [vmem:[%s1871 + $0x188] sm:$0xff]
    %v1922 = vld [vmem:[%s1871 + $0x190] sm:$0xff]
    %v1923 = vld [vmem:[%s1871 + $0x198] sm:$0xff]
    %v1924 = vld [vmem:[%s1871 + $0x1a0] sm:$0xff]
    %v1925 = vld [vmem:[%s1871 + $0x1a8] sm:$0xff]
    %v1926 = vld [vmem:[%s1871 + $0x1b0] sm:$0xff]
    %v1927 = vld [vmem:[%s1871 + $0x1b8] sm:$0xff]
    %v1928 = vld [vmem:[%s1871 + $0x1c0] sm:$0xff]
    %v1929 = vld [vmem:[%s1871 + $0x1c8] sm:$0xff]
    %v1930 = vld [vmem:[%s1871 + $0x1d0] sm:$0xff]
    %v1931 = vld [vmem:[%s1871 + $0x1d8] sm:$0xff]
    %v1932 = vld [vmem:[%s1871 + $0x1e0] sm:$0xff]
    %v1933 = vld [vmem:[%s1871 + $0x1e8] sm:$0xff]
    %v1934 = vld [vmem:[%s1871 + $0x1f0] sm:$0xff]
    %v1935 = vld [vmem:[%s1871 + $0x1f8] sm:$0xff]
    %v1936 = vld [vmem:[%s1871 + $0x200] sm:$0xff]
    %v1937 = vld [vmem:[%s1871 + $0x208] sm:$0xff]
    %v1938 = vld [vmem:[%s1871 + $0x210] sm:$0xff]
    %v1939 = vld [vmem:[%s1871 + $0x218] sm:$0xff]
    %v1940 = vld [vmem:[%s1871 + $0x220] sm:$0xff]
    %v1941 = vld [vmem:[%s1871 + $0x228] sm:$0xff]
    %v1942 = vld [vmem:[%s1871 + $0x230] sm:$0xff]
    %v1943 = vld [vmem:[%s1871 + $0x238] sm:$0xff]
    %v1944 = vld [vmem:[%s1871 + $0x240] sm:$0xff]
    %v1945 = vld [vmem:[%s1871 + $0x248] sm:$0xff]
    %v1946 = vld [vmem:[%s1871 + $0x250] sm:$0xff]
    %v1947 = vld [vmem:[%s1871 + $0x258] sm:$0xff]
    %v1948 = vld [vmem:[%s1871 + $0x260] sm:$0xff]
    %v1949 = vld [vmem:[%s1871 + $0x268] sm:$0xff]
    %v1950 = vld [vmem:[%s1871 + $0x270] sm:$0xff]
    %v1951 = vld [vmem:[%s1871 + $0x278] sm:$0xff]
    %v1952 = vld [vmem:[%s1871 + $0x280] sm:$0xff]
    %v1953 = vld [vmem:[%s1871 + $0x288] sm:$0xff]
    %v1954 = vld [vmem:[%s1871 + $0x290] sm:$0xff]
    %v1955 = vld [vmem:[%s1871 + $0x298] sm:$0xff]
    %v1956 = vld [vmem:[%s1871 + $0x2a0] sm:$0xf]
    %v1958 = vsel %vm353, %v1870, 0
    %v1961 = vsel %vm738, %v1956, 0
    %1963 = vmatprep.subr.mxu0 0.0
    %1964 = vmatpush1.msra.mxu0 %v1887
    %1965 = vmatprep.subr.mxu0 0.0
    %1966 = vmatpush1.msra.mxu0 %v1886
    %1967 = vmatprep.subr.mxu0 0.0
    %1968 = vmatpush1.msra.mxu0 %v1885
    %1969 = vmatprep.subr.mxu0 0.0
    %1970 = vmatpush1.msra.mxu0 %v1884
    %1971 = vmatprep.subr.mxu0 0.0
    %1972 = vmatpush1.msra.mxu0 %v1883
    %1973 = vmatprep.subr.mxu0 0.0
    %1974 = vmatpush1.msra.mxu0 %v1882
    %1975 = vmatprep.subr.mxu0 0.0
    %1976 = vmatpush1.msra.mxu0 %v1881
    %1977 = vmatprep.subr.mxu0 0.0
    %1978 = vmatpush1.msra.mxu0 %v1880
    %1979 = vmatprep.subr.mxu0 0.0
    %1980 = vmatpush1.msra.mxu0 %v1879
    %1981 = vmatprep.subr.mxu0 0.0
    %1982 = vmatpush1.msra.mxu0 %v1878
    %1983 = vmatprep.subr.mxu0 0.0
    %1984 = vmatpush1.msra.mxu0 %v1877
    %1985 = vmatprep.subr.mxu0 0.0
    %1986 = vmatpush1.msra.mxu0 %v1876
    %1987 = vmatprep.subr.mxu0 0.0
    %1988 = vmatpush1.msra.mxu0 %v1875
    %1989 = vmatprep.subr.mxu0 0.0
    %1990 = vmatpush1.msra.mxu0 %v1874
    %1991 = vmatprep.subr.mxu0 0.0
    %1992 = vmatpush1.msra.mxu0 %v1873
    %1993 = vmatprep.subr.mxu0 0.0
    %1994 = vmatpush1.msra.mxu0 %v1872
    %1995 = vmatprep.subr.mxu0 0.0
    %1996 = vmatpush2.msra.mxu0 %v1903
    %1997 = vmatprep.subr.mxu0 0.0
    %1998 = vmatpush2.msra.mxu0 %v1902
    %1999 = vmatprep.subr.mxu0 0.0
    %2000 = vmatpush2.msra.mxu0 %v1901
    %2001 = vmatprep.subr.mxu0 0.0
    %2002 = vmatpush2.msra.mxu0 %v1900
    %2003 = vmatprep.subr.mxu0 0.0
    %2004 = vmatpush2.msra.mxu0 %v1899
    %2005 = vmatprep.subr.mxu0 0.0
    %2006 = vmatpush2.msra.mxu0 %v1898
    %2007 = vmatprep.subr.mxu0 0.0
    %2008 = vmatpush2.msra.mxu0 %v1897
    %2009 = vmatprep.subr.mxu0 0.0
    %2010 = vmatpush2.msra.mxu0 %v1896
    %2011 = vmatprep.subr.mxu0 0.0
    %2012 = vmatpush2.msra.mxu0 %v1895
    %2013 = vmatprep.subr.mxu0 0.0
    %2014 = vmatpush2.msra.mxu0 %v1894
    %2015 = vmatprep.subr.mxu0 0.0
    %2016 = vmatpush2.msra.mxu0 %v1893
    %2017 = vmatprep.subr.mxu0 0.0
    %2018 = vmatpush2.msra.mxu0 %v1892
    %2019 = vmatprep.subr.mxu0 0.0
    %2020 = vmatpush2.msra.mxu0 %v1891
    %2021 = vmatprep.subr.mxu0 0.0
    %2022 = vmatpush2.msra.mxu0 %v1890
    %2023 = vmatprep.subr.mxu0 0.0
    %2024 = vmatpush2.msra.mxu0 %v1889
    %2025 = vmatprep.subr.mxu0 0.0
    %2026 = vmatpush2.msra.mxu0 %v1888
    %2027 = vmatprep.mubr.f32.mxu0 %v1866
    %2028 = vmatmul.mubr.f32.gmra.mxu0 %v1865
    %v2029 = vpop.f32.mrf.mxu0
    %v2030 = vadd.f32 0.0, %v2029
    %v2031 = vpop.f32.mrf.mxu0
    %2032 = vdwg.mxu0
    %2033 = vmatprep.subr.mxu0 0.0
    %2034 = vmatpush1.msra.mxu0 %v1919
    %2035 = vmatprep.subr.mxu0 0.0
    %2036 = vmatpush1.msra.mxu0 %v1918
    %2037 = vmatprep.subr.mxu0 0.0
    %2038 = vmatpush1.msra.mxu0 %v1917
    %2039 = vmatprep.subr.mxu0 0.0
    %2040 = vmatpush1.msra.mxu0 %v1916
    %2041 = vmatprep.subr.mxu0 0.0
    %2042 = vmatpush1.msra.mxu0 %v1915
    %2043 = vmatprep.subr.mxu0 0.0
    %2044 = vmatpush1.msra.mxu0 %v1914
    %2045 = vmatprep.subr.mxu0 0.0
    %2046 = vmatpush1.msra.mxu0 %v1913
    %2047 = vmatprep.subr.mxu0 0.0
    %2048 = vmatpush1.msra.mxu0 %v1912
    %2049 = vmatprep.subr.mxu0 0.0
    %2050 = vmatpush1.msra.mxu0 %v1911
    %2051 = vmatprep.subr.mxu0 0.0
    %2052 = vmatpush1.msra.mxu0 %v1910
    %2053 = vmatprep.subr.mxu0 0.0
    %2054 = vmatpush1.msra.mxu0 %v1909
    %2055 = vmatprep.subr.mxu0 0.0
    %2056 = vmatpush1.msra.mxu0 %v1908
    %2057 = vmatprep.subr.mxu0 0.0
    %2058 = vmatpush1.msra.mxu0 %v1907
    %2059 = vmatprep.subr.mxu0 0.0
    %2060 = vmatpush1.msra.mxu0 %v1906
    %2061 = vmatprep.subr.mxu0 0.0
    %2062 = vmatpush1.msra.mxu0 %v1905
    %2063 = vmatprep.subr.mxu0 0.0
    %2064 = vmatpush1.msra.mxu0 %v1904
    %2065 = vmatprep.subr.mxu0 0.0
    %2066 = vmatpush2.msra.mxu0 %v1935
    %2067 = vmatprep.subr.mxu0 0.0
    %2068 = vmatpush2.msra.mxu0 %v1934
    %2069 = vmatprep.subr.mxu0 0.0
    %2070 = vmatpush2.msra.mxu0 %v1933
    %2071 = vmatprep.subr.mxu0 0.0
    %2072 = vmatpush2.msra.mxu0 %v1932
    %2073 = vmatprep.subr.mxu0 0.0
    %2074 = vmatpush2.msra.mxu0 %v1931
    %2075 = vmatprep.subr.mxu0 0.0
    %2076 = vmatpush2.msra.mxu0 %v1930
    %2077 = vmatprep.subr.mxu0 0.0
    %2078 = vmatpush2.msra.mxu0 %v1929
    %2079 = vmatprep.subr.mxu0 0.0
    %2080 = vmatpush2.msra.mxu0 %v1928
    %2081 = vmatprep.subr.mxu0 0.0
    %2082 = vmatpush2.msra.mxu0 %v1927
    %2083 = vmatprep.subr.mxu0 0.0
    %2084 = vmatpush2.msra.mxu0 %v1926
    %2085 = vmatprep.subr.mxu0 0.0
    %2086 = vmatpush2.msra.mxu0 %v1925
    %2087 = vmatprep.subr.mxu0 0.0
    %2088 = vmatpush2.msra.mxu0 %v1924
    %2089 = vmatprep.subr.mxu0 0.0
    %2090 = vmatpush2.msra.mxu0 %v1923
    %2091 = vmatprep.subr.mxu0 0.0
    %2092 = vmatpush2.msra.mxu0 %v1922
    %2093 = vmatprep.subr.mxu0 0.0
    %2094 = vmatpush2.msra.mxu0 %v1921
    %2095 = vmatprep.subr.mxu0 0.0
    %2096 = vmatpush2.msra.mxu0 %v1920
    %2097 = vmatprep.mubr.f32.mxu0 %v1868
    %2098 = vmatmul.mubr.f32.gmra.mxu0 %v1867
    %v2099 = vpop.f32.mrf.mxu0
    %v2100 = vadd.f32 %v2030, %v2099
    %v2101 = vpop.f32.mrf.mxu0
    %2102 = vdwg.mxu0
    %2103 = vmatprep.subr.mxu0 0.0
    %2104 = vmatpush1.msra.mxu0 %v1951
    %2105 = vmatprep.subr.mxu0 0.0
    %2106 = vmatpush1.msra.mxu0 %v1950
    %2107 = vmatprep.subr.mxu0 0.0
    %2108 = vmatpush1.msra.mxu0 %v1949
    %2109 = vmatprep.subr.mxu0 0.0
    %2110 = vmatpush1.msra.mxu0 %v1948
    %2111 = vmatprep.subr.mxu0 0.0
    %2112 = vmatpush1.msra.mxu0 %v1947
    %2113 = vmatprep.subr.mxu0 0.0
    %2114 = vmatpush1.msra.mxu0 %v1946
    %2115 = vmatprep.subr.mxu0 0.0
    %2116 = vmatpush1.msra.mxu0 %v1945
    %2117 = vmatprep.subr.mxu0 0.0
    %2118 = vmatpush1.msra.mxu0 %v1944
    %2119 = vmatprep.subr.mxu0 0.0
    %2120 = vmatpush1.msra.mxu0 %v1943
    %2121 = vmatprep.subr.mxu0 0.0
    %2122 = vmatpush1.msra.mxu0 %v1942
    %2123 = vmatprep.subr.mxu0 0.0
    %2124 = vmatpush1.msra.mxu0 %v1941
    %2125 = vmatprep.subr.mxu0 0.0
    %2126 = vmatpush1.msra.mxu0 %v1940
    %2127 = vmatprep.subr.mxu0 0.0
    %2128 = vmatpush1.msra.mxu0 %v1939
    %2129 = vmatprep.subr.mxu0 0.0
    %2130 = vmatpush1.msra.mxu0 %v1938
    %2131 = vmatprep.subr.mxu0 0.0
    %2132 = vmatpush1.msra.mxu0 %v1937
    %2133 = vmatprep.subr.mxu0 0.0
    %2134 = vmatpush1.msra.mxu0 %v1936
    %2135 = vmatprep.subr.mxu0 0.0
    %2136 = vmatpush2.msra.mxu0 0.0
    %2137 = vmatprep.subr.mxu0 0.0
    %2138 = vmatpush2.msra.mxu0 0.0
    %2139 = vmatprep.subr.mxu0 0.0
    %2140 = vmatpush2.msra.mxu0 0.0
    %2141 = vmatprep.subr.mxu0 0.0
    %2142 = vmatpush2.msra.mxu0 0.0
    %2143 = vmatprep.subr.mxu0 0.0
    %2144 = vmatpush2.msra.mxu0 0.0
    %2145 = vmatprep.subr.mxu0 0.0
    %2146 = vmatpush2.msra.mxu0 0.0
    %2147 = vmatprep.subr.mxu0 0.0
    %2148 = vmatpush2.msra.mxu0 0.0
    %2149 = vmatprep.subr.mxu0 0.0
    %2150 = vmatpush2.msra.mxu0 0.0
    %2151 = vmatprep.subr.mxu0 0.0
    %2152 = vmatpush2.msra.mxu0 0.0
    %2153 = vmatprep.subr.mxu0 0.0
    %2154 = vmatpush2.msra.mxu0 0.0
    %2155 = vmatprep.subr.mxu0 0.0
    %2156 = vmatpush2.msra.mxu0 0.0
    %2157 = vmatprep.subr.mxu0 0.0
    %2158 = vmatpush2.msra.mxu0 %v1961
    %2159 = vmatprep.subr.mxu0 0.0
    %2160 = vmatpush2.msra.mxu0 %v1955
    %2161 = vmatprep.subr.mxu0 0.0
    %2162 = vmatpush2.msra.mxu0 %v1954
    %2163 = vmatprep.subr.mxu0 0.0
    %2164 = vmatpush2.msra.mxu0 %v1953
    %2165 = vmatprep.subr.mxu0 0.0
    %2166 = vmatpush2.msra.mxu0 %v1952
    %2167 = vmatprep.mubr.f32.mxu0 %v1958
    %2168 = vmatmul.mubr.f32.gmra.mxu0 %v1869
    %v2169 = vpop.f32.mrf.mxu0
    %v2170 = vadd.f32 %v2100, %v2169
    %v2171 = vpop.f32.mrf.mxu0
    %2172 = vdwg.mxu0
    %v2173 = vadd.f32 %v1670, %v2170
    %v2174 = vld [vmem:[%s133] sm:$0xff]
    %v2175 = vld [vmem:[%s133 + $0x8] sm:$0xff]
    %v2176 = vld [vmem:[%s133 + $0x10] sm:$0xff]
    %v2177 = vld [vmem:[%s133 + $0x18] sm:$0xff]
    %v2178 = vld [vmem:[%s133 + $0x20] sm:$0xff]
    %v2179 = vld [vmem:[%s133 + $0x28] sm:$0xff]
    %s2180 = sld [smem:[#allocation3 + $0x200]]
    %v2181 = vstv %s2180
    %v2182 = vmul.f32 %v2174, %v2181
    %v2183 = vmul.f32 %v2175, %v2181
    %v2184 = vmul.f32 %v2176, %v2181
    %v2185 = vmul.f32 %v2177, %v2181
    %v2186 = vmul.f32 %v2178, %v2181
    %v2187 = vmul.f32 %v2179, %v2181
    %v2188 = vld [vmem:[%s150] sm:$0xff]
    %v2189 = vld [vmem:[%s150 + $0x8] sm:$0xff]
    %v2190 = vld [vmem:[%s150 + $0x10] sm:$0xff]
    %v2191 = vld [vmem:[%s150 + $0x18] sm:$0xff]
    %v2192 = vld [vmem:[%s150 + $0x20] sm:$0xff]
    %v2193 = vld [vmem:[%s150 + $0x28] sm:$0xff]
    %s2194 = sld [smem:[#allocation3 + $0x201]]
    %v2195 = vstv %s2194
    %v2196 = vmul.f32 %v2188, %v2195
    %v2197 = vmul.f32 %v2189, %v2195
    %v2198 = vmul.f32 %v2190, %v2195
    %v2199 = vmul.f32 %v2191, %v2195
    %v2200 = vmul.f32 %v2192, %v2195
    %v2201 = vmul.f32 %v2193, %v2195
    %v2202 = vadd.f32 %v2182, %v2196
    %v2203 = vadd.f32 %v2183, %v2197
    %v2204 = vadd.f32 %v2184, %v2198
    %v2205 = vadd.f32 %v2185, %v2199
    %v2206 = vadd.f32 %v2186, %v2200
    %v2207 = vadd.f32 %v2187, %v2201
    %v2208 = vld [vmem:[%s173] sm:$0xff]
    %v2209 = vld [vmem:[%s173 + $0x8] sm:$0xff]
    %v2210 = vld [vmem:[%s173 + $0x10] sm:$0xff]
    %v2211 = vld [vmem:[%s173 + $0x18] sm:$0xff]
    %v2212 = vld [vmem:[%s173 + $0x20] sm:$0xff]
    %v2213 = vld [vmem:[%s173 + $0x28] sm:$0xff]
    %s2214 = sld [smem:[#allocation3 + $0x202]]
    %v2215 = vstv %s2214
    %v2216 = vmul.f32 %v2208, %v2215
    %v2217 = vmul.f32 %v2209, %v2215
    %v2218 = vmul.f32 %v2210, %v2215
    %v2219 = vmul.f32 %v2211, %v2215
    %v2220 = vmul.f32 %v2212, %v2215
    %v2221 = vmul.f32 %v2213, %v2215
    %v2222 = vadd.f32 %v2202, %v2216
    %v2223 = vadd.f32 %v2203, %v2217
    %v2224 = vadd.f32 %v2204, %v2218
    %v2225 = vadd.f32 %v2205, %v2219
    %v2226 = vadd.f32 %v2206, %v2220
    %v2227 = vadd.f32 %v2207, %v2221
    %v2228 = vld [vmem:[%s196] sm:$0xff]
    %v2229 = vld [vmem:[%s196 + $0x8] sm:$0xff]
    %v2230 = vld [vmem:[%s196 + $0x10] sm:$0xff]
    %v2231 = vld [vmem:[%s196 + $0x18] sm:$0xff]
    %v2232 = vld [vmem:[%s196 + $0x20] sm:$0xff]
    %v2233 = vld [vmem:[%s196 + $0x28] sm:$0xff]
    %s2234 = sld [smem:[#allocation3 + $0x203]]
    %v2235 = vstv %s2234
    %v2236 = vmul.f32 %v2228, %v2235
    %v2237 = vmul.f32 %v2229, %v2235
    %v2238 = vmul.f32 %v2230, %v2235
    %v2239 = vmul.f32 %v2231, %v2235
    %v2240 = vmul.f32 %v2232, %v2235
    %v2241 = vmul.f32 %v2233, %v2235
    %v2242 = vadd.f32 %v2222, %v2236
    %v2243 = vadd.f32 %v2223, %v2237
    %v2244 = vadd.f32 %v2224, %v2238
    %v2245 = vadd.f32 %v2225, %v2239
    %v2246 = vadd.f32 %v2226, %v2240
    %v2247 = vadd.f32 %v2227, %v2241
    %v2248 = vld [vmem:[%s219] sm:$0xff]
    %v2249 = vld [vmem:[%s219 + $0x8] sm:$0xff]
    %v2250 = vld [vmem:[%s219 + $0x10] sm:$0xff]
    %v2251 = vld [vmem:[%s219 + $0x18] sm:$0xff]
    %v2252 = vld [vmem:[%s219 + $0x20] sm:$0xff]
    %v2253 = vld [vmem:[%s219 + $0x28] sm:$0xff]
    %s2254 = sld [smem:[#allocation3 + $0x204]]
    %v2255 = vstv %s2254
    %v2256 = vmul.f32 %v2248, %v2255
    %v2257 = vmul.f32 %v2249, %v2255
    %v2258 = vmul.f32 %v2250, %v2255
    %v2259 = vmul.f32 %v2251, %v2255
    %v2260 = vmul.f32 %v2252, %v2255
    %v2261 = vmul.f32 %v2253, %v2255
    %v2262 = vadd.f32 %v2242, %v2256
    %v2263 = vadd.f32 %v2243, %v2257
    %v2264 = vadd.f32 %v2244, %v2258
    %v2265 = vadd.f32 %v2245, %v2259
    %v2266 = vadd.f32 %v2246, %v2260
    %v2267 = vadd.f32 %v2247, %v2261
    %v2268 = vld [vmem:[%s242] sm:$0xff]
    %v2269 = vld [vmem:[%s242 + $0x8] sm:$0xff]
    %v2270 = vld [vmem:[%s242 + $0x10] sm:$0xff]
    %v2271 = vld [vmem:[%s242 + $0x18] sm:$0xff]
    %v2272 = vld [vmem:[%s242 + $0x20] sm:$0xff]
    %v2273 = vld [vmem:[%s242 + $0x28] sm:$0xff]
    %s2274 = sld [smem:[#allocation3 + $0x205]]
    %v2275 = vstv %s2274
    %v2276 = vmul.f32 %v2268, %v2275
    %v2277 = vmul.f32 %v2269, %v2275
    %v2278 = vmul.f32 %v2270, %v2275
    %v2279 = vmul.f32 %v2271, %v2275
    %v2280 = vmul.f32 %v2272, %v2275
    %v2281 = vmul.f32 %v2273, %v2275
    %v2282 = vadd.f32 %v2262, %v2276
    %v2283 = vadd.f32 %v2263, %v2277
    %v2284 = vadd.f32 %v2264, %v2278
    %v2285 = vadd.f32 %v2265, %v2279
    %v2286 = vadd.f32 %v2266, %v2280
    %v2287 = vadd.f32 %v2267, %v2281
    %v2288 = vld [vmem:[%s265] sm:$0xff]
    %v2289 = vld [vmem:[%s265 + $0x8] sm:$0xff]
    %v2290 = vld [vmem:[%s265 + $0x10] sm:$0xff]
    %v2291 = vld [vmem:[%s265 + $0x18] sm:$0xff]
    %v2292 = vld [vmem:[%s265 + $0x20] sm:$0xff]
    %v2293 = vld [vmem:[%s265 + $0x28] sm:$0xff]
    %s2294 = sld [smem:[#allocation3 + $0x206]]
    %v2295 = vstv %s2294
    %v2296 = vmul.f32 %v2288, %v2295
    %v2297 = vmul.f32 %v2289, %v2295
    %v2298 = vmul.f32 %v2290, %v2295
    %v2299 = vmul.f32 %v2291, %v2295
    %v2300 = vmul.f32 %v2292, %v2295
    %v2301 = vmul.f32 %v2293, %v2295
    %v2302 = vadd.f32 %v2282, %v2296
    %v2303 = vadd.f32 %v2283, %v2297
    %v2304 = vadd.f32 %v2284, %v2298
    %v2305 = vadd.f32 %v2285, %v2299
    %v2306 = vadd.f32 %v2286, %v2300
    %v2307 = vadd.f32 %v2287, %v2301
    %v2308 = vld [vmem:[%s288] sm:$0xff]
    %v2309 = vld [vmem:[%s288 + $0x8] sm:$0xff]
    %v2310 = vld [vmem:[%s288 + $0x10] sm:$0xff]
    %v2311 = vld [vmem:[%s288 + $0x18] sm:$0xff]
    %v2312 = vld [vmem:[%s288 + $0x20] sm:$0xff]
    %v2313 = vld [vmem:[%s288 + $0x28] sm:$0xff]
    %s2314 = sld [smem:[#allocation3 + $0x207]]
    %v2315 = vstv %s2314
    %v2316 = vmul.f32 %v2308, %v2315
    %v2317 = vmul.f32 %v2309, %v2315
    %v2318 = vmul.f32 %v2310, %v2315
    %v2319 = vmul.f32 %v2311, %v2315
    %v2320 = vmul.f32 %v2312, %v2315
    %v2321 = vmul.f32 %v2313, %v2315
    %v2322 = vadd.f32 %v2302, %v2316
    %v2323 = vadd.f32 %v2303, %v2317
    %v2324 = vadd.f32 %v2304, %v2318
    %v2325 = vadd.f32 %v2305, %v2319
    %v2326 = vadd.f32 %v2306, %v2320
    %v2327 = vadd.f32 %v2307, %v2321
    %v2328 = vld [vmem:[%s311] sm:$0xff]
    %v2329 = vld [vmem:[%s311 + $0x8] sm:$0xff]
    %v2330 = vld [vmem:[%s311 + $0x10] sm:$0xff]
    %v2331 = vld [vmem:[%s311 + $0x18] sm:$0xff]
    %v2332 = vld [vmem:[%s311 + $0x20] sm:$0xff]
    %v2333 = vld [vmem:[%s311 + $0x28] sm:$0xff]
    %s2334 = sld [smem:[#allocation3 + $0x208]]
    %v2335 = vstv %s2334
    %v2336 = vmul.f32 %v2328, %v2335
    %v2337 = vmul.f32 %v2329, %v2335
    %v2338 = vmul.f32 %v2330, %v2335
    %v2339 = vmul.f32 %v2331, %v2335
    %v2340 = vmul.f32 %v2332, %v2335
    %v2341 = vmul.f32 %v2333, %v2335
    %v2342 = vadd.f32 %v2322, %v2336
    %v2343 = vadd.f32 %v2323, %v2337
    %v2344 = vadd.f32 %v2324, %v2338
    %v2345 = vadd.f32 %v2325, %v2339
    %v2346 = vadd.f32 %v2326, %v2340
    %v2347 = vadd.f32 %v2327, %v2341
    %s2348 = sld [smem:[#allocation6 + $0x4]]
    %v2349 = vstv %s2348
    %v2350 = vadd.f32 %v2342, %v2349
    %v2351 = vadd.f32 %v2343, %v2349
    %v2352 = vadd.f32 %v2344, %v2349
    %v2353 = vadd.f32 %v2345, %v2349
    %v2354 = vadd.f32 %v2346, %v2349
    %v2355 = vadd.f32 %v2347, %v2349
    %v2356 = vmax.f32 %v2350, 0.0
    %v2357 = vmax.f32 %v2351, 0.0
    %v2358 = vmax.f32 %v2352, 0.0
    %v2359 = vmax.f32 %v2353, 0.0
    %v2360 = vmax.f32 %v2354, 0.0
    %v2361 = vmax.f32 %v2355, 0.0
    %2362 = vst [vmem:[%s347] sm:$0xff] %v2356
    %2363 = vst [vmem:[%s347 + $0x8] sm:$0xff] %v2357
    %2364 = vst [vmem:[%s347 + $0x10] sm:$0xff] %v2358
    %2365 = vst [vmem:[%s347 + $0x18] sm:$0xff] %v2359
    %2366 = vst [vmem:[%s347 + $0x20] sm:$0xff] %v2360
    %2367 = vst.msk [vmem:[%s347 + $0x28] sm:$0xff] %vm353, %v2361
    %v2368 = vld [vmem:[#allocation2] sm:$0xff]
    %v2369 = vld [vmem:[#allocation2 + $0x8] sm:$0xff]
    %v2370 = vld [vmem:[#allocation2 + $0x10] sm:$0xff]
    %v2371 = vld [vmem:[#allocation2 + $0x18] sm:$0xff]
    %v2372 = vld [vmem:[#allocation2 + $0x20] sm:$0xff]
    %v2373 = vld [vmem:[#allocation2 + $0x28] sm:$0xff]
    %s2374 = scalar_lea.vmem [#allocation8], 2720
    %v2375 = vld [vmem:[%s2374] sm:$0xff]
    %v2376 = vld [vmem:[%s2374 + $0x8] sm:$0xff]
    %v2377 = vld [vmem:[%s2374 + $0x10] sm:$0xff]
    %v2378 = vld [vmem:[%s2374 + $0x18] sm:$0xff]
    %v2379 = vld [vmem:[%s2374 + $0x20] sm:$0xff]
    %v2380 = vld [vmem:[%s2374 + $0x28] sm:$0xff]
    %v2381 = vld [vmem:[%s2374 + $0x30] sm:$0xff]
    %v2382 = vld [vmem:[%s2374 + $0x38] sm:$0xff]
    %v2383 = vld [vmem:[%s2374 + $0x40] sm:$0xff]
    %v2384 = vld [vmem:[%s2374 + $0x48] sm:$0xff]
    %v2385 = vld [vmem:[%s2374 + $0x50] sm:$0xff]
    %v2386 = vld [vmem:[%s2374 + $0x58] sm:$0xff]
    %v2387 = vld [vmem:[%s2374 + $0x60] sm:$0xff]
    %v2388 = vld [vmem:[%s2374 + $0x68] sm:$0xff]
    %v2389 = vld [vmem:[%s2374 + $0x70] sm:$0xff]
    %v2390 = vld [vmem:[%s2374 + $0x78] sm:$0xff]
    %v2391 = vld [vmem:[%s2374 + $0x80] sm:$0xff]
    %v2392 = vld [vmem:[%s2374 + $0x88] sm:$0xff]
    %v2393 = vld [vmem:[%s2374 + $0x90] sm:$0xff]
    %v2394 = vld [vmem:[%s2374 + $0x98] sm:$0xff]
    %v2395 = vld [vmem:[%s2374 + $0xa0] sm:$0xff]
    %v2396 = vld [vmem:[%s2374 + $0xa8] sm:$0xff]
    %v2397 = vld [vmem:[%s2374 + $0xb0] sm:$0xff]
    %v2398 = vld [vmem:[%s2374 + $0xb8] sm:$0xff]
    %v2399 = vld [vmem:[%s2374 + $0xc0] sm:$0xff]
    %v2400 = vld [vmem:[%s2374 + $0xc8] sm:$0xff]
    %v2401 = vld [vmem:[%s2374 + $0xd0] sm:$0xff]
    %v2402 = vld [vmem:[%s2374 + $0xd8] sm:$0xff]
    %v2403 = vld [vmem:[%s2374 + $0xe0] sm:$0xff]
    %v2404 = vld [vmem:[%s2374 + $0xe8] sm:$0xff]
    %v2405 = vld [vmem:[%s2374 + $0xf0] sm:$0xff]
    %v2406 = vld [vmem:[%s2374 + $0xf8] sm:$0xff]
    %v2407 = vld [vmem:[%s2374 + $0x100] sm:$0xff]
    %v2408 = vld [vmem:[%s2374 + $0x108] sm:$0xff]
    %v2409 = vld [vmem:[%s2374 + $0x110] sm:$0xff]
    %v2410 = vld [vmem:[%s2374 + $0x118] sm:$0xff]
    %v2411 = vld [vmem:[%s2374 + $0x120] sm:$0xff]
    %v2412 = vld [vmem:[%s2374 + $0x128] sm:$0xff]
    %v2413 = vld [vmem:[%s2374 + $0x130] sm:$0xff]
    %v2414 = vld [vmem:[%s2374 + $0x138] sm:$0xff]
    %v2415 = vld [vmem:[%s2374 + $0x140] sm:$0xff]
    %v2416 = vld [vmem:[%s2374 + $0x148] sm:$0xff]
    %v2417 = vld [vmem:[%s2374 + $0x150] sm:$0xff]
    %v2418 = vld [vmem:[%s2374 + $0x158] sm:$0xff]
    %v2419 = vld [vmem:[%s2374 + $0x160] sm:$0xff]
    %v2420 = vld [vmem:[%s2374 + $0x168] sm:$0xff]
    %v2421 = vld [vmem:[%s2374 + $0x170] sm:$0xff]
    %v2422 = vld [vmem:[%s2374 + $0x178] sm:$0xff]
    %v2423 = vld [vmem:[%s2374 + $0x180] sm:$0xff]
    %v2424 = vld [vmem:[%s2374 + $0x188] sm:$0xff]
    %v2425 = vld [vmem:[%s2374 + $0x190] sm:$0xff]
    %v2426 = vld [vmem:[%s2374 + $0x198] sm:$0xff]
    %v2427 = vld [vmem:[%s2374 + $0x1a0] sm:$0xff]
    %v2428 = vld [vmem:[%s2374 + $0x1a8] sm:$0xff]
    %v2429 = vld [vmem:[%s2374 + $0x1b0] sm:$0xff]
    %v2430 = vld [vmem:[%s2374 + $0x1b8] sm:$0xff]
    %v2431 = vld [vmem:[%s2374 + $0x1c0] sm:$0xff]
    %v2432 = vld [vmem:[%s2374 + $0x1c8] sm:$0xff]
    %v2433 = vld [vmem:[%s2374 + $0x1d0] sm:$0xff]
    %v2434 = vld [vmem:[%s2374 + $0x1d8] sm:$0xff]
    %v2435 = vld [vmem:[%s2374 + $0x1e0] sm:$0xff]
    %v2436 = vld [vmem:[%s2374 + $0x1e8] sm:$0xff]
    %v2437 = vld [vmem:[%s2374 + $0x1f0] sm:$0xff]
    %v2438 = vld [vmem:[%s2374 + $0x1f8] sm:$0xff]
    %v2439 = vld [vmem:[%s2374 + $0x200] sm:$0xff]
    %v2440 = vld [vmem:[%s2374 + $0x208] sm:$0xff]
    %v2441 = vld [vmem:[%s2374 + $0x210] sm:$0xff]
    %v2442 = vld [vmem:[%s2374 + $0x218] sm:$0xff]
    %v2443 = vld [vmem:[%s2374 + $0x220] sm:$0xff]
    %v2444 = vld [vmem:[%s2374 + $0x228] sm:$0xff]
    %v2445 = vld [vmem:[%s2374 + $0x230] sm:$0xff]
    %v2446 = vld [vmem:[%s2374 + $0x238] sm:$0xff]
    %v2447 = vld [vmem:[%s2374 + $0x240] sm:$0xff]
    %v2448 = vld [vmem:[%s2374 + $0x248] sm:$0xff]
    %v2449 = vld [vmem:[%s2374 + $0x250] sm:$0xff]
    %v2450 = vld [vmem:[%s2374 + $0x258] sm:$0xff]
    %v2451 = vld [vmem:[%s2374 + $0x260] sm:$0xff]
    %v2452 = vld [vmem:[%s2374 + $0x268] sm:$0xff]
    %v2453 = vld [vmem:[%s2374 + $0x270] sm:$0xff]
    %v2454 = vld [vmem:[%s2374 + $0x278] sm:$0xff]
    %v2455 = vld [vmem:[%s2374 + $0x280] sm:$0xff]
    %v2456 = vld [vmem:[%s2374 + $0x288] sm:$0xff]
    %v2457 = vld [vmem:[%s2374 + $0x290] sm:$0xff]
    %v2458 = vld [vmem:[%s2374 + $0x298] sm:$0xff]
    %v2459 = vld [vmem:[%s2374 + $0x2a0] sm:$0xf]
    %v2461 = vsel %vm353, %v2373, 0
    %v2464 = vsel %vm738, %v2459, 0
    %2466 = vmatprep.subr.mxu0 0.0
    %2467 = vmatpush1.msra.mxu0 %v2390
    %2468 = vmatprep.subr.mxu0 0.0
    %2469 = vmatpush1.msra.mxu0 %v2389
    %2470 = vmatprep.subr.mxu0 0.0
    %2471 = vmatpush1.msra.mxu0 %v2388
    %2472 = vmatprep.subr.mxu0 0.0
    %2473 = vmatpush1.msra.mxu0 %v2387
    %2474 = vmatprep.subr.mxu0 0.0
    %2475 = vmatpush1.msra.mxu0 %v2386
    %2476 = vmatprep.subr.mxu0 0.0
    %2477 = vmatpush1.msra.mxu0 %v2385
    %2478 = vmatprep.subr.mxu0 0.0
    %2479 = vmatpush1.msra.mxu0 %v2384
    %2480 = vmatprep.subr.mxu0 0.0
    %2481 = vmatpush1.msra.mxu0 %v2383
    %2482 = vmatprep.subr.mxu0 0.0
    %2483 = vmatpush1.msra.mxu0 %v2382
    %2484 = vmatprep.subr.mxu0 0.0
    %2485 = vmatpush1.msra.mxu0 %v2381
    %2486 = vmatprep.subr.mxu0 0.0
    %2487 = vmatpush1.msra.mxu0 %v2380
    %2488 = vmatprep.subr.mxu0 0.0
    %2489 = vmatpush1.msra.mxu0 %v2379
    %2490 = vmatprep.subr.mxu0 0.0
    %2491 = vmatpush1.msra.mxu0 %v2378
    %2492 = vmatprep.subr.mxu0 0.0
    %2493 = vmatpush1.msra.mxu0 %v2377
    %2494 = vmatprep.subr.mxu0 0.0
    %2495 = vmatpush1.msra.mxu0 %v2376
    %2496 = vmatprep.subr.mxu0 0.0
    %2497 = vmatpush1.msra.mxu0 %v2375
    %2498 = vmatprep.subr.mxu0 0.0
    %2499 = vmatpush2.msra.mxu0 %v2406
    %2500 = vmatprep.subr.mxu0 0.0
    %2501 = vmatpush2.msra.mxu0 %v2405
    %2502 = vmatprep.subr.mxu0 0.0
    %2503 = vmatpush2.msra.mxu0 %v2404
    %2504 = vmatprep.subr.mxu0 0.0
    %2505 = vmatpush2.msra.mxu0 %v2403
    %2506 = vmatprep.subr.mxu0 0.0
    %2507 = vmatpush2.msra.mxu0 %v2402
    %2508 = vmatprep.subr.mxu0 0.0
    %2509 = vmatpush2.msra.mxu0 %v2401
    %2510 = vmatprep.subr.mxu0 0.0
    %2511 = vmatpush2.msra.mxu0 %v2400
    %2512 = vmatprep.subr.mxu0 0.0
    %2513 = vmatpush2.msra.mxu0 %v2399
    %2514 = vmatprep.subr.mxu0 0.0
    %2515 = vmatpush2.msra.mxu0 %v2398
    %2516 = vmatprep.subr.mxu0 0.0
    %2517 = vmatpush2.msra.mxu0 %v2397
    %2518 = vmatprep.subr.mxu0 0.0
    %2519 = vmatpush2.msra.mxu0 %v2396
    %2520 = vmatprep.subr.mxu0 0.0
    %2521 = vmatpush2.msra.mxu0 %v2395
    %2522 = vmatprep.subr.mxu0 0.0
    %2523 = vmatpush2.msra.mxu0 %v2394
    %2524 = vmatprep.subr.mxu0 0.0
    %2525 = vmatpush2.msra.mxu0 %v2393
    %2526 = vmatprep.subr.mxu0 0.0
    %2527 = vmatpush2.msra.mxu0 %v2392
    %2528 = vmatprep.subr.mxu0 0.0
    %2529 = vmatpush2.msra.mxu0 %v2391
    %2530 = vmatprep.mubr.f32.mxu0 %v2369
    %2531 = vmatmul.mubr.f32.gmra.mxu0 %v2368
    %v2532 = vpop.f32.mrf.mxu0
    %v2533 = vadd.f32 0.0, %v2532
    %v2534 = vpop.f32.mrf.mxu0
    %2535 = vdwg.mxu0
    %2536 = vmatprep.subr.mxu0 0.0
    %2537 = vmatpush1.msra.mxu0 %v2422
    %2538 = vmatprep.subr.mxu0 0.0
    %2539 = vmatpush1.msra.mxu0 %v2421
    %2540 = vmatprep.subr.mxu0 0.0
    %2541 = vmatpush1.msra.mxu0 %v2420
    %2542 = vmatprep.subr.mxu0 0.0
    %2543 = vmatpush1.msra.mxu0 %v2419
    %2544 = vmatprep.subr.mxu0 0.0
    %2545 = vmatpush1.msra.mxu0 %v2418
    %2546 = vmatprep.subr.mxu0 0.0
    %2547 = vmatpush1.msra.mxu0 %v2417
    %2548 = vmatprep.subr.mxu0 0.0
    %2549 = vmatpush1.msra.mxu0 %v2416
    %2550 = vmatprep.subr.mxu0 0.0
    %2551 = vmatpush1.msra.mxu0 %v2415
    %2552 = vmatprep.subr.mxu0 0.0
    %2553 = vmatpush1.msra.mxu0 %v2414
    %2554 = vmatprep.subr.mxu0 0.0
    %2555 = vmatpush1.msra.mxu0 %v2413
    %2556 = vmatprep.subr.mxu0 0.0
    %2557 = vmatpush1.msra.mxu0 %v2412
    %2558 = vmatprep.subr.mxu0 0.0
    %2559 = vmatpush1.msra.mxu0 %v2411
    %2560 = vmatprep.subr.mxu0 0.0
    %2561 = vmatpush1.msra.mxu0 %v2410
    %2562 = vmatprep.subr.mxu0 0.0
    %2563 = vmatpush1.msra.mxu0 %v2409
    %2564 = vmatprep.subr.mxu0 0.0
    %2565 = vmatpush1.msra.mxu0 %v2408
    %2566 = vmatprep.subr.mxu0 0.0
    %2567 = vmatpush1.msra.mxu0 %v2407
    %2568 = vmatprep.subr.mxu0 0.0
    %2569 = vmatpush2.msra.mxu0 %v2438
    %2570 = vmatprep.subr.mxu0 0.0
    %2571 = vmatpush2.msra.mxu0 %v2437
    %2572 = vmatprep.subr.mxu0 0.0
    %2573 = vmatpush2.msra.mxu0 %v2436
    %2574 = vmatprep.subr.mxu0 0.0
    %2575 = vmatpush2.msra.mxu0 %v2435
    %2576 = vmatprep.subr.mxu0 0.0
    %2577 = vmatpush2.msra.mxu0 %v2434
    %2578 = vmatprep.subr.mxu0 0.0
    %2579 = vmatpush2.msra.mxu0 %v2433
    %2580 = vmatprep.subr.mxu0 0.0
    %2581 = vmatpush2.msra.mxu0 %v2432
    %2582 = vmatprep.subr.mxu0 0.0
    %2583 = vmatpush2.msra.mxu0 %v2431
    %2584 = vmatprep.subr.mxu0 0.0
    %2585 = vmatpush2.msra.mxu0 %v2430
    %2586 = vmatprep.subr.mxu0 0.0
    %2587 = vmatpush2.msra.mxu0 %v2429
    %2588 = vmatprep.subr.mxu0 0.0
    %2589 = vmatpush2.msra.mxu0 %v2428
    %2590 = vmatprep.subr.mxu0 0.0
    %2591 = vmatpush2.msra.mxu0 %v2427
    %2592 = vmatprep.subr.mxu0 0.0
    %2593 = vmatpush2.msra.mxu0 %v2426
    %2594 = vmatprep.subr.mxu0 0.0
    %2595 = vmatpush2.msra.mxu0 %v2425
    %2596 = vmatprep.subr.mxu0 0.0
    %2597 = vmatpush2.msra.mxu0 %v2424
    %2598 = vmatprep.subr.mxu0 0.0
    %2599 = vmatpush2.msra.mxu0 %v2423
    %2600 = vmatprep.mubr.f32.mxu0 %v2371
    %2601 = vmatmul.mubr.f32.gmra.mxu0 %v2370
    %v2602 = vpop.f32.mrf.mxu0
    %v2603 = vadd.f32 %v2533, %v2602
    %v2604 = vpop.f32.mrf.mxu0
    %2605 = vdwg.mxu0
    %2606 = vmatprep.subr.mxu0 0.0
    %2607 = vmatpush1.msra.mxu0 %v2454
    %2608 = vmatprep.subr.mxu0 0.0
    %2609 = vmatpush1.msra.mxu0 %v2453
    %2610 = vmatprep.subr.mxu0 0.0
    %2611 = vmatpush1.msra.mxu0 %v2452
    %2612 = vmatprep.subr.mxu0 0.0
    %2613 = vmatpush1.msra.mxu0 %v2451
    %2614 = vmatprep.subr.mxu0 0.0
    %2615 = vmatpush1.msra.mxu0 %v2450
    %2616 = vmatprep.subr.mxu0 0.0
    %2617 = vmatpush1.msra.mxu0 %v2449
    %2618 = vmatprep.subr.mxu0 0.0
    %2619 = vmatpush1.msra.mxu0 %v2448
    %2620 = vmatprep.subr.mxu0 0.0
    %2621 = vmatpush1.msra.mxu0 %v2447
    %2622 = vmatprep.subr.mxu0 0.0
    %2623 = vmatpush1.msra.mxu0 %v2446
    %2624 = vmatprep.subr.mxu0 0.0
    %2625 = vmatpush1.msra.mxu0 %v2445
    %2626 = vmatprep.subr.mxu0 0.0
    %2627 = vmatpush1.msra.mxu0 %v2444
    %2628 = vmatprep.subr.mxu0 0.0
    %2629 = vmatpush1.msra.mxu0 %v2443
    %2630 = vmatprep.subr.mxu0 0.0
    %2631 = vmatpush1.msra.mxu0 %v2442
    %2632 = vmatprep.subr.mxu0 0.0
    %2633 = vmatpush1.msra.mxu0 %v2441
    %2634 = vmatprep.subr.mxu0 0.0
    %2635 = vmatpush1.msra.mxu0 %v2440
    %2636 = vmatprep.subr.mxu0 0.0
    %2637 = vmatpush1.msra.mxu0 %v2439
    %2638 = vmatprep.subr.mxu0 0.0
    %2639 = vmatpush2.msra.mxu0 0.0
    %2640 = vmatprep.subr.mxu0 0.0
    %2641 = vmatpush2.msra.mxu0 0.0
    %2642 = vmatprep.subr.mxu0 0.0
    %2643 = vmatpush2.msra.mxu0 0.0
    %2644 = vmatprep.subr.mxu0 0.0
    %2645 = vmatpush2.msra.mxu0 0.0
    %2646 = vmatprep.subr.mxu0 0.0
    %2647 = vmatpush2.msra.mxu0 0.0
    %2648 = vmatprep.subr.mxu0 0.0
    %2649 = vmatpush2.msra.mxu0 0.0
    %2650 = vmatprep.subr.mxu0 0.0
    %2651 = vmatpush2.msra.mxu0 0.0
    %2652 = vmatprep.subr.mxu0 0.0
    %2653 = vmatpush2.msra.mxu0 0.0
    %2654 = vmatprep.subr.mxu0 0.0
    %2655 = vmatpush2.msra.mxu0 0.0
    %2656 = vmatprep.subr.mxu0 0.0
    %2657 = vmatpush2.msra.mxu0 0.0
    %2658 = vmatprep.subr.mxu0 0.0
    %2659 = vmatpush2.msra.mxu0 0.0
    %2660 = vmatprep.subr.mxu0 0.0
    %2661 = vmatpush2.msra.mxu0 %v2464
    %2662 = vmatprep.subr.mxu0 0.0
    %2663 = vmatpush2.msra.mxu0 %v2458
    %2664 = vmatprep.subr.mxu0 0.0
    %2665 = vmatpush2.msra.mxu0 %v2457
    %2666 = vmatprep.subr.mxu0 0.0
    %2667 = vmatpush2.msra.mxu0 %v2456
    %2668 = vmatprep.subr.mxu0 0.0
    %2669 = vmatpush2.msra.mxu0 %v2455
    %2670 = vmatprep.mubr.f32.mxu0 %v2461
    %2671 = vmatmul.mubr.f32.gmra.mxu0 %v2372
    %v2672 = vpop.f32.mrf.mxu0
    %v2673 = vadd.f32 %v2603, %v2672
    %v2674 = vpop.f32.mrf.mxu0
    %2675 = vdwg.mxu0
    %v2676 = vadd.f32 %v2173, %v2673
    %v2677 = vld [vmem:[%s133] sm:$0xff]
    %v2678 = vld [vmem:[%s133 + $0x8] sm:$0xff]
    %v2679 = vld [vmem:[%s133 + $0x10] sm:$0xff]
    %v2680 = vld [vmem:[%s133 + $0x18] sm:$0xff]
    %v2681 = vld [vmem:[%s133 + $0x20] sm:$0xff]
    %v2682 = vld [vmem:[%s133 + $0x28] sm:$0xff]
    %s2683 = sld [smem:[#allocation3 + $0x280]]
    %v2684 = vstv %s2683
    %v2685 = vmul.f32 %v2677, %v2684
    %v2686 = vmul.f32 %v2678, %v2684
    %v2687 = vmul.f32 %v2679, %v2684
    %v2688 = vmul.f32 %v2680, %v2684
    %v2689 = vmul.f32 %v2681, %v2684
    %v2690 = vmul.f32 %v2682, %v2684
    %v2691 = vld [vmem:[%s150] sm:$0xff]
    %v2692 = vld [vmem:[%s150 + $0x8] sm:$0xff]
    %v2693 = vld [vmem:[%s150 + $0x10] sm:$0xff]
    %v2694 = vld [vmem:[%s150 + $0x18] sm:$0xff]
    %v2695 = vld [vmem:[%s150 + $0x20] sm:$0xff]
    %v2696 = vld [vmem:[%s150 + $0x28] sm:$0xff]
    %s2697 = sld [smem:[#allocation3 + $0x281]]
    %v2698 = vstv %s2697
    %v2699 = vmul.f32 %v2691, %v2698
    %v2700 = vmul.f32 %v2692, %v2698
    %v2701 = vmul.f32 %v2693, %v2698
    %v2702 = vmul.f32 %v2694, %v2698
    %v2703 = vmul.f32 %v2695, %v2698
    %v2704 = vmul.f32 %v2696, %v2698
    %v2705 = vadd.f32 %v2685, %v2699
    %v2706 = vadd.f32 %v2686, %v2700
    %v2707 = vadd.f32 %v2687, %v2701
    %v2708 = vadd.f32 %v2688, %v2702
    %v2709 = vadd.f32 %v2689, %v2703
    %v2710 = vadd.f32 %v2690, %v2704
    %v2711 = vld [vmem:[%s173] sm:$0xff]
    %v2712 = vld [vmem:[%s173 + $0x8] sm:$0xff]
    %v2713 = vld [vmem:[%s173 + $0x10] sm:$0xff]
    %v2714 = vld [vmem:[%s173 + $0x18] sm:$0xff]
    %v2715 = vld [vmem:[%s173 + $0x20] sm:$0xff]
    %v2716 = vld [vmem:[%s173 + $0x28] sm:$0xff]
    %s2717 = sld [smem:[#allocation3 + $0x282]]
    %v2718 = vstv %s2717
    %v2719 = vmul.f32 %v2711, %v2718
    %v2720 = vmul.f32 %v2712, %v2718
    %v2721 = vmul.f32 %v2713, %v2718
    %v2722 = vmul.f32 %v2714, %v2718
    %v2723 = vmul.f32 %v2715, %v2718
    %v2724 = vmul.f32 %v2716, %v2718
    %v2725 = vadd.f32 %v2705, %v2719
    %v2726 = vadd.f32 %v2706, %v2720
    %v2727 = vadd.f32 %v2707, %v2721
    %v2728 = vadd.f32 %v2708, %v2722
    %v2729 = vadd.f32 %v2709, %v2723
    %v2730 = vadd.f32 %v2710, %v2724
    %v2731 = vld [vmem:[%s196] sm:$0xff]
    %v2732 = vld [vmem:[%s196 + $0x8] sm:$0xff]
    %v2733 = vld [vmem:[%s196 + $0x10] sm:$0xff]
    %v2734 = vld [vmem:[%s196 + $0x18] sm:$0xff]
    %v2735 = vld [vmem:[%s196 + $0x20] sm:$0xff]
    %v2736 = vld [vmem:[%s196 + $0x28] sm:$0xff]
    %s2737 = sld [smem:[#allocation3 + $0x283]]
    %v2738 = vstv %s2737
    %v2739 = vmul.f32 %v2731, %v2738
    %v2740 = vmul.f32 %v2732, %v2738
    %v2741 = vmul.f32 %v2733, %v2738
    %v2742 = vmul.f32 %v2734, %v2738
    %v2743 = vmul.f32 %v2735, %v2738
    %v2744 = vmul.f32 %v2736, %v2738
    %v2745 = vadd.f32 %v2725, %v2739
    %v2746 = vadd.f32 %v2726, %v2740
    %v2747 = vadd.f32 %v2727, %v2741
    %v2748 = vadd.f32 %v2728, %v2742
    %v2749 = vadd.f32 %v2729, %v2743
    %v2750 = vadd.f32 %v2730, %v2744
    %v2751 = vld [vmem:[%s219] sm:$0xff]
    %v2752 = vld [vmem:[%s219 + $0x8] sm:$0xff]
    %v2753 = vld [vmem:[%s219 + $0x10] sm:$0xff]
    %v2754 = vld [vmem:[%s219 + $0x18] sm:$0xff]
    %v2755 = vld [vmem:[%s219 + $0x20] sm:$0xff]
    %v2756 = vld [vmem:[%s219 + $0x28] sm:$0xff]
    %s2757 = sld [smem:[#allocation3 + $0x284]]
    %v2758 = vstv %s2757
    %v2759 = vmul.f32 %v2751, %v2758
    %v2760 = vmul.f32 %v2752, %v2758
    %v2761 = vmul.f32 %v2753, %v2758
    %v2762 = vmul.f32 %v2754, %v2758
    %v2763 = vmul.f32 %v2755, %v2758
    %v2764 = vmul.f32 %v2756, %v2758
    %v2765 = vadd.f32 %v2745, %v2759
    %v2766 = vadd.f32 %v2746, %v2760
    %v2767 = vadd.f32 %v2747, %v2761
    %v2768 = vadd.f32 %v2748, %v2762
    %v2769 = vadd.f32 %v2749, %v2763
    %v2770 = vadd.f32 %v2750, %v2764
    %v2771 = vld [vmem:[%s242] sm:$0xff]
    %v2772 = vld [vmem:[%s242 + $0x8] sm:$0xff]
    %v2773 = vld [vmem:[%s242 + $0x10] sm:$0xff]
    %v2774 = vld [vmem:[%s242 + $0x18] sm:$0xff]
    %v2775 = vld [vmem:[%s242 + $0x20] sm:$0xff]
    %v2776 = vld [vmem:[%s242 + $0x28] sm:$0xff]
    %s2777 = sld [smem:[#allocation3 + $0x285]]
    %v2778 = vstv %s2777
    %v2779 = vmul.f32 %v2771, %v2778
    %v2780 = vmul.f32 %v2772, %v2778
    %v2781 = vmul.f32 %v2773, %v2778
    %v2782 = vmul.f32 %v2774, %v2778
    %v2783 = vmul.f32 %v2775, %v2778
    %v2784 = vmul.f32 %v2776, %v2778
    %v2785 = vadd.f32 %v2765, %v2779
    %v2786 = vadd.f32 %v2766, %v2780
    %v2787 = vadd.f32 %v2767, %v2781
    %v2788 = vadd.f32 %v2768, %v2782
    %v2789 = vadd.f32 %v2769, %v2783
    %v2790 = vadd.f32 %v2770, %v2784
    %v2791 = vld [vmem:[%s265] sm:$0xff]
    %v2792 = vld [vmem:[%s265 + $0x8] sm:$0xff]
    %v2793 = vld [vmem:[%s265 + $0x10] sm:$0xff]
    %v2794 = vld [vmem:[%s265 + $0x18] sm:$0xff]
    %v2795 = vld [vmem:[%s265 + $0x20] sm:$0xff]
    %v2796 = vld [vmem:[%s265 + $0x28] sm:$0xff]
    %s2797 = sld [smem:[#allocation3 + $0x286]]
    %v2798 = vstv %s2797
    %v2799 = vmul.f32 %v2791, %v2798
    %v2800 = vmul.f32 %v2792, %v2798
    %v2801 = vmul.f32 %v2793, %v2798
    %v2802 = vmul.f32 %v2794, %v2798
    %v2803 = vmul.f32 %v2795, %v2798
    %v2804 = vmul.f32 %v2796, %v2798
    %v2805 = vadd.f32 %v2785, %v2799
    %v2806 = vadd.f32 %v2786, %v2800
    %v2807 = vadd.f32 %v2787, %v2801
    %v2808 = vadd.f32 %v2788, %v2802
    %v2809 = vadd.f32 %v2789, %v2803
    %v2810 = vadd.f32 %v2790, %v2804
    %v2811 = vld [vmem:[%s288] sm:$0xff]
    %v2812 = vld [vmem:[%s288 + $0x8] sm:$0xff]
    %v2813 = vld [vmem:[%s288 + $0x10] sm:$0xff]
    %v2814 = vld [vmem:[%s288 + $0x18] sm:$0xff]
    %v2815 = vld [vmem:[%s288 + $0x20] sm:$0xff]
    %v2816 = vld [vmem:[%s288 + $0x28] sm:$0xff]
    %s2817 = sld [smem:[#allocation3 + $0x287]]
    %v2818 = vstv %s2817
    %v2819 = vmul.f32 %v2811, %v2818
    %v2820 = vmul.f32 %v2812, %v2818
    %v2821 = vmul.f32 %v2813, %v2818
    %v2822 = vmul.f32 %v2814, %v2818
    %v2823 = vmul.f32 %v2815, %v2818
    %v2824 = vmul.f32 %v2816, %v2818
    %v2825 = vadd.f32 %v2805, %v2819
    %v2826 = vadd.f32 %v2806, %v2820
    %v2827 = vadd.f32 %v2807, %v2821
    %v2828 = vadd.f32 %v2808, %v2822
    %v2829 = vadd.f32 %v2809, %v2823
    %v2830 = vadd.f32 %v2810, %v2824
    %v2831 = vld [vmem:[%s311] sm:$0xff]
    %v2832 = vld [vmem:[%s311 + $0x8] sm:$0xff]
    %v2833 = vld [vmem:[%s311 + $0x10] sm:$0xff]
    %v2834 = vld [vmem:[%s311 + $0x18] sm:$0xff]
    %v2835 = vld [vmem:[%s311 + $0x20] sm:$0xff]
    %v2836 = vld [vmem:[%s311 + $0x28] sm:$0xff]
    %s2837 = sld [smem:[#allocation3 + $0x288]]
    %v2838 = vstv %s2837
    %v2839 = vmul.f32 %v2831, %v2838
    %v2840 = vmul.f32 %v2832, %v2838
    %v2841 = vmul.f32 %v2833, %v2838
    %v2842 = vmul.f32 %v2834, %v2838
    %v2843 = vmul.f32 %v2835, %v2838
    %v2844 = vmul.f32 %v2836, %v2838
    %v2845 = vadd.f32 %v2825, %v2839
    %v2846 = vadd.f32 %v2826, %v2840
    %v2847 = vadd.f32 %v2827, %v2841
    %v2848 = vadd.f32 %v2828, %v2842
    %v2849 = vadd.f32 %v2829, %v2843
    %v2850 = vadd.f32 %v2830, %v2844
    %s2851 = sld [smem:[#allocation6 + $0x5]]
    %v2852 = vstv %s2851
    %v2853 = vadd.f32 %v2845, %v2852
    %v2854 = vadd.f32 %v2846, %v2852
    %v2855 = vadd.f32 %v2847, %v2852
    %v2856 = vadd.f32 %v2848, %v2852
    %v2857 = vadd.f32 %v2849, %v2852
    %v2858 = vadd.f32 %v2850, %v2852
    %v2859 = vmax.f32 %v2853, 0.0
    %v2860 = vmax.f32 %v2854, 0.0
    %v2861 = vmax.f32 %v2855, 0.0
    %v2862 = vmax.f32 %v2856, 0.0
    %v2863 = vmax.f32 %v2857, 0.0
    %v2864 = vmax.f32 %v2858, 0.0
    %2865 = vst [vmem:[%s635] sm:$0xff] %v2859
    %2866 = vst [vmem:[%s635 + $0x8] sm:$0xff] %v2860
    %2867 = vst [vmem:[%s635 + $0x10] sm:$0xff] %v2861
    %2868 = vst [vmem:[%s635 + $0x18] sm:$0xff] %v2862
    %2869 = vst [vmem:[%s635 + $0x20] sm:$0xff] %v2863
    %2870 = vst.msk [vmem:[%s635 + $0x28] sm:$0xff] %vm353, %v2864
    %v2871 = vld [vmem:[%s642] sm:$0xff]
    %v2872 = vld [vmem:[%s642 + $0x8] sm:$0xff]
    %v2873 = vld [vmem:[%s642 + $0x10] sm:$0xff]
    %v2874 = vld [vmem:[%s642 + $0x18] sm:$0xff]
    %v2875 = vld [vmem:[%s642 + $0x20] sm:$0xff]
    %v2876 = vld [vmem:[%s642 + $0x28] sm:$0xff]
    %s2877 = scalar_lea.vmem [#allocation8], 3400
    %v2878 = vld [vmem:[%s2877] sm:$0xff]
    %v2879 = vld [vmem:[%s2877 + $0x8] sm:$0xff]
    %v2880 = vld [vmem:[%s2877 + $0x10] sm:$0xff]
    %v2881 = vld [vmem:[%s2877 + $0x18] sm:$0xff]
    %v2882 = vld [vmem:[%s2877 + $0x20] sm:$0xff]
    %v2883 = vld [vmem:[%s2877 + $0x28] sm:$0xff]
    %v2884 = vld [vmem:[%s2877 + $0x30] sm:$0xff]
    %v2885 = vld [vmem:[%s2877 + $0x38] sm:$0xff]
    %v2886 = vld [vmem:[%s2877 + $0x40] sm:$0xff]
    %v2887 = vld [vmem:[%s2877 + $0x48] sm:$0xff]
    %v2888 = vld [vmem:[%s2877 + $0x50] sm:$0xff]
    %v2889 = vld [vmem:[%s2877 + $0x58] sm:$0xff]
    %v2890 = vld [vmem:[%s2877 + $0x60] sm:$0xff]
    %v2891 = vld [vmem:[%s2877 + $0x68] sm:$0xff]
    %v2892 = vld [vmem:[%s2877 + $0x70] sm:$0xff]
    %v2893 = vld [vmem:[%s2877 + $0x78] sm:$0xff]
    %v2894 = vld [vmem:[%s2877 + $0x80] sm:$0xff]
    %v2895 = vld [vmem:[%s2877 + $0x88] sm:$0xff]
    %v2896 = vld [vmem:[%s2877 + $0x90] sm:$0xff]
    %v2897 = vld [vmem:[%s2877 + $0x98] sm:$0xff]
    %v2898 = vld [vmem:[%s2877 + $0xa0] sm:$0xff]
    %v2899 = vld [vmem:[%s2877 + $0xa8] sm:$0xff]
    %v2900 = vld [vmem:[%s2877 + $0xb0] sm:$0xff]
    %v2901 = vld [vmem:[%s2877 + $0xb8] sm:$0xff]
    %v2902 = vld [vmem:[%s2877 + $0xc0] sm:$0xff]
    %v2903 = vld [vmem:[%s2877 + $0xc8] sm:$0xff]
    %v2904 = vld [vmem:[%s2877 + $0xd0] sm:$0xff]
    %v2905 = vld [vmem:[%s2877 + $0xd8] sm:$0xff]
    %v2906 = vld [vmem:[%s2877 + $0xe0] sm:$0xff]
    %v2907 = vld [vmem:[%s2877 + $0xe8] sm:$0xff]
    %v2908 = vld [vmem:[%s2877 + $0xf0] sm:$0xff]
    %v2909 = vld [vmem:[%s2877 + $0xf8] sm:$0xff]
    %v2910 = vld [vmem:[%s2877 + $0x100] sm:$0xff]
    %v2911 = vld [vmem:[%s2877 + $0x108] sm:$0xff]
    %v2912 = vld [vmem:[%s2877 + $0x110] sm:$0xff]
    %v2913 = vld [vmem:[%s2877 + $0x118] sm:$0xff]
    %v2914 = vld [vmem:[%s2877 + $0x120] sm:$0xff]
    %v2915 = vld [vmem:[%s2877 + $0x128] sm:$0xff]
    %v2916 = vld [vmem:[%s2877 + $0x130] sm:$0xff]
    %v2917 = vld [vmem:[%s2877 + $0x138] sm:$0xff]
    %v2918 = vld [vmem:[%s2877 + $0x140] sm:$0xff]
    %v2919 = vld [vmem:[%s2877 + $0x148] sm:$0xff]
    %v2920 = vld [vmem:[%s2877 + $0x150] sm:$0xff]
    %v2921 = vld [vmem:[%s2877 + $0x158] sm:$0xff]
    %v2922 = vld [vmem:[%s2877 + $0x160] sm:$0xff]
    %v2923 = vld [vmem:[%s2877 + $0x168] sm:$0xff]
    %v2924 = vld [vmem:[%s2877 + $0x170] sm:$0xff]
    %v2925 = vld [vmem:[%s2877 + $0x178] sm:$0xff]
    %v2926 = vld [vmem:[%s2877 + $0x180] sm:$0xff]
    %v2927 = vld [vmem:[%s2877 + $0x188] sm:$0xff]
    %v2928 = vld [vmem:[%s2877 + $0x190] sm:$0xff]
    %v2929 = vld [vmem:[%s2877 + $0x198] sm:$0xff]
    %v2930 = vld [vmem:[%s2877 + $0x1a0] sm:$0xff]
    %v2931 = vld [vmem:[%s2877 + $0x1a8] sm:$0xff]
    %v2932 = vld [vmem:[%s2877 + $0x1b0] sm:$0xff]
    %v2933 = vld [vmem:[%s2877 + $0x1b8] sm:$0xff]
    %v2934 = vld [vmem:[%s2877 + $0x1c0] sm:$0xff]
    %v2935 = vld [vmem:[%s2877 + $0x1c8] sm:$0xff]
    %v2936 = vld [vmem:[%s2877 + $0x1d0] sm:$0xff]
    %v2937 = vld [vmem:[%s2877 + $0x1d8] sm:$0xff]
    %v2938 = vld [vmem:[%s2877 + $0x1e0] sm:$0xff]
    %v2939 = vld [vmem:[%s2877 + $0x1e8] sm:$0xff]
    %v2940 = vld [vmem:[%s2877 + $0x1f0] sm:$0xff]
    %v2941 = vld [vmem:[%s2877 + $0x1f8] sm:$0xff]
    %v2942 = vld [vmem:[%s2877 + $0x200] sm:$0xff]
    %v2943 = vld [vmem:[%s2877 + $0x208] sm:$0xff]
    %v2944 = vld [vmem:[%s2877 + $0x210] sm:$0xff]
    %v2945 = vld [vmem:[%s2877 + $0x218] sm:$0xff]
    %v2946 = vld [vmem:[%s2877 + $0x220] sm:$0xff]
    %v2947 = vld [vmem:[%s2877 + $0x228] sm:$0xff]
    %v2948 = vld [vmem:[%s2877 + $0x230] sm:$0xff]
    %v2949 = vld [vmem:[%s2877 + $0x238] sm:$0xff]
    %v2950 = vld [vmem:[%s2877 + $0x240] sm:$0xff]
    %v2951 = vld [vmem:[%s2877 + $0x248] sm:$0xff]
    %v2952 = vld [vmem:[%s2877 + $0x250] sm:$0xff]
    %v2953 = vld [vmem:[%s2877 + $0x258] sm:$0xff]
    %v2954 = vld [vmem:[%s2877 + $0x260] sm:$0xff]
    %v2955 = vld [vmem:[%s2877 + $0x268] sm:$0xff]
    %v2956 = vld [vmem:[%s2877 + $0x270] sm:$0xff]
    %v2957 = vld [vmem:[%s2877 + $0x278] sm:$0xff]
    %v2958 = vld [vmem:[%s2877 + $0x280] sm:$0xff]
    %v2959 = vld [vmem:[%s2877 + $0x288] sm:$0xff]
    %v2960 = vld [vmem:[%s2877 + $0x290] sm:$0xff]
    %v2961 = vld [vmem:[%s2877 + $0x298] sm:$0xff]
    %v2962 = vld [vmem:[%s2877 + $0x2a0] sm:$0xf]
    %v2964 = vsel %vm353, %v2876, 0
    %v2967 = vsel %vm738, %v2962, 0
    %2969 = vmatprep.subr.mxu0 0.0
    %2970 = vmatpush1.msra.mxu0 %v2893
    %2971 = vmatprep.subr.mxu0 0.0
    %2972 = vmatpush1.msra.mxu0 %v2892
    %2973 = vmatprep.subr.mxu0 0.0
    %2974 = vmatpush1.msra.mxu0 %v2891
    %2975 = vmatprep.subr.mxu0 0.0
    %2976 = vmatpush1.msra.mxu0 %v2890
    %2977 = vmatprep.subr.mxu0 0.0
    %2978 = vmatpush1.msra.mxu0 %v2889
    %2979 = vmatprep.subr.mxu0 0.0
    %2980 = vmatpush1.msra.mxu0 %v2888
    %2981 = vmatprep.subr.mxu0 0.0
    %2982 = vmatpush1.msra.mxu0 %v2887
    %2983 = vmatprep.subr.mxu0 0.0
    %2984 = vmatpush1.msra.mxu0 %v2886
    %2985 = vmatprep.subr.mxu0 0.0
    %2986 = vmatpush1.msra.mxu0 %v2885
    %2987 = vmatprep.subr.mxu0 0.0
    %2988 = vmatpush1.msra.mxu0 %v2884
    %2989 = vmatprep.subr.mxu0 0.0
    %2990 = vmatpush1.msra.mxu0 %v2883
    %2991 = vmatprep.subr.mxu0 0.0
    %2992 = vmatpush1.msra.mxu0 %v2882
    %2993 = vmatprep.subr.mxu0 0.0
    %2994 = vmatpush1.msra.mxu0 %v2881
    %2995 = vmatprep.subr.mxu0 0.0
    %2996 = vmatpush1.msra.mxu0 %v2880
    %2997 = vmatprep.subr.mxu0 0.0
    %2998 = vmatpush1.msra.mxu0 %v2879
    %2999 = vmatprep.subr.mxu0 0.0
    %3000 = vmatpush1.msra.mxu0 %v2878
    %3001 = vmatprep.subr.mxu0 0.0
    %3002 = vmatpush2.msra.mxu0 %v2909
    %3003 = vmatprep.subr.mxu0 0.0
    %3004 = vmatpush2.msra.mxu0 %v2908
    %3005 = vmatprep.subr.mxu0 0.0
    %3006 = vmatpush2.msra.mxu0 %v2907
    %3007 = vmatprep.subr.mxu0 0.0
    %3008 = vmatpush2.msra.mxu0 %v2906
    %3009 = vmatprep.subr.mxu0 0.0
    %3010 = vmatpush2.msra.mxu0 %v2905
    %3011 = vmatprep.subr.mxu0 0.0
    %3012 = vmatpush2.msra.mxu0 %v2904
    %3013 = vmatprep.subr.mxu0 0.0
    %3014 = vmatpush2.msra.mxu0 %v2903
    %3015 = vmatprep.subr.mxu0 0.0
    %3016 = vmatpush2.msra.mxu0 %v2902
    %3017 = vmatprep.subr.mxu0 0.0
    %3018 = vmatpush2.msra.mxu0 %v2901
    %3019 = vmatprep.subr.mxu0 0.0
    %3020 = vmatpush2.msra.mxu0 %v2900
    %3021 = vmatprep.subr.mxu0 0.0
    %3022 = vmatpush2.msra.mxu0 %v2899
    %3023 = vmatprep.subr.mxu0 0.0
    %3024 = vmatpush2.msra.mxu0 %v2898
    %3025 = vmatprep.subr.mxu0 0.0
    %3026 = vmatpush2.msra.mxu0 %v2897
    %3027 = vmatprep.subr.mxu0 0.0
    %3028 = vmatpush2.msra.mxu0 %v2896
    %3029 = vmatprep.subr.mxu0 0.0
    %3030 = vmatpush2.msra.mxu0 %v2895
    %3031 = vmatprep.subr.mxu0 0.0
    %3032 = vmatpush2.msra.mxu0 %v2894
    %3033 = vmatprep.mubr.f32.mxu0 %v2872
    %3034 = vmatmul.mubr.f32.gmra.mxu0 %v2871
    %v3035 = vpop.f32.mrf.mxu0
    %v3036 = vadd.f32 0.0, %v3035
    %v3037 = vpop.f32.mrf.mxu0
    %3038 = vdwg.mxu0
    %3039 = vmatprep.subr.mxu0 0.0
    %3040 = vmatpush1.msra.mxu0 %v2925
    %3041 = vmatprep.subr.mxu0 0.0
    %3042 = vmatpush1.msra.mxu0 %v2924
    %3043 = vmatprep.subr.mxu0 0.0
    %3044 = vmatpush1.msra.mxu0 %v2923
    %3045 = vmatprep.subr.mxu0 0.0
    %3046 = vmatpush1.msra.mxu0 %v2922
    %3047 = vmatprep.subr.mxu0 0.0
    %3048 = vmatpush1.msra.mxu0 %v2921
    %3049 = vmatprep.subr.mxu0 0.0
    %3050 = vmatpush1.msra.mxu0 %v2920
    %3051 = vmatprep.subr.mxu0 0.0
    %3052 = vmatpush1.msra.mxu0 %v2919
    %3053 = vmatprep.subr.mxu0 0.0
    %3054 = vmatpush1.msra.mxu0 %v2918
    %3055 = vmatprep.subr.mxu0 0.0
    %3056 = vmatpush1.msra.mxu0 %v2917
    %3057 = vmatprep.subr.mxu0 0.0
    %3058 = vmatpush1.msra.mxu0 %v2916
    %3059 = vmatprep.subr.mxu0 0.0
    %3060 = vmatpush1.msra.mxu0 %v2915
    %3061 = vmatprep.subr.mxu0 0.0
    %3062 = vmatpush1.msra.mxu0 %v2914
    %3063 = vmatprep.subr.mxu0 0.0
    %3064 = vmatpush1.msra.mxu0 %v2913
    %3065 = vmatprep.subr.mxu0 0.0
    %3066 = vmatpush1.msra.mxu0 %v2912
    %3067 = vmatprep.subr.mxu0 0.0
    %3068 = vmatpush1.msra.mxu0 %v2911
    %3069 = vmatprep.subr.mxu0 0.0
    %3070 = vmatpush1.msra.mxu0 %v2910
    %3071 = vmatprep.subr.mxu0 0.0
    %3072 = vmatpush2.msra.mxu0 %v2941
    %3073 = vmatprep.subr.mxu0 0.0
    %3074 = vmatpush2.msra.mxu0 %v2940
    %3075 = vmatprep.subr.mxu0 0.0
    %3076 = vmatpush2.msra.mxu0 %v2939
    %3077 = vmatprep.subr.mxu0 0.0
    %3078 = vmatpush2.msra.mxu0 %v2938
    %3079 = vmatprep.subr.mxu0 0.0
    %3080 = vmatpush2.msra.mxu0 %v2937
    %3081 = vmatprep.subr.mxu0 0.0
    %3082 = vmatpush2.msra.mxu0 %v2936
    %3083 = vmatprep.subr.mxu0 0.0
    %3084 = vmatpush2.msra.mxu0 %v2935
    %3085 = vmatprep.subr.mxu0 0.0
    %3086 = vmatpush2.msra.mxu0 %v2934
    %3087 = vmatprep.subr.mxu0 0.0
    %3088 = vmatpush2.msra.mxu0 %v2933
    %3089 = vmatprep.subr.mxu0 0.0
    %3090 = vmatpush2.msra.mxu0 %v2932
    %3091 = vmatprep.subr.mxu0 0.0
    %3092 = vmatpush2.msra.mxu0 %v2931
    %3093 = vmatprep.subr.mxu0 0.0
    %3094 = vmatpush2.msra.mxu0 %v2930
    %3095 = vmatprep.subr.mxu0 0.0
    %3096 = vmatpush2.msra.mxu0 %v2929
    %3097 = vmatprep.subr.mxu0 0.0
    %3098 = vmatpush2.msra.mxu0 %v2928
    %3099 = vmatprep.subr.mxu0 0.0
    %3100 = vmatpush2.msra.mxu0 %v2927
    %3101 = vmatprep.subr.mxu0 0.0
    %3102 = vmatpush2.msra.mxu0 %v2926
    %3103 = vmatprep.mubr.f32.mxu0 %v2874
    %3104 = vmatmul.mubr.f32.gmra.mxu0 %v2873
    %v3105 = vpop.f32.mrf.mxu0
    %v3106 = vadd.f32 %v3036, %v3105
    %v3107 = vpop.f32.mrf.mxu0
    %3108 = vdwg.mxu0
    %3109 = vmatprep.subr.mxu0 0.0
    %3110 = vmatpush1.msra.mxu0 %v2957
    %3111 = vmatprep.subr.mxu0 0.0
    %3112 = vmatpush1.msra.mxu0 %v2956
    %3113 = vmatprep.subr.mxu0 0.0
    %3114 = vmatpush1.msra.mxu0 %v2955
    %3115 = vmatprep.subr.mxu0 0.0
    %3116 = vmatpush1.msra.mxu0 %v2954
    %3117 = vmatprep.subr.mxu0 0.0
    %3118 = vmatpush1.msra.mxu0 %v2953
    %3119 = vmatprep.subr.mxu0 0.0
    %3120 = vmatpush1.msra.mxu0 %v2952
    %3121 = vmatprep.subr.mxu0 0.0
    %3122 = vmatpush1.msra.mxu0 %v2951
    %3123 = vmatprep.subr.mxu0 0.0
    %3124 = vmatpush1.msra.mxu0 %v2950
    %3125 = vmatprep.subr.mxu0 0.0
    %3126 = vmatpush1.msra.mxu0 %v2949
    %3127 = vmatprep.subr.mxu0 0.0
    %3128 = vmatpush1.msra.mxu0 %v2948
    %3129 = vmatprep.subr.mxu0 0.0
    %3130 = vmatpush1.msra.mxu0 %v2947
    %3131 = vmatprep.subr.mxu0 0.0
    %3132 = vmatpush1.msra.mxu0 %v2946
    %3133 = vmatprep.subr.mxu0 0.0
    %3134 = vmatpush1.msra.mxu0 %v2945
    %3135 = vmatprep.subr.mxu0 0.0
    %3136 = vmatpush1.msra.mxu0 %v2944
    %3137 = vmatprep.subr.mxu0 0.0
    %3138 = vmatpush1.msra.mxu0 %v2943
    %3139 = vmatprep.subr.mxu0 0.0
    %3140 = vmatpush1.msra.mxu0 %v2942
    %3141 = vmatprep.subr.mxu0 0.0
    %3142 = vmatpush2.msra.mxu0 0.0
    %3143 = vmatprep.subr.mxu0 0.0
    %3144 = vmatpush2.msra.mxu0 0.0
    %3145 = vmatprep.subr.mxu0 0.0
    %3146 = vmatpush2.msra.mxu0 0.0
    %3147 = vmatprep.subr.mxu0 0.0
    %3148 = vmatpush2.msra.mxu0 0.0
    %3149 = vmatprep.subr.mxu0 0.0
    %3150 = vmatpush2.msra.mxu0 0.0
    %3151 = vmatprep.subr.mxu0 0.0
    %3152 = vmatpush2.msra.mxu0 0.0
    %3153 = vmatprep.subr.mxu0 0.0
    %3154 = vmatpush2.msra.mxu0 0.0
    %3155 = vmatprep.subr.mxu0 0.0
    %3156 = vmatpush2.msra.mxu0 0.0
    %3157 = vmatprep.subr.mxu0 0.0
    %3158 = vmatpush2.msra.mxu0 0.0
    %3159 = vmatprep.subr.mxu0 0.0
    %3160 = vmatpush2.msra.mxu0 0.0
    %3161 = vmatprep.subr.mxu0 0.0
    %3162 = vmatpush2.msra.mxu0 0.0
    %3163 = vmatprep.subr.mxu0 0.0
    %3164 = vmatpush2.msra.mxu0 %v2967
    %3165 = vmatprep.subr.mxu0 0.0
    %3166 = vmatpush2.msra.mxu0 %v2961
    %3167 = vmatprep.subr.mxu0 0.0
    %3168 = vmatpush2.msra.mxu0 %v2960
    %3169 = vmatprep.subr.mxu0 0.0
    %3170 = vmatpush2.msra.mxu0 %v2959
    %3171 = vmatprep.subr.mxu0 0.0
    %3172 = vmatpush2.msra.mxu0 %v2958
    %3173 = vmatprep.mubr.f32.mxu0 %v2964
    %3174 = vmatmul.mubr.f32.gmra.mxu0 %v2875
    %v3175 = vpop.f32.mrf.mxu0
    %v3176 = vadd.f32 %v3106, %v3175
    %v3177 = vpop.f32.mrf.mxu0
    %3178 = vdwg.mxu0
    %v3179 = vadd.f32 %v2676, %v3176
    %v3180 = vld [vmem:[%s133] sm:$0xff]
    %v3181 = vld [vmem:[%s133 + $0x8] sm:$0xff]
    %v3182 = vld [vmem:[%s133 + $0x10] sm:$0xff]
    %v3183 = vld [vmem:[%s133 + $0x18] sm:$0xff]
    %v3184 = vld [vmem:[%s133 + $0x20] sm:$0xff]
    %v3185 = vld [vmem:[%s133 + $0x28] sm:$0xff]
    %s3186 = sld [smem:[#allocation3 + $0x300]]
    %v3187 = vstv %s3186
    %v3188 = vmul.f32 %v3180, %v3187
    %v3189 = vmul.f32 %v3181, %v3187
    %v3190 = vmul.f32 %v3182, %v3187
    %v3191 = vmul.f32 %v3183, %v3187
    %v3192 = vmul.f32 %v3184, %v3187
    %v3193 = vmul.f32 %v3185, %v3187
    %v3194 = vld [vmem:[%s150] sm:$0xff]
    %v3195 = vld [vmem:[%s150 + $0x8] sm:$0xff]
    %v3196 = vld [vmem:[%s150 + $0x10] sm:$0xff]
    %v3197 = vld [vmem:[%s150 + $0x18] sm:$0xff]
    %v3198 = vld [vmem:[%s150 + $0x20] sm:$0xff]
    %v3199 = vld [vmem:[%s150 + $0x28] sm:$0xff]
    %s3200 = sld [smem:[#allocation3 + $0x301]]
    %v3201 = vstv %s3200
    %v3202 = vmul.f32 %v3194, %v3201
    %v3203 = vmul.f32 %v3195, %v3201
    %v3204 = vmul.f32 %v3196, %v3201
    %v3205 = vmul.f32 %v3197, %v3201
    %v3206 = vmul.f32 %v3198, %v3201
    %v3207 = vmul.f32 %v3199, %v3201
    %v3208 = vadd.f32 %v3188, %v3202
    %v3209 = vadd.f32 %v3189, %v3203
    %v3210 = vadd.f32 %v3190, %v3204
    %v3211 = vadd.f32 %v3191, %v3205
    %v3212 = vadd.f32 %v3192, %v3206
    %v3213 = vadd.f32 %v3193, %v3207
    %v3214 = vld [vmem:[%s173] sm:$0xff]
    %v3215 = vld [vmem:[%s173 + $0x8] sm:$0xff]
    %v3216 = vld [vmem:[%s173 + $0x10] sm:$0xff]
    %v3217 = vld [vmem:[%s173 + $0x18] sm:$0xff]
    %v3218 = vld [vmem:[%s173 + $0x20] sm:$0xff]
    %v3219 = vld [vmem:[%s173 + $0x28] sm:$0xff]
    %s3220 = sld [smem:[#allocation3 + $0x302]]
    %v3221 = vstv %s3220
    %v3222 = vmul.f32 %v3214, %v3221
    %v3223 = vmul.f32 %v3215, %v3221
    %v3224 = vmul.f32 %v3216, %v3221
    %v3225 = vmul.f32 %v3217, %v3221
    %v3226 = vmul.f32 %v3218, %v3221
    %v3227 = vmul.f32 %v3219, %v3221
    %v3228 = vadd.f32 %v3208, %v3222
    %v3229 = vadd.f32 %v3209, %v3223
    %v3230 = vadd.f32 %v3210, %v3224
    %v3231 = vadd.f32 %v3211, %v3225
    %v3232 = vadd.f32 %v3212, %v3226
    %v3233 = vadd.f32 %v3213, %v3227
    %v3234 = vld [vmem:[%s196] sm:$0xff]
    %v3235 = vld [vmem:[%s196 + $0x8] sm:$0xff]
    %v3236 = vld [vmem:[%s196 + $0x10] sm:$0xff]
    %v3237 = vld [vmem:[%s196 + $0x18] sm:$0xff]
    %v3238 = vld [vmem:[%s196 + $0x20] sm:$0xff]
    %v3239 = vld [vmem:[%s196 + $0x28] sm:$0xff]
    %s3240 = sld [smem:[#allocation3 + $0x303]]
    %v3241 = vstv %s3240
    %v3242 = vmul.f32 %v3234, %v3241
    %v3243 = vmul.f32 %v3235, %v3241
    %v3244 = vmul.f32 %v3236, %v3241
    %v3245 = vmul.f32 %v3237, %v3241
    %v3246 = vmul.f32 %v3238, %v3241
    %v3247 = vmul.f32 %v3239, %v3241
    %v3248 = vadd.f32 %v3228, %v3242
    %v3249 = vadd.f32 %v3229, %v3243
    %v3250 = vadd.f32 %v3230, %v3244
    %v3251 = vadd.f32 %v3231, %v3245
    %v3252 = vadd.f32 %v3232, %v3246
    %v3253 = vadd.f32 %v3233, %v3247
    %v3254 = vld [vmem:[%s219] sm:$0xff]
    %v3255 = vld [vmem:[%s219 + $0x8] sm:$0xff]
    %v3256 = vld [vmem:[%s219 + $0x10] sm:$0xff]
    %v3257 = vld [vmem:[%s219 + $0x18] sm:$0xff]
    %v3258 = vld [vmem:[%s219 + $0x20] sm:$0xff]
    %v3259 = vld [vmem:[%s219 + $0x28] sm:$0xff]
    %s3260 = sld [smem:[#allocation3 + $0x304]]
    %v3261 = vstv %s3260
    %v3262 = vmul.f32 %v3254, %v3261
    %v3263 = vmul.f32 %v3255, %v3261
    %v3264 = vmul.f32 %v3256, %v3261
    %v3265 = vmul.f32 %v3257, %v3261
    %v3266 = vmul.f32 %v3258, %v3261
    %v3267 = vmul.f32 %v3259, %v3261
    %v3268 = vadd.f32 %v3248, %v3262
    %v3269 = vadd.f32 %v3249, %v3263
    %v3270 = vadd.f32 %v3250, %v3264
    %v3271 = vadd.f32 %v3251, %v3265
    %v3272 = vadd.f32 %v3252, %v3266
    %v3273 = vadd.f32 %v3253, %v3267
    %v3274 = vld [vmem:[%s242] sm:$0xff]
    %v3275 = vld [vmem:[%s242 + $0x8] sm:$0xff]
    %v3276 = vld [vmem:[%s242 + $0x10] sm:$0xff]
    %v3277 = vld [vmem:[%s242 + $0x18] sm:$0xff]
    %v3278 = vld [vmem:[%s242 + $0x20] sm:$0xff]
    %v3279 = vld [vmem:[%s242 + $0x28] sm:$0xff]
    %s3280 = sld [smem:[#allocation3 + $0x305]]
    %v3281 = vstv %s3280
    %v3282 = vmul.f32 %v3274, %v3281
    %v3283 = vmul.f32 %v3275, %v3281
    %v3284 = vmul.f32 %v3276, %v3281
    %v3285 = vmul.f32 %v3277, %v3281
    %v3286 = vmul.f32 %v3278, %v3281
    %v3287 = vmul.f32 %v3279, %v3281
    %v3288 = vadd.f32 %v3268, %v3282
    %v3289 = vadd.f32 %v3269, %v3283
    %v3290 = vadd.f32 %v3270, %v3284
    %v3291 = vadd.f32 %v3271, %v3285
    %v3292 = vadd.f32 %v3272, %v3286
    %v3293 = vadd.f32 %v3273, %v3287
    %v3294 = vld [vmem:[%s265] sm:$0xff]
    %v3295 = vld [vmem:[%s265 + $0x8] sm:$0xff]
    %v3296 = vld [vmem:[%s265 + $0x10] sm:$0xff]
    %v3297 = vld [vmem:[%s265 + $0x18] sm:$0xff]
    %v3298 = vld [vmem:[%s265 + $0x20] sm:$0xff]
    %v3299 = vld [vmem:[%s265 + $0x28] sm:$0xff]
    %s3300 = sld [smem:[#allocation3 + $0x306]]
    %v3301 = vstv %s3300
    %v3302 = vmul.f32 %v3294, %v3301
    %v3303 = vmul.f32 %v3295, %v3301
    %v3304 = vmul.f32 %v3296, %v3301
    %v3305 = vmul.f32 %v3297, %v3301
    %v3306 = vmul.f32 %v3298, %v3301
    %v3307 = vmul.f32 %v3299, %v3301
    %v3308 = vadd.f32 %v3288, %v3302
    %v3309 = vadd.f32 %v3289, %v3303
    %v3310 = vadd.f32 %v3290, %v3304
    %v3311 = vadd.f32 %v3291, %v3305
    %v3312 = vadd.f32 %v3292, %v3306
    %v3313 = vadd.f32 %v3293, %v3307
    %v3314 = vld [vmem:[%s288] sm:$0xff]
    %v3315 = vld [vmem:[%s288 + $0x8] sm:$0xff]
    %v3316 = vld [vmem:[%s288 + $0x10] sm:$0xff]
    %v3317 = vld [vmem:[%s288 + $0x18] sm:$0xff]
    %v3318 = vld [vmem:[%s288 + $0x20] sm:$0xff]
    %v3319 = vld [vmem:[%s288 + $0x28] sm:$0xff]
    %s3320 = sld [smem:[#allocation3 + $0x307]]
    %v3321 = vstv %s3320
    %v3322 = vmul.f32 %v3314, %v3321
    %v3323 = vmul.f32 %v3315, %v3321
    %v3324 = vmul.f32 %v3316, %v3321
    %v3325 = vmul.f32 %v3317, %v3321
    %v3326 = vmul.f32 %v3318, %v3321
    %v3327 = vmul.f32 %v3319, %v3321
    %v3328 = vadd.f32 %v3308, %v3322
    %v3329 = vadd.f32 %v3309, %v3323
    %v3330 = vadd.f32 %v3310, %v3324
    %v3331 = vadd.f32 %v3311, %v3325
    %v3332 = vadd.f32 %v3312, %v3326
    %v3333 = vadd.f32 %v3313, %v3327
    %v3334 = vld [vmem:[%s311] sm:$0xff]
    %v3335 = vld [vmem:[%s311 + $0x8] sm:$0xff]
    %v3336 = vld [vmem:[%s311 + $0x10] sm:$0xff]
    %v3337 = vld [vmem:[%s311 + $0x18] sm:$0xff]
    %v3338 = vld [vmem:[%s311 + $0x20] sm:$0xff]
    %v3339 = vld [vmem:[%s311 + $0x28] sm:$0xff]
    %s3340 = sld [smem:[#allocation3 + $0x308]]
    %v3341 = vstv %s3340
    %v3342 = vmul.f32 %v3334, %v3341
    %v3343 = vmul.f32 %v3335, %v3341
    %v3344 = vmul.f32 %v3336, %v3341
    %v3345 = vmul.f32 %v3337, %v3341
    %v3346 = vmul.f32 %v3338, %v3341
    %v3347 = vmul.f32 %v3339, %v3341
    %v3348 = vadd.f32 %v3328, %v3342
    %v3349 = vadd.f32 %v3329, %v3343
    %v3350 = vadd.f32 %v3330, %v3344
    %v3351 = vadd.f32 %v3331, %v3345
    %v3352 = vadd.f32 %v3332, %v3346
    %v3353 = vadd.f32 %v3333, %v3347
    %s3354 = sld [smem:[#allocation6 + $0x6]]
    %v3355 = vstv %s3354
    %v3356 = vadd.f32 %v3348, %v3355
    %v3357 = vadd.f32 %v3349, %v3355
    %v3358 = vadd.f32 %v3350, %v3355
    %v3359 = vadd.f32 %v3351, %v3355
    %v3360 = vadd.f32 %v3352, %v3355
    %v3361 = vadd.f32 %v3353, %v3355
    %v3362 = vmax.f32 %v3356, 0.0
    %v3363 = vmax.f32 %v3357, 0.0
    %v3364 = vmax.f32 %v3358, 0.0
    %v3365 = vmax.f32 %v3359, 0.0
    %v3366 = vmax.f32 %v3360, 0.0
    %v3367 = vmax.f32 %v3361, 0.0
    %3368 = vst [vmem:[%s347] sm:$0xff] %v3362
    %3369 = vst [vmem:[%s347 + $0x8] sm:$0xff] %v3363
    %3370 = vst [vmem:[%s347 + $0x10] sm:$0xff] %v3364
    %3371 = vst [vmem:[%s347 + $0x18] sm:$0xff] %v3365
    %3372 = vst [vmem:[%s347 + $0x20] sm:$0xff] %v3366
    %3373 = vst.msk [vmem:[%s347 + $0x28] sm:$0xff] %vm353, %v3367
    %v3374 = vld [vmem:[#allocation2] sm:$0xff]
    %v3375 = vld [vmem:[#allocation2 + $0x8] sm:$0xff]
    %v3376 = vld [vmem:[#allocation2 + $0x10] sm:$0xff]
    %v3377 = vld [vmem:[#allocation2 + $0x18] sm:$0xff]
    %v3378 = vld [vmem:[#allocation2 + $0x20] sm:$0xff]
    %v3379 = vld [vmem:[#allocation2 + $0x28] sm:$0xff]
    %s3380 = scalar_lea.vmem [#allocation8], 4080
    %v3381 = vld [vmem:[%s3380] sm:$0xff]
    %v3382 = vld [vmem:[%s3380 + $0x8] sm:$0xff]
    %v3383 = vld [vmem:[%s3380 + $0x10] sm:$0xff]
    %v3384 = vld [vmem:[%s3380 + $0x18] sm:$0xff]
    %v3385 = vld [vmem:[%s3380 + $0x20] sm:$0xff]
    %v3386 = vld [vmem:[%s3380 + $0x28] sm:$0xff]
    %v3387 = vld [vmem:[%s3380 + $0x30] sm:$0xff]
    %v3388 = vld [vmem:[%s3380 + $0x38] sm:$0xff]
    %v3389 = vld [vmem:[%s3380 + $0x40] sm:$0xff]
    %v3390 = vld [vmem:[%s3380 + $0x48] sm:$0xff]
    %v3391 = vld [vmem:[%s3380 + $0x50] sm:$0xff]
    %v3392 = vld [vmem:[%s3380 + $0x58] sm:$0xff]
    %v3393 = vld [vmem:[%s3380 + $0x60] sm:$0xff]
    %v3394 = vld [vmem:[%s3380 + $0x68] sm:$0xff]
    %v3395 = vld [vmem:[%s3380 + $0x70] sm:$0xff]
    %v3396 = vld [vmem:[%s3380 + $0x78] sm:$0xff]
    %v3397 = vld [vmem:[%s3380 + $0x80] sm:$0xff]
    %v3398 = vld [vmem:[%s3380 + $0x88] sm:$0xff]
    %v3399 = vld [vmem:[%s3380 + $0x90] sm:$0xff]
    %v3400 = vld [vmem:[%s3380 + $0x98] sm:$0xff]
    %v3401 = vld [vmem:[%s3380 + $0xa0] sm:$0xff]
    %v3402 = vld [vmem:[%s3380 + $0xa8] sm:$0xff]
    %v3403 = vld [vmem:[%s3380 + $0xb0] sm:$0xff]
    %v3404 = vld [vmem:[%s3380 + $0xb8] sm:$0xff]
    %v3405 = vld [vmem:[%s3380 + $0xc0] sm:$0xff]
    %v3406 = vld [vmem:[%s3380 + $0xc8] sm:$0xff]
    %v3407 = vld [vmem:[%s3380 + $0xd0] sm:$0xff]
    %v3408 = vld [vmem:[%s3380 + $0xd8] sm:$0xff]
    %v3409 = vld [vmem:[%s3380 + $0xe0] sm:$0xff]
    %v3410 = vld [vmem:[%s3380 + $0xe8] sm:$0xff]
    %v3411 = vld [vmem:[%s3380 + $0xf0] sm:$0xff]
    %v3412 = vld [vmem:[%s3380 + $0xf8] sm:$0xff]
    %v3413 = vld [vmem:[%s3380 + $0x100] sm:$0xff]
    %v3414 = vld [vmem:[%s3380 + $0x108] sm:$0xff]
    %v3415 = vld [vmem:[%s3380 + $0x110] sm:$0xff]
    %v3416 = vld [vmem:[%s3380 + $0x118] sm:$0xff]
    %v3417 = vld [vmem:[%s3380 + $0x120] sm:$0xff]
    %v3418 = vld [vmem:[%s3380 + $0x128] sm:$0xff]
    %v3419 = vld [vmem:[%s3380 + $0x130] sm:$0xff]
    %v3420 = vld [vmem:[%s3380 + $0x138] sm:$0xff]
    %v3421 = vld [vmem:[%s3380 + $0x140] sm:$0xff]
    %v3422 = vld [vmem:[%s3380 + $0x148] sm:$0xff]
    %v3423 = vld [vmem:[%s3380 + $0x150] sm:$0xff]
    %v3424 = vld [vmem:[%s3380 + $0x158] sm:$0xff]
    %v3425 = vld [vmem:[%s3380 + $0x160] sm:$0xff]
    %v3426 = vld [vmem:[%s3380 + $0x168] sm:$0xff]
    %v3427 = vld [vmem:[%s3380 + $0x170] sm:$0xff]
    %v3428 = vld [vmem:[%s3380 + $0x178] sm:$0xff]
    %v3429 = vld [vmem:[%s3380 + $0x180] sm:$0xff]
    %v3430 = vld [vmem:[%s3380 + $0x188] sm:$0xff]
    %v3431 = vld [vmem:[%s3380 + $0x190] sm:$0xff]
    %v3432 = vld [vmem:[%s3380 + $0x198] sm:$0xff]
    %v3433 = vld [vmem:[%s3380 + $0x1a0] sm:$0xff]
    %v3434 = vld [vmem:[%s3380 + $0x1a8] sm:$0xff]
    %v3435 = vld [vmem:[%s3380 + $0x1b0] sm:$0xff]
    %v3436 = vld [vmem:[%s3380 + $0x1b8] sm:$0xff]
    %v3437 = vld [vmem:[%s3380 + $0x1c0] sm:$0xff]
    %v3438 = vld [vmem:[%s3380 + $0x1c8] sm:$0xff]
    %v3439 = vld [vmem:[%s3380 + $0x1d0] sm:$0xff]
    %v3440 = vld [vmem:[%s3380 + $0x1d8] sm:$0xff]
    %v3441 = vld [vmem:[%s3380 + $0x1e0] sm:$0xff]
    %v3442 = vld [vmem:[%s3380 + $0x1e8] sm:$0xff]
    %v3443 = vld [vmem:[%s3380 + $0x1f0] sm:$0xff]
    %v3444 = vld [vmem:[%s3380 + $0x1f8] sm:$0xff]
    %v3445 = vld [vmem:[%s3380 + $0x200] sm:$0xff]
    %v3446 = vld [vmem:[%s3380 + $0x208] sm:$0xff]
    %v3447 = vld [vmem:[%s3380 + $0x210] sm:$0xff]
    %v3448 = vld [vmem:[%s3380 + $0x218] sm:$0xff]
    %v3449 = vld [vmem:[%s3380 + $0x220] sm:$0xff]
    %v3450 = vld [vmem:[%s3380 + $0x228] sm:$0xff]
    %v3451 = vld [vmem:[%s3380 + $0x230] sm:$0xff]
    %v3452 = vld [vmem:[%s3380 + $0x238] sm:$0xff]
    %v3453 = vld [vmem:[%s3380 + $0x240] sm:$0xff]
    %v3454 = vld [vmem:[%s3380 + $0x248] sm:$0xff]
    %v3455 = vld [vmem:[%s3380 + $0x250] sm:$0xff]
    %v3456 = vld [vmem:[%s3380 + $0x258] sm:$0xff]
    %v3457 = vld [vmem:[%s3380 + $0x260] sm:$0xff]
    %v3458 = vld [vmem:[%s3380 + $0x268] sm:$0xff]
    %v3459 = vld [vmem:[%s3380 + $0x270] sm:$0xff]
    %v3460 = vld [vmem:[%s3380 + $0x278] sm:$0xff]
    %v3461 = vld [vmem:[%s3380 + $0x280] sm:$0xff]
    %v3462 = vld [vmem:[%s3380 + $0x288] sm:$0xff]
    %v3463 = vld [vmem:[%s3380 + $0x290] sm:$0xff]
    %v3464 = vld [vmem:[%s3380 + $0x298] sm:$0xff]
    %v3465 = vld [vmem:[%s3380 + $0x2a0] sm:$0xf]
    %v3467 = vsel %vm353, %v3379, 0
    %v3470 = vsel %vm738, %v3465, 0
    %3472 = vmatprep.subr.mxu0 0.0
    %3473 = vmatpush1.msra.mxu0 %v3396
    %3474 = vmatprep.subr.mxu0 0.0
    %3475 = vmatpush1.msra.mxu0 %v3395
    %3476 = vmatprep.subr.mxu0 0.0
    %3477 = vmatpush1.msra.mxu0 %v3394
    %3478 = vmatprep.subr.mxu0 0.0
    %3479 = vmatpush1.msra.mxu0 %v3393
    %3480 = vmatprep.subr.mxu0 0.0
    %3481 = vmatpush1.msra.mxu0 %v3392
    %3482 = vmatprep.subr.mxu0 0.0
    %3483 = vmatpush1.msra.mxu0 %v3391
    %3484 = vmatprep.subr.mxu0 0.0
    %3485 = vmatpush1.msra.mxu0 %v3390
    %3486 = vmatprep.subr.mxu0 0.0
    %3487 = vmatpush1.msra.mxu0 %v3389
    %3488 = vmatprep.subr.mxu0 0.0
    %3489 = vmatpush1.msra.mxu0 %v3388
    %3490 = vmatprep.subr.mxu0 0.0
    %3491 = vmatpush1.msra.mxu0 %v3387
    %3492 = vmatprep.subr.mxu0 0.0
    %3493 = vmatpush1.msra.mxu0 %v3386
    %3494 = vmatprep.subr.mxu0 0.0
    %3495 = vmatpush1.msra.mxu0 %v3385
    %3496 = vmatprep.subr.mxu0 0.0
    %3497 = vmatpush1.msra.mxu0 %v3384
    %3498 = vmatprep.subr.mxu0 0.0
    %3499 = vmatpush1.msra.mxu0 %v3383
    %3500 = vmatprep.subr.mxu0 0.0
    %3501 = vmatpush1.msra.mxu0 %v3382
    %3502 = vmatprep.subr.mxu0 0.0
    %3503 = vmatpush1.msra.mxu0 %v3381
    %3504 = vmatprep.subr.mxu0 0.0
    %3505 = vmatpush2.msra.mxu0 %v3412
    %3506 = vmatprep.subr.mxu0 0.0
    %3507 = vmatpush2.msra.mxu0 %v3411
    %3508 = vmatprep.subr.mxu0 0.0
    %3509 = vmatpush2.msra.mxu0 %v3410
    %3510 = vmatprep.subr.mxu0 0.0
    %3511 = vmatpush2.msra.mxu0 %v3409
    %3512 = vmatprep.subr.mxu0 0.0
    %3513 = vmatpush2.msra.mxu0 %v3408
    %3514 = vmatprep.subr.mxu0 0.0
    %3515 = vmatpush2.msra.mxu0 %v3407
    %3516 = vmatprep.subr.mxu0 0.0
    %3517 = vmatpush2.msra.mxu0 %v3406
    %3518 = vmatprep.subr.mxu0 0.0
    %3519 = vmatpush2.msra.mxu0 %v3405
    %3520 = vmatprep.subr.mxu0 0.0
    %3521 = vmatpush2.msra.mxu0 %v3404
    %3522 = vmatprep.subr.mxu0 0.0
    %3523 = vmatpush2.msra.mxu0 %v3403
    %3524 = vmatprep.subr.mxu0 0.0
    %3525 = vmatpush2.msra.mxu0 %v3402
    %3526 = vmatprep.subr.mxu0 0.0
    %3527 = vmatpush2.msra.mxu0 %v3401
    %3528 = vmatprep.subr.mxu0 0.0
    %3529 = vmatpush2.msra.mxu0 %v3400
    %3530 = vmatprep.subr.mxu0 0.0
    %3531 = vmatpush2.msra.mxu0 %v3399
    %3532 = vmatprep.subr.mxu0 0.0
    %3533 = vmatpush2.msra.mxu0 %v3398
    %3534 = vmatprep.subr.mxu0 0.0
    %3535 = vmatpush2.msra.mxu0 %v3397
    %3536 = vmatprep.mubr.f32.mxu0 %v3375
    %3537 = vmatmul.mubr.f32.gmra.mxu0 %v3374
    %v3538 = vpop.f32.mrf.mxu0
    %v3539 = vadd.f32 0.0, %v3538
    %v3540 = vpop.f32.mrf.mxu0
    %3541 = vdwg.mxu0
    %3542 = vmatprep.subr.mxu0 0.0
    %3543 = vmatpush1.msra.mxu0 %v3428
    %3544 = vmatprep.subr.mxu0 0.0
    %3545 = vmatpush1.msra.mxu0 %v3427
    %3546 = vmatprep.subr.mxu0 0.0
    %3547 = vmatpush1.msra.mxu0 %v3426
    %3548 = vmatprep.subr.mxu0 0.0
    %3549 = vmatpush1.msra.mxu0 %v3425
    %3550 = vmatprep.subr.mxu0 0.0
    %3551 = vmatpush1.msra.mxu0 %v3424
    %3552 = vmatprep.subr.mxu0 0.0
    %3553 = vmatpush1.msra.mxu0 %v3423
    %3554 = vmatprep.subr.mxu0 0.0
    %3555 = vmatpush1.msra.mxu0 %v3422
    %3556 = vmatprep.subr.mxu0 0.0
    %3557 = vmatpush1.msra.mxu0 %v3421
    %3558 = vmatprep.subr.mxu0 0.0
    %3559 = vmatpush1.msra.mxu0 %v3420
    %3560 = vmatprep.subr.mxu0 0.0
    %3561 = vmatpush1.msra.mxu0 %v3419
    %3562 = vmatprep.subr.mxu0 0.0
    %3563 = vmatpush1.msra.mxu0 %v3418
    %3564 = vmatprep.subr.mxu0 0.0
    %3565 = vmatpush1.msra.mxu0 %v3417
    %3566 = vmatprep.subr.mxu0 0.0
    %3567 = vmatpush1.msra.mxu0 %v3416
    %3568 = vmatprep.subr.mxu0 0.0
    %3569 = vmatpush1.msra.mxu0 %v3415
    %3570 = vmatprep.subr.mxu0 0.0
    %3571 = vmatpush1.msra.mxu0 %v3414
    %3572 = vmatprep.subr.mxu0 0.0
    %3573 = vmatpush1.msra.mxu0 %v3413
    %3574 = vmatprep.subr.mxu0 0.0
    %3575 = vmatpush2.msra.mxu0 %v3444
    %3576 = vmatprep.subr.mxu0 0.0
    %3577 = vmatpush2.msra.mxu0 %v3443
    %3578 = vmatprep.subr.mxu0 0.0
    %3579 = vmatpush2.msra.mxu0 %v3442
    %3580 = vmatprep.subr.mxu0 0.0
    %3581 = vmatpush2.msra.mxu0 %v3441
    %3582 = vmatprep.subr.mxu0 0.0
    %3583 = vmatpush2.msra.mxu0 %v3440
    %3584 = vmatprep.subr.mxu0 0.0
    %3585 = vmatpush2.msra.mxu0 %v3439
    %3586 = vmatprep.subr.mxu0 0.0
    %3587 = vmatpush2.msra.mxu0 %v3438
    %3588 = vmatprep.subr.mxu0 0.0
    %3589 = vmatpush2.msra.mxu0 %v3437
    %3590 = vmatprep.subr.mxu0 0.0
    %3591 = vmatpush2.msra.mxu0 %v3436
    %3592 = vmatprep.subr.mxu0 0.0
    %3593 = vmatpush2.msra.mxu0 %v3435
    %3594 = vmatprep.subr.mxu0 0.0
    %3595 = vmatpush2.msra.mxu0 %v3434
    %3596 = vmatprep.subr.mxu0 0.0
    %3597 = vmatpush2.msra.mxu0 %v3433
    %3598 = vmatprep.subr.mxu0 0.0
    %3599 = vmatpush2.msra.mxu0 %v3432
    %3600 = vmatprep.subr.mxu0 0.0
    %3601 = vmatpush2.msra.mxu0 %v3431
    %3602 = vmatprep.subr.mxu0 0.0
    %3603 = vmatpush2.msra.mxu0 %v3430
    %3604 = vmatprep.subr.mxu0 0.0
    %3605 = vmatpush2.msra.mxu0 %v3429
    %3606 = vmatprep.mubr.f32.mxu0 %v3377
    %3607 = vmatmul.mubr.f32.gmra.mxu0 %v3376
    %v3608 = vpop.f32.mrf.mxu0
    %v3609 = vadd.f32 %v3539, %v3608
    %v3610 = vpop.f32.mrf.mxu0
    %3611 = vdwg.mxu0
    %3612 = vmatprep.subr.mxu0 0.0
    %3613 = vmatpush1.msra.mxu0 %v3460
    %3614 = vmatprep.subr.mxu0 0.0
    %3615 = vmatpush1.msra.mxu0 %v3459
    %3616 = vmatprep.subr.mxu0 0.0
    %3617 = vmatpush1.msra.mxu0 %v3458
    %3618 = vmatprep.subr.mxu0 0.0
    %3619 = vmatpush1.msra.mxu0 %v3457
    %3620 = vmatprep.subr.mxu0 0.0
    %3621 = vmatpush1.msra.mxu0 %v3456
    %3622 = vmatprep.subr.mxu0 0.0
    %3623 = vmatpush1.msra.mxu0 %v3455
    %3624 = vmatprep.subr.mxu0 0.0
    %3625 = vmatpush1.msra.mxu0 %v3454
    %3626 = vmatprep.subr.mxu0 0.0
    %3627 = vmatpush1.msra.mxu0 %v3453
    %3628 = vmatprep.subr.mxu0 0.0
    %3629 = vmatpush1.msra.mxu0 %v3452
    %3630 = vmatprep.subr.mxu0 0.0
    %3631 = vmatpush1.msra.mxu0 %v3451
    %3632 = vmatprep.subr.mxu0 0.0
    %3633 = vmatpush1.msra.mxu0 %v3450
    %3634 = vmatprep.subr.mxu0 0.0
    %3635 = vmatpush1.msra.mxu0 %v3449
    %3636 = vmatprep.subr.mxu0 0.0
    %3637 = vmatpush1.msra.mxu0 %v3448
    %3638 = vmatprep.subr.mxu0 0.0
    %3639 = vmatpush1.msra.mxu0 %v3447
    %3640 = vmatprep.subr.mxu0 0.0
    %3641 = vmatpush1.msra.mxu0 %v3446
    %3642 = vmatprep.subr.mxu0 0.0
    %3643 = vmatpush1.msra.mxu0 %v3445
    %3644 = vmatprep.subr.mxu0 0.0
    %3645 = vmatpush2.msra.mxu0 0.0
    %3646 = vmatprep.subr.mxu0 0.0
    %3647 = vmatpush2.msra.mxu0 0.0
    %3648 = vmatprep.subr.mxu0 0.0
    %3649 = vmatpush2.msra.mxu0 0.0
    %3650 = vmatprep.subr.mxu0 0.0
    %3651 = vmatpush2.msra.mxu0 0.0
    %3652 = vmatprep.subr.mxu0 0.0
    %3653 = vmatpush2.msra.mxu0 0.0
    %3654 = vmatprep.subr.mxu0 0.0
    %3655 = vmatpush2.msra.mxu0 0.0
    %3656 = vmatprep.subr.mxu0 0.0
    %3657 = vmatpush2.msra.mxu0 0.0
    %3658 = vmatprep.subr.mxu0 0.0
    %3659 = vmatpush2.msra.mxu0 0.0
    %3660 = vmatprep.subr.mxu0 0.0
    %3661 = vmatpush2.msra.mxu0 0.0
    %3662 = vmatprep.subr.mxu0 0.0
    %3663 = vmatpush2.msra.mxu0 0.0
    %3664 = vmatprep.subr.mxu0 0.0
    %3665 = vmatpush2.msra.mxu0 0.0
    %3666 = vmatprep.subr.mxu0 0.0
    %3667 = vmatpush2.msra.mxu0 %v3470
    %3668 = vmatprep.subr.mxu0 0.0
    %3669 = vmatpush2.msra.mxu0 %v3464
    %3670 = vmatprep.subr.mxu0 0.0
    %3671 = vmatpush2.msra.mxu0 %v3463
    %3672 = vmatprep.subr.mxu0 0.0
    %3673 = vmatpush2.msra.mxu0 %v3462
    %3674 = vmatprep.subr.mxu0 0.0
    %3675 = vmatpush2.msra.mxu0 %v3461
    %3676 = vmatprep.mubr.f32.mxu0 %v3467
    %3677 = vmatmul.mubr.f32.gmra.mxu0 %v3378
    %v3678 = vpop.f32.mrf.mxu0
    %v3679 = vadd.f32 %v3609, %v3678
    %v3680 = vpop.f32.mrf.mxu0
    %3681 = vdwg.mxu0
    %v3682 = vadd.f32 %v3179, %v3679
    %v3683 = vld [vmem:[%s133] sm:$0xff]
    %v3684 = vld [vmem:[%s133 + $0x8] sm:$0xff]
    %v3685 = vld [vmem:[%s133 + $0x10] sm:$0xff]
    %v3686 = vld [vmem:[%s133 + $0x18] sm:$0xff]
    %v3687 = vld [vmem:[%s133 + $0x20] sm:$0xff]
    %v3688 = vld [vmem:[%s133 + $0x28] sm:$0xff]
    %s3689 = sld [smem:[#allocation3 + $0x380]]
    %v3690 = vstv %s3689
    %v3691 = vmul.f32 %v3683, %v3690
    %v3692 = vmul.f32 %v3684, %v3690
    %v3693 = vmul.f32 %v3685, %v3690
    %v3694 = vmul.f32 %v3686, %v3690
    %v3695 = vmul.f32 %v3687, %v3690
    %v3696 = vmul.f32 %v3688, %v3690
    %v3697 = vld [vmem:[%s150] sm:$0xff]
    %v3698 = vld [vmem:[%s150 + $0x8] sm:$0xff]
    %v3699 = vld [vmem:[%s150 + $0x10] sm:$0xff]
    %v3700 = vld [vmem:[%s150 + $0x18] sm:$0xff]
    %v3701 = vld [vmem:[%s150 + $0x20] sm:$0xff]
    %v3702 = vld [vmem:[%s150 + $0x28] sm:$0xff]
    %s3703 = sld [smem:[#allocation3 + $0x381]]
    %v3704 = vstv %s3703
    %v3705 = vmul.f32 %v3697, %v3704
    %v3706 = vmul.f32 %v3698, %v3704
    %v3707 = vmul.f32 %v3699, %v3704
    %v3708 = vmul.f32 %v3700, %v3704
    %v3709 = vmul.f32 %v3701, %v3704
    %v3710 = vmul.f32 %v3702, %v3704
    %v3711 = vadd.f32 %v3691, %v3705
    %v3712 = vadd.f32 %v3692, %v3706
    %v3713 = vadd.f32 %v3693, %v3707
    %v3714 = vadd.f32 %v3694, %v3708
    %v3715 = vadd.f32 %v3695, %v3709
    %v3716 = vadd.f32 %v3696, %v3710
    %v3717 = vld [vmem:[%s173] sm:$0xff]
    %v3718 = vld [vmem:[%s173 + $0x8] sm:$0xff]
    %v3719 = vld [vmem:[%s173 + $0x10] sm:$0xff]
    %v3720 = vld [vmem:[%s173 + $0x18] sm:$0xff]
    %v3721 = vld [vmem:[%s173 + $0x20] sm:$0xff]
    %v3722 = vld [vmem:[%s173 + $0x28] sm:$0xff]
    %s3723 = sld [smem:[#allocation3 + $0x382]]
    %v3724 = vstv %s3723
    %v3725 = vmul.f32 %v3717, %v3724
    %v3726 = vmul.f32 %v3718, %v3724
    %v3727 = vmul.f32 %v3719, %v3724
    %v3728 = vmul.f32 %v3720, %v3724
    %v3729 = vmul.f32 %v3721, %v3724
    %v3730 = vmul.f32 %v3722, %v3724
    %v3731 = vadd.f32 %v3711, %v3725
    %v3732 = vadd.f32 %v3712, %v3726
    %v3733 = vadd.f32 %v3713, %v3727
    %v3734 = vadd.f32 %v3714, %v3728
    %v3735 = vadd.f32 %v3715, %v3729
    %v3736 = vadd.f32 %v3716, %v3730
    %v3737 = vld [vmem:[%s196] sm:$0xff]
    %v3738 = vld [vmem:[%s196 + $0x8] sm:$0xff]
    %v3739 = vld [vmem:[%s196 + $0x10] sm:$0xff]
    %v3740 = vld [vmem:[%s196 + $0x18] sm:$0xff]
    %v3741 = vld [vmem:[%s196 + $0x20] sm:$0xff]
    %v3742 = vld [vmem:[%s196 + $0x28] sm:$0xff]
    %s3743 = sld [smem:[#allocation3 + $0x383]]
    %v3744 = vstv %s3743
    %v3745 = vmul.f32 %v3737, %v3744
    %v3746 = vmul.f32 %v3738, %v3744
    %v3747 = vmul.f32 %v3739, %v3744
    %v3748 = vmul.f32 %v3740, %v3744
    %v3749 = vmul.f32 %v3741, %v3744
    %v3750 = vmul.f32 %v3742, %v3744
    %v3751 = vadd.f32 %v3731, %v3745
    %v3752 = vadd.f32 %v3732, %v3746
    %v3753 = vadd.f32 %v3733, %v3747
    %v3754 = vadd.f32 %v3734, %v3748
    %v3755 = vadd.f32 %v3735, %v3749
    %v3756 = vadd.f32 %v3736, %v3750
    %v3757 = vld [vmem:[%s219] sm:$0xff]
    %v3758 = vld [vmem:[%s219 + $0x8] sm:$0xff]
    %v3759 = vld [vmem:[%s219 + $0x10] sm:$0xff]
    %v3760 = vld [vmem:[%s219 + $0x18] sm:$0xff]
    %v3761 = vld [vmem:[%s219 + $0x20] sm:$0xff]
    %v3762 = vld [vmem:[%s219 + $0x28] sm:$0xff]
    %s3763 = sld [smem:[#allocation3 + $0x384]]
    %v3764 = vstv %s3763
    %v3765 = vmul.f32 %v3757, %v3764
    %v3766 = vmul.f32 %v3758, %v3764
    %v3767 = vmul.f32 %v3759, %v3764
    %v3768 = vmul.f32 %v3760, %v3764
    %v3769 = vmul.f32 %v3761, %v3764
    %v3770 = vmul.f32 %v3762, %v3764
    %v3771 = vadd.f32 %v3751, %v3765
    %v3772 = vadd.f32 %v3752, %v3766
    %v3773 = vadd.f32 %v3753, %v3767
    %v3774 = vadd.f32 %v3754, %v3768
    %v3775 = vadd.f32 %v3755, %v3769
    %v3776 = vadd.f32 %v3756, %v3770
    %v3777 = vld [vmem:[%s242] sm:$0xff]
    %v3778 = vld [vmem:[%s242 + $0x8] sm:$0xff]
    %v3779 = vld [vmem:[%s242 + $0x10] sm:$0xff]
    %v3780 = vld [vmem:[%s242 + $0x18] sm:$0xff]
    %v3781 = vld [vmem:[%s242 + $0x20] sm:$0xff]
    %v3782 = vld [vmem:[%s242 + $0x28] sm:$0xff]
    %s3783 = sld [smem:[#allocation3 + $0x385]]
    %v3784 = vstv %s3783
    %v3785 = vmul.f32 %v3777, %v3784
    %v3786 = vmul.f32 %v3778, %v3784
    %v3787 = vmul.f32 %v3779, %v3784
    %v3788 = vmul.f32 %v3780, %v3784
    %v3789 = vmul.f32 %v3781, %v3784
    %v3790 = vmul.f32 %v3782, %v3784
    %v3791 = vadd.f32 %v3771, %v3785
    %v3792 = vadd.f32 %v3772, %v3786
    %v3793 = vadd.f32 %v3773, %v3787
    %v3794 = vadd.f32 %v3774, %v3788
    %v3795 = vadd.f32 %v3775, %v3789
    %v3796 = vadd.f32 %v3776, %v3790
    %v3797 = vld [vmem:[%s265] sm:$0xff]
    %v3798 = vld [vmem:[%s265 + $0x8] sm:$0xff]
    %v3799 = vld [vmem:[%s265 + $0x10] sm:$0xff]
    %v3800 = vld [vmem:[%s265 + $0x18] sm:$0xff]
    %v3801 = vld [vmem:[%s265 + $0x20] sm:$0xff]
    %v3802 = vld [vmem:[%s265 + $0x28] sm:$0xff]
    %s3803 = sld [smem:[#allocation3 + $0x386]]
    %v3804 = vstv %s3803
    %v3805 = vmul.f32 %v3797, %v3804
    %v3806 = vmul.f32 %v3798, %v3804
    %v3807 = vmul.f32 %v3799, %v3804
    %v3808 = vmul.f32 %v3800, %v3804
    %v3809 = vmul.f32 %v3801, %v3804
    %v3810 = vmul.f32 %v3802, %v3804
    %v3811 = vadd.f32 %v3791, %v3805
    %v3812 = vadd.f32 %v3792, %v3806
    %v3813 = vadd.f32 %v3793, %v3807
    %v3814 = vadd.f32 %v3794, %v3808
    %v3815 = vadd.f32 %v3795, %v3809
    %v3816 = vadd.f32 %v3796, %v3810
    %v3817 = vld [vmem:[%s288] sm:$0xff]
    %v3818 = vld [vmem:[%s288 + $0x8] sm:$0xff]
    %v3819 = vld [vmem:[%s288 + $0x10] sm:$0xff]
    %v3820 = vld [vmem:[%s288 + $0x18] sm:$0xff]
    %v3821 = vld [vmem:[%s288 + $0x20] sm:$0xff]
    %v3822 = vld [vmem:[%s288 + $0x28] sm:$0xff]
    %s3823 = sld [smem:[#allocation3 + $0x387]]
    %v3824 = vstv %s3823
    %v3825 = vmul.f32 %v3817, %v3824
    %v3826 = vmul.f32 %v3818, %v3824
    %v3827 = vmul.f32 %v3819, %v3824
    %v3828 = vmul.f32 %v3820, %v3824
    %v3829 = vmul.f32 %v3821, %v3824
    %v3830 = vmul.f32 %v3822, %v3824
    %v3831 = vadd.f32 %v3811, %v3825
    %v3832 = vadd.f32 %v3812, %v3826
    %v3833 = vadd.f32 %v3813, %v3827
    %v3834 = vadd.f32 %v3814, %v3828
    %v3835 = vadd.f32 %v3815, %v3829
    %v3836 = vadd.f32 %v3816, %v3830
    %v3837 = vld [vmem:[%s311] sm:$0xff]
    %v3838 = vld [vmem:[%s311 + $0x8] sm:$0xff]
    %v3839 = vld [vmem:[%s311 + $0x10] sm:$0xff]
    %v3840 = vld [vmem:[%s311 + $0x18] sm:$0xff]
    %v3841 = vld [vmem:[%s311 + $0x20] sm:$0xff]
    %v3842 = vld [vmem:[%s311 + $0x28] sm:$0xff]
    %s3843 = sld [smem:[#allocation3 + $0x388]]
    %v3844 = vstv %s3843
    %v3845 = vmul.f32 %v3837, %v3844
    %v3846 = vmul.f32 %v3838, %v3844
    %v3847 = vmul.f32 %v3839, %v3844
    %v3848 = vmul.f32 %v3840, %v3844
    %v3849 = vmul.f32 %v3841, %v3844
    %v3850 = vmul.f32 %v3842, %v3844
    %v3851 = vadd.f32 %v3831, %v3845
    %v3852 = vadd.f32 %v3832, %v3846
    %v3853 = vadd.f32 %v3833, %v3847
    %v3854 = vadd.f32 %v3834, %v3848
    %v3855 = vadd.f32 %v3835, %v3849
    %v3856 = vadd.f32 %v3836, %v3850
    %s3857 = sld [smem:[#allocation6 + $0x7]]
    %v3858 = vstv %s3857
    %v3859 = vadd.f32 %v3851, %v3858
    %v3860 = vadd.f32 %v3852, %v3858
    %v3861 = vadd.f32 %v3853, %v3858
    %v3862 = vadd.f32 %v3854, %v3858
    %v3863 = vadd.f32 %v3855, %v3858
    %v3864 = vadd.f32 %v3856, %v3858
    %v3865 = vmax.f32 %v3859, 0.0
    %v3866 = vmax.f32 %v3860, 0.0
    %v3867 = vmax.f32 %v3861, 0.0
    %v3868 = vmax.f32 %v3862, 0.0
    %v3869 = vmax.f32 %v3863, 0.0
    %v3870 = vmax.f32 %v3864, 0.0
    %3871 = vst [vmem:[%s635] sm:$0xff] %v3865
    %3872 = vst [vmem:[%s635 + $0x8] sm:$0xff] %v3866
    %3873 = vst [vmem:[%s635 + $0x10] sm:$0xff] %v3867
    %3874 = vst [vmem:[%s635 + $0x18] sm:$0xff] %v3868
    %3875 = vst [vmem:[%s635 + $0x20] sm:$0xff] %v3869
    %3876 = vst.msk [vmem:[%s635 + $0x28] sm:$0xff] %vm353, %v3870
    %v3877 = vld [vmem:[%s642] sm:$0xff]
    %v3878 = vld [vmem:[%s642 + $0x8] sm:$0xff]
    %v3879 = vld [vmem:[%s642 + $0x10] sm:$0xff]
    %v3880 = vld [vmem:[%s642 + $0x18] sm:$0xff]
    %v3881 = vld [vmem:[%s642 + $0x20] sm:$0xff]
    %v3882 = vld [vmem:[%s642 + $0x28] sm:$0xff]
    %s3883 = scalar_lea.vmem [#allocation8], 4760
    %v3884 = vld [vmem:[%s3883] sm:$0xff]
    %v3885 = vld [vmem:[%s3883 + $0x8] sm:$0xff]
    %v3886 = vld [vmem:[%s3883 + $0x10] sm:$0xff]
    %v3887 = vld [vmem:[%s3883 + $0x18] sm:$0xff]
    %v3888 = vld [vmem:[%s3883 + $0x20] sm:$0xff]
    %v3889 = vld [vmem:[%s3883 + $0x28] sm:$0xff]
    %v3890 = vld [vmem:[%s3883 + $0x30] sm:$0xff]
    %v3891 = vld [vmem:[%s3883 + $0x38] sm:$0xff]
    %v3892 = vld [vmem:[%s3883 + $0x40] sm:$0xff]
    %v3893 = vld [vmem:[%s3883 + $0x48] sm:$0xff]
    %v3894 = vld [vmem:[%s3883 + $0x50] sm:$0xff]
    %v3895 = vld [vmem:[%s3883 + $0x58] sm:$0xff]
    %v3896 = vld [vmem:[%s3883 + $0x60] sm:$0xff]
    %v3897 = vld [vmem:[%s3883 + $0x68] sm:$0xff]
    %v3898 = vld [vmem:[%s3883 + $0x70] sm:$0xff]
    %v3899 = vld [vmem:[%s3883 + $0x78] sm:$0xff]
    %v3900 = vld [vmem:[%s3883 + $0x80] sm:$0xff]
    %v3901 = vld [vmem:[%s3883 + $0x88] sm:$0xff]
    %v3902 = vld [vmem:[%s3883 + $0x90] sm:$0xff]
    %v3903 = vld [vmem:[%s3883 + $0x98] sm:$0xff]
    %v3904 = vld [vmem:[%s3883 + $0xa0] sm:$0xff]
    %v3905 = vld [vmem:[%s3883 + $0xa8] sm:$0xff]
    %v3906 = vld [vmem:[%s3883 + $0xb0] sm:$0xff]
    %v3907 = vld [vmem:[%s3883 + $0xb8] sm:$0xff]
    %v3908 = vld [vmem:[%s3883 + $0xc0] sm:$0xff]
    %v3909 = vld [vmem:[%s3883 + $0xc8] sm:$0xff]
    %v3910 = vld [vmem:[%s3883 + $0xd0] sm:$0xff]
    %v3911 = vld [vmem:[%s3883 + $0xd8] sm:$0xff]
    %v3912 = vld [vmem:[%s3883 + $0xe0] sm:$0xff]
    %v3913 = vld [vmem:[%s3883 + $0xe8] sm:$0xff]
    %v3914 = vld [vmem:[%s3883 + $0xf0] sm:$0xff]
    %v3915 = vld [vmem:[%s3883 + $0xf8] sm:$0xff]
    %v3916 = vld [vmem:[%s3883 + $0x100] sm:$0xff]
    %v3917 = vld [vmem:[%s3883 + $0x108] sm:$0xff]
    %v3918 = vld [vmem:[%s3883 + $0x110] sm:$0xff]
    %v3919 = vld [vmem:[%s3883 + $0x118] sm:$0xff]
    %v3920 = vld [vmem:[%s3883 + $0x120] sm:$0xff]
    %v3921 = vld [vmem:[%s3883 + $0x128] sm:$0xff]
    %v3922 = vld [vmem:[%s3883 + $0x130] sm:$0xff]
    %v3923 = vld [vmem:[%s3883 + $0x138] sm:$0xff]
    %v3924 = vld [vmem:[%s3883 + $0x140] sm:$0xff]
    %v3925 = vld [vmem:[%s3883 + $0x148] sm:$0xff]
    %v3926 = vld [vmem:[%s3883 + $0x150] sm:$0xff]
    %v3927 = vld [vmem:[%s3883 + $0x158] sm:$0xff]
    %v3928 = vld [vmem:[%s3883 + $0x160] sm:$0xff]
    %v3929 = vld [vmem:[%s3883 + $0x168] sm:$0xff]
    %v3930 = vld [vmem:[%s3883 + $0x170] sm:$0xff]
    %v3931 = vld [vmem:[%s3883 + $0x178] sm:$0xff]
    %v3932 = vld [vmem:[%s3883 + $0x180] sm:$0xff]
    %v3933 = vld [vmem:[%s3883 + $0x188] sm:$0xff]
    %v3934 = vld [vmem:[%s3883 + $0x190] sm:$0xff]
    %v3935 = vld [vmem:[%s3883 + $0x198] sm:$0xff]
    %v3936 = vld [vmem:[%s3883 + $0x1a0] sm:$0xff]
    %v3937 = vld [vmem:[%s3883 + $0x1a8] sm:$0xff]
    %v3938 = vld [vmem:[%s3883 + $0x1b0] sm:$0xff]
    %v3939 = vld [vmem:[%s3883 + $0x1b8] sm:$0xff]
    %v3940 = vld [vmem:[%s3883 + $0x1c0] sm:$0xff]
    %v3941 = vld [vmem:[%s3883 + $0x1c8] sm:$0xff]
    %v3942 = vld [vmem:[%s3883 + $0x1d0] sm:$0xff]
    %v3943 = vld [vmem:[%s3883 + $0x1d8] sm:$0xff]
    %v3944 = vld [vmem:[%s3883 + $0x1e0] sm:$0xff]
    %v3945 = vld [vmem:[%s3883 + $0x1e8] sm:$0xff]
    %v3946 = vld [vmem:[%s3883 + $0x1f0] sm:$0xff]
    %v3947 = vld [vmem:[%s3883 + $0x1f8] sm:$0xff]
    %v3948 = vld [vmem:[%s3883 + $0x200] sm:$0xff]
    %v3949 = vld [vmem:[%s3883 + $0x208] sm:$0xff]
    %v3950 = vld [vmem:[%s3883 + $0x210] sm:$0xff]
    %v3951 = vld [vmem:[%s3883 + $0x218] sm:$0xff]
    %v3952 = vld [vmem:[%s3883 + $0x220] sm:$0xff]
    %v3953 = vld [vmem:[%s3883 + $0x228] sm:$0xff]
    %v3954 = vld [vmem:[%s3883 + $0x230] sm:$0xff]
    %v3955 = vld [vmem:[%s3883 + $0x238] sm:$0xff]
    %v3956 = vld [vmem:[%s3883 + $0x240] sm:$0xff]
    %v3957 = vld [vmem:[%s3883 + $0x248] sm:$0xff]
    %v3958 = vld [vmem:[%s3883 + $0x250] sm:$0xff]
    %v3959 = vld [vmem:[%s3883 + $0x258] sm:$0xff]
    %v3960 = vld [vmem:[%s3883 + $0x260] sm:$0xff]
    %v3961 = vld [vmem:[%s3883 + $0x268] sm:$0xff]
    %v3962 = vld [vmem:[%s3883 + $0x270] sm:$0xff]
    %v3963 = vld [vmem:[%s3883 + $0x278] sm:$0xff]
    %v3964 = vld [vmem:[%s3883 + $0x280] sm:$0xff]
    %v3965 = vld [vmem:[%s3883 + $0x288] sm:$0xff]
    %v3966 = vld [vmem:[%s3883 + $0x290] sm:$0xff]
    %v3967 = vld [vmem:[%s3883 + $0x298] sm:$0xff]
    %v3968 = vld [vmem:[%s3883 + $0x2a0] sm:$0xf]
    %v3970 = vsel %vm353, %v3882, 0
    %v3973 = vsel %vm738, %v3968, 0
    %3975 = vmatprep.subr.mxu0 0.0
    %3976 = vmatpush1.msra.mxu0 %v3899
    %3977 = vmatprep.subr.mxu0 0.0
    %3978 = vmatpush1.msra.mxu0 %v3898
    %3979 = vmatprep.subr.mxu0 0.0
    %3980 = vmatpush1.msra.mxu0 %v3897
    %3981 = vmatprep.subr.mxu0 0.0
    %3982 = vmatpush1.msra.mxu0 %v3896
    %3983 = vmatprep.subr.mxu0 0.0
    %3984 = vmatpush1.msra.mxu0 %v3895
    %3985 = vmatprep.subr.mxu0 0.0
    %3986 = vmatpush1.msra.mxu0 %v3894
    %3987 = vmatprep.subr.mxu0 0.0
    %3988 = vmatpush1.msra.mxu0 %v3893
    %3989 = vmatprep.subr.mxu0 0.0
    %3990 = vmatpush1.msra.mxu0 %v3892
    %3991 = vmatprep.subr.mxu0 0.0
    %3992 = vmatpush1.msra.mxu0 %v3891
    %3993 = vmatprep.subr.mxu0 0.0
    %3994 = vmatpush1.msra.mxu0 %v3890
    %3995 = vmatprep.subr.mxu0 0.0
    %3996 = vmatpush1.msra.mxu0 %v3889
    %3997 = vmatprep.subr.mxu0 0.0
    %3998 = vmatpush1.msra.mxu0 %v3888
    %3999 = vmatprep.subr.mxu0 0.0
    %4000 = vmatpush1.msra.mxu0 %v3887
    %4001 = vmatprep.subr.mxu0 0.0
    %4002 = vmatpush1.msra.mxu0 %v3886
    %4003 = vmatprep.subr.mxu0 0.0
    %4004 = vmatpush1.msra.mxu0 %v3885
    %4005 = vmatprep.subr.mxu0 0.0
    %4006 = vmatpush1.msra.mxu0 %v3884
    %4007 = vmatprep.subr.mxu0 0.0
    %4008 = vmatpush2.msra.mxu0 %v3915
    %4009 = vmatprep.subr.mxu0 0.0
    %4010 = vmatpush2.msra.mxu0 %v3914
    %4011 = vmatprep.subr.mxu0 0.0
    %4012 = vmatpush2.msra.mxu0 %v3913
    %4013 = vmatprep.subr.mxu0 0.0
    %4014 = vmatpush2.msra.mxu0 %v3912
    %4015 = vmatprep.subr.mxu0 0.0
    %4016 = vmatpush2.msra.mxu0 %v3911
    %4017 = vmatprep.subr.mxu0 0.0
    %4018 = vmatpush2.msra.mxu0 %v3910
    %4019 = vmatprep.subr.mxu0 0.0
    %4020 = vmatpush2.msra.mxu0 %v3909
    %4021 = vmatprep.subr.mxu0 0.0
    %4022 = vmatpush2.msra.mxu0 %v3908
    %4023 = vmatprep.subr.mxu0 0.0
    %4024 = vmatpush2.msra.mxu0 %v3907
    %4025 = vmatprep.subr.mxu0 0.0
    %4026 = vmatpush2.msra.mxu0 %v3906
    %4027 = vmatprep.subr.mxu0 0.0
    %4028 = vmatpush2.msra.mxu0 %v3905
    %4029 = vmatprep.subr.mxu0 0.0
    %4030 = vmatpush2.msra.mxu0 %v3904
    %4031 = vmatprep.subr.mxu0 0.0
    %4032 = vmatpush2.msra.mxu0 %v3903
    %4033 = vmatprep.subr.mxu0 0.0
    %4034 = vmatpush2.msra.mxu0 %v3902
    %4035 = vmatprep.subr.mxu0 0.0
    %4036 = vmatpush2.msra.mxu0 %v3901
    %4037 = vmatprep.subr.mxu0 0.0
    %4038 = vmatpush2.msra.mxu0 %v3900
    %4039 = vmatprep.mubr.f32.mxu0 %v3878
    %4040 = vmatmul.mubr.f32.gmra.mxu0 %v3877
    %v4041 = vpop.f32.mrf.mxu0
    %v4042 = vadd.f32 0.0, %v4041
    %v4043 = vpop.f32.mrf.mxu0
    %4044 = vdwg.mxu0
    %4045 = vmatprep.subr.mxu0 0.0
    %4046 = vmatpush1.msra.mxu0 %v3931
    %4047 = vmatprep.subr.mxu0 0.0
    %4048 = vmatpush1.msra.mxu0 %v3930
    %4049 = vmatprep.subr.mxu0 0.0
    %4050 = vmatpush1.msra.mxu0 %v3929
    %4051 = vmatprep.subr.mxu0 0.0
    %4052 = vmatpush1.msra.mxu0 %v3928
    %4053 = vmatprep.subr.mxu0 0.0
    %4054 = vmatpush1.msra.mxu0 %v3927
    %4055 = vmatprep.subr.mxu0 0.0
    %4056 = vmatpush1.msra.mxu0 %v3926
    %4057 = vmatprep.subr.mxu0 0.0
    %4058 = vmatpush1.msra.mxu0 %v3925
    %4059 = vmatprep.subr.mxu0 0.0
    %4060 = vmatpush1.msra.mxu0 %v3924
    %4061 = vmatprep.subr.mxu0 0.0
    %4062 = vmatpush1.msra.mxu0 %v3923
    %4063 = vmatprep.subr.mxu0 0.0
    %4064 = vmatpush1.msra.mxu0 %v3922
    %4065 = vmatprep.subr.mxu0 0.0
    %4066 = vmatpush1.msra.mxu0 %v3921
    %4067 = vmatprep.subr.mxu0 0.0
    %4068 = vmatpush1.msra.mxu0 %v3920
    %4069 = vmatprep.subr.mxu0 0.0
    %4070 = vmatpush1.msra.mxu0 %v3919
    %4071 = vmatprep.subr.mxu0 0.0
    %4072 = vmatpush1.msra.mxu0 %v3918
    %4073 = vmatprep.subr.mxu0 0.0
    %4074 = vmatpush1.msra.mxu0 %v3917
    %4075 = vmatprep.subr.mxu0 0.0
    %4076 = vmatpush1.msra.mxu0 %v3916
    %4077 = vmatprep.subr.mxu0 0.0
    %4078 = vmatpush2.msra.mxu0 %v3947
    %4079 = vmatprep.subr.mxu0 0.0
    %4080 = vmatpush2.msra.mxu0 %v3946
    %4081 = vmatprep.subr.mxu0 0.0
    %4082 = vmatpush2.msra.mxu0 %v3945
    %4083 = vmatprep.subr.mxu0 0.0
    %4084 = vmatpush2.msra.mxu0 %v3944
    %4085 = vmatprep.subr.mxu0 0.0
    %4086 = vmatpush2.msra.mxu0 %v3943
    %4087 = vmatprep.subr.mxu0 0.0
    %4088 = vmatpush2.msra.mxu0 %v3942
    %4089 = vmatprep.subr.mxu0 0.0
    %4090 = vmatpush2.msra.mxu0 %v3941
    %4091 = vmatprep.subr.mxu0 0.0
    %4092 = vmatpush2.msra.mxu0 %v3940
    %4093 = vmatprep.subr.mxu0 0.0
    %4094 = vmatpush2.msra.mxu0 %v3939
    %4095 = vmatprep.subr.mxu0 0.0
    %4096 = vmatpush2.msra.mxu0 %v3938
    %4097 = vmatprep.subr.mxu0 0.0
    %4098 = vmatpush2.msra.mxu0 %v3937
    %4099 = vmatprep.subr.mxu0 0.0
    %4100 = vmatpush2.msra.mxu0 %v3936
    %4101 = vmatprep.subr.mxu0 0.0
    %4102 = vmatpush2.msra.mxu0 %v3935
    %4103 = vmatprep.subr.mxu0 0.0
    %4104 = vmatpush2.msra.mxu0 %v3934
    %4105 = vmatprep.subr.mxu0 0.0
    %4106 = vmatpush2.msra.mxu0 %v3933
    %4107 = vmatprep.subr.mxu0 0.0
    %4108 = vmatpush2.msra.mxu0 %v3932
    %4109 = vmatprep.mubr.f32.mxu0 %v3880
    %4110 = vmatmul.mubr.f32.gmra.mxu0 %v3879
    %v4111 = vpop.f32.mrf.mxu0
    %v4112 = vadd.f32 %v4042, %v4111
    %v4113 = vpop.f32.mrf.mxu0
    %4114 = vdwg.mxu0
    %4115 = vmatprep.subr.mxu0 0.0
    %4116 = vmatpush1.msra.mxu0 %v3963
    %4117 = vmatprep.subr.mxu0 0.0
    %4118 = vmatpush1.msra.mxu0 %v3962
    %4119 = vmatprep.subr.mxu0 0.0
    %4120 = vmatpush1.msra.mxu0 %v3961
    %4121 = vmatprep.subr.mxu0 0.0
    %4122 = vmatpush1.msra.mxu0 %v3960
    %4123 = vmatprep.subr.mxu0 0.0
    %4124 = vmatpush1.msra.mxu0 %v3959
    %4125 = vmatprep.subr.mxu0 0.0
    %4126 = vmatpush1.msra.mxu0 %v3958
    %4127 = vmatprep.subr.mxu0 0.0
    %4128 = vmatpush1.msra.mxu0 %v3957
    %4129 = vmatprep.subr.mxu0 0.0
    %4130 = vmatpush1.msra.mxu0 %v3956
    %4131 = vmatprep.subr.mxu0 0.0
    %4132 = vmatpush1.msra.mxu0 %v3955
    %4133 = vmatprep.subr.mxu0 0.0
    %4134 = vmatpush1.msra.mxu0 %v3954
    %4135 = vmatprep.subr.mxu0 0.0
    %4136 = vmatpush1.msra.mxu0 %v3953
    %4137 = vmatprep.subr.mxu0 0.0
    %4138 = vmatpush1.msra.mxu0 %v3952
    %4139 = vmatprep.subr.mxu0 0.0
    %4140 = vmatpush1.msra.mxu0 %v3951
    %4141 = vmatprep.subr.mxu0 0.0
    %4142 = vmatpush1.msra.mxu0 %v3950
    %4143 = vmatprep.subr.mxu0 0.0
    %4144 = vmatpush1.msra.mxu0 %v3949
    %4145 = vmatprep.subr.mxu0 0.0
    %4146 = vmatpush1.msra.mxu0 %v3948
    %4147 = vmatprep.subr.mxu0 0.0
    %4148 = vmatpush2.msra.mxu0 0.0
    %4149 = vmatprep.subr.mxu0 0.0
    %4150 = vmatpush2.msra.mxu0 0.0
    %4151 = vmatprep.subr.mxu0 0.0
    %4152 = vmatpush2.msra.mxu0 0.0
    %4153 = vmatprep.subr.mxu0 0.0
    %4154 = vmatpush2.msra.mxu0 0.0
    %4155 = vmatprep.subr.mxu0 0.0
    %4156 = vmatpush2.msra.mxu0 0.0
    %4157 = vmatprep.subr.mxu0 0.0
    %4158 = vmatpush2.msra.mxu0 0.0
    %4159 = vmatprep.subr.mxu0 0.0
    %4160 = vmatpush2.msra.mxu0 0.0
    %4161 = vmatprep.subr.mxu0 0.0
    %4162 = vmatpush2.msra.mxu0 0.0
    %4163 = vmatprep.subr.mxu0 0.0
    %4164 = vmatpush2.msra.mxu0 0.0
    %4165 = vmatprep.subr.mxu0 0.0
    %4166 = vmatpush2.msra.mxu0 0.0
    %4167 = vmatprep.subr.mxu0 0.0
    %4168 = vmatpush2.msra.mxu0 0.0
    %4169 = vmatprep.subr.mxu0 0.0
    %4170 = vmatpush2.msra.mxu0 %v3973
    %4171 = vmatprep.subr.mxu0 0.0
    %4172 = vmatpush2.msra.mxu0 %v3967
    %4173 = vmatprep.subr.mxu0 0.0
    %4174 = vmatpush2.msra.mxu0 %v3966
    %4175 = vmatprep.subr.mxu0 0.0
    %4176 = vmatpush2.msra.mxu0 %v3965
    %4177 = vmatprep.subr.mxu0 0.0
    %4178 = vmatpush2.msra.mxu0 %v3964
    %4179 = vmatprep.mubr.f32.mxu0 %v3970
    %4180 = vmatmul.mubr.f32.gmra.mxu0 %v3881
    %v4181 = vpop.f32.mrf.mxu0
    %v4182 = vadd.f32 %v4112, %v4181
    %v4183 = vpop.f32.mrf.mxu0
    %4184 = vdwg.mxu0
    %v4185 = vadd.f32 %v3682, %v4182
    %v4186 = vld [vmem:[%s133] sm:$0xff]
    %v4187 = vld [vmem:[%s133 + $0x8] sm:$0xff]
    %v4188 = vld [vmem:[%s133 + $0x10] sm:$0xff]
    %v4189 = vld [vmem:[%s133 + $0x18] sm:$0xff]
    %v4190 = vld [vmem:[%s133 + $0x20] sm:$0xff]
    %v4191 = vld [vmem:[%s133 + $0x28] sm:$0xff]
    %s4192 = sld [smem:[#allocation3 + $0x400]]
    %v4193 = vstv %s4192
    %v4194 = vmul.f32 %v4186, %v4193
    %v4195 = vmul.f32 %v4187, %v4193
    %v4196 = vmul.f32 %v4188, %v4193
    %v4197 = vmul.f32 %v4189, %v4193
    %v4198 = vmul.f32 %v4190, %v4193
    %v4199 = vmul.f32 %v4191, %v4193
    %v4200 = vld [vmem:[%s150] sm:$0xff]
    %v4201 = vld [vmem:[%s150 + $0x8] sm:$0xff]
    %v4202 = vld [vmem:[%s150 + $0x10] sm:$0xff]
    %v4203 = vld [vmem:[%s150 + $0x18] sm:$0xff]
    %v4204 = vld [vmem:[%s150 + $0x20] sm:$0xff]
    %v4205 = vld [vmem:[%s150 + $0x28] sm:$0xff]
    %s4206 = sld [smem:[#allocation3 + $0x401]]
    %v4207 = vstv %s4206
    %v4208 = vmul.f32 %v4200, %v4207
    %v4209 = vmul.f32 %v4201, %v4207
    %v4210 = vmul.f32 %v4202, %v4207
    %v4211 = vmul.f32 %v4203, %v4207
    %v4212 = vmul.f32 %v4204, %v4207
    %v4213 = vmul.f32 %v4205, %v4207
    %v4214 = vadd.f32 %v4194, %v4208
    %v4215 = vadd.f32 %v4195, %v4209
    %v4216 = vadd.f32 %v4196, %v4210
    %v4217 = vadd.f32 %v4197, %v4211
    %v4218 = vadd.f32 %v4198, %v4212
    %v4219 = vadd.f32 %v4199, %v4213
    %v4220 = vld [vmem:[%s173] sm:$0xff]
    %v4221 = vld [vmem:[%s173 + $0x8] sm:$0xff]
    %v4222 = vld [vmem:[%s173 + $0x10] sm:$0xff]
    %v4223 = vld [vmem:[%s173 + $0x18] sm:$0xff]
    %v4224 = vld [vmem:[%s173 + $0x20] sm:$0xff]
    %v4225 = vld [vmem:[%s173 + $0x28] sm:$0xff]
    %s4226 = sld [smem:[#allocation3 + $0x402]]
    %v4227 = vstv %s4226
    %v4228 = vmul.f32 %v4220, %v4227
    %v4229 = vmul.f32 %v4221, %v4227
    %v4230 = vmul.f32 %v4222, %v4227
    %v4231 = vmul.f32 %v4223, %v4227
    %v4232 = vmul.f32 %v4224, %v4227
    %v4233 = vmul.f32 %v4225, %v4227
    %v4234 = vadd.f32 %v4214, %v4228
    %v4235 = vadd.f32 %v4215, %v4229
    %v4236 = vadd.f32 %v4216, %v4230
    %v4237 = vadd.f32 %v4217, %v4231
    %v4238 = vadd.f32 %v4218, %v4232
    %v4239 = vadd.f32 %v4219, %v4233
    %v4240 = vld [vmem:[%s196] sm:$0xff]
    %v4241 = vld [vmem:[%s196 + $0x8] sm:$0xff]
    %v4242 = vld [vmem:[%s196 + $0x10] sm:$0xff]
    %v4243 = vld [vmem:[%s196 + $0x18] sm:$0xff]
    %v4244 = vld [vmem:[%s196 + $0x20] sm:$0xff]
    %v4245 = vld [vmem:[%s196 + $0x28] sm:$0xff]
    %s4246 = sld [smem:[#allocation3 + $0x403]]
    %v4247 = vstv %s4246
    %v4248 = vmul.f32 %v4240, %v4247
    %v4249 = vmul.f32 %v4241, %v4247
    %v4250 = vmul.f32 %v4242, %v4247
    %v4251 = vmul.f32 %v4243, %v4247
    %v4252 = vmul.f32 %v4244, %v4247
    %v4253 = vmul.f32 %v4245, %v4247
    %v4254 = vadd.f32 %v4234, %v4248
    %v4255 = vadd.f32 %v4235, %v4249
    %v4256 = vadd.f32 %v4236, %v4250
    %v4257 = vadd.f32 %v4237, %v4251
    %v4258 = vadd.f32 %v4238, %v4252
    %v4259 = vadd.f32 %v4239, %v4253
    %v4260 = vld [vmem:[%s219] sm:$0xff]
    %v4261 = vld [vmem:[%s219 + $0x8] sm:$0xff]
    %v4262 = vld [vmem:[%s219 + $0x10] sm:$0xff]
    %v4263 = vld [vmem:[%s219 + $0x18] sm:$0xff]
    %v4264 = vld [vmem:[%s219 + $0x20] sm:$0xff]
    %v4265 = vld [vmem:[%s219 + $0x28] sm:$0xff]
    %s4266 = sld [smem:[#allocation3 + $0x404]]
    %v4267 = vstv %s4266
    %v4268 = vmul.f32 %v4260, %v4267
    %v4269 = vmul.f32 %v4261, %v4267
    %v4270 = vmul.f32 %v4262, %v4267
    %v4271 = vmul.f32 %v4263, %v4267
    %v4272 = vmul.f32 %v4264, %v4267
    %v4273 = vmul.f32 %v4265, %v4267
    %v4274 = vadd.f32 %v4254, %v4268
    %v4275 = vadd.f32 %v4255, %v4269
    %v4276 = vadd.f32 %v4256, %v4270
    %v4277 = vadd.f32 %v4257, %v4271
    %v4278 = vadd.f32 %v4258, %v4272
    %v4279 = vadd.f32 %v4259, %v4273
    %v4280 = vld [vmem:[%s242] sm:$0xff]
    %v4281 = vld [vmem:[%s242 + $0x8] sm:$0xff]
    %v4282 = vld [vmem:[%s242 + $0x10] sm:$0xff]
    %v4283 = vld [vmem:[%s242 + $0x18] sm:$0xff]
    %v4284 = vld [vmem:[%s242 + $0x20] sm:$0xff]
    %v4285 = vld [vmem:[%s242 + $0x28] sm:$0xff]
    %s4286 = sld [smem:[#allocation3 + $0x405]]
    %v4287 = vstv %s4286
    %v4288 = vmul.f32 %v4280, %v4287
    %v4289 = vmul.f32 %v4281, %v4287
    %v4290 = vmul.f32 %v4282, %v4287
    %v4291 = vmul.f32 %v4283, %v4287
    %v4292 = vmul.f32 %v4284, %v4287
    %v4293 = vmul.f32 %v4285, %v4287
    %v4294 = vadd.f32 %v4274, %v4288
    %v4295 = vadd.f32 %v4275, %v4289
    %v4296 = vadd.f32 %v4276, %v4290
    %v4297 = vadd.f32 %v4277, %v4291
    %v4298 = vadd.f32 %v4278, %v4292
    %v4299 = vadd.f32 %v4279, %v4293
    %v4300 = vld [vmem:[%s265] sm:$0xff]
    %v4301 = vld [vmem:[%s265 + $0x8] sm:$0xff]
    %v4302 = vld [vmem:[%s265 + $0x10] sm:$0xff]
    %v4303 = vld [vmem:[%s265 + $0x18] sm:$0xff]
    %v4304 = vld [vmem:[%s265 + $0x20] sm:$0xff]
    %v4305 = vld [vmem:[%s265 + $0x28] sm:$0xff]
    %s4306 = sld [smem:[#allocation3 + $0x406]]
    %v4307 = vstv %s4306
    %v4308 = vmul.f32 %v4300, %v4307
    %v4309 = vmul.f32 %v4301, %v4307
    %v4310 = vmul.f32 %v4302, %v4307
    %v4311 = vmul.f32 %v4303, %v4307
    %v4312 = vmul.f32 %v4304, %v4307
    %v4313 = vmul.f32 %v4305, %v4307
    %v4314 = vadd.f32 %v4294, %v4308
    %v4315 = vadd.f32 %v4295, %v4309
    %v4316 = vadd.f32 %v4296, %v4310
    %v4317 = vadd.f32 %v4297, %v4311
    %v4318 = vadd.f32 %v4298, %v4312
    %v4319 = vadd.f32 %v4299, %v4313
    %v4320 = vld [vmem:[%s288] sm:$0xff]
    %v4321 = vld [vmem:[%s288 + $0x8] sm:$0xff]
    %v4322 = vld [vmem:[%s288 + $0x10] sm:$0xff]
    %v4323 = vld [vmem:[%s288 + $0x18] sm:$0xff]
    %v4324 = vld [vmem:[%s288 + $0x20] sm:$0xff]
    %v4325 = vld [vmem:[%s288 + $0x28] sm:$0xff]
    %s4326 = sld [smem:[#allocation3 + $0x407]]
    %v4327 = vstv %s4326
    %v4328 = vmul.f32 %v4320, %v4327
    %v4329 = vmul.f32 %v4321, %v4327
    %v4330 = vmul.f32 %v4322, %v4327
    %v4331 = vmul.f32 %v4323, %v4327
    %v4332 = vmul.f32 %v4324, %v4327
    %v4333 = vmul.f32 %v4325, %v4327
    %v4334 = vadd.f32 %v4314, %v4328
    %v4335 = vadd.f32 %v4315, %v4329
    %v4336 = vadd.f32 %v4316, %v4330
    %v4337 = vadd.f32 %v4317, %v4331
    %v4338 = vadd.f32 %v4318, %v4332
    %v4339 = vadd.f32 %v4319, %v4333
    %v4340 = vld [vmem:[%s311] sm:$0xff]
    %v4341 = vld [vmem:[%s311 + $0x8] sm:$0xff]
    %v4342 = vld [vmem:[%s311 + $0x10] sm:$0xff]
    %v4343 = vld [vmem:[%s311 + $0x18] sm:$0xff]
    %v4344 = vld [vmem:[%s311 + $0x20] sm:$0xff]
    %v4345 = vld [vmem:[%s311 + $0x28] sm:$0xff]
    %s4346 = sld [smem:[#allocation3 + $0x408]]
    %v4347 = vstv %s4346
    %v4348 = vmul.f32 %v4340, %v4347
    %v4349 = vmul.f32 %v4341, %v4347
    %v4350 = vmul.f32 %v4342, %v4347
    %v4351 = vmul.f32 %v4343, %v4347
    %v4352 = vmul.f32 %v4344, %v4347
    %v4353 = vmul.f32 %v4345, %v4347
    %v4354 = vadd.f32 %v4334, %v4348
    %v4355 = vadd.f32 %v4335, %v4349
    %v4356 = vadd.f32 %v4336, %v4350
    %v4357 = vadd.f32 %v4337, %v4351
    %v4358 = vadd.f32 %v4338, %v4352
    %v4359 = vadd.f32 %v4339, %v4353
    %s4360 = sld [smem:[#allocation6 + $0x8]]
    %v4361 = vstv %s4360
    %v4362 = vadd.f32 %v4354, %v4361
    %v4363 = vadd.f32 %v4355, %v4361
    %v4364 = vadd.f32 %v4356, %v4361
    %v4365 = vadd.f32 %v4357, %v4361
    %v4366 = vadd.f32 %v4358, %v4361
    %v4367 = vadd.f32 %v4359, %v4361
    %v4368 = vmax.f32 %v4362, 0.0
    %v4369 = vmax.f32 %v4363, 0.0
    %v4370 = vmax.f32 %v4364, 0.0
    %v4371 = vmax.f32 %v4365, 0.0
    %v4372 = vmax.f32 %v4366, 0.0
    %v4373 = vmax.f32 %v4367, 0.0
    %4374 = vst [vmem:[%s347] sm:$0xff] %v4368
    %4375 = vst [vmem:[%s347 + $0x8] sm:$0xff] %v4369
    %4376 = vst [vmem:[%s347 + $0x10] sm:$0xff] %v4370
    %4377 = vst [vmem:[%s347 + $0x18] sm:$0xff] %v4371
    %4378 = vst [vmem:[%s347 + $0x20] sm:$0xff] %v4372
    %4379 = vst.msk [vmem:[%s347 + $0x28] sm:$0xff] %vm353, %v4373
    %v4380 = vld [vmem:[#allocation2] sm:$0xff]
    %v4381 = vld [vmem:[#allocation2 + $0x8] sm:$0xff]
    %v4382 = vld [vmem:[#allocation2 + $0x10] sm:$0xff]
    %v4383 = vld [vmem:[#allocation2 + $0x18] sm:$0xff]
    %v4384 = vld [vmem:[#allocation2 + $0x20] sm:$0xff]
    %v4385 = vld [vmem:[#allocation2 + $0x28] sm:$0xff]
    %s4386 = scalar_lea.vmem [#allocation8], 5440
    %v4387 = vld [vmem:[%s4386] sm:$0xff]
    %v4388 = vld [vmem:[%s4386 + $0x8] sm:$0xff]
    %v4389 = vld [vmem:[%s4386 + $0x10] sm:$0xff]
    %v4390 = vld [vmem:[%s4386 + $0x18] sm:$0xff]
    %v4391 = vld [vmem:[%s4386 + $0x20] sm:$0xff]
    %v4392 = vld [vmem:[%s4386 + $0x28] sm:$0xff]
    %v4393 = vld [vmem:[%s4386 + $0x30] sm:$0xff]
    %v4394 = vld [vmem:[%s4386 + $0x38] sm:$0xff]
    %v4395 = vld [vmem:[%s4386 + $0x40] sm:$0xff]
    %v4396 = vld [vmem:[%s4386 + $0x48] sm:$0xff]
    %v4397 = vld [vmem:[%s4386 + $0x50] sm:$0xff]
    %v4398 = vld [vmem:[%s4386 + $0x58] sm:$0xff]
    %v4399 = vld [vmem:[%s4386 + $0x60] sm:$0xff]
    %v4400 = vld [vmem:[%s4386 + $0x68] sm:$0xff]
    %v4401 = vld [vmem:[%s4386 + $0x70] sm:$0xff]
    %v4402 = vld [vmem:[%s4386 + $0x78] sm:$0xff]
    %v4403 = vld [vmem:[%s4386 + $0x80] sm:$0xff]
    %v4404 = vld [vmem:[%s4386 + $0x88] sm:$0xff]
    %v4405 = vld [vmem:[%s4386 + $0x90] sm:$0xff]
    %v4406 = vld [vmem:[%s4386 + $0x98] sm:$0xff]
    %v4407 = vld [vmem:[%s4386 + $0xa0] sm:$0xff]
    %v4408 = vld [vmem:[%s4386 + $0xa8] sm:$0xff]
    %v4409 = vld [vmem:[%s4386 + $0xb0] sm:$0xff]
    %v4410 = vld [vmem:[%s4386 + $0xb8] sm:$0xff]
    %v4411 = vld [vmem:[%s4386 + $0xc0] sm:$0xff]
    %v4412 = vld [vmem:[%s4386 + $0xc8] sm:$0xff]
    %v4413 = vld [vmem:[%s4386 + $0xd0] sm:$0xff]
    %v4414 = vld [vmem:[%s4386 + $0xd8] sm:$0xff]
    %v4415 = vld [vmem:[%s4386 + $0xe0] sm:$0xff]
    %v4416 = vld [vmem:[%s4386 + $0xe8] sm:$0xff]
    %v4417 = vld [vmem:[%s4386 + $0xf0] sm:$0xff]
    %v4418 = vld [vmem:[%s4386 + $0xf8] sm:$0xff]
    %v4419 = vld [vmem:[%s4386 + $0x100] sm:$0xff]
    %v4420 = vld [vmem:[%s4386 + $0x108] sm:$0xff]
    %v4421 = vld [vmem:[%s4386 + $0x110] sm:$0xff]
    %v4422 = vld [vmem:[%s4386 + $0x118] sm:$0xff]
    %v4423 = vld [vmem:[%s4386 + $0x120] sm:$0xff]
    %v4424 = vld [vmem:[%s4386 + $0x128] sm:$0xff]
    %v4425 = vld [vmem:[%s4386 + $0x130] sm:$0xff]
    %v4426 = vld [vmem:[%s4386 + $0x138] sm:$0xff]
    %v4427 = vld [vmem:[%s4386 + $0x140] sm:$0xff]
    %v4428 = vld [vmem:[%s4386 + $0x148] sm:$0xff]
    %v4429 = vld [vmem:[%s4386 + $0x150] sm:$0xff]
    %v4430 = vld [vmem:[%s4386 + $0x158] sm:$0xff]
    %v4431 = vld [vmem:[%s4386 + $0x160] sm:$0xff]
    %v4432 = vld [vmem:[%s4386 + $0x168] sm:$0xff]
    %v4433 = vld [vmem:[%s4386 + $0x170] sm:$0xff]
    %v4434 = vld [vmem:[%s4386 + $0x178] sm:$0xff]
    %v4435 = vld [vmem:[%s4386 + $0x180] sm:$0xff]
    %v4436 = vld [vmem:[%s4386 + $0x188] sm:$0xff]
    %v4437 = vld [vmem:[%s4386 + $0x190] sm:$0xff]
    %v4438 = vld [vmem:[%s4386 + $0x198] sm:$0xff]
    %v4439 = vld [vmem:[%s4386 + $0x1a0] sm:$0xff]
    %v4440 = vld [vmem:[%s4386 + $0x1a8] sm:$0xff]
    %v4441 = vld [vmem:[%s4386 + $0x1b0] sm:$0xff]
    %v4442 = vld [vmem:[%s4386 + $0x1b8] sm:$0xff]
    %v4443 = vld [vmem:[%s4386 + $0x1c0] sm:$0xff]
    %v4444 = vld [vmem:[%s4386 + $0x1c8] sm:$0xff]
    %v4445 = vld [vmem:[%s4386 + $0x1d0] sm:$0xff]
    %v4446 = vld [vmem:[%s4386 + $0x1d8] sm:$0xff]
    %v4447 = vld [vmem:[%s4386 + $0x1e0] sm:$0xff]
    %v4448 = vld [vmem:[%s4386 + $0x1e8] sm:$0xff]
    %v4449 = vld [vmem:[%s4386 + $0x1f0] sm:$0xff]
    %v4450 = vld [vmem:[%s4386 + $0x1f8] sm:$0xff]
    %v4451 = vld [vmem:[%s4386 + $0x200] sm:$0xff]
    %v4452 = vld [vmem:[%s4386 + $0x208] sm:$0xff]
    %v4453 = vld [vmem:[%s4386 + $0x210] sm:$0xff]
    %v4454 = vld [vmem:[%s4386 + $0x218] sm:$0xff]
    %v4455 = vld [vmem:[%s4386 + $0x220] sm:$0xff]
    %v4456 = vld [vmem:[%s4386 + $0x228] sm:$0xff]
    %v4457 = vld [vmem:[%s4386 + $0x230] sm:$0xff]
    %v4458 = vld [vmem:[%s4386 + $0x238] sm:$0xff]
    %v4459 = vld [vmem:[%s4386 + $0x240] sm:$0xff]
    %v4460 = vld [vmem:[%s4386 + $0x248] sm:$0xff]
    %v4461 = vld [vmem:[%s4386 + $0x250] sm:$0xff]
    %v4462 = vld [vmem:[%s4386 + $0x258] sm:$0xff]
    %v4463 = vld [vmem:[%s4386 + $0x260] sm:$0xff]
    %v4464 = vld [vmem:[%s4386 + $0x268] sm:$0xff]
    %v4465 = vld [vmem:[%s4386 + $0x270] sm:$0xff]
    %v4466 = vld [vmem:[%s4386 + $0x278] sm:$0xff]
    %v4467 = vld [vmem:[%s4386 + $0x280] sm:$0xff]
    %v4468 = vld [vmem:[%s4386 + $0x288] sm:$0xff]
    %v4469 = vld [vmem:[%s4386 + $0x290] sm:$0xff]
    %v4470 = vld [vmem:[%s4386 + $0x298] sm:$0xff]
    %v4471 = vld [vmem:[%s4386 + $0x2a0] sm:$0xf]
    %v4473 = vsel %vm353, %v4385, 0
    %v4476 = vsel %vm738, %v4471, 0
    %4478 = vmatprep.subr.mxu0 0.0
    %4479 = vmatpush1.msra.mxu0 %v4402
    %4480 = vmatprep.subr.mxu0 0.0
    %4481 = vmatpush1.msra.mxu0 %v4401
    %4482 = vmatprep.subr.mxu0 0.0
    %4483 = vmatpush1.msra.mxu0 %v4400
    %4484 = vmatprep.subr.mxu0 0.0
    %4485 = vmatpush1.msra.mxu0 %v4399
    %4486 = vmatprep.subr.mxu0 0.0
    %4487 = vmatpush1.msra.mxu0 %v4398
    %4488 = vmatprep.subr.mxu0 0.0
    %4489 = vmatpush1.msra.mxu0 %v4397
    %4490 = vmatprep.subr.mxu0 0.0
    %4491 = vmatpush1.msra.mxu0 %v4396
    %4492 = vmatprep.subr.mxu0 0.0
    %4493 = vmatpush1.msra.mxu0 %v4395
    %4494 = vmatprep.subr.mxu0 0.0
    %4495 = vmatpush1.msra.mxu0 %v4394
    %4496 = vmatprep.subr.mxu0 0.0
    %4497 = vmatpush1.msra.mxu0 %v4393
    %4498 = vmatprep.subr.mxu0 0.0
    %4499 = vmatpush1.msra.mxu0 %v4392
    %4500 = vmatprep.subr.mxu0 0.0
    %4501 = vmatpush1.msra.mxu0 %v4391
    %4502 = vmatprep.subr.mxu0 0.0
    %4503 = vmatpush1.msra.mxu0 %v4390
    %4504 = vmatprep.subr.mxu0 0.0
    %4505 = vmatpush1.msra.mxu0 %v4389
    %4506 = vmatprep.subr.mxu0 0.0
    %4507 = vmatpush1.msra.mxu0 %v4388
    %4508 = vmatprep.subr.mxu0 0.0
    %4509 = vmatpush1.msra.mxu0 %v4387
    %4510 = vmatprep.subr.mxu0 0.0
    %4511 = vmatpush2.msra.mxu0 %v4418
    %4512 = vmatprep.subr.mxu0 0.0
    %4513 = vmatpush2.msra.mxu0 %v4417
    %4514 = vmatprep.subr.mxu0 0.0
    %4515 = vmatpush2.msra.mxu0 %v4416
    %4516 = vmatprep.subr.mxu0 0.0
    %4517 = vmatpush2.msra.mxu0 %v4415
    %4518 = vmatprep.subr.mxu0 0.0
    %4519 = vmatpush2.msra.mxu0 %v4414
    %4520 = vmatprep.subr.mxu0 0.0
    %4521 = vmatpush2.msra.mxu0 %v4413
    %4522 = vmatprep.subr.mxu0 0.0
    %4523 = vmatpush2.msra.mxu0 %v4412
    %4524 = vmatprep.subr.mxu0 0.0
    %4525 = vmatpush2.msra.mxu0 %v4411
    %4526 = vmatprep.subr.mxu0 0.0
    %4527 = vmatpush2.msra.mxu0 %v4410
    %4528 = vmatprep.subr.mxu0 0.0
    %4529 = vmatpush2.msra.mxu0 %v4409
    %4530 = vmatprep.subr.mxu0 0.0
    %4531 = vmatpush2.msra.mxu0 %v4408
    %4532 = vmatprep.subr.mxu0 0.0
    %4533 = vmatpush2.msra.mxu0 %v4407
    %4534 = vmatprep.subr.mxu0 0.0
    %4535 = vmatpush2.msra.mxu0 %v4406
    %4536 = vmatprep.subr.mxu0 0.0
    %4537 = vmatpush2.msra.mxu0 %v4405
    %4538 = vmatprep.subr.mxu0 0.0
    %4539 = vmatpush2.msra.mxu0 %v4404
    %4540 = vmatprep.subr.mxu0 0.0
    %4541 = vmatpush2.msra.mxu0 %v4403
    %4542 = vmatprep.mubr.f32.mxu0 %v4381
    %4543 = vmatmul.mubr.f32.gmra.mxu0 %v4380
    %v4544 = vpop.f32.mrf.mxu0
    %v4545 = vadd.f32 0.0, %v4544
    %v4546 = vpop.f32.mrf.mxu0
    %4547 = vdwg.mxu0
    %4548 = vmatprep.subr.mxu0 0.0
    %4549 = vmatpush1.msra.mxu0 %v4434
    %4550 = vmatprep.subr.mxu0 0.0
    %4551 = vmatpush1.msra.mxu0 %v4433
    %4552 = vmatprep.subr.mxu0 0.0
    %4553 = vmatpush1.msra.mxu0 %v4432
    %4554 = vmatprep.subr.mxu0 0.0
    %4555 = vmatpush1.msra.mxu0 %v4431
    %4556 = vmatprep.subr.mxu0 0.0
    %4557 = vmatpush1.msra.mxu0 %v4430
    %4558 = vmatprep.subr.mxu0 0.0
    %4559 = vmatpush1.msra.mxu0 %v4429
    %4560 = vmatprep.subr.mxu0 0.0
    %4561 = vmatpush1.msra.mxu0 %v4428
    %4562 = vmatprep.subr.mxu0 0.0
    %4563 = vmatpush1.msra.mxu0 %v4427
    %4564 = vmatprep.subr.mxu0 0.0
    %4565 = vmatpush1.msra.mxu0 %v4426
    %4566 = vmatprep.subr.mxu0 0.0
    %4567 = vmatpush1.msra.mxu0 %v4425
    %4568 = vmatprep.subr.mxu0 0.0
    %4569 = vmatpush1.msra.mxu0 %v4424
    %4570 = vmatprep.subr.mxu0 0.0
    %4571 = vmatpush1.msra.mxu0 %v4423
    %4572 = vmatprep.subr.mxu0 0.0
    %4573 = vmatpush1.msra.mxu0 %v4422
    %4574 = vmatprep.subr.mxu0 0.0
    %4575 = vmatpush1.msra.mxu0 %v4421
    %4576 = vmatprep.subr.mxu0 0.0
    %4577 = vmatpush1.msra.mxu0 %v4420
    %4578 = vmatprep.subr.mxu0 0.0
    %4579 = vmatpush1.msra.mxu0 %v4419
    %4580 = vmatprep.subr.mxu0 0.0
    %4581 = vmatpush2.msra.mxu0 %v4450
    %4582 = vmatprep.subr.mxu0 0.0
    %4583 = vmatpush2.msra.mxu0 %v4449
    %4584 = vmatprep.subr.mxu0 0.0
    %4585 = vmatpush2.msra.mxu0 %v4448
    %4586 = vmatprep.subr.mxu0 0.0
    %4587 = vmatpush2.msra.mxu0 %v4447
    %4588 = vmatprep.subr.mxu0 0.0
    %4589 = vmatpush2.msra.mxu0 %v4446
    %4590 = vmatprep.subr.mxu0 0.0
    %4591 = vmatpush2.msra.mxu0 %v4445
    %4592 = vmatprep.subr.mxu0 0.0
    %4593 = vmatpush2.msra.mxu0 %v4444
    %4594 = vmatprep.subr.mxu0 0.0
    %4595 = vmatpush2.msra.mxu0 %v4443
    %4596 = vmatprep.subr.mxu0 0.0
    %4597 = vmatpush2.msra.mxu0 %v4442
    %4598 = vmatprep.subr.mxu0 0.0
    %4599 = vmatpush2.msra.mxu0 %v4441
    %4600 = vmatprep.subr.mxu0 0.0
    %4601 = vmatpush2.msra.mxu0 %v4440
    %4602 = vmatprep.subr.mxu0 0.0
    %4603 = vmatpush2.msra.mxu0 %v4439
    %4604 = vmatprep.subr.mxu0 0.0
    %4605 = vmatpush2.msra.mxu0 %v4438
    %4606 = vmatprep.subr.mxu0 0.0
    %4607 = vmatpush2.msra.mxu0 %v4437
    %4608 = vmatprep.subr.mxu0 0.0
    %4609 = vmatpush2.msra.mxu0 %v4436
    %4610 = vmatprep.subr.mxu0 0.0
    %4611 = vmatpush2.msra.mxu0 %v4435
    %4612 = vmatprep.mubr.f32.mxu0 %v4383
    %4613 = vmatmul.mubr.f32.gmra.mxu0 %v4382
    %v4614 = vpop.f32.mrf.mxu0
    %v4615 = vadd.f32 %v4545, %v4614
    %v4616 = vpop.f32.mrf.mxu0
    %4617 = vdwg.mxu0
    %4618 = vmatprep.subr.mxu0 0.0
    %4619 = vmatpush1.msra.mxu0 %v4466
    %4620 = vmatprep.subr.mxu0 0.0
    %4621 = vmatpush1.msra.mxu0 %v4465
    %4622 = vmatprep.subr.mxu0 0.0
    %4623 = vmatpush1.msra.mxu0 %v4464
    %4624 = vmatprep.subr.mxu0 0.0
    %4625 = vmatpush1.msra.mxu0 %v4463
    %4626 = vmatprep.subr.mxu0 0.0
    %4627 = vmatpush1.msra.mxu0 %v4462
    %4628 = vmatprep.subr.mxu0 0.0
    %4629 = vmatpush1.msra.mxu0 %v4461
    %4630 = vmatprep.subr.mxu0 0.0
    %4631 = vmatpush1.msra.mxu0 %v4460
    %4632 = vmatprep.subr.mxu0 0.0
    %4633 = vmatpush1.msra.mxu0 %v4459
    %4634 = vmatprep.subr.mxu0 0.0
    %4635 = vmatpush1.msra.mxu0 %v4458
    %4636 = vmatprep.subr.mxu0 0.0
    %4637 = vmatpush1.msra.mxu0 %v4457
    %4638 = vmatprep.subr.mxu0 0.0
    %4639 = vmatpush1.msra.mxu0 %v4456
    %4640 = vmatprep.subr.mxu0 0.0
    %4641 = vmatpush1.msra.mxu0 %v4455
    %4642 = vmatprep.subr.mxu0 0.0
    %4643 = vmatpush1.msra.mxu0 %v4454
    %4644 = vmatprep.subr.mxu0 0.0
    %4645 = vmatpush1.msra.mxu0 %v4453
    %4646 = vmatprep.subr.mxu0 0.0
    %4647 = vmatpush1.msra.mxu0 %v4452
    %4648 = vmatprep.subr.mxu0 0.0
    %4649 = vmatpush1.msra.mxu0 %v4451
    %4650 = vmatprep.subr.mxu0 0.0
    %4651 = vmatpush2.msra.mxu0 0.0
    %4652 = vmatprep.subr.mxu0 0.0
    %4653 = vmatpush2.msra.mxu0 0.0
    %4654 = vmatprep.subr.mxu0 0.0
    %4655 = vmatpush2.msra.mxu0 0.0
    %4656 = vmatprep.subr.mxu0 0.0
    %4657 = vmatpush2.msra.mxu0 0.0
    %4658 = vmatprep.subr.mxu0 0.0
    %4659 = vmatpush2.msra.mxu0 0.0
    %4660 = vmatprep.subr.mxu0 0.0
    %4661 = vmatpush2.msra.mxu0 0.0
    %4662 = vmatprep.subr.mxu0 0.0
    %4663 = vmatpush2.msra.mxu0 0.0
    %4664 = vmatprep.subr.mxu0 0.0
    %4665 = vmatpush2.msra.mxu0 0.0
    %4666 = vmatprep.subr.mxu0 0.0
    %4667 = vmatpush2.msra.mxu0 0.0
    %4668 = vmatprep.subr.mxu0 0.0
    %4669 = vmatpush2.msra.mxu0 0.0
    %4670 = vmatprep.subr.mxu0 0.0
    %4671 = vmatpush2.msra.mxu0 0.0
    %4672 = vmatprep.subr.mxu0 0.0
    %4673 = vmatpush2.msra.mxu0 %v4476
    %4674 = vmatprep.subr.mxu0 0.0
    %4675 = vmatpush2.msra.mxu0 %v4470
    %4676 = vmatprep.subr.mxu0 0.0
    %4677 = vmatpush2.msra.mxu0 %v4469
    %4678 = vmatprep.subr.mxu0 0.0
    %4679 = vmatpush2.msra.mxu0 %v4468
    %4680 = vmatprep.subr.mxu0 0.0
    %4681 = vmatpush2.msra.mxu0 %v4467
    %4682 = vmatprep.mubr.f32.mxu0 %v4473
    %4683 = vmatmul.mubr.f32.gmra.mxu0 %v4384
    %v4684 = vpop.f32.mrf.mxu0
    %v4685 = vadd.f32 %v4615, %v4684
    %v4686 = vpop.f32.mrf.mxu0
    %4687 = vdwg.mxu0
    %v4688 = vadd.f32 %v4185, %v4685
    %v4689 = vld [vmem:[%s133] sm:$0xff]
    %v4690 = vld [vmem:[%s133 + $0x8] sm:$0xff]
    %v4691 = vld [vmem:[%s133 + $0x10] sm:$0xff]
    %v4692 = vld [vmem:[%s133 + $0x18] sm:$0xff]
    %v4693 = vld [vmem:[%s133 + $0x20] sm:$0xff]
    %v4694 = vld [vmem:[%s133 + $0x28] sm:$0xff]
    %s4695 = sld [smem:[#allocation3 + $0x480]]
    %v4696 = vstv %s4695
    %v4697 = vmul.f32 %v4689, %v4696
    %v4698 = vmul.f32 %v4690, %v4696
    %v4699 = vmul.f32 %v4691, %v4696
    %v4700 = vmul.f32 %v4692, %v4696
    %v4701 = vmul.f32 %v4693, %v4696
    %v4702 = vmul.f32 %v4694, %v4696
    %v4703 = vld [vmem:[%s150] sm:$0xff]
    %v4704 = vld [vmem:[%s150 + $0x8] sm:$0xff]
    %v4705 = vld [vmem:[%s150 + $0x10] sm:$0xff]
    %v4706 = vld [vmem:[%s150 + $0x18] sm:$0xff]
    %v4707 = vld [vmem:[%s150 + $0x20] sm:$0xff]
    %v4708 = vld [vmem:[%s150 + $0x28] sm:$0xff]
    %s4709 = sld [smem:[#allocation3 + $0x481]]
    %v4710 = vstv %s4709
    %v4711 = vmul.f32 %v4703, %v4710
    %v4712 = vmul.f32 %v4704, %v4710
    %v4713 = vmul.f32 %v4705, %v4710
    %v4714 = vmul.f32 %v4706, %v4710
    %v4715 = vmul.f32 %v4707, %v4710
    %v4716 = vmul.f32 %v4708, %v4710
    %v4717 = vadd.f32 %v4697, %v4711
    %v4718 = vadd.f32 %v4698, %v4712
    %v4719 = vadd.f32 %v4699, %v4713
    %v4720 = vadd.f32 %v4700, %v4714
    %v4721 = vadd.f32 %v4701, %v4715
    %v4722 = vadd.f32 %v4702, %v4716
    %v4723 = vld [vmem:[%s173] sm:$0xff]
    %v4724 = vld [vmem:[%s173 + $0x8] sm:$0xff]
    %v4725 = vld [vmem:[%s173 + $0x10] sm:$0xff]
    %v4726 = vld [vmem:[%s173 + $0x18] sm:$0xff]
    %v4727 = vld [vmem:[%s173 + $0x20] sm:$0xff]
    %v4728 = vld [vmem:[%s173 + $0x28] sm:$0xff]
    %s4729 = sld [smem:[#allocation3 + $0x482]]
    %v4730 = vstv %s4729
    %v4731 = vmul.f32 %v4723, %v4730
    %v4732 = vmul.f32 %v4724, %v4730
    %v4733 = vmul.f32 %v4725, %v4730
    %v4734 = vmul.f32 %v4726, %v4730
    %v4735 = vmul.f32 %v4727, %v4730
    %v4736 = vmul.f32 %v4728, %v4730
    %v4737 = vadd.f32 %v4717, %v4731
    %v4738 = vadd.f32 %v4718, %v4732
    %v4739 = vadd.f32 %v4719, %v4733
    %v4740 = vadd.f32 %v4720, %v4734
    %v4741 = vadd.f32 %v4721, %v4735
    %v4742 = vadd.f32 %v4722, %v4736
    %v4743 = vld [vmem:[%s196] sm:$0xff]
    %v4744 = vld [vmem:[%s196 + $0x8] sm:$0xff]
    %v4745 = vld [vmem:[%s196 + $0x10] sm:$0xff]
    %v4746 = vld [vmem:[%s196 + $0x18] sm:$0xff]
    %v4747 = vld [vmem:[%s196 + $0x20] sm:$0xff]
    %v4748 = vld [vmem:[%s196 + $0x28] sm:$0xff]
    %s4749 = sld [smem:[#allocation3 + $0x483]]
    %v4750 = vstv %s4749
    %v4751 = vmul.f32 %v4743, %v4750
    %v4752 = vmul.f32 %v4744, %v4750
    %v4753 = vmul.f32 %v4745, %v4750
    %v4754 = vmul.f32 %v4746, %v4750
    %v4755 = vmul.f32 %v4747, %v4750
    %v4756 = vmul.f32 %v4748, %v4750
    %v4757 = vadd.f32 %v4737, %v4751
    %v4758 = vadd.f32 %v4738, %v4752
    %v4759 = vadd.f32 %v4739, %v4753
    %v4760 = vadd.f32 %v4740, %v4754
    %v4761 = vadd.f32 %v4741, %v4755
    %v4762 = vadd.f32 %v4742, %v4756
    %v4763 = vld [vmem:[%s219] sm:$0xff]
    %v4764 = vld [vmem:[%s219 + $0x8] sm:$0xff]
    %v4765 = vld [vmem:[%s219 + $0x10] sm:$0xff]
    %v4766 = vld [vmem:[%s219 + $0x18] sm:$0xff]
    %v4767 = vld [vmem:[%s219 + $0x20] sm:$0xff]
    %v4768 = vld [vmem:[%s219 + $0x28] sm:$0xff]
    %s4769 = sld [smem:[#allocation3 + $0x484]]
    %v4770 = vstv %s4769
    %v4771 = vmul.f32 %v4763, %v4770
    %v4772 = vmul.f32 %v4764, %v4770
    %v4773 = vmul.f32 %v4765, %v4770
    %v4774 = vmul.f32 %v4766, %v4770
    %v4775 = vmul.f32 %v4767, %v4770
    %v4776 = vmul.f32 %v4768, %v4770
    %v4777 = vadd.f32 %v4757, %v4771
    %v4778 = vadd.f32 %v4758, %v4772
    %v4779 = vadd.f32 %v4759, %v4773
    %v4780 = vadd.f32 %v4760, %v4774
    %v4781 = vadd.f32 %v4761, %v4775
    %v4782 = vadd.f32 %v4762, %v4776
    %v4783 = vld [vmem:[%s242] sm:$0xff]
    %v4784 = vld [vmem:[%s242 + $0x8] sm:$0xff]
    %v4785 = vld [vmem:[%s242 + $0x10] sm:$0xff]
    %v4786 = vld [vmem:[%s242 + $0x18] sm:$0xff]
    %v4787 = vld [vmem:[%s242 + $0x20] sm:$0xff]
    %v4788 = vld [vmem:[%s242 + $0x28] sm:$0xff]
    %s4789 = sld [smem:[#allocation3 + $0x485]]
    %v4790 = vstv %s4789
    %v4791 = vmul.f32 %v4783, %v4790
    %v4792 = vmul.f32 %v4784, %v4790
    %v4793 = vmul.f32 %v4785, %v4790
    %v4794 = vmul.f32 %v4786, %v4790
    %v4795 = vmul.f32 %v4787, %v4790
    %v4796 = vmul.f32 %v4788, %v4790
    %v4797 = vadd.f32 %v4777, %v4791
    %v4798 = vadd.f32 %v4778, %v4792
    %v4799 = vadd.f32 %v4779, %v4793
    %v4800 = vadd.f32 %v4780, %v4794
    %v4801 = vadd.f32 %v4781, %v4795
    %v4802 = vadd.f32 %v4782, %v4796
    %v4803 = vld [vmem:[%s265] sm:$0xff]
    %v4804 = vld [vmem:[%s265 + $0x8] sm:$0xff]
    %v4805 = vld [vmem:[%s265 + $0x10] sm:$0xff]
    %v4806 = vld [vmem:[%s265 + $0x18] sm:$0xff]
    %v4807 = vld [vmem:[%s265 + $0x20] sm:$0xff]
    %v4808 = vld [vmem:[%s265 + $0x28] sm:$0xff]
    %s4809 = sld [smem:[#allocation3 + $0x486]]
    %v4810 = vstv %s4809
    %v4811 = vmul.f32 %v4803, %v4810
    %v4812 = vmul.f32 %v4804, %v4810
    %v4813 = vmul.f32 %v4805, %v4810
    %v4814 = vmul.f32 %v4806, %v4810
    %v4815 = vmul.f32 %v4807, %v4810
    %v4816 = vmul.f32 %v4808, %v4810
    %v4817 = vadd.f32 %v4797, %v4811
    %v4818 = vadd.f32 %v4798, %v4812
    %v4819 = vadd.f32 %v4799, %v4813
    %v4820 = vadd.f32 %v4800, %v4814
    %v4821 = vadd.f32 %v4801, %v4815
    %v4822 = vadd.f32 %v4802, %v4816
    %v4823 = vld [vmem:[%s288] sm:$0xff]
    %v4824 = vld [vmem:[%s288 + $0x8] sm:$0xff]
    %v4825 = vld [vmem:[%s288 + $0x10] sm:$0xff]
    %v4826 = vld [vmem:[%s288 + $0x18] sm:$0xff]
    %v4827 = vld [vmem:[%s288 + $0x20] sm:$0xff]
    %v4828 = vld [vmem:[%s288 + $0x28] sm:$0xff]
    %s4829 = sld [smem:[#allocation3 + $0x487]]
    %v4830 = vstv %s4829
    %v4831 = vmul.f32 %v4823, %v4830
    %v4832 = vmul.f32 %v4824, %v4830
    %v4833 = vmul.f32 %v4825, %v4830
    %v4834 = vmul.f32 %v4826, %v4830
    %v4835 = vmul.f32 %v4827, %v4830
    %v4836 = vmul.f32 %v4828, %v4830
    %v4837 = vadd.f32 %v4817, %v4831
    %v4838 = vadd.f32 %v4818, %v4832
    %v4839 = vadd.f32 %v4819, %v4833
    %v4840 = vadd.f32 %v4820, %v4834
    %v4841 = vadd.f32 %v4821, %v4835
    %v4842 = vadd.f32 %v4822, %v4836
    %v4843 = vld [vmem:[%s311] sm:$0xff]
    %v4844 = vld [vmem:[%s311 + $0x8] sm:$0xff]
    %v4845 = vld [vmem:[%s311 + $0x10] sm:$0xff]
    %v4846 = vld [vmem:[%s311 + $0x18] sm:$0xff]
    %v4847 = vld [vmem:[%s311 + $0x20] sm:$0xff]
    %v4848 = vld [vmem:[%s311 + $0x28] sm:$0xff]
    %s4849 = sld [smem:[#allocation3 + $0x488]]
    %v4850 = vstv %s4849
    %v4851 = vmul.f32 %v4843, %v4850
    %v4852 = vmul.f32 %v4844, %v4850
    %v4853 = vmul.f32 %v4845, %v4850
    %v4854 = vmul.f32 %v4846, %v4850
    %v4855 = vmul.f32 %v4847, %v4850
    %v4856 = vmul.f32 %v4848, %v4850
    %v4857 = vadd.f32 %v4837, %v4851
    %v4858 = vadd.f32 %v4838, %v4852
    %v4859 = vadd.f32 %v4839, %v4853
    %v4860 = vadd.f32 %v4840, %v4854
    %v4861 = vadd.f32 %v4841, %v4855
    %v4862 = vadd.f32 %v4842, %v4856
    %s4863 = sld [smem:[#allocation6 + $0x9]]
    %v4864 = vstv %s4863
    %v4865 = vadd.f32 %v4857, %v4864
    %v4866 = vadd.f32 %v4858, %v4864
    %v4867 = vadd.f32 %v4859, %v4864
    %v4868 = vadd.f32 %v4860, %v4864
    %v4869 = vadd.f32 %v4861, %v4864
    %v4870 = vadd.f32 %v4862, %v4864
    %v4871 = vmax.f32 %v4865, 0.0
    %v4872 = vmax.f32 %v4866, 0.0
    %v4873 = vmax.f32 %v4867, 0.0
    %v4874 = vmax.f32 %v4868, 0.0
    %v4875 = vmax.f32 %v4869, 0.0
    %v4876 = vmax.f32 %v4870, 0.0
    %4877 = vst [vmem:[%s635] sm:$0xff] %v4871
    %4878 = vst [vmem:[%s635 + $0x8] sm:$0xff] %v4872
    %4879 = vst [vmem:[%s635 + $0x10] sm:$0xff] %v4873
    %4880 = vst [vmem:[%s635 + $0x18] sm:$0xff] %v4874
    %4881 = vst [vmem:[%s635 + $0x20] sm:$0xff] %v4875
    %4882 = vst.msk [vmem:[%s635 + $0x28] sm:$0xff] %vm353, %v4876
    %v4883 = vld [vmem:[%s642] sm:$0xff]
    %v4884 = vld [vmem:[%s642 + $0x8] sm:$0xff]
    %v4885 = vld [vmem:[%s642 + $0x10] sm:$0xff]
    %v4886 = vld [vmem:[%s642 + $0x18] sm:$0xff]
    %v4887 = vld [vmem:[%s642 + $0x20] sm:$0xff]
    %v4888 = vld [vmem:[%s642 + $0x28] sm:$0xff]
    %s4889 = scalar_lea.vmem [#allocation8], 6120
    %v4890 = vld [vmem:[%s4889] sm:$0xff]
    %v4891 = vld [vmem:[%s4889 + $0x8] sm:$0xff]
    %v4892 = vld [vmem:[%s4889 + $0x10] sm:$0xff]
    %v4893 = vld [vmem:[%s4889 + $0x18] sm:$0xff]
    %v4894 = vld [vmem:[%s4889 + $0x20] sm:$0xff]
    %v4895 = vld [vmem:[%s4889 + $0x28] sm:$0xff]
    %v4896 = vld [vmem:[%s4889 + $0x30] sm:$0xff]
    %v4897 = vld [vmem:[%s4889 + $0x38] sm:$0xff]
    %v4898 = vld [vmem:[%s4889 + $0x40] sm:$0xff]
    %v4899 = vld [vmem:[%s4889 + $0x48] sm:$0xff]
    %v4900 = vld [vmem:[%s4889 + $0x50] sm:$0xff]
    %v4901 = vld [vmem:[%s4889 + $0x58] sm:$0xff]
    %v4902 = vld [vmem:[%s4889 + $0x60] sm:$0xff]
    %v4903 = vld [vmem:[%s4889 + $0x68] sm:$0xff]
    %v4904 = vld [vmem:[%s4889 + $0x70] sm:$0xff]
    %v4905 = vld [vmem:[%s4889 + $0x78] sm:$0xff]
    %v4906 = vld [vmem:[%s4889 + $0x80] sm:$0xff]
    %v4907 = vld [vmem:[%s4889 + $0x88] sm:$0xff]
    %v4908 = vld [vmem:[%s4889 + $0x90] sm:$0xff]
    %v4909 = vld [vmem:[%s4889 + $0x98] sm:$0xff]
    %v4910 = vld [vmem:[%s4889 + $0xa0] sm:$0xff]
    %v4911 = vld [vmem:[%s4889 + $0xa8] sm:$0xff]
    %v4912 = vld [vmem:[%s4889 + $0xb0] sm:$0xff]
    %v4913 = vld [vmem:[%s4889 + $0xb8] sm:$0xff]
    %v4914 = vld [vmem:[%s4889 + $0xc0] sm:$0xff]
    %v4915 = vld [vmem:[%s4889 + $0xc8] sm:$0xff]
    %v4916 = vld [vmem:[%s4889 + $0xd0] sm:$0xff]
    %v4917 = vld [vmem:[%s4889 + $0xd8] sm:$0xff]
    %v4918 = vld [vmem:[%s4889 + $0xe0] sm:$0xff]
    %v4919 = vld [vmem:[%s4889 + $0xe8] sm:$0xff]
    %v4920 = vld [vmem:[%s4889 + $0xf0] sm:$0xff]
    %v4921 = vld [vmem:[%s4889 + $0xf8] sm:$0xff]
    %v4922 = vld [vmem:[%s4889 + $0x100] sm:$0xff]
    %v4923 = vld [vmem:[%s4889 + $0x108] sm:$0xff]
    %v4924 = vld [vmem:[%s4889 + $0x110] sm:$0xff]
    %v4925 = vld [vmem:[%s4889 + $0x118] sm:$0xff]
    %v4926 = vld [vmem:[%s4889 + $0x120] sm:$0xff]
    %v4927 = vld [vmem:[%s4889 + $0x128] sm:$0xff]
    %v4928 = vld [vmem:[%s4889 + $0x130] sm:$0xff]
    %v4929 = vld [vmem:[%s4889 + $0x138] sm:$0xff]
    %v4930 = vld [vmem:[%s4889 + $0x140] sm:$0xff]
    %v4931 = vld [vmem:[%s4889 + $0x148] sm:$0xff]
    %v4932 = vld [vmem:[%s4889 + $0x150] sm:$0xff]
    %v4933 = vld [vmem:[%s4889 + $0x158] sm:$0xff]
    %v4934 = vld [vmem:[%s4889 + $0x160] sm:$0xff]
    %v4935 = vld [vmem:[%s4889 + $0x168] sm:$0xff]
    %v4936 = vld [vmem:[%s4889 + $0x170] sm:$0xff]
    %v4937 = vld [vmem:[%s4889 + $0x178] sm:$0xff]
    %v4938 = vld [vmem:[%s4889 + $0x180] sm:$0xff]
    %v4939 = vld [vmem:[%s4889 + $0x188] sm:$0xff]
    %v4940 = vld [vmem:[%s4889 + $0x190] sm:$0xff]
    %v4941 = vld [vmem:[%s4889 + $0x198] sm:$0xff]
    %v4942 = vld [vmem:[%s4889 + $0x1a0] sm:$0xff]
    %v4943 = vld [vmem:[%s4889 + $0x1a8] sm:$0xff]
    %v4944 = vld [vmem:[%s4889 + $0x1b0] sm:$0xff]
    %v4945 = vld [vmem:[%s4889 + $0x1b8] sm:$0xff]
    %v4946 = vld [vmem:[%s4889 + $0x1c0] sm:$0xff]
    %v4947 = vld [vmem:[%s4889 + $0x1c8] sm:$0xff]
    %v4948 = vld [vmem:[%s4889 + $0x1d0] sm:$0xff]
    %v4949 = vld [vmem:[%s4889 + $0x1d8] sm:$0xff]
    %v4950 = vld [vmem:[%s4889 + $0x1e0] sm:$0xff]
    %v4951 = vld [vmem:[%s4889 + $0x1e8] sm:$0xff]
    %v4952 = vld [vmem:[%s4889 + $0x1f0] sm:$0xff]
    %v4953 = vld [vmem:[%s4889 + $0x1f8] sm:$0xff]
    %v4954 = vld [vmem:[%s4889 + $0x200] sm:$0xff]
    %v4955 = vld [vmem:[%s4889 + $0x208] sm:$0xff]
    %v4956 = vld [vmem:[%s4889 + $0x210] sm:$0xff]
    %v4957 = vld [vmem:[%s4889 + $0x218] sm:$0xff]
    %v4958 = vld [vmem:[%s4889 + $0x220] sm:$0xff]
    %v4959 = vld [vmem:[%s4889 + $0x228] sm:$0xff]
    %v4960 = vld [vmem:[%s4889 + $0x230] sm:$0xff]
    %v4961 = vld [vmem:[%s4889 + $0x238] sm:$0xff]
    %v4962 = vld [vmem:[%s4889 + $0x240] sm:$0xff]
    %v4963 = vld [vmem:[%s4889 + $0x248] sm:$0xff]
    %v4964 = vld [vmem:[%s4889 + $0x250] sm:$0xff]
    %v4965 = vld [vmem:[%s4889 + $0x258] sm:$0xff]
    %v4966 = vld [vmem:[%s4889 + $0x260] sm:$0xff]
    %v4967 = vld [vmem:[%s4889 + $0x268] sm:$0xff]
    %v4968 = vld [vmem:[%s4889 + $0x270] sm:$0xff]
    %v4969 = vld [vmem:[%s4889 + $0x278] sm:$0xff]
    %v4970 = vld [vmem:[%s4889 + $0x280] sm:$0xff]
    %v4971 = vld [vmem:[%s4889 + $0x288] sm:$0xff]
    %v4972 = vld [vmem:[%s4889 + $0x290] sm:$0xff]
    %v4973 = vld [vmem:[%s4889 + $0x298] sm:$0xff]
    %v4974 = vld [vmem:[%s4889 + $0x2a0] sm:$0xf]
    %v4976 = vsel %vm353, %v4888, 0
    %v4979 = vsel %vm738, %v4974, 0
    %4981 = vmatprep.subr.mxu0 0.0
    %4982 = vmatpush1.msra.mxu0 %v4905
    %4983 = vmatprep.subr.mxu0 0.0
    %4984 = vmatpush1.msra.mxu0 %v4904
    %4985 = vmatprep.subr.mxu0 0.0
    %4986 = vmatpush1.msra.mxu0 %v4903
    %4987 = vmatprep.subr.mxu0 0.0
    %4988 = vmatpush1.msra.mxu0 %v4902
    %4989 = vmatprep.subr.mxu0 0.0
    %4990 = vmatpush1.msra.mxu0 %v4901
    %4991 = vmatprep.subr.mxu0 0.0
    %4992 = vmatpush1.msra.mxu0 %v4900
    %4993 = vmatprep.subr.mxu0 0.0
    %4994 = vmatpush1.msra.mxu0 %v4899
    %4995 = vmatprep.subr.mxu0 0.0
    %4996 = vmatpush1.msra.mxu0 %v4898
    %4997 = vmatprep.subr.mxu0 0.0
    %4998 = vmatpush1.msra.mxu0 %v4897
    %4999 = vmatprep.subr.mxu0 0.0
    %5000 = vmatpush1.msra.mxu0 %v4896
    %5001 = vmatprep.subr.mxu0 0.0
    %5002 = vmatpush1.msra.mxu0 %v4895
    %5003 = vmatprep.subr.mxu0 0.0
    %5004 = vmatpush1.msra.mxu0 %v4894
    %5005 = vmatprep.subr.mxu0 0.0
    %5006 = vmatpush1.msra.mxu0 %v4893
    %5007 = vmatprep.subr.mxu0 0.0
    %5008 = vmatpush1.msra.mxu0 %v4892
    %5009 = vmatprep.subr.mxu0 0.0
    %5010 = vmatpush1.msra.mxu0 %v4891
    %5011 = vmatprep.subr.mxu0 0.0
    %5012 = vmatpush1.msra.mxu0 %v4890
    %5013 = vmatprep.subr.mxu0 0.0
    %5014 = vmatpush2.msra.mxu0 %v4921
    %5015 = vmatprep.subr.mxu0 0.0
    %5016 = vmatpush2.msra.mxu0 %v4920
    %5017 = vmatprep.subr.mxu0 0.0
    %5018 = vmatpush2.msra.mxu0 %v4919
    %5019 = vmatprep.subr.mxu0 0.0
    %5020 = vmatpush2.msra.mxu0 %v4918
    %5021 = vmatprep.subr.mxu0 0.0
    %5022 = vmatpush2.msra.mxu0 %v4917
    %5023 = vmatprep.subr.mxu0 0.0
    %5024 = vmatpush2.msra.mxu0 %v4916
    %5025 = vmatprep.subr.mxu0 0.0
    %5026 = vmatpush2.msra.mxu0 %v4915
    %5027 = vmatprep.subr.mxu0 0.0
    %5028 = vmatpush2.msra.mxu0 %v4914
    %5029 = vmatprep.subr.mxu0 0.0
    %5030 = vmatpush2.msra.mxu0 %v4913
    %5031 = vmatprep.subr.mxu0 0.0
    %5032 = vmatpush2.msra.mxu0 %v4912
    %5033 = vmatprep.subr.mxu0 0.0
    %5034 = vmatpush2.msra.mxu0 %v4911
    %5035 = vmatprep.subr.mxu0 0.0
    %5036 = vmatpush2.msra.mxu0 %v4910
    %5037 = vmatprep.subr.mxu0 0.0
    %5038 = vmatpush2.msra.mxu0 %v4909
    %5039 = vmatprep.subr.mxu0 0.0
    %5040 = vmatpush2.msra.mxu0 %v4908
    %5041 = vmatprep.subr.mxu0 0.0
    %5042 = vmatpush2.msra.mxu0 %v4907
    %5043 = vmatprep.subr.mxu0 0.0
    %5044 = vmatpush2.msra.mxu0 %v4906
    %5045 = vmatprep.mubr.f32.mxu0 %v4884
    %5046 = vmatmul.mubr.f32.gmra.mxu0 %v4883
    %v5047 = vpop.f32.mrf.mxu0
    %v5048 = vadd.f32 0.0, %v5047
    %v5049 = vpop.f32.mrf.mxu0
    %5050 = vdwg.mxu0
    %5051 = vmatprep.subr.mxu0 0.0
    %5052 = vmatpush1.msra.mxu0 %v4937
    %5053 = vmatprep.subr.mxu0 0.0
    %5054 = vmatpush1.msra.mxu0 %v4936
    %5055 = vmatprep.subr.mxu0 0.0
    %5056 = vmatpush1.msra.mxu0 %v4935
    %5057 = vmatprep.subr.mxu0 0.0
    %5058 = vmatpush1.msra.mxu0 %v4934
    %5059 = vmatprep.subr.mxu0 0.0
    %5060 = vmatpush1.msra.mxu0 %v4933
    %5061 = vmatprep.subr.mxu0 0.0
    %5062 = vmatpush1.msra.mxu0 %v4932
    %5063 = vmatprep.subr.mxu0 0.0
    %5064 = vmatpush1.msra.mxu0 %v4931
    %5065 = vmatprep.subr.mxu0 0.0
    %5066 = vmatpush1.msra.mxu0 %v4930
    %5067 = vmatprep.subr.mxu0 0.0
    %5068 = vmatpush1.msra.mxu0 %v4929
    %5069 = vmatprep.subr.mxu0 0.0
    %5070 = vmatpush1.msra.mxu0 %v4928
    %5071 = vmatprep.subr.mxu0 0.0
    %5072 = vmatpush1.msra.mxu0 %v4927
    %5073 = vmatprep.subr.mxu0 0.0
    %5074 = vmatpush1.msra.mxu0 %v4926
    %5075 = vmatprep.subr.mxu0 0.0
    %5076 = vmatpush1.msra.mxu0 %v4925
    %5077 = vmatprep.subr.mxu0 0.0
    %5078 = vmatpush1.msra.mxu0 %v4924
    %5079 = vmatprep.subr.mxu0 0.0
    %5080 = vmatpush1.msra.mxu0 %v4923
    %5081 = vmatprep.subr.mxu0 0.0
    %5082 = vmatpush1.msra.mxu0 %v4922
    %5083 = vmatprep.subr.mxu0 0.0
    %5084 = vmatpush2.msra.mxu0 %v4953
    %5085 = vmatprep.subr.mxu0 0.0
    %5086 = vmatpush2.msra.mxu0 %v4952
    %5087 = vmatprep.subr.mxu0 0.0
    %5088 = vmatpush2.msra.mxu0 %v4951
    %5089 = vmatprep.subr.mxu0 0.0
    %5090 = vmatpush2.msra.mxu0 %v4950
    %5091 = vmatprep.subr.mxu0 0.0
    %5092 = vmatpush2.msra.mxu0 %v4949
    %5093 = vmatprep.subr.mxu0 0.0
    %5094 = vmatpush2.msra.mxu0 %v4948
    %5095 = vmatprep.subr.mxu0 0.0
    %5096 = vmatpush2.msra.mxu0 %v4947
    %5097 = vmatprep.subr.mxu0 0.0
    %5098 = vmatpush2.msra.mxu0 %v4946
    %5099 = vmatprep.subr.mxu0 0.0
    %5100 = vmatpush2.msra.mxu0 %v4945
    %5101 = vmatprep.subr.mxu0 0.0
    %5102 = vmatpush2.msra.mxu0 %v4944
    %5103 = vmatprep.subr.mxu0 0.0
    %5104 = vmatpush2.msra.mxu0 %v4943
    %5105 = vmatprep.subr.mxu0 0.0
    %5106 = vmatpush2.msra.mxu0 %v4942
    %5107 = vmatprep.subr.mxu0 0.0
    %5108 = vmatpush2.msra.mxu0 %v4941
    %5109 = vmatprep.subr.mxu0 0.0
    %5110 = vmatpush2.msra.mxu0 %v4940
    %5111 = vmatprep.subr.mxu0 0.0
    %5112 = vmatpush2.msra.mxu0 %v4939
    %5113 = vmatprep.subr.mxu0 0.0
    %5114 = vmatpush2.msra.mxu0 %v4938
    %5115 = vmatprep.mubr.f32.mxu0 %v4886
    %5116 = vmatmul.mubr.f32.gmra.mxu0 %v4885
    %v5117 = vpop.f32.mrf.mxu0
    %v5118 = vadd.f32 %v5048, %v5117
    %v5119 = vpop.f32.mrf.mxu0
    %5120 = vdwg.mxu0
    %5121 = vmatprep.subr.mxu0 0.0
    %5122 = vmatpush1.msra.mxu0 %v4969
    %5123 = vmatprep.subr.mxu0 0.0
    %5124 = vmatpush1.msra.mxu0 %v4968
    %5125 = vmatprep.subr.mxu0 0.0
    %5126 = vmatpush1.msra.mxu0 %v4967
    %5127 = vmatprep.subr.mxu0 0.0
    %5128 = vmatpush1.msra.mxu0 %v4966
    %5129 = vmatprep.subr.mxu0 0.0
    %5130 = vmatpush1.msra.mxu0 %v4965
    %5131 = vmatprep.subr.mxu0 0.0
    %5132 = vmatpush1.msra.mxu0 %v4964
    %5133 = vmatprep.subr.mxu0 0.0
    %5134 = vmatpush1.msra.mxu0 %v4963
    %5135 = vmatprep.subr.mxu0 0.0
    %5136 = vmatpush1.msra.mxu0 %v4962
    %5137 = vmatprep.subr.mxu0 0.0
    %5138 = vmatpush1.msra.mxu0 %v4961
    %5139 = vmatprep.subr.mxu0 0.0
    %5140 = vmatpush1.msra.mxu0 %v4960
    %5141 = vmatprep.subr.mxu0 0.0
    %5142 = vmatpush1.msra.mxu0 %v4959
    %5143 = vmatprep.subr.mxu0 0.0
    %5144 = vmatpush1.msra.mxu0 %v4958
    %5145 = vmatprep.subr.mxu0 0.0
    %5146 = vmatpush1.msra.mxu0 %v4957
    %5147 = vmatprep.subr.mxu0 0.0
    %5148 = vmatpush1.msra.mxu0 %v4956
    %5149 = vmatprep.subr.mxu0 0.0
    %5150 = vmatpush1.msra.mxu0 %v4955
    %5151 = vmatprep.subr.mxu0 0.0
    %5152 = vmatpush1.msra.mxu0 %v4954
    %5153 = vmatprep.subr.mxu0 0.0
    %5154 = vmatpush2.msra.mxu0 0.0
    %5155 = vmatprep.subr.mxu0 0.0
    %5156 = vmatpush2.msra.mxu0 0.0
    %5157 = vmatprep.subr.mxu0 0.0
    %5158 = vmatpush2.msra.mxu0 0.0
    %5159 = vmatprep.subr.mxu0 0.0
    %5160 = vmatpush2.msra.mxu0 0.0
    %5161 = vmatprep.subr.mxu0 0.0
    %5162 = vmatpush2.msra.mxu0 0.0
    %5163 = vmatprep.subr.mxu0 0.0
    %5164 = vmatpush2.msra.mxu0 0.0
    %5165 = vmatprep.subr.mxu0 0.0
    %5166 = vmatpush2.msra.mxu0 0.0
    %5167 = vmatprep.subr.mxu0 0.0
    %5168 = vmatpush2.msra.mxu0 0.0
    %5169 = vmatprep.subr.mxu0 0.0
    %5170 = vmatpush2.msra.mxu0 0.0
    %5171 = vmatprep.subr.mxu0 0.0
    %5172 = vmatpush2.msra.mxu0 0.0
    %5173 = vmatprep.subr.mxu0 0.0
    %5174 = vmatpush2.msra.mxu0 0.0
    %5175 = vmatprep.subr.mxu0 0.0
    %5176 = vmatpush2.msra.mxu0 %v4979
    %5177 = vmatprep.subr.mxu0 0.0
    %5178 = vmatpush2.msra.mxu0 %v4973
    %5179 = vmatprep.subr.mxu0 0.0
    %5180 = vmatpush2.msra.mxu0 %v4972
    %5181 = vmatprep.subr.mxu0 0.0
    %5182 = vmatpush2.msra.mxu0 %v4971
    %5183 = vmatprep.subr.mxu0 0.0
    %5184 = vmatpush2.msra.mxu0 %v4970
    %5185 = vmatprep.mubr.f32.mxu0 %v4976
    %5186 = vmatmul.mubr.f32.gmra.mxu0 %v4887
    %v5187 = vpop.f32.mrf.mxu0
    %v5188 = vadd.f32 %v5118, %v5187
    %v5189 = vpop.f32.mrf.mxu0
    %5190 = vdwg.mxu0
    %v5191 = vadd.f32 %v4688, %v5188
    %v5192 = vld [vmem:[#allocation9] sm:$0x1]
    %v5194 = vlaneseq
    %v5195 = vshrl.u32 %v5194, 7
    %v5196 = vsub.s32 0, %v5195
    %v5197 = vrot.slane %v5192, %v5196
    %v5199 = vadd.f32 %v5191, %v5197
    %v5200 = vmax.f32 %v5199, 0.0
    %v5201 = vld [vmem:[#allocation11] sm:$0xff]
    %v5202 = vld [vmem:[#allocation11 + $0x8] sm:$0xff]
    %v5203 = vld [vmem:[#allocation11 + $0x10] sm:$0xff]
    %v5204 = vld [vmem:[#allocation11 + $0x18] sm:$0xff]
    %v5205 = vld [vmem:[#allocation11 + $0x20] sm:$0xff]
    %v5206 = vld [vmem:[#allocation11 + $0x28] sm:$0xff]
    %v5207 = vld [vmem:[#allocation11 + $0x30] sm:$0xff]
    %v5208 = vld [vmem:[#allocation11 + $0x38] sm:$0xff]
    %v5209 = vld [vmem:[#allocation11 + $0x40] sm:$0xff]
    %v5210 = vld [vmem:[#allocation11 + $0x48] sm:$0xff]
    %v5211 = vld [vmem:[#allocation11 + $0x50] sm:$0xff]
    %v5212 = vld [vmem:[#allocation11 + $0x58] sm:$0xff]
    %v5213 = vld [vmem:[#allocation11 + $0x60] sm:$0xff]
    %v5214 = vld [vmem:[#allocation11 + $0x68] sm:$0xff]
    %v5215 = vld [vmem:[#allocation11 + $0x70] sm:$0xff]
    %v5216 = vld [vmem:[#allocation11 + $0x78] sm:$0xff]
    %v5217 = vld [vmem:[#allocation12] sm:$0x1]
    %v5219 = vlaneseq
    %v5220 = vshrl.u32 %v5219, 7
    %v5221 = vsub.s32 0, %v5220
    %v5222 = vrot.slane %v5217, %v5221
    %5224 = vmatprep.subr.mxu0 0.0
    %5225 = vmatpush1.msra.mxu0 %v5216
    %5226 = vmatprep.subr.mxu0 0.0
    %5227 = vmatpush1.msra.mxu0 %v5215
    %5228 = vmatprep.subr.mxu0 0.0
    %5229 = vmatpush1.msra.mxu0 %v5214
    %5230 = vmatprep.subr.mxu0 0.0
    %5231 = vmatpush1.msra.mxu0 %v5213
    %5232 = vmatprep.subr.mxu0 0.0
    %5233 = vmatpush1.msra.mxu0 %v5212
    %5234 = vmatprep.subr.mxu0 0.0
    %5235 = vmatpush1.msra.mxu0 %v5211
    %5236 = vmatprep.subr.mxu0 0.0
    %5237 = vmatpush1.msra.mxu0 %v5210
    %5238 = vmatprep.subr.mxu0 0.0
    %5239 = vmatpush1.msra.mxu0 %v5209
    %5240 = vmatprep.subr.mxu0 0.0
    %5241 = vmatpush1.msra.mxu0 %v5208
    %5242 = vmatprep.subr.mxu0 0.0
    %5243 = vmatpush1.msra.mxu0 %v5207
    %5244 = vmatprep.subr.mxu0 0.0
    %5245 = vmatpush1.msra.mxu0 %v5206
    %5246 = vmatprep.subr.mxu0 0.0
    %5247 = vmatpush1.msra.mxu0 %v5205
    %5248 = vmatprep.subr.mxu0 0.0
    %5249 = vmatpush1.msra.mxu0 %v5204
    %5250 = vmatprep.subr.mxu0 0.0
    %5251 = vmatpush1.msra.mxu0 %v5203
    %5252 = vmatprep.subr.mxu0 0.0
    %5253 = vmatpush1.msra.mxu0 %v5202
    %5254 = vmatprep.subr.mxu0 0.0
    %5255 = vmatpush1.msra.mxu0 %v5201
    %5256 = vmatprep.subr.mxu0 0.0
    %5257 = vmatpush2.msra.mxu0 0.0
    %5258 = vmatprep.subr.mxu0 0.0
    %5259 = vmatpush2.msra.mxu0 0.0
    %5260 = vmatprep.subr.mxu0 0.0
    %5261 = vmatpush2.msra.mxu0 0.0
    %5262 = vmatprep.subr.mxu0 0.0
    %5263 = vmatpush2.msra.mxu0 0.0
    %5264 = vmatprep.subr.mxu0 0.0
    %5265 = vmatpush2.msra.mxu0 0.0
    %5266 = vmatprep.subr.mxu0 0.0
    %5267 = vmatpush2.msra.mxu0 0.0
    %5268 = vmatprep.subr.mxu0 0.0
    %5269 = vmatpush2.msra.mxu0 0.0
    %5270 = vmatprep.subr.mxu0 0.0
    %5271 = vmatpush2.msra.mxu0 0.0
    %5272 = vmatprep.subr.mxu0 0.0
    %5273 = vmatpush2.msra.mxu0 0.0
    %5274 = vmatprep.subr.mxu0 0.0
    %5275 = vmatpush2.msra.mxu0 0.0
    %5276 = vmatprep.subr.mxu0 0.0
    %5277 = vmatpush2.msra.mxu0 0.0
    %5278 = vmatprep.subr.mxu0 0.0
    %5279 = vmatpush2.msra.mxu0 0.0
    %5280 = vmatprep.subr.mxu0 0.0
    %5281 = vmatpush2.msra.mxu0 0.0
    %5282 = vmatprep.subr.mxu0 0.0
    %5283 = vmatpush2.msra.mxu0 0.0
    %5284 = vmatprep.subr.mxu0 0.0
    %5285 = vmatpush2.msra.mxu0 0.0
    %5286 = vmatprep.subr.mxu0 0.0
    %5287 = vmatpush2.msra.mxu0 0.0
    %5288 = vmatprep.mubr.f32.mxu0 0.0
    %5289 = vmatmul.mubr.f32.gmra.mxu0 %v5200
    %v5290 = vpop.f32.mrf.mxu0
    %v5291 = vadd.f32 %v5222, %v5290
    %v5292 = vpop.f32.mrf.mxu0
    %5293 = vdwg.mxu0
    %v5294 = vmax.f32 %v5291, 0.0
    %v5295 = vld [vmem:[#allocation14] sm:$0xff]
    %v5296 = vld [vmem:[#allocation14 + $0x8] sm:$0xff]
    %v5297 = vld [vmem:[#allocation14 + $0x10] sm:$0xff]
    %v5298 = vld [vmem:[#allocation14 + $0x18] sm:$0xff]
    %v5299 = vld [vmem:[#allocation14 + $0x20] sm:$0xff]
    %v5300 = vld [vmem:[#allocation14 + $0x28] sm:$0xff]
    %v5301 = vld [vmem:[#allocation14 + $0x30] sm:$0xff]
    %v5302 = vld [vmem:[#allocation14 + $0x38] sm:$0xff]
    %v5303 = vld [vmem:[#allocation14 + $0x40] sm:$0xff]
    %v5304 = vld [vmem:[#allocation14 + $0x48] sm:$0xff]
    %v5305 = vld [vmem:[#allocation14 + $0x50] sm:$0xff]
    %v5306 = vld [vmem:[#allocation14 + $0x58] sm:$0xff]
    %v5307 = vld [vmem:[#allocation14 + $0x60] sm:$0xff]
    %v5308 = vld [vmem:[#allocation14 + $0x68] sm:$0xff]
    %v5309 = vld [vmem:[#allocation14 + $0x70] sm:$0xff]
    %v5310 = vld [vmem:[#allocation14 + $0x78] sm:$0xff]
    %v5311 = vld [vmem:[#allocation15] sm:$0x1]
    %v5313 = vlaneseq
    %v5314 = vshrl.u32 %v5313, 7
    %v5315 = vsub.s32 0, %v5314
    %v5316 = vrot.slane %v5311, %v5315
    %5318 = vmatprep.subr.mxu0 0.0
    %5319 = vmatpush1.msra.mxu0 %v5310
    %5320 = vmatprep.subr.mxu0 0.0
    %5321 = vmatpush1.msra.mxu0 %v5309
    %5322 = vmatprep.subr.mxu0 0.0
    %5323 = vmatpush1.msra.mxu0 %v5308
    %5324 = vmatprep.subr.mxu0 0.0
    %5325 = vmatpush1.msra.mxu0 %v5307
    %5326 = vmatprep.subr.mxu0 0.0
    %5327 = vmatpush1.msra.mxu0 %v5306
    %5328 = vmatprep.subr.mxu0 0.0
    %5329 = vmatpush1.msra.mxu0 %v5305
    %5330 = vmatprep.subr.mxu0 0.0
    %5331 = vmatpush1.msra.mxu0 %v5304
    %5332 = vmatprep.subr.mxu0 0.0
    %5333 = vmatpush1.msra.mxu0 %v5303
    %5334 = vmatprep.subr.mxu0 0.0
    %5335 = vmatpush1.msra.mxu0 %v5302
    %5336 = vmatprep.subr.mxu0 0.0
    %5337 = vmatpush1.msra.mxu0 %v5301
    %5338 = vmatprep.subr.mxu0 0.0
    %5339 = vmatpush1.msra.mxu0 %v5300
    %5340 = vmatprep.subr.mxu0 0.0
    %5341 = vmatpush1.msra.mxu0 %v5299
    %5342 = vmatprep.subr.mxu0 0.0
    %5343 = vmatpush1.msra.mxu0 %v5298
    %5344 = vmatprep.subr.mxu0 0.0
    %5345 = vmatpush1.msra.mxu0 %v5297
    %5346 = vmatprep.subr.mxu0 0.0
    %5347 = vmatpush1.msra.mxu0 %v5296
    %5348 = vmatprep.subr.mxu0 0.0
    %5349 = vmatpush1.msra.mxu0 %v5295
    %5350 = vmatprep.subr.mxu0 0.0
    %5351 = vmatpush2.msra.mxu0 0.0
    %5352 = vmatprep.subr.mxu0 0.0
    %5353 = vmatpush2.msra.mxu0 0.0
    %5354 = vmatprep.subr.mxu0 0.0
    %5355 = vmatpush2.msra.mxu0 0.0
    %5356 = vmatprep.subr.mxu0 0.0
    %5357 = vmatpush2.msra.mxu0 0.0
    %5358 = vmatprep.subr.mxu0 0.0
    %5359 = vmatpush2.msra.mxu0 0.0
    %5360 = vmatprep.subr.mxu0 0.0
    %5361 = vmatpush2.msra.mxu0 0.0
    %5362 = vmatprep.subr.mxu0 0.0
    %5363 = vmatpush2.msra.mxu0 0.0
    %5364 = vmatprep.subr.mxu0 0.0
    %5365 = vmatpush2.msra.mxu0 0.0
    %5366 = vmatprep.subr.mxu0 0.0
    %5367 = vmatpush2.msra.mxu0 0.0
    %5368 = vmatprep.subr.mxu0 0.0
    %5369 = vmatpush2.msra.mxu0 0.0
    %5370 = vmatprep.subr.mxu0 0.0
    %5371 = vmatpush2.msra.mxu0 0.0
    %5372 = vmatprep.subr.mxu0 0.0
    %5373 = vmatpush2.msra.mxu0 0.0
    %5374 = vmatprep.subr.mxu0 0.0
    %5375 = vmatpush2.msra.mxu0 0.0
    %5376 = vmatprep.subr.mxu0 0.0
    %5377 = vmatpush2.msra.mxu0 0.0
    %5378 = vmatprep.subr.mxu0 0.0
    %5379 = vmatpush2.msra.mxu0 0.0
    %5380 = vmatprep.subr.mxu0 0.0
    %5381 = vmatpush2.msra.mxu0 0.0
    %5382 = vmatprep.mubr.f32.mxu0 0.0
    %5383 = vmatmul.mubr.f32.gmra.mxu0 %v5294
    %v5384 = vpop.f32.mrf.mxu0
    %v5385 = vadd.f32 %v5316, %v5384
    %v5386 = vpop.f32.mrf.mxu0
    %5387 = vdwg.mxu0
    %5388 = vst [vmem:[%s9] sm:$0xff] %v5385
    // Predicated region
    $region70: #{simple_convnet_forward.1} parent=1 // pred_check
      _
    $region71: #{simple_convnet_forward.1} parent=1 // pred_check_branch
      %5390 = sbr.rel (0) target = $region73
    $region72: #{simple_convnet_forward.1} parent=1 // pred_region
      _
    $region73: #{simple_convnet_forward.1} parent=1 // pred_fallthru
      _
    // Predicated region
    $region74: #{simple_convnet_forward.1} parent=1 // pred_check
      _
    $region75: #{simple_convnet_forward.1} parent=1 // pred_check_branch
      %5392 = sbr.rel (0) target = $region77
    $region76: #{simple_convnet_forward.1} parent=1 // pred_region
      _
    $region77: #{simple_convnet_forward.1} parent=1 // pred_fallthru
      _
    %5393 = vsyncpa [#allocation4], 1
    %5394 = vsyncpa [#allocation10], 1
    %5395 = vsyncpa [#allocation13], 1
    %5396 = vsyncpa [#allocation16], 1
    %5397 = vsyncpa [#allocation5], 1
    %5398 = vsyncpa [#allocation7], 1

</llo_original>
